<compile_context>
chip_gen: v7x
topology: tpu7x:2x2x1
jax: 0.10.0
libtpu: 0.0.40
codegen_flags: <defaults>
</compile_context>

<pallas_src>
import functools

import jax
import jax.numpy as jnp
from jax.experimental import pallas as pl
from jax.experimental.pallas import tpu as pltpu


def _resnet_block_kernel(x_ref, w1_ref, b1_ref, w2_ref, b2_ref, o_ref,
                         *, H, W, mxu_dtype):
    HW = H * W
    x = x_ref[0].astype(jnp.float32)                 # (HW, Cp), lane-dense Cp
    Cp = x.shape[1]

    # Column index of each flattened spatial position, for horizontal
    # reflection fixups at x == 0 / x == W-1.  (Requires H, W >= 2.)
    p = jax.lax.broadcasted_iota(jnp.int32, (HW, 1), 0)
    col = p % W
    is_left = col == 0
    is_right = col == (W - 1)

    def conv3x3(a, w_ref, b_ref):
        # Reflected horizontal neighbours built in f32 via XLU rolls
        # (pltpu.roll follows jnp.roll semantics: out[i] = a[i - shift]),
        # with column-mask fixups at the image edges.
        h_m1 = pltpu.roll(a, 1, axis=0)              # a[y, x-1] (wraps at x==0)
        h_p1 = pltpu.roll(a, HW - 1, axis=0)         # a[y, x+1] (wraps at x==W-1)
        left = jnp.where(is_left, h_p1, h_m1).astype(mxu_dtype)     # kx = 0
        ctr = a.astype(mxu_dtype)                                   # kx = 1
        right = jnp.where(is_right, h_m1, h_p1).astype(mxu_dtype)   # kx = 2

        # 9 accumulated per-tap MXU matmuls into one f32 accumulator.
        acc = jnp.zeros((HW, Cp), jnp.float32)
        for kx, c in enumerate((left, ctr, right)):
            # Reflected vertical neighbours via sublane-aligned static slices
            # (all slice boundaries are multiples of W).
            up = jnp.concatenate([c[W:2 * W], c[:(H - 1) * W]], axis=0)        # ky=0
            down = jnp.concatenate([c[W:], c[(H - 2) * W:(H - 1) * W]], axis=0)  # ky=2
            for ky, tap in enumerate((up, c, down)):
                acc = acc + jnp.dot(tap, w_ref[3 * ky + kx],
                                    preferred_element_type=jnp.float32)
        return acc + b_ref[...].astype(jnp.float32)                 # (HW, Cp) f32

    def instance_norm(a, eps=1e-5):
        # Fused one-pass per-channel statistics (biased variance, no affine).
        inv_hw = jnp.float32(1.0 / HW)
        s = jnp.sum(a, axis=0, keepdims=True)
        ss = jnp.sum(a * a, axis=0, keepdims=True)
        m = s * inv_hw
        var = jnp.maximum(ss * inv_hw - m * m, 0.0)
        return (a - m) * jax.lax.rsqrt(var + eps)

    y = conv3x3(x, w1_ref, b1_ref)
    y = jax.nn.relu(instance_norm(y))
    y = conv3x3(y, w2_ref, b2_ref)
    y = instance_norm(y)

    o_ref[0] = (x + y).astype(o_ref.dtype)                          # skip connection


def resnet_block_forward(x_nchw, w1, b1, w2, b2, *, mxu_dtype=jnp.bfloat16):
    """x_nchw: (N, C, H, W) f32; w*: (Cout, Cin, 3, 3) PyTorch layout; b*: (C,).

    mxu_dtype controls the matmul-operand precision only (bf16 default for
    ~2-4x MXU throughput); accumulation and all elementwise math stay in f32.
    """
    N, C, H, W = x_nchw.shape
    Cp = ((C + 127) // 128) * 128               # lane-dense channel padding
    # NOTE: at tiny channel counts (demo C=8 -> Cp=128) this wastes most of the
    # MXU/lane width; production CycleGAN dims (C=256) are already lane-dense.

    x = jnp.transpose(x_nchw, (0, 2, 3, 1))     # -> NHWC
    x = jnp.pad(x, ((0, 0), (0, 0), (0, 0), (0, Cp - C)))
    x = x.reshape(N, H * W, Cp)
    # NOTE: if neighbouring blocks carry NHWC channel-padded activations, the
    # transpose/pad/slice HBM round-trips above/below can be dropped entirely.

    def prep_w(w):
        wt = jnp.transpose(w, (2, 3, 1, 0))     # -> (ky, kx, Cin, Cout)
        wt = jnp.pad(wt, ((0, 0), (0, 0), (0, Cp - C), (0, Cp - C)))
        return wt.reshape(9, Cp, Cp).astype(mxu_dtype)   # pre-cast for the MXU

    def prep_b(b):
        return jnp.pad(b, (0, Cp - C)).reshape(1, Cp).astype(jnp.float32)

    w1f, w2f = prep_w(w1), prep_w(w2)
    b1f, b2f = prep_b(b1), prep_b(b2)

    kernel = functools.partial(_resnet_block_kernel, H=H, W=W,
                               mxu_dtype=mxu_dtype)

    out = pl.pallas_call(
        kernel,
        out_shape=jax.ShapeDtypeStruct((N, H * W, Cp), x.dtype),
        grid_spec=pltpu.PrefetchScalarGridSpec(
            num_scalar_prefetch=0,
            grid=(N,),
            in_specs=[
                pl.BlockSpec((1, H * W, Cp), lambda b: (b, 0, 0)),
                # Constant blocks: index_map never changes, so they are only
                # DMA'd once per core (not re-fetched every batch step).
                pl.BlockSpec((9, Cp, Cp), lambda b: (0, 0, 0)),
                pl.BlockSpec((1, Cp), lambda b: (0, 0)),
                pl.BlockSpec((9, Cp, Cp), lambda b: (0, 0, 0)),
                pl.BlockSpec((1, Cp), lambda b: (0, 0)),
            ],
            out_specs=pl.BlockSpec((1, H * W, Cp), lambda b: (b, 0, 0)),
        ),
        compiler_params=pltpu.CompilerParams(
            dimension_semantics=("parallel",),        # batch across TCs
            vmem_limit_bytes=64 * 1024 * 1024,        # explicit scoped-VMEM budget
        ),
    )(x, w1f, b1f, w2f, b2f)

    out = out.reshape(N, H, W, Cp)[..., :C]
    return jnp.transpose(out, (0, 3, 1, 2))      # -> NCHW


def _reference_forward(x_nchw, w1, b1, w2, b2):
    """Pure-JAX reference (lax.conv) for validation."""
    x = jnp.transpose(x_nchw, (0, 2, 3, 1))

    def conv(a, w, b):
        ap = jnp.pad(a, ((0, 0), (1, 1), (1, 1), (0, 0)), mode="reflect")
        y = jax.lax.conv_general_dilated(
            ap, jnp.transpose(w, (2, 3, 1, 0)),
            window_strides=(1, 1), padding="VALID",
            dimension_numbers=("NHWC", "HWIO", "NHWC"))
        return y + b

    def inorm(a, eps=1e-5):
        m = jnp.mean(a, axis=(1, 2), keepdims=True)
        v = jnp.mean((a - m) ** 2, axis=(1, 2), keepdims=True)
        return (a - m) * jax.lax.rsqrt(v + eps)

    y = jax.nn.relu(inorm(conv(x, w1, b1)))
    y = inorm(conv(y, w2, b2))
    return jnp.transpose(x + y, (0, 3, 1, 2))


if __name__ == "__main__":
    N, C, H, W = 2, 8, 16, 16
    key = jax.random.PRNGKey(0)
    kx, kw1, kb1, kw2, kb2 = jax.random.split(key, 5)

    x = jax.random.normal(kx, (N, C, H, W), dtype=jnp.float32)
    # Deterministic parameter init (roughly kaiming scale for 3x3 conv).
    scale = 1.0 / (3.0 * 3.0 * C) ** 0.5
    w1 = jax.random.normal(kw1, (C, C, 3, 3), dtype=jnp.float32) * scale
    b1 = jax.random.normal(kb1, (C,), dtype=jnp.float32) * 0.1
    w2 = jax.random.normal(kw2, (C, C, 3, 3), dtype=jnp.float32) * scale
    b2 = jax.random.normal(kb2, (C,), dtype=jnp.float32) * 0.1

    # Default fast path: bf16 MXU operands, f32 accumulation / elementwise.
    out_bf16 = jax.block_until_ready(resnet_block_forward(x, w1, b1, w2, b2))
    # Full-precision path for exact numerics validation against the reference.
    out_f32 = jax.block_until_ready(
        resnet_block_forward(x, w1, b1, w2, b2, mxu_dtype=jnp.float32))
    ref = jax.block_until_ready(_reference_forward(x, w1, b1, w2, b2))

    assert out_bf16.shape == (N, C, H, W)
    assert bool(jnp.all(jnp.isfinite(out_bf16)))
    assert float(jnp.max(jnp.abs(out_f32 - ref))) < 5e-4
    # bf16 operand rounding accumulates to ~1e-2 after two convs + two
    # instance norms; 1e-1 still catches any tap / reflection / norm bug.
    assert float(jnp.max(jnp.abs(out_bf16 - ref))) < 1e-1

    print("KERNEL_OK")
</pallas_src>

<mosaic_0001>
module attributes {stable_mosaic.version = 11 : i64} {
  func.func @_resnet_block_kernel(%arg0: i32, %arg1: memref<1x256x128xf32, #tpu.memory_space<vmem>>, %arg2: memref<9x128x128xbf16, #tpu.memory_space<vmem>>, %arg3: memref<1x128xf32, #tpu.memory_space<vmem>>, %arg4: memref<9x128x128xbf16, #tpu.memory_space<vmem>>, %arg5: memref<1x128xf32, #tpu.memory_space<vmem>>, %arg6: memref<1x256x128xf32, #tpu.memory_space<vmem>>) attributes {dimension_semantics = [#tpu.dimension_semantics<parallel>], iteration_bounds = array<i64: 2>, scalar_prefetch = 0 : i64, scratch_operands = 0 : i64, tpu.core_type = #tpu.core_type<tc>, window_params = [{transform_indices = @transform_0, window_bounds = array<i64: 1, 256, 128>}, {pipeline_mode = #tpu.pipeline_mode<synchronous>, transform_indices = @transform_1, window_bounds = array<i64: 9, 128, 128>}, {pipeline_mode = #tpu.pipeline_mode<synchronous>, transform_indices = @transform_2, window_bounds = array<i64: 1, 128>}, {pipeline_mode = #tpu.pipeline_mode<synchronous>, transform_indices = @transform_3, window_bounds = array<i64: 9, 128, 128>}, {pipeline_mode = #tpu.pipeline_mode<synchronous>, transform_indices = @transform_4, window_bounds = array<i64: 1, 128>}, {transform_indices = @transform_5, window_bounds = array<i64: 1, 256, 128>}]} {
    %c0 = arith.constant 0 : index
    %c0_0 = arith.constant 0 : index
    %c0_1 = arith.constant 0 : index
    %0 = vector.load %arg1[%c0, %c0_0, %c0_1] : memref<1x256x128xf32, #tpu.memory_space<vmem>>, vector<1x256x128xf32>
    %1 = vector.shape_cast %0 : vector<1x256x128xf32> to vector<256x128xf32>
    %2 = tpu.iota {dimensions = array<i32: 0>} : vector<256x1xi32>
    %c16_i32 = arith.constant 16 : i32
    %c0_i32 = arith.constant 0 : i32
    %3 = arith.cmpi eq, %c16_i32, %c0_i32 : i32
    %c1_i32 = arith.constant 1 : i32
    %4 = arith.select %3, %c1_i32, %c16_i32 : i32
    %5 = vector.broadcast %4 : i32 to vector<256x1xi32>
    %6 = arith.remsi %2, %5 : vector<256x1xi32>
    %c0_i32_2 = arith.constant 0 : i32
    %7 = vector.broadcast %c0_i32_2 : i32 to vector<256x1xi32>
    %8 = arith.cmpi ne, %6, %7 : vector<256x1xi32>
    %c0_i32_3 = arith.constant 0 : i32
    %9 = vector.broadcast %c0_i32_3 : i32 to vector<256x1xi32>
    %10 = arith.cmpi slt, %6, %9 : vector<256x1xi32>
    %c0_i32_4 = arith.constant 0 : i32
    %11 = arith.cmpi slt, %4, %c0_i32_4 : i32
    %12 = vector.broadcast %11 : i1 to vector<256x1xi1>
    %13 = vector.broadcast %12 : vector<256x1xi1> to vector<256x1xi1>
    %14 = arith.xori %10, %13 : vector<256x1xi1>
    %15 = arith.andi %14, %8 : vector<256x1xi1>
    %16 = vector.broadcast %4 : i32 to vector<256x1xi32>
    %17 = arith.addi %6, %16 : vector<256x1xi32>
    %18 = arith.select %15, %17, %6 : vector<256x1xi1>, vector<256x1xi32>
    %c0_i32_5 = arith.constant 0 : i32
    %19 = vector.broadcast %c0_i32_5 : i32 to vector<256x1xi32>
    %20 = arith.cmpi eq, %18, %19 : vector<256x1xi32>
    %c15_i32 = arith.constant 15 : i32
    %21 = vector.broadcast %c15_i32 : i32 to vector<256x1xi32>
    %22 = arith.cmpi eq, %18, %21 : vector<256x1xi32>
    %c1_i32_6 = arith.constant 1 : i32
    %23 = tpu.dynamic_rotate %1 by %c1_i32_6 dim 0 : vector<256x128xf32>, i32 -> vector<256x128xf32>
    %c255_i32 = arith.constant 255 : i32
    %24 = tpu.dynamic_rotate %1 by %c255_i32 dim 0 : vector<256x128xf32>, i32 -> vector<256x128xf32>
    %25 = vector.shape_cast %20 : vector<256x1xi1> to vector<256x1xi1>
    %26 = vector.broadcast %25 : vector<256x1xi1> to vector<256x128xi1>
    %27 = arith.select %26, %24, %23 : vector<256x128xi1>, vector<256x128xf32>
    %28 = arith.truncf %27 : vector<256x128xf32> to vector<256x128xbf16>
    %29 = arith.truncf %1 : vector<256x128xf32> to vector<256x128xbf16>
    %30 = vector.shape_cast %22 : vector<256x1xi1> to vector<256x1xi1>
    %31 = vector.broadcast %30 : vector<256x1xi1> to vector<256x128xi1>
    %32 = arith.select %31, %23, %24 : vector<256x128xi1>, vector<256x128xf32>
    %33 = arith.truncf %32 : vector<256x128xf32> to vector<256x128xbf16>
    %cst = arith.constant 0.000000e+00 : f32
    %34 = vector.broadcast %cst : f32 to vector<256x128xf32>
    %35 = vector.extract_strided_slice %28 {offsets = [16, 0], sizes = [16, 128], strides = [1, 1]} : vector<256x128xbf16> to vector<16x128xbf16>
    %36 = vector.extract_strided_slice %28 {offsets = [0, 0], sizes = [240, 128], strides = [1, 1]} : vector<256x128xbf16> to vector<240x128xbf16>
    %37 = tpu.concatenate %35, %36 in 0 : vector<16x128xbf16>, vector<240x128xbf16> -> vector<256x128xbf16>
    %38 = vector.extract_strided_slice %28 {offsets = [16, 0], sizes = [240, 128], strides = [1, 1]} : vector<256x128xbf16> to vector<240x128xbf16>
    %39 = vector.extract_strided_slice %28 {offsets = [224, 0], sizes = [16, 128], strides = [1, 1]} : vector<256x128xbf16> to vector<16x128xbf16>
    %40 = tpu.concatenate %38, %39 in 0 : vector<240x128xbf16>, vector<16x128xbf16> -> vector<256x128xbf16>
    %c0_7 = arith.constant 0 : index
    %c0_8 = arith.constant 0 : index
    %c0_9 = arith.constant 0 : index
    %41 = vector.load %arg2[%c0_7, %c0_8, %c0_9] : memref<9x128x128xbf16, #tpu.memory_space<vmem>>, vector<1x128x128xbf16>
    %42 = vector.shape_cast %41 : vector<1x128x128xbf16> to vector<128x128xbf16>
    %cst_10 = arith.constant dense<0.000000e+00> : vector<256x128xf32>
    %43 = tpu.matmul %37, %42, %cst_10 {dimension_numbers = #tpu.dot_dimension_numbers<[1], [0], [0], [1], [0, 0, 1, 1], [], []>} : vector<256x128xbf16>, vector<128x128xbf16>, vector<256x128xf32> -> vector<256x128xf32>
    %44 = arith.addf %34, %43 : vector<256x128xf32>
    %c3 = arith.constant 3 : index
    %c0_11 = arith.constant 0 : index
    %c0_12 = arith.constant 0 : index
    %45 = vector.load %arg2[%c3, %c0_11, %c0_12] : memref<9x128x128xbf16, #tpu.memory_space<vmem>>, vector<1x128x128xbf16>
    %46 = vector.shape_cast %45 : vector<1x128x128xbf16> to vector<128x128xbf16>
    %cst_13 = arith.constant dense<0.000000e+00> : vector<256x128xf32>
    %47 = tpu.matmul %28, %46, %cst_13 {dimension_numbers = #tpu.dot_dimension_numbers<[1], [0], [0], [1], [0, 0, 1, 1], [], []>} : vector<256x128xbf16>, vector<128x128xbf16>, vector<256x128xf32> -> vector<256x128xf32>
    %48 = arith.addf %44, %47 : vector<256x128xf32>
    %c6 = arith.constant 6 : index
    %c0_14 = arith.constant 0 : index
    %c0_15 = arith.constant 0 : index
    %49 = vector.load %arg2[%c6, %c0_14, %c0_15] : memref<9x128x128xbf16, #tpu.memory_space<vmem>>, vector<1x128x128xbf16>
    %50 = vector.shape_cast %49 : vector<1x128x128xbf16> to vector<128x128xbf16>
    %cst_16 = arith.constant dense<0.000000e+00> : vector<256x128xf32>
    %51 = tpu.matmul %40, %50, %cst_16 {dimension_numbers = #tpu.dot_dimension_numbers<[1], [0], [0], [1], [0, 0, 1, 1], [], []>} : vector<256x128xbf16>, vector<128x128xbf16>, vector<256x128xf32> -> vector<256x128xf32>
    %52 = arith.addf %48, %51 : vector<256x128xf32>
    %53 = vector.extract_strided_slice %29 {offsets = [16, 0], sizes = [16, 128], strides = [1, 1]} : vector<256x128xbf16> to vector<16x128xbf16>
    %54 = vector.extract_strided_slice %29 {offsets = [0, 0], sizes = [240, 128], strides = [1, 1]} : vector<256x128xbf16> to vector<240x128xbf16>
    %55 = tpu.concatenate %53, %54 in 0 : vector<16x128xbf16>, vector<240x128xbf16> -> vector<256x128xbf16>
    %56 = vector.extract_strided_slice %29 {offsets = [16, 0], sizes = [240, 128], strides = [1, 1]} : vector<256x128xbf16> to vector<240x128xbf16>
    %57 = vector.extract_strided_slice %29 {offsets = [224, 0], sizes = [16, 128], strides = [1, 1]} : vector<256x128xbf16> to vector<16x128xbf16>
    %58 = tpu.concatenate %56, %57 in 0 : vector<240x128xbf16>, vector<16x128xbf16> -> vector<256x128xbf16>
    %c1 = arith.constant 1 : index
    %c0_17 = arith.constant 0 : index
    %c0_18 = arith.constant 0 : index
    %59 = vector.load %arg2[%c1, %c0_17, %c0_18] : memref<9x128x128xbf16, #tpu.memory_space<vmem>>, vector<1x128x128xbf16>
    %60 = vector.shape_cast %59 : vector<1x128x128xbf16> to vector<128x128xbf16>
    %cst_19 = arith.constant dense<0.000000e+00> : vector<256x128xf32>
    %61 = tpu.matmul %55, %60, %cst_19 {dimension_numbers = #tpu.dot_dimension_numbers<[1], [0], [0], [1], [0, 0, 1, 1], [], []>} : vector<256x128xbf16>, vector<128x128xbf16>, vector<256x128xf32> -> vector<256x128xf32>
    %62 = arith.addf %52, %61 : vector<256x128xf32>
    %c4 = arith.constant 4 : index
    %c0_20 = arith.constant 0 : index
    %c0_21 = arith.constant 0 : index
    %63 = vector.load %arg2[%c4, %c0_20, %c0_21] : memref<9x128x128xbf16, #tpu.memory_space<vmem>>, vector<1x128x128xbf16>
    %64 = vector.shape_cast %63 : vector<1x128x128xbf16> to vector<128x128xbf16>
    %cst_22 = arith.constant dense<0.000000e+00> : vector<256x128xf32>
    %65 = tpu.matmul %29, %64, %cst_22 {dimension_numbers = #tpu.dot_dimension_numbers<[1], [0], [0], [1], [0, 0, 1, 1], [], []>} : vector<256x128xbf16>, vector<128x128xbf16>, vector<256x128xf32> -> vector<256x128xf32>
    %66 = arith.addf %62, %65 : vector<256x128xf32>
    %c7 = arith.constant 7 : index
    %c0_23 = arith.constant 0 : index
    %c0_24 = arith.constant 0 : index
    %67 = vector.load %arg2[%c7, %c0_23, %c0_24] : memref<9x128x128xbf16, #tpu.memory_space<vmem>>, vector<1x128x128xbf16>
    %68 = vector.shape_cast %67 : vector<1x128x128xbf16> to vector<128x128xbf16>
    %cst_25 = arith.constant dense<0.000000e+00> : vector<256x128xf32>
    %69 = tpu.matmul %58, %68, %cst_25 {dimension_numbers = #tpu.dot_dimension_numbers<[1], [0], [0], [1], [0, 0, 1, 1], [], []>} : vector<256x128xbf16>, vector<128x128xbf16>, vector<256x128xf32> -> vector<256x128xf32>
    %70 = arith.addf %66, %69 : vector<256x128xf32>
    %71 = vector.extract_strided_slice %33 {offsets = [16, 0], sizes = [16, 128], strides = [1, 1]} : vector<256x128xbf16> to vector<16x128xbf16>
    %72 = vector.extract_strided_slice %33 {offsets = [0, 0], sizes = [240, 128], strides = [1, 1]} : vector<256x128xbf16> to vector<240x128xbf16>
    %73 = tpu.concatenate %71, %72 in 0 : vector<16x128xbf16>, vector<240x128xbf16> -> vector<256x128xbf16>
    %74 = vector.extract_strided_slice %33 {offsets = [16, 0], sizes = [240, 128], strides = [1, 1]} : vector<256x128xbf16> to vector<240x128xbf16>
    %75 = vector.extract_strided_slice %33 {offsets = [224, 0], sizes = [16, 128], strides = [1, 1]} : vector<256x128xbf16> to vector<16x128xbf16>
    %76 = tpu.concatenate %74, %75 in 0 : vector<240x128xbf16>, vector<16x128xbf16> -> vector<256x128xbf16>
    %c2 = arith.constant 2 : index
    %c0_26 = arith.constant 0 : index
    %c0_27 = arith.constant 0 : index
    %77 = vector.load %arg2[%c2, %c0_26, %c0_27] : memref<9x128x128xbf16, #tpu.memory_space<vmem>>, vector<1x128x128xbf16>
    %78 = vector.shape_cast %77 : vector<1x128x128xbf16> to vector<128x128xbf16>
    %cst_28 = arith.constant dense<0.000000e+00> : vector<256x128xf32>
    %79 = tpu.matmul %73, %78, %cst_28 {dimension_numbers = #tpu.dot_dimension_numbers<[1], [0], [0], [1], [0, 0, 1, 1], [], []>} : vector<256x128xbf16>, vector<128x128xbf16>, vector<256x128xf32> -> vector<256x128xf32>
    %80 = arith.addf %70, %79 : vector<256x128xf32>
    %c5 = arith.constant 5 : index
    %c0_29 = arith.constant 0 : index
    %c0_30 = arith.constant 0 : index
    %81 = vector.load %arg2[%c5, %c0_29, %c0_30] : memref<9x128x128xbf16, #tpu.memory_space<vmem>>, vector<1x128x128xbf16>
    %82 = vector.shape_cast %81 : vector<1x128x128xbf16> to vector<128x128xbf16>
    %cst_31 = arith.constant dense<0.000000e+00> : vector<256x128xf32>
    %83 = tpu.matmul %33, %82, %cst_31 {dimension_numbers = #tpu.dot_dimension_numbers<[1], [0], [0], [1], [0, 0, 1, 1], [], []>} : vector<256x128xbf16>, vector<128x128xbf16>, vector<256x128xf32> -> vector<256x128xf32>
    %84 = arith.addf %80, %83 : vector<256x128xf32>
    %c8 = arith.constant 8 : index
    %c0_32 = arith.constant 0 : index
    %c0_33 = arith.constant 0 : index
    %85 = vector.load %arg2[%c8, %c0_32, %c0_33] : memref<9x128x128xbf16, #tpu.memory_space<vmem>>, vector<1x128x128xbf16>
    %86 = vector.shape_cast %85 : vector<1x128x128xbf16> to vector<128x128xbf16>
    %cst_34 = arith.constant dense<0.000000e+00> : vector<256x128xf32>
    %87 = tpu.matmul %76, %86, %cst_34 {dimension_numbers = #tpu.dot_dimension_numbers<[1], [0], [0], [1], [0, 0, 1, 1], [], []>} : vector<256x128xbf16>, vector<128x128xbf16>, vector<256x128xf32> -> vector<256x128xf32>
    %88 = arith.addf %84, %87 : vector<256x128xf32>
    %c0_35 = arith.constant 0 : index
    %c0_36 = arith.constant 0 : index
    %89 = vector.load %arg3[%c0_35, %c0_36] : memref<1x128xf32, #tpu.memory_space<vmem>>, vector<1x128xf32>
    %90 = vector.broadcast %89 : vector<1x128xf32> to vector<256x128xf32>
    %91 = arith.addf %88, %90 : vector<256x128xf32>
    %cst_37 = arith.constant dense<0.000000e+00> : vector<128xf32>
    %92 = vector.multi_reduction <add>, %91, %cst_37 [0] : vector<256x128xf32> to vector<128xf32>
    %93 = vector.shape_cast %92 : vector<128xf32> to vector<1x128xf32>
    %94 = arith.mulf %91, %91 : vector<256x128xf32>
    %cst_38 = arith.constant dense<0.000000e+00> : vector<128xf32>
    %95 = vector.multi_reduction <add>, %94, %cst_38 [0] : vector<256x128xf32> to vector<128xf32>
    %96 = vector.shape_cast %95 : vector<128xf32> to vector<1x128xf32>
    %cst_39 = arith.constant 3.906250e-03 : f32
    %97 = vector.broadcast %cst_39 : f32 to vector<1x128xf32>
    %98 = arith.mulf %93, %97 : vector<1x128xf32>
    %cst_40 = arith.constant 3.906250e-03 : f32
    %99 = vector.broadcast %cst_40 : f32 to vector<1x128xf32>
    %100 = arith.mulf %96, %99 : vector<1x128xf32>
    %101 = arith.mulf %98, %98 : vector<1x128xf32>
    %102 = arith.subf %100, %101 : vector<1x128xf32>
    %cst_41 = arith.constant 0.000000e+00 : f32
    %103 = vector.broadcast %cst_41 : f32 to vector<1x128xf32>
    %104 = arith.maximumf %102, %103 : vector<1x128xf32>
    %105 = vector.broadcast %98 : vector<1x128xf32> to vector<256x128xf32>
    %106 = arith.subf %91, %105 : vector<256x128xf32>
    %cst_42 = arith.constant 9.99999974E-6 : f32
    %107 = vector.broadcast %cst_42 : f32 to vector<1x128xf32>
    %108 = arith.addf %104, %107 : vector<1x128xf32>
    %109 = math.rsqrt %108 : vector<1x128xf32>
    %110 = vector.broadcast %109 : vector<1x128xf32> to vector<256x128xf32>
    %111 = arith.mulf %106, %110 : vector<256x128xf32>
    %cst_43 = arith.constant 0.000000e+00 : f32
    %112 = vector.broadcast %cst_43 : f32 to vector<256x128xf32>
    %113 = arith.maximumf %111, %112 : vector<256x128xf32>
    %c1_i32_44 = arith.constant 1 : i32
    %114 = tpu.dynamic_rotate %113 by %c1_i32_44 dim 0 : vector<256x128xf32>, i32 -> vector<256x128xf32>
    %c255_i32_45 = arith.constant 255 : i32
    %115 = tpu.dynamic_rotate %113 by %c255_i32_45 dim 0 : vector<256x128xf32>, i32 -> vector<256x128xf32>
    %116 = vector.shape_cast %20 : vector<256x1xi1> to vector<256x1xi1>
    %117 = vector.broadcast %116 : vector<256x1xi1> to vector<256x128xi1>
    %118 = arith.select %117, %115, %114 : vector<256x128xi1>, vector<256x128xf32>
    %119 = arith.truncf %118 : vector<256x128xf32> to vector<256x128xbf16>
    %120 = arith.truncf %113 : vector<256x128xf32> to vector<256x128xbf16>
    %121 = vector.shape_cast %22 : vector<256x1xi1> to vector<256x1xi1>
    %122 = vector.broadcast %121 : vector<256x1xi1> to vector<256x128xi1>
    %123 = arith.select %122, %114, %115 : vector<256x128xi1>, vector<256x128xf32>
    %124 = arith.truncf %123 : vector<256x128xf32> to vector<256x128xbf16>
    %cst_46 = arith.constant 0.000000e+00 : f32
    %125 = vector.broadcast %cst_46 : f32 to vector<256x128xf32>
    %126 = vector.extract_strided_slice %119 {offsets = [16, 0], sizes = [16, 128], strides = [1, 1]} : vector<256x128xbf16> to vector<16x128xbf16>
    %127 = vector.extract_strided_slice %119 {offsets = [0, 0], sizes = [240, 128], strides = [1, 1]} : vector<256x128xbf16> to vector<240x128xbf16>
    %128 = tpu.concatenate %126, %127 in 0 : vector<16x128xbf16>, vector<240x128xbf16> -> vector<256x128xbf16>
    %129 = vector.extract_strided_slice %119 {offsets = [16, 0], sizes = [240, 128], strides = [1, 1]} : vector<256x128xbf16> to vector<240x128xbf16>
    %130 = vector.extract_strided_slice %119 {offsets = [224, 0], sizes = [16, 128], strides = [1, 1]} : vector<256x128xbf16> to vector<16x128xbf16>
    %131 = tpu.concatenate %129, %130 in 0 : vector<240x128xbf16>, vector<16x128xbf16> -> vector<256x128xbf16>
    %c0_47 = arith.constant 0 : index
    %c0_48 = arith.constant 0 : index
    %c0_49 = arith.constant 0 : index
    %132 = vector.load %arg4[%c0_47, %c0_48, %c0_49] : memref<9x128x128xbf16, #tpu.memory_space<vmem>>, vector<1x128x128xbf16>
    %133 = vector.shape_cast %132 : vector<1x128x128xbf16> to vector<128x128xbf16>
    %cst_50 = arith.constant dense<0.000000e+00> : vector<256x128xf32>
    %134 = tpu.matmul %128, %133, %cst_50 {dimension_numbers = #tpu.dot_dimension_numbers<[1], [0], [0], [1], [0, 0, 1, 1], [], []>} : vector<256x128xbf16>, vector<128x128xbf16>, vector<256x128xf32> -> vector<256x128xf32>
    %135 = arith.addf %125, %134 : vector<256x128xf32>
    %c3_51 = arith.constant 3 : index
    %c0_52 = arith.constant 0 : index
    %c0_53 = arith.constant 0 : index
    %136 = vector.load %arg4[%c3_51, %c0_52, %c0_53] : memref<9x128x128xbf16, #tpu.memory_space<vmem>>, vector<1x128x128xbf16>
    %137 = vector.shape_cast %136 : vector<1x128x128xbf16> to vector<128x128xbf16>
    %cst_54 = arith.constant dense<0.000000e+00> : vector<256x128xf32>
    %138 = tpu.matmul %119, %137, %cst_54 {dimension_numbers = #tpu.dot_dimension_numbers<[1], [0], [0], [1], [0, 0, 1, 1], [], []>} : vector<256x128xbf16>, vector<128x128xbf16>, vector<256x128xf32> -> vector<256x128xf32>
    %139 = arith.addf %135, %138 : vector<256x128xf32>
    %c6_55 = arith.constant 6 : index
    %c0_56 = arith.constant 0 : index
    %c0_57 = arith.constant 0 : index
    %140 = vector.load %arg4[%c6_55, %c0_56, %c0_57] : memref<9x128x128xbf16, #tpu.memory_space<vmem>>, vector<1x128x128xbf16>
    %141 = vector.shape_cast %140 : vector<1x128x128xbf16> to vector<128x128xbf16>
    %cst_58 = arith.constant dense<0.000000e+00> : vector<256x128xf32>
    %142 = tpu.matmul %131, %141, %cst_58 {dimension_numbers = #tpu.dot_dimension_numbers<[1], [0], [0], [1], [0, 0, 1, 1], [], []>} : vector<256x128xbf16>, vector<128x128xbf16>, vector<256x128xf32> -> vector<256x128xf32>
    %143 = arith.addf %139, %142 : vector<256x128xf32>
    %144 = vector.extract_strided_slice %120 {offsets = [16, 0], sizes = [16, 128], strides = [1, 1]} : vector<256x128xbf16> to vector<16x128xbf16>
    %145 = vector.extract_strided_slice %120 {offsets = [0, 0], sizes = [240, 128], strides = [1, 1]} : vector<256x128xbf16> to vector<240x128xbf16>
    %146 = tpu.concatenate %144, %145 in 0 : vector<16x128xbf16>, vector<240x128xbf16> -> vector<256x128xbf16>
    %147 = vector.extract_strided_slice %120 {offsets = [16, 0], sizes = [240, 128], strides = [1, 1]} : vector<256x128xbf16> to vector<240x128xbf16>
    %148 = vector.extract_strided_slice %120 {offsets = [224, 0], sizes = [16, 128], strides = [1, 1]} : vector<256x128xbf16> to vector<16x128xbf16>
    %149 = tpu.concatenate %147, %148 in 0 : vector<240x128xbf16>, vector<16x128xbf16> -> vector<256x128xbf16>
    %c1_59 = arith.constant 1 : index
    %c0_60 = arith.constant 0 : index
    %c0_61 = arith.constant 0 : index
    %150 = vector.load %arg4[%c1_59, %c0_60, %c0_61] : memref<9x128x128xbf16, #tpu.memory_space<vmem>>, vector<1x128x128xbf16>
    %151 = vector.shape_cast %150 : vector<1x128x128xbf16> to vector<128x128xbf16>
    %cst_62 = arith.constant dense<0.000000e+00> : vector<256x128xf32>
    %152 = tpu.matmul %146, %151, %cst_62 {dimension_numbers = #tpu.dot_dimension_numbers<[1], [0], [0], [1], [0, 0, 1, 1], [], []>} : vector<256x128xbf16>, vector<128x128xbf16>, vector<256x128xf32> -> vector<256x128xf32>
    %153 = arith.addf %143, %152 : vector<256x128xf32>
    %c4_63 = arith.constant 4 : index
    %c0_64 = arith.constant 0 : index
    %c0_65 = arith.constant 0 : index
    %154 = vector.load %arg4[%c4_63, %c0_64, %c0_65] : memref<9x128x128xbf16, #tpu.memory_space<vmem>>, vector<1x128x128xbf16>
    %155 = vector.shape_cast %154 : vector<1x128x128xbf16> to vector<128x128xbf16>
    %cst_66 = arith.constant dense<0.000000e+00> : vector<256x128xf32>
    %156 = tpu.matmul %120, %155, %cst_66 {dimension_numbers = #tpu.dot_dimension_numbers<[1], [0], [0], [1], [0, 0, 1, 1], [], []>} : vector<256x128xbf16>, vector<128x128xbf16>, vector<256x128xf32> -> vector<256x128xf32>
    %157 = arith.addf %153, %156 : vector<256x128xf32>
    %c7_67 = arith.constant 7 : index
    %c0_68 = arith.constant 0 : index
    %c0_69 = arith.constant 0 : index
    %158 = vector.load %arg4[%c7_67, %c0_68, %c0_69] : memref<9x128x128xbf16, #tpu.memory_space<vmem>>, vector<1x128x128xbf16>
    %159 = vector.shape_cast %158 : vector<1x128x128xbf16> to vector<128x128xbf16>
    %cst_70 = arith.constant dense<0.000000e+00> : vector<256x128xf32>
    %160 = tpu.matmul %149, %159, %cst_70 {dimension_numbers = #tpu.dot_dimension_numbers<[1], [0], [0], [1], [0, 0, 1, 1], [], []>} : vector<256x128xbf16>, vector<128x128xbf16>, vector<256x128xf32> -> vector<256x128xf32>
    %161 = arith.addf %157, %160 : vector<256x128xf32>
    %162 = vector.extract_strided_slice %124 {offsets = [16, 0], sizes = [16, 128], strides = [1, 1]} : vector<256x128xbf16> to vector<16x128xbf16>
    %163 = vector.extract_strided_slice %124 {offsets = [0, 0], sizes = [240, 128], strides = [1, 1]} : vector<256x128xbf16> to vector<240x128xbf16>
    %164 = tpu.concatenate %162, %163 in 0 : vector<16x128xbf16>, vector<240x128xbf16> -> vector<256x128xbf16>
    %165 = vector.extract_strided_slice %124 {offsets = [16, 0], sizes = [240, 128], strides = [1, 1]} : vector<256x128xbf16> to vector<240x128xbf16>
    %166 = vector.extract_strided_slice %124 {offsets = [224, 0], sizes = [16, 128], strides = [1, 1]} : vector<256x128xbf16> to vector<16x128xbf16>
    %167 = tpu.concatenate %165, %166 in 0 : vector<240x128xbf16>, vector<16x128xbf16> -> vector<256x128xbf16>
    %c2_71 = arith.constant 2 : index
    %c0_72 = arith.constant 0 : index
    %c0_73 = arith.constant 0 : index
    %168 = vector.load %arg4[%c2_71, %c0_72, %c0_73] : memref<9x128x128xbf16, #tpu.memory_space<vmem>>, vector<1x128x128xbf16>
    %169 = vector.shape_cast %168 : vector<1x128x128xbf16> to vector<128x128xbf16>
    %cst_74 = arith.constant dense<0.000000e+00> : vector<256x128xf32>
    %170 = tpu.matmul %164, %169, %cst_74 {dimension_numbers = #tpu.dot_dimension_numbers<[1], [0], [0], [1], [0, 0, 1, 1], [], []>} : vector<256x128xbf16>, vector<128x128xbf16>, vector<256x128xf32> -> vector<256x128xf32>
    %171 = arith.addf %161, %170 : vector<256x128xf32>
    %c5_75 = arith.constant 5 : index
    %c0_76 = arith.constant 0 : index
    %c0_77 = arith.constant 0 : index
    %172 = vector.load %arg4[%c5_75, %c0_76, %c0_77] : memref<9x128x128xbf16, #tpu.memory_space<vmem>>, vector<1x128x128xbf16>
    %173 = vector.shape_cast %172 : vector<1x128x128xbf16> to vector<128x128xbf16>
    %cst_78 = arith.constant dense<0.000000e+00> : vector<256x128xf32>
    %174 = tpu.matmul %124, %173, %cst_78 {dimension_numbers = #tpu.dot_dimension_numbers<[1], [0], [0], [1], [0, 0, 1, 1], [], []>} : vector<256x128xbf16>, vector<128x128xbf16>, vector<256x128xf32> -> vector<256x128xf32>
    %175 = arith.addf %171, %174 : vector<256x128xf32>
    %c8_79 = arith.constant 8 : index
    %c0_80 = arith.constant 0 : index
    %c0_81 = arith.constant 0 : index
    %176 = vector.load %arg4[%c8_79, %c0_80, %c0_81] : memref<9x128x128xbf16, #tpu.memory_space<vmem>>, vector<1x128x128xbf16>
    %177 = vector.shape_cast %176 : vector<1x128x128xbf16> to vector<128x128xbf16>
    %cst_82 = arith.constant dense<0.000000e+00> : vector<256x128xf32>
    %178 = tpu.matmul %167, %177, %cst_82 {dimension_numbers = #tpu.dot_dimension_numbers<[1], [0], [0], [1], [0, 0, 1, 1], [], []>} : vector<256x128xbf16>, vector<128x128xbf16>, vector<256x128xf32> -> vector<256x128xf32>
    %179 = arith.addf %175, %178 : vector<256x128xf32>
    %c0_83 = arith.constant 0 : index
    %c0_84 = arith.constant 0 : index
    %180 = vector.load %arg5[%c0_83, %c0_84] : memref<1x128xf32, #tpu.memory_space<vmem>>, vector<1x128xf32>
    %181 = vector.broadcast %180 : vector<1x128xf32> to vector<256x128xf32>
    %182 = arith.addf %179, %181 : vector<256x128xf32>
    %cst_85 = arith.constant dense<0.000000e+00> : vector<128xf32>
    %183 = vector.multi_reduction <add>, %182, %cst_85 [0] : vector<256x128xf32> to vector<128xf32>
    %184 = vector.shape_cast %183 : vector<128xf32> to vector<1x128xf32>
    %185 = arith.mulf %182, %182 : vector<256x128xf32>
    %cst_86 = arith.constant dense<0.000000e+00> : vector<128xf32>
    %186 = vector.multi_reduction <add>, %185, %cst_86 [0] : vector<256x128xf32> to vector<128xf32>
    %187 = vector.shape_cast %186 : vector<128xf32> to vector<1x128xf32>
    %cst_87 = arith.constant 3.906250e-03 : f32
    %188 = vector.broadcast %cst_87 : f32 to vector<1x128xf32>
    %189 = arith.mulf %184, %188 : vector<1x128xf32>
    %cst_88 = arith.constant 3.906250e-03 : f32
    %190 = vector.broadcast %cst_88 : f32 to vector<1x128xf32>
    %191 = arith.mulf %187, %190 : vector<1x128xf32>
    %192 = arith.mulf %189, %189 : vector<1x128xf32>
    %193 = arith.subf %191, %192 : vector<1x128xf32>
    %cst_89 = arith.constant 0.000000e+00 : f32
    %194 = vector.broadcast %cst_89 : f32 to vector<1x128xf32>
    %195 = arith.maximumf %193, %194 : vector<1x128xf32>
    %196 = vector.broadcast %189 : vector<1x128xf32> to vector<256x128xf32>
    %197 = arith.subf %182, %196 : vector<256x128xf32>
    %cst_90 = arith.constant 9.99999974E-6 : f32
    %198 = vector.broadcast %cst_90 : f32 to vector<1x128xf32>
    %199 = arith.addf %195, %198 : vector<1x128xf32>
    %200 = math.rsqrt %199 : vector<1x128xf32>
    %201 = vector.broadcast %200 : vector<1x128xf32> to vector<256x128xf32>
    %202 = arith.mulf %197, %201 : vector<256x128xf32>
    %203 = arith.addf %1, %202 : vector<256x128xf32>
    %c0_91 = arith.constant 0 : index
    %c0_92 = arith.constant 0 : index
    %c0_93 = arith.constant 0 : index
    %204 = vector.load %arg6[%c0_91, %c0_92, %c0_93] : memref<1x256x128xf32, #tpu.memory_space<vmem>>, vector<1x256x128xf32>
    %205 = vector.shape_cast %204 : vector<1x256x128xf32> to vector<256x128xf32>
    %206 = vector.shape_cast %203 : vector<256x128xf32> to vector<1x256x128xf32>
    tpu.vector_store %arg6[%c0_91, %c0_92, %c0_93], %206 {strides = array<i32>} : memref<1x256x128xf32, #tpu.memory_space<vmem>>, vector<1x256x128xf32>,
    return
  }
  func.func @transform_0(%arg0: i32) -> (i32, i32, i32) {
    %c0_i32 = arith.constant 0 : i32
    %c0_i32_0 = arith.constant 0 : i32
    %c0_i32_1 = arith.constant 0 : i32
    return %arg0, %c0_i32, %c0_i32_0 : i32, i32, i32
  }
  func.func @transform_1(%arg0: i32) -> (i32, i32, i32) {
    %c0_i32 = arith.constant 0 : i32
    %c0_i32_0 = arith.constant 0 : i32
    %c0_i32_1 = arith.constant 0 : i32
    %c0_i32_2 = arith.constant 0 : i32
    return %c0_i32, %c0_i32_0, %c0_i32_1 : i32, i32, i32
  }
  func.func @transform_2(%arg0: i32) -> (i32, i32) {
    %c0_i32 = arith.constant 0 : i32
    %c0_i32_0 = arith.constant 0 : i32
    %c0_i32_1 = arith.constant 0 : i32
    return %c0_i32, %c0_i32_0 : i32, i32
  }
  func.func @transform_3(%arg0: i32) -> (i32, i32, i32) {
    %c0_i32 = arith.constant 0 : i32
    %c0_i32_0 = arith.constant 0 : i32
    %c0_i32_1 = arith.constant 0 : i32
    %c0_i32_2 = arith.constant 0 : i32
    return %c0_i32, %c0_i32_0, %c0_i32_1 : i32, i32, i32
  }
  func.func @transform_4(%arg0: i32) -> (i32, i32) {
    %c0_i32 = arith.constant 0 : i32
    %c0_i32_0 = arith.constant 0 : i32
    %c0_i32_1 = arith.constant 0 : i32
    return %c0_i32, %c0_i32_0 : i32, i32
  }
  func.func @transform_5(%arg0: i32) -> (i32, i32, i32) {
    %c0_i32 = arith.constant 0 : i32
    %c0_i32_0 = arith.constant 0 : i32
    %c0_i32_1 = arith.constant 0 : i32
    return %arg0, %c0_i32, %c0_i32_0 : i32, i32, i32
  }
}

</mosaic_0001>

<llo_original>
// kernel: tpu_custom_call.1
$region0: #{tpu_custom_call.1}
  #allocation0 [shape = 'u32[]', space=smem, size = 0x4, offset = 0x4, fixed_abs, tag = 'smem constant byte address 0x4 - core index']
  #allocation1 [shape = 'u32[144,128]{1,0:T(1,128)}', space=vmem, size = 0x12000, scoped, tag = 'internal scratch']
  %s0 = inlined_call_operand.hbm [shape: f32[2,256,128], index: 0, kind: input, shape index: {}]
  %s1 = inlined_call_operand.hbm [shape: bf16[9,128,128], index: 1, kind: input, shape index: {}]
  %s2 = inlined_call_operand.hbm [shape: f32[1,128], index: 2, kind: input, shape index: {}]
  %s3 = inlined_call_operand.hbm [shape: bf16[9,128,128], index: 3, kind: input, shape index: {}]
  %s4 = inlined_call_operand.hbm [shape: f32[1,128], index: 4, kind: input, shape index: {}]
  %s5 = inlined_call_operand.hbm [shape: f32[2,256,128], index: 5, kind: output, shape index: {}]
  %s6 = sld [smem:[#allocation0]]
  $region73: #{tpu_custom_call.1} parent=0
    _
  %s8 = ssub.s32 1, %s6
  %s9 = scalar_select 0, %s8, %s6
  $region1: #{tpu_custom_call.1} parent=0
    #allocation2 [shape = 'u8[262144]{0}', space=vmem, size = 0x40000, scoped, tag = 'input window, operand 0']
    #allocation3 [shape = 's32[2]{0}', space=sflag, size = 0x8, scoped, tag = 'scoped memory for tpu_custom_call.1']
    #allocation4 [shape = 's32[2]{0}', space=sflag, size = 0x8, scoped, tag = 'scoped memory for tpu_custom_call.1']
    #allocation5 [shape = 'u8[294912]{0}', space=vmem, size = 0x48000, scoped, tag = 'input window, operand 1, single buffered']
    #allocation6 [shape = 's32[1]{0}', space=sflag, size = 0x4, scoped, tag = 'scoped memory for tpu_custom_call.1']
    #allocation7 [shape = 'u8[512]{0}', space=vmem, size = 0x400, scoped, tag = 'input window, operand 2, single buffered']
    #allocation8 [shape = 'u8[294912]{0}', space=vmem, size = 0x48000, scoped, tag = 'input window, operand 3, single buffered']
    #allocation9 [shape = 's32[1]{0}', space=sflag, size = 0x4, scoped, tag = 'scoped memory for tpu_custom_call.1']
    #allocation10 [shape = 'u8[512]{0}', space=vmem, size = 0x400, scoped, tag = 'input window, operand 4, single buffered']
    #allocation11 [shape = 'u8[262144]{0}', space=vmem, size = 0x40000, scoped, tag = 'output window, operand 0']
    %10 = vsyncpa [#allocation3], 0
    %s11 = scalar_lea.sflag [#allocation3], 1
    %12 = vsyncpa %s11, 0
    %13 = vsyncpa [#allocation6], 0
    %14 = vsyncpa [#allocation9], 0
    %15 = vsyncpa [#allocation4], 0
    %s16 = scalar_lea.sflag [#allocation4], 1
    %17 = vsyncpa %s16, 0
    loop: start=0, step=1, limit=4
    $region2: #{tpu_custom_call.1} parent=1 // loop_pre_header
      _
    $region3: #{tpu_custom_call.1} parent=1 // loop_header
      %s19 = sphi 0, %s23
      %p20 = scmp.ge.s32.totalorder %s19, 4
      %s29 = sphi 0, %s31
      %s32 = sphi 0, %s29
      %s33 = sphi 0, %s32
      %s49 = sphi 0, %s33
      %s53 = sphi 0, %s53
      %s55 = sphi 0, %s53
      %s56 = sphi 0, %s55
      %s70 = sphi 0, %s56
      %s74 = sphi 0, %s74
      %s76 = sphi 0, %s74
      %s77 = sphi 0, %s76
      %s91 = sphi 0, %s77
      %s95 = sphi 0, %s95
      %s97 = sphi 0, %s95
      %s98 = sphi 0, %s97
      %s112 = sphi 0, %s98
      %s116 = sphi 0, %s116
      %s118 = sphi 0, %s116
      %s119 = sphi 0, %s118
      %s133 = sphi 0, %s119
      %s139 = sphi 0, %s141
      %s142 = sphi 0, %s139
      %s143 = sphi 0, %s142
      %s159 = sphi 0, %s143
    $region4: #{tpu_custom_call.1} parent=1 // loop_header_branch
      %22 = sbr.rel (%p20) target = $region8
    $region5: #{tpu_custom_call.1} parent=1 // loop_body
      %s24 = ssub.s32 %s19, 1
      %s25 = ssub.s32 %s19, 2
      %s26 = sadd.s32 %s19, 1
      %s27 = ssub.s32 %s19, %s26
      %p28 = scmp.eq.s32.totalorder %s27, 0
      %s30 = sadd.s32 %s29, 1
      %s31 = scalar_select %p28, %s29, %s30
      %p34 = pneg %p28
      %p35 = scmp.eq.s32.totalorder %s19, 1
      %p36 = por %p34, %p35
      %p37 = scmp.ne.s32.totalorder %s29, %s32
      %p38 = scmp.eq.s32.totalorder %s19, 0
      %p39 = por %p37, %p38
      %p40 = scmp.ne.s32.totalorder %s29, %s32
      %p41 = scmp.eq.s32.totalorder %s24, 1
      %p42 = por %p40, %p41
      %p43 = scmp.ne.s32.totalorder %s32, %s33
      %p44 = scmp.eq.s32.totalorder %s24, 0
      %p45 = por %p43, %p44
      %p46 = scmp.ne.s32.totalorder %s32, %s33
      %p47 = scmp.eq.s32.totalorder %s25, 1
      %p48 = por %p46, %p47
      %p50 = scmp.ne.s32.totalorder %s33, %s49
      %p51 = scmp.eq.s32.totalorder %s25, 0
      %p52 = por %p50, %p51
      %s54 = sadd.s32 %s53, 1
      %p57 = scmp.eq.s32.totalorder %s19, 1
      %p58 = scmp.ne.s32.totalorder %s53, %s55
      %p59 = scmp.eq.s32.totalorder %s19, 0
      %p60 = por %p58, %p59
      %p61 = scmp.ne.s32.totalorder %s53, %s55
      %p62 = scmp.eq.s32.totalorder %s24, 1
      %p63 = por %p61, %p62
      %p64 = scmp.ne.s32.totalorder %s55, %s56
      %p65 = scmp.eq.s32.totalorder %s24, 0
      %p66 = por %p64, %p65
      %p67 = scmp.ne.s32.totalorder %s55, %s56
      %p68 = scmp.eq.s32.totalorder %s25, 1
      %p69 = por %p67, %p68
      %p71 = scmp.ne.s32.totalorder %s56, %s70
      %p72 = scmp.eq.s32.totalorder %s25, 0
      %p73 = por %p71, %p72
      %s75 = sadd.s32 %s74, 1
      %p78 = scmp.eq.s32.totalorder %s19, 1
      %p79 = scmp.ne.s32.totalorder %s74, %s76
      %p80 = scmp.eq.s32.totalorder %s19, 0
      %p81 = por %p79, %p80
      %p82 = scmp.ne.s32.totalorder %s74, %s76
      %p83 = scmp.eq.s32.totalorder %s24, 1
      %p84 = por %p82, %p83
      %p85 = scmp.ne.s32.totalorder %s76, %s77
      %p86 = scmp.eq.s32.totalorder %s24, 0
      %p87 = por %p85, %p86
      %p88 = scmp.ne.s32.totalorder %s76, %s77
      %p89 = scmp.eq.s32.totalorder %s25, 1
      %p90 = por %p88, %p89
      %p92 = scmp.ne.s32.totalorder %s77, %s91
      %p93 = scmp.eq.s32.totalorder %s25, 0
      %p94 = por %p92, %p93
      %s96 = sadd.s32 %s95, 1
      %p99 = scmp.eq.s32.totalorder %s19, 1
      %p100 = scmp.ne.s32.totalorder %s95, %s97
      %p101 = scmp.eq.s32.totalorder %s19, 0
      %p102 = por %p100, %p101
      %p103 = scmp.ne.s32.totalorder %s95, %s97
      %p104 = scmp.eq.s32.totalorder %s24, 1
      %p105 = por %p103, %p104
      %p106 = scmp.ne.s32.totalorder %s97, %s98
      %p107 = scmp.eq.s32.totalorder %s24, 0
      %p108 = por %p106, %p107
      %p109 = scmp.ne.s32.totalorder %s97, %s98
      %p110 = scmp.eq.s32.totalorder %s25, 1
      %p111 = por %p109, %p110
      %p113 = scmp.ne.s32.totalorder %s98, %s112
      %p114 = scmp.eq.s32.totalorder %s25, 0
      %p115 = por %p113, %p114
      %s117 = sadd.s32 %s116, 1
      %p120 = scmp.eq.s32.totalorder %s19, 1
      %p121 = scmp.ne.s32.totalorder %s116, %s118
      %p122 = scmp.eq.s32.totalorder %s19, 0
      %p123 = por %p121, %p122
      %p124 = scmp.ne.s32.totalorder %s116, %s118
      %p125 = scmp.eq.s32.totalorder %s24, 1
      %p126 = por %p124, %p125
      %p127 = scmp.ne.s32.totalorder %s118, %s119
      %p128 = scmp.eq.s32.totalorder %s24, 0
      %p129 = por %p127, %p128
      %p130 = scmp.ne.s32.totalorder %s118, %s119
      %p131 = scmp.eq.s32.totalorder %s25, 1
      %p132 = por %p130, %p131
      %p134 = scmp.ne.s32.totalorder %s119, %s133
      %p135 = scmp.eq.s32.totalorder %s25, 0
      %p136 = por %p134, %p135
      %s137 = ssub.s32 %s19, %s26
      %p138 = scmp.eq.s32.totalorder %s137, 0
      %s140 = sadd.s32 %s139, 1
      %s141 = scalar_select %p138, %s139, %s140
      %p144 = pneg %p138
      %p145 = scmp.eq.s32.totalorder %s19, 1
      %p146 = por %p144, %p145
      %p147 = scmp.ne.s32.totalorder %s139, %s142
      %p148 = scmp.eq.s32.totalorder %s19, 0
      %p149 = por %p147, %p148
      %p150 = scmp.ne.s32.totalorder %s139, %s142
      %p151 = scmp.eq.s32.totalorder %s24, 1
      %p152 = por %p150, %p151
      %p153 = scmp.ne.s32.totalorder %s142, %s143
      %p154 = scmp.eq.s32.totalorder %s24, 0
      %p155 = por %p153, %p154
      %p156 = scmp.ne.s32.totalorder %s142, %s143
      %p157 = scmp.eq.s32.totalorder %s25, 1
      %p158 = por %p156, %p157
      %p160 = scmp.ne.s32.totalorder %s143, %s159
      %p161 = scmp.eq.s32.totalorder %s25, 0
      %p162 = por %p160, %p161
      %p163 = scmp.le.s32.totalorder 1, %s19
      %p164 = scmp.lt.s32.totalorder %s19, 3
      %p165 = pnand %p163, %p164
      %p166 = pneg %p165
      // Predicated region
      $region9: #{tpu_custom_call.1} parent=5 // pred_check
        _
      $region10: #{tpu_custom_call.1} parent=5 // pred_check_branch
        %168 = sbr.rel (%p165) target = $region12
      $region11: #{tpu_custom_call.1} parent=5 // pred_region
        %s169 = ssub.s32 %s19, 1
        // Predicated region
        $region13: #{tpu_custom_call.1} parent=11 // pred_check
          %p170 = pneg %p66
        $region14: #{tpu_custom_call.1} parent=11 // pred_check_branch
          %172 = sbr.rel (%p170) target = $region16
        $region15: #{tpu_custom_call.1} parent=11 // pred_region
          %s174 = ssub.s32 9216, 9216
          %175 = vsyncadd [#allocation6], %s174
          %s176 = sshll.u32 [#allocation5], 4
          %s177 = int_to_ptr.vmem [resolvable:$true] %s176
          %182 = dma.hbm_to_vmem [thread:$0]  %s1, 9216, %s177, [#allocation6], 64, 64, 4
        $region16: #{tpu_custom_call.1} parent=11 // pred_fallthru
          _
        // Predicated region
        $region17: #{tpu_custom_call.1} parent=11 // pred_check
          %p183 = pneg %p87
        $region18: #{tpu_custom_call.1} parent=11 // pred_check_branch
          %185 = sbr.rel (%p183) target = $region20
        $region19: #{tpu_custom_call.1} parent=11 // pred_region
          %s187 = ssub.s32 16, 16
          %188 = vsyncadd [#allocation6], %s187
          %s190 = sshll.u32 [#allocation7], 4
          %s191 = int_to_ptr.vmem [resolvable:$true] %s190
          %193 = dma.hbm_to_vmem [thread:$0]  %s2, 16, %s191, [#allocation6]
        $region20: #{tpu_custom_call.1} parent=11 // pred_fallthru
          _
        // Predicated region
        $region21: #{tpu_custom_call.1} parent=11 // pred_check
          %p194 = pneg %p108
        $region22: #{tpu_custom_call.1} parent=11 // pred_check_branch
          %196 = sbr.rel (%p194) target = $region24
        $region23: #{tpu_custom_call.1} parent=11 // pred_region
          %s198 = ssub.s32 9216, 9216
          %199 = vsyncadd [#allocation9], %s198
          %s200 = sshll.u32 [#allocation8], 4
          %s201 = int_to_ptr.vmem [resolvable:$true] %s200
          %206 = dma.hbm_to_vmem [thread:$0]  %s3, 9216, %s201, [#allocation9], 64, 64, 4
        $region24: #{tpu_custom_call.1} parent=11 // pred_fallthru
          _
        // Predicated region
        $region25: #{tpu_custom_call.1} parent=11 // pred_check
          %p207 = pneg %p129
        $region26: #{tpu_custom_call.1} parent=11 // pred_check_branch
          %209 = sbr.rel (%p207) target = $region28
        $region27: #{tpu_custom_call.1} parent=11 // pred_region
          %s211 = ssub.s32 16, 16
          %212 = vsyncadd [#allocation9], %s211
          %s214 = sshll.u32 [#allocation10], 4
          %s215 = int_to_ptr.vmem [resolvable:$true] %s214
          %217 = dma.hbm_to_vmem [thread:$0]  %s4, 16, %s215, [#allocation9]
        $region28: #{tpu_custom_call.1} parent=11 // pred_fallthru
          _
      $region12: #{tpu_custom_call.1} parent=5 // pred_fallthru
        _
      %p218 = scmp.lt.s32.totalorder %s19, 2
      // Predicated region
      $region29: #{tpu_custom_call.1} parent=5 // pred_check
        %p219 = pneg %p218
      $region30: #{tpu_custom_call.1} parent=5 // pred_check_branch
        %221 = sbr.rel (%p219) target = $region32
      $region31: #{tpu_custom_call.1} parent=5 // pred_region
        // Predicated region
        $region33: #{tpu_custom_call.1} parent=31 // pred_check
          %p222 = pneg %p39
        $region34: #{tpu_custom_call.1} parent=31 // pred_check_branch
          %224 = sbr.rel (%p222) target = $region36
        $region35: #{tpu_custom_call.1} parent=31 // pred_region
          %s225 = sand.u32 %s29, 1
          %s226 = scalar_lea.sflag [#allocation3], %s225
          %s227 = sand.u32 %s29, 1
          %s228 = smul.addr %s227, 256
          %s229 = scalar_lea.vmem [#allocation2], %s228
          %s231 = ssub.s32 4096, 4096
          %232 = vsyncadd %s226, %s231
          %s233 = smul.addr %s19, 32
          %s234 = smul.addr %s233, 128
          %s235 = scalar_lea.hbm %s0, %s234
          %s236 = sshll.u32 %s229, 4
          %s237 = int_to_ptr.vmem [resolvable:$true] %s236
          %242 = dma.hbm_to_vmem [thread:$0]  %s235, 4096, %s237, %s226, 128, 128, 8
        $region36: #{tpu_custom_call.1} parent=31 // pred_fallthru
          _
      $region32: #{tpu_custom_call.1} parent=5 // pred_fallthru
        _
      %p243 = scmp.le.s32.totalorder 1, %s19
      %p244 = scmp.lt.s32.totalorder %s19, 3
      %p245 = pnand %p243, %p244
      %p246 = pneg %p245
      // Predicated region
      $region37: #{tpu_custom_call.1} parent=5 // pred_check
        _
      $region38: #{tpu_custom_call.1} parent=5 // pred_check_branch
        %248 = sbr.rel (%p245) target = $region40
      $region39: #{tpu_custom_call.1} parent=5 // pred_region
        %s249 = ssub.s32 %s19, 1
        %s250 = sand.u32 %s32, 1
        %s251 = scalar_lea.sflag [#allocation3], %s250
        %s252 = sand.u32 %s32, 1
        %s253 = smul.addr %s252, 256
        %s254 = scalar_lea.vmem [#allocation2], %s253
        // Predicated region
        $region41: #{tpu_custom_call.1} parent=39 // pred_check
          %p255 = pneg %p45
        $region42: #{tpu_custom_call.1} parent=39 // pred_check_branch
          %257 = sbr.rel (%p255) target = $region44
        $region43: #{tpu_custom_call.1} parent=39 // pred_region
          %258 = dma.done %s251, 4096
        $region44: #{tpu_custom_call.1} parent=39 // pred_fallthru
          _
        // Predicated region
        $region45: #{tpu_custom_call.1} parent=39 // pred_check
          %p259 = pneg %p66
        $region46: #{tpu_custom_call.1} parent=39 // pred_check_branch
          %261 = sbr.rel (%p259) target = $region48
        $region47: #{tpu_custom_call.1} parent=39 // pred_region
          %262 = dma.done [#allocation6], 9216
        $region48: #{tpu_custom_call.1} parent=39 // pred_fallthru
          _
        // Predicated region
        $region49: #{tpu_custom_call.1} parent=39 // pred_check
          %p263 = pneg %p87
        $region50: #{tpu_custom_call.1} parent=39 // pred_check_branch
          %265 = sbr.rel (%p263) target = $region52
        $region51: #{tpu_custom_call.1} parent=39 // pred_region
          %266 = dma.done [#allocation6], 16
        $region52: #{tpu_custom_call.1} parent=39 // pred_fallthru
          _
        // Predicated region
        $region53: #{tpu_custom_call.1} parent=39 // pred_check
          %p267 = pneg %p108
        $region54: #{tpu_custom_call.1} parent=39 // pred_check_branch
          %269 = sbr.rel (%p267) target = $region56
        $region55: #{tpu_custom_call.1} parent=39 // pred_region
          %270 = dma.done [#allocation9], 9216
        $region56: #{tpu_custom_call.1} parent=39 // pred_fallthru
          _
        // Predicated region
        $region57: #{tpu_custom_call.1} parent=39 // pred_check
          %p271 = pneg %p129
        $region58: #{tpu_custom_call.1} parent=39 // pred_check_branch
          %273 = sbr.rel (%p271) target = $region60
        $region59: #{tpu_custom_call.1} parent=39 // pred_region
          %274 = dma.done [#allocation9], 16
        $region60: #{tpu_custom_call.1} parent=39 // pred_fallthru
          _
        %s275 = sand.u32 %s32, 1
        %s276 = scalar_lea.sflag [#allocation3], %s275
        %s277 = sand.u32 %s32, 1
        %s278 = smul.addr %s277, 256
        %s279 = scalar_lea.vmem [#allocation2], %s278
        %p280 = pneg %p45
        %p281 = pneg %p42
        %p282 = pneg %p66
        %p283 = pneg %p63
        %p284 = pneg %p87
        %p285 = pneg %p84
        %p286 = pneg %p108
        %p287 = pneg %p105
        %p288 = pneg %p129
        %p289 = pneg %p126
        %p290 = pneg %p155
        %p291 = pneg %p152
        %s292 = sand.u32 %s142, 1
        %s293 = scalar_lea.sflag [#allocation4], %s292
        %s294 = sand.u32 %s142, 1
        %s295 = smul.addr %s294, 256
        %s296 = scalar_lea.vmem [#allocation11], %s295
        %v298 = vld [vmem:[%s254] sm:$0xff]
        %v299 = vld [vmem:[%s254 + $0x8] sm:$0xff]
        %v300 = vld [vmem:[%s254 + $0x10] sm:$0xff]
        %v301 = vld [vmem:[%s254 + $0x18] sm:$0xff]
        %v302 = vld [vmem:[%s254 + $0x20] sm:$0xff]
        %v303 = vld [vmem:[%s254 + $0x28] sm:$0xff]
        %v304 = vld [vmem:[%s254 + $0x30] sm:$0xff]
        %v305 = vld [vmem:[%s254 + $0x38] sm:$0xff]
        %v306 = vld [vmem:[%s254 + $0x40] sm:$0xff]
        %v307 = vld [vmem:[%s254 + $0x48] sm:$0xff]
        %v308 = vld [vmem:[%s254 + $0x50] sm:$0xff]
        %v309 = vld [vmem:[%s254 + $0x58] sm:$0xff]
        %v310 = vld [vmem:[%s254 + $0x60] sm:$0xff]
        %v311 = vld [vmem:[%s254 + $0x68] sm:$0xff]
        %v312 = vld [vmem:[%s254 + $0x70] sm:$0xff]
        %v313 = vld [vmem:[%s254 + $0x78] sm:$0xff]
        %v314 = vld [vmem:[%s254 + $0x80] sm:$0xff]
        %v315 = vld [vmem:[%s254 + $0x88] sm:$0xff]
        %v316 = vld [vmem:[%s254 + $0x90] sm:$0xff]
        %v317 = vld [vmem:[%s254 + $0x98] sm:$0xff]
        %v318 = vld [vmem:[%s254 + $0xa0] sm:$0xff]
        %v319 = vld [vmem:[%s254 + $0xa8] sm:$0xff]
        %v320 = vld [vmem:[%s254 + $0xb0] sm:$0xff]
        %v321 = vld [vmem:[%s254 + $0xb8] sm:$0xff]
        %v322 = vld [vmem:[%s254 + $0xc0] sm:$0xff]
        %v323 = vld [vmem:[%s254 + $0xc8] sm:$0xff]
        %v324 = vld [vmem:[%s254 + $0xd0] sm:$0xff]
        %v325 = vld [vmem:[%s254 + $0xd8] sm:$0xff]
        %v326 = vld [vmem:[%s254 + $0xe0] sm:$0xff]
        %v327 = vld [vmem:[%s254 + $0xe8] sm:$0xff]
        %v328 = vld [vmem:[%s254 + $0xf0] sm:$0xff]
        %v329 = vld [vmem:[%s254 + $0xf8] sm:$0xff]
        %v330 = vlaneseq
        %v331 = vshrl.u32 %v330, 7
        %v332 = vadd.s32 %v331, 8
        %v333 = vadd.s32 %v331, 16
        %v334 = vadd.s32 %v331, 24
        %v335 = vadd.s32 %v331, 32
        %v336 = vadd.s32 %v331, 40
        %v337 = vadd.s32 %v331, 48
        %v338 = vadd.s32 %v331, 56
        %v339 = vadd.s32 %v331, 64
        %v340 = vadd.s32 %v331, 72
        %v341 = vadd.s32 %v331, 80
        %v342 = vadd.s32 %v331, 88
        %v343 = vadd.s32 %v331, 96
        %v344 = vadd.s32 %v331, 104
        %v345 = vadd.s32 %v331, 112
        %v346 = vadd.s32 %v331, 120
        %v347 = vadd.s32 %v331, 128
        %v348 = vadd.s32 %v331, 136
        %v349 = vadd.s32 %v331, 144
        %v350 = vadd.s32 %v331, 152
        %v351 = vadd.s32 %v331, 160
        %v352 = vadd.s32 %v331, 168
        %v353 = vadd.s32 %v331, 176
        %v354 = vadd.s32 %v331, 184
        %v355 = vadd.s32 %v331, 192
        %v356 = vadd.s32 %v331, 200
        %v357 = vadd.s32 %v331, 208
        %v358 = vadd.s32 %v331, 216
        %v359 = vadd.s32 %v331, 224
        %v360 = vadd.s32 %v331, 232
        %v361 = vadd.s32 %v331, 240
        %v362 = vadd.s32 %v331, 248
        %vm363 = vcmp.lt.s32.totalorder %v331, 0
        %v364 = vsub.s32 0, %v331
        %v365 = vsel %vm363, %v364, %v331
        %v366 = vshrl.u32 %v365, 4
        %v367 = vand.u32 %v365, 15
        %v368 = vsub.s32 0, %v367
        %v369 = vsel %vm363, %v368, %v367
        %vm370 = vcmp.lt.s32.totalorder %v332, 0
        %v371 = vsub.s32 0, %v332
        %v372 = vsel %vm370, %v371, %v332
        %v373 = vshrl.u32 %v372, 4
        %v374 = vand.u32 %v372, 15
        %v375 = vsub.s32 0, %v374
        %v376 = vsel %vm370, %v375, %v374
        %vm377 = vcmp.lt.s32.totalorder %v333, 0
        %v378 = vsub.s32 0, %v333
        %v379 = vsel %vm377, %v378, %v333
        %v380 = vshrl.u32 %v379, 4
        %v381 = vand.u32 %v379, 15
        %v382 = vsub.s32 0, %v381
        %v383 = vsel %vm377, %v382, %v381
        %vm384 = vcmp.lt.s32.totalorder %v334, 0
        %v385 = vsub.s32 0, %v334
        %v386 = vsel %vm384, %v385, %v334
        %v387 = vshrl.u32 %v386, 4
        %v388 = vand.u32 %v386, 15
        %v389 = vsub.s32 0, %v388
        %v390 = vsel %vm384, %v389, %v388
        %vm391 = vcmp.lt.s32.totalorder %v335, 0
        %v392 = vsub.s32 0, %v335
        %v393 = vsel %vm391, %v392, %v335
        %v394 = vshrl.u32 %v393, 4
        %v395 = vand.u32 %v393, 15
        %v396 = vsub.s32 0, %v395
        %v397 = vsel %vm391, %v396, %v395
        %vm398 = vcmp.lt.s32.totalorder %v336, 0
        %v399 = vsub.s32 0, %v336
        %v400 = vsel %vm398, %v399, %v336
        %v401 = vshrl.u32 %v400, 4
        %v402 = vand.u32 %v400, 15
        %v403 = vsub.s32 0, %v402
        %v404 = vsel %vm398, %v403, %v402
        %vm405 = vcmp.lt.s32.totalorder %v337, 0
        %v406 = vsub.s32 0, %v337
        %v407 = vsel %vm405, %v406, %v337
        %v408 = vshrl.u32 %v407, 4
        %v409 = vand.u32 %v407, 15
        %v410 = vsub.s32 0, %v409
        %v411 = vsel %vm405, %v410, %v409
        %vm412 = vcmp.lt.s32.totalorder %v338, 0
        %v413 = vsub.s32 0, %v338
        %v414 = vsel %vm412, %v413, %v338
        %v415 = vshrl.u32 %v414, 4
        %v416 = vand.u32 %v414, 15
        %v417 = vsub.s32 0, %v416
        %v418 = vsel %vm412, %v417, %v416
        %vm419 = vcmp.lt.s32.totalorder %v339, 0
        %v420 = vsub.s32 0, %v339
        %v421 = vsel %vm419, %v420, %v339
        %v422 = vshrl.u32 %v421, 4
        %v423 = vand.u32 %v421, 15
        %v424 = vsub.s32 0, %v423
        %v425 = vsel %vm419, %v424, %v423
        %vm426 = vcmp.lt.s32.totalorder %v340, 0
        %v427 = vsub.s32 0, %v340
        %v428 = vsel %vm426, %v427, %v340
        %v429 = vshrl.u32 %v428, 4
        %v430 = vand.u32 %v428, 15
        %v431 = vsub.s32 0, %v430
        %v432 = vsel %vm426, %v431, %v430
        %vm433 = vcmp.lt.s32.totalorder %v341, 0
        %v434 = vsub.s32 0, %v341
        %v435 = vsel %vm433, %v434, %v341
        %v436 = vshrl.u32 %v435, 4
        %v437 = vand.u32 %v435, 15
        %v438 = vsub.s32 0, %v437
        %v439 = vsel %vm433, %v438, %v437
        %vm440 = vcmp.lt.s32.totalorder %v342, 0
        %v441 = vsub.s32 0, %v342
        %v442 = vsel %vm440, %v441, %v342
        %v443 = vshrl.u32 %v442, 4
        %v444 = vand.u32 %v442, 15
        %v445 = vsub.s32 0, %v444
        %v446 = vsel %vm440, %v445, %v444
        %vm447 = vcmp.lt.s32.totalorder %v343, 0
        %v448 = vsub.s32 0, %v343
        %v449 = vsel %vm447, %v448, %v343
        %v450 = vshrl.u32 %v449, 4
        %v451 = vand.u32 %v449, 15
        %v452 = vsub.s32 0, %v451
        %v453 = vsel %vm447, %v452, %v451
        %vm454 = vcmp.lt.s32.totalorder %v344, 0
        %v455 = vsub.s32 0, %v344
        %v456 = vsel %vm454, %v455, %v344
        %v457 = vshrl.u32 %v456, 4
        %v458 = vand.u32 %v456, 15
        %v459 = vsub.s32 0, %v458
        %v460 = vsel %vm454, %v459, %v458
        %vm461 = vcmp.lt.s32.totalorder %v345, 0
        %v462 = vsub.s32 0, %v345
        %v463 = vsel %vm461, %v462, %v345
        %v464 = vshrl.u32 %v463, 4
        %v465 = vand.u32 %v463, 15
        %v466 = vsub.s32 0, %v465
        %v467 = vsel %vm461, %v466, %v465
        %vm468 = vcmp.lt.s32.totalorder %v346, 0
        %v469 = vsub.s32 0, %v346
        %v470 = vsel %vm468, %v469, %v346
        %v471 = vshrl.u32 %v470, 4
        %v472 = vand.u32 %v470, 15
        %v473 = vsub.s32 0, %v472
        %v474 = vsel %vm468, %v473, %v472
        %vm475 = vcmp.lt.s32.totalorder %v347, 0
        %v476 = vsub.s32 0, %v347
        %v477 = vsel %vm475, %v476, %v347
        %v478 = vshrl.u32 %v477, 4
        %v479 = vand.u32 %v477, 15
        %v480 = vsub.s32 0, %v479
        %v481 = vsel %vm475, %v480, %v479
        %vm482 = vcmp.lt.s32.totalorder %v348, 0
        %v483 = vsub.s32 0, %v348
        %v484 = vsel %vm482, %v483, %v348
        %v485 = vshrl.u32 %v484, 4
        %v486 = vand.u32 %v484, 15
        %v487 = vsub.s32 0, %v486
        %v488 = vsel %vm482, %v487, %v486
        %vm489 = vcmp.lt.s32.totalorder %v349, 0
        %v490 = vsub.s32 0, %v349
        %v491 = vsel %vm489, %v490, %v349
        %v492 = vshrl.u32 %v491, 4
        %v493 = vand.u32 %v491, 15
        %v494 = vsub.s32 0, %v493
        %v495 = vsel %vm489, %v494, %v493
        %vm496 = vcmp.lt.s32.totalorder %v350, 0
        %v497 = vsub.s32 0, %v350
        %v498 = vsel %vm496, %v497, %v350
        %v499 = vshrl.u32 %v498, 4
        %v500 = vand.u32 %v498, 15
        %v501 = vsub.s32 0, %v500
        %v502 = vsel %vm496, %v501, %v500
        %vm503 = vcmp.lt.s32.totalorder %v351, 0
        %v504 = vsub.s32 0, %v351
        %v505 = vsel %vm503, %v504, %v351
        %v506 = vshrl.u32 %v505, 4
        %v507 = vand.u32 %v505, 15
        %v508 = vsub.s32 0, %v507
        %v509 = vsel %vm503, %v508, %v507
        %vm510 = vcmp.lt.s32.totalorder %v352, 0
        %v511 = vsub.s32 0, %v352
        %v512 = vsel %vm510, %v511, %v352
        %v513 = vshrl.u32 %v512, 4
        %v514 = vand.u32 %v512, 15
        %v515 = vsub.s32 0, %v514
        %v516 = vsel %vm510, %v515, %v514
        %vm517 = vcmp.lt.s32.totalorder %v353, 0
        %v518 = vsub.s32 0, %v353
        %v519 = vsel %vm517, %v518, %v353
        %v520 = vshrl.u32 %v519, 4
        %v521 = vand.u32 %v519, 15
        %v522 = vsub.s32 0, %v521
        %v523 = vsel %vm517, %v522, %v521
        %vm524 = vcmp.lt.s32.totalorder %v354, 0
        %v525 = vsub.s32 0, %v354
        %v526 = vsel %vm524, %v525, %v354
        %v527 = vshrl.u32 %v526, 4
        %v528 = vand.u32 %v526, 15
        %v529 = vsub.s32 0, %v528
        %v530 = vsel %vm524, %v529, %v528
        %vm531 = vcmp.lt.s32.totalorder %v355, 0
        %v532 = vsub.s32 0, %v355
        %v533 = vsel %vm531, %v532, %v355
        %v534 = vshrl.u32 %v533, 4
        %v535 = vand.u32 %v533, 15
        %v536 = vsub.s32 0, %v535
        %v537 = vsel %vm531, %v536, %v535
        %vm538 = vcmp.lt.s32.totalorder %v356, 0
        %v539 = vsub.s32 0, %v356
        %v540 = vsel %vm538, %v539, %v356
        %v541 = vshrl.u32 %v540, 4
        %v542 = vand.u32 %v540, 15
        %v543 = vsub.s32 0, %v542
        %v544 = vsel %vm538, %v543, %v542
        %vm545 = vcmp.lt.s32.totalorder %v357, 0
        %v546 = vsub.s32 0, %v357
        %v547 = vsel %vm545, %v546, %v357
        %v548 = vshrl.u32 %v547, 4
        %v549 = vand.u32 %v547, 15
        %v550 = vsub.s32 0, %v549
        %v551 = vsel %vm545, %v550, %v549
        %vm552 = vcmp.lt.s32.totalorder %v358, 0
        %v553 = vsub.s32 0, %v358
        %v554 = vsel %vm552, %v553, %v358
        %v555 = vshrl.u32 %v554, 4
        %v556 = vand.u32 %v554, 15
        %v557 = vsub.s32 0, %v556
        %v558 = vsel %vm552, %v557, %v556
        %vm559 = vcmp.lt.s32.totalorder %v359, 0
        %v560 = vsub.s32 0, %v359
        %v561 = vsel %vm559, %v560, %v359
        %v562 = vshrl.u32 %v561, 4
        %v563 = vand.u32 %v561, 15
        %v564 = vsub.s32 0, %v563
        %v565 = vsel %vm559, %v564, %v563
        %vm566 = vcmp.lt.s32.totalorder %v360, 0
        %v567 = vsub.s32 0, %v360
        %v568 = vsel %vm566, %v567, %v360
        %v569 = vshrl.u32 %v568, 4
        %v570 = vand.u32 %v568, 15
        %v571 = vsub.s32 0, %v570
        %v572 = vsel %vm566, %v571, %v570
        %vm573 = vcmp.lt.s32.totalorder %v361, 0
        %v574 = vsub.s32 0, %v361
        %v575 = vsel %vm573, %v574, %v361
        %v576 = vshrl.u32 %v575, 4
        %v577 = vand.u32 %v575, 15
        %v578 = vsub.s32 0, %v577
        %v579 = vsel %vm573, %v578, %v577
        %vm580 = vcmp.lt.s32.totalorder %v362, 0
        %v581 = vsub.s32 0, %v362
        %v582 = vsel %vm580, %v581, %v362
        %v583 = vshrl.u32 %v582, 4
        %v584 = vand.u32 %v582, 15
        %v585 = vsub.s32 0, %v584
        %v586 = vsel %vm580, %v585, %v584
        %vm587 = vcmp.ne.s32.totalorder %v369, 0
        %vm588 = vcmp.ne.s32.totalorder %v376, 0
        %vm589 = vcmp.ne.s32.totalorder %v383, 0
        %vm590 = vcmp.ne.s32.totalorder %v390, 0
        %vm591 = vcmp.ne.s32.totalorder %v397, 0
        %vm592 = vcmp.ne.s32.totalorder %v404, 0
        %vm593 = vcmp.ne.s32.totalorder %v411, 0
        %vm594 = vcmp.ne.s32.totalorder %v418, 0
        %vm595 = vcmp.ne.s32.totalorder %v425, 0
        %vm596 = vcmp.ne.s32.totalorder %v432, 0
        %vm597 = vcmp.ne.s32.totalorder %v439, 0
        %vm598 = vcmp.ne.s32.totalorder %v446, 0
        %vm599 = vcmp.ne.s32.totalorder %v453, 0
        %vm600 = vcmp.ne.s32.totalorder %v460, 0
        %vm601 = vcmp.ne.s32.totalorder %v467, 0
        %vm602 = vcmp.ne.s32.totalorder %v474, 0
        %vm603 = vcmp.ne.s32.totalorder %v481, 0
        %vm604 = vcmp.ne.s32.totalorder %v488, 0
        %vm605 = vcmp.ne.s32.totalorder %v495, 0
        %vm606 = vcmp.ne.s32.totalorder %v502, 0
        %vm607 = vcmp.ne.s32.totalorder %v509, 0
        %vm608 = vcmp.ne.s32.totalorder %v516, 0
        %vm609 = vcmp.ne.s32.totalorder %v523, 0
        %vm610 = vcmp.ne.s32.totalorder %v530, 0
        %vm611 = vcmp.ne.s32.totalorder %v537, 0
        %vm612 = vcmp.ne.s32.totalorder %v544, 0
        %vm613 = vcmp.ne.s32.totalorder %v551, 0
        %vm614 = vcmp.ne.s32.totalorder %v558, 0
        %vm615 = vcmp.ne.s32.totalorder %v565, 0
        %vm616 = vcmp.ne.s32.totalorder %v572, 0
        %vm617 = vcmp.ne.s32.totalorder %v579, 0
        %vm618 = vcmp.ne.s32.totalorder %v586, 0
        %vm619 = vcmp.lt.s32.totalorder %v369, 0
        %vm620 = vcmp.lt.s32.totalorder %v376, 0
        %vm621 = vcmp.lt.s32.totalorder %v383, 0
        %vm622 = vcmp.lt.s32.totalorder %v390, 0
        %vm623 = vcmp.lt.s32.totalorder %v397, 0
        %vm624 = vcmp.lt.s32.totalorder %v404, 0
        %vm625 = vcmp.lt.s32.totalorder %v411, 0
        %vm626 = vcmp.lt.s32.totalorder %v418, 0
        %vm627 = vcmp.lt.s32.totalorder %v425, 0
        %vm628 = vcmp.lt.s32.totalorder %v432, 0
        %vm629 = vcmp.lt.s32.totalorder %v439, 0
        %vm630 = vcmp.lt.s32.totalorder %v446, 0
        %vm631 = vcmp.lt.s32.totalorder %v453, 0
        %vm632 = vcmp.lt.s32.totalorder %v460, 0
        %vm633 = vcmp.lt.s32.totalorder %v467, 0
        %vm634 = vcmp.lt.s32.totalorder %v474, 0
        %vm635 = vcmp.lt.s32.totalorder %v481, 0
        %vm636 = vcmp.lt.s32.totalorder %v488, 0
        %vm637 = vcmp.lt.s32.totalorder %v495, 0
        %vm638 = vcmp.lt.s32.totalorder %v502, 0
        %vm639 = vcmp.lt.s32.totalorder %v509, 0
        %vm640 = vcmp.lt.s32.totalorder %v516, 0
        %vm641 = vcmp.lt.s32.totalorder %v523, 0
        %vm642 = vcmp.lt.s32.totalorder %v530, 0
        %vm643 = vcmp.lt.s32.totalorder %v537, 0
        %vm644 = vcmp.lt.s32.totalorder %v544, 0
        %vm645 = vcmp.lt.s32.totalorder %v551, 0
        %vm646 = vcmp.lt.s32.totalorder %v558, 0
        %vm647 = vcmp.lt.s32.totalorder %v565, 0
        %vm648 = vcmp.lt.s32.totalorder %v572, 0
        %vm649 = vcmp.lt.s32.totalorder %v579, 0
        %vm650 = vcmp.lt.s32.totalorder %v586, 0
        %vm651 = vmand %vm619, %vm587
        %vm652 = vmand %vm620, %vm588
        %vm653 = vmand %vm621, %vm589
        %vm654 = vmand %vm622, %vm590
        %vm655 = vmand %vm623, %vm591
        %vm656 = vmand %vm624, %vm592
        %vm657 = vmand %vm625, %vm593
        %vm658 = vmand %vm626, %vm594
        %vm659 = vmand %vm627, %vm595
        %vm660 = vmand %vm628, %vm596
        %vm661 = vmand %vm629, %vm597
        %vm662 = vmand %vm630, %vm598
        %vm663 = vmand %vm631, %vm599
        %vm664 = vmand %vm632, %vm600
        %vm665 = vmand %vm633, %vm601
        %vm666 = vmand %vm634, %vm602
        %vm667 = vmand %vm635, %vm603
        %vm668 = vmand %vm636, %vm604
        %vm669 = vmand %vm637, %vm605
        %vm670 = vmand %vm638, %vm606
        %vm671 = vmand %vm639, %vm607
        %vm672 = vmand %vm640, %vm608
        %vm673 = vmand %vm641, %vm609
        %vm674 = vmand %vm642, %vm610
        %vm675 = vmand %vm643, %vm611
        %vm676 = vmand %vm644, %vm612
        %vm677 = vmand %vm645, %vm613
        %vm678 = vmand %vm646, %vm614
        %vm679 = vmand %vm647, %vm615
        %vm680 = vmand %vm648, %vm616
        %vm681 = vmand %vm649, %vm617
        %vm682 = vmand %vm650, %vm618
        %v683 = vadd.s32 %v369, 16
        %v684 = vadd.s32 %v376, 16
        %v685 = vadd.s32 %v383, 16
        %v686 = vadd.s32 %v390, 16
        %v687 = vadd.s32 %v397, 16
        %v688 = vadd.s32 %v404, 16
        %v689 = vadd.s32 %v411, 16
        %v690 = vadd.s32 %v418, 16
        %v691 = vadd.s32 %v425, 16
        %v692 = vadd.s32 %v432, 16
        %v693 = vadd.s32 %v439, 16
        %v694 = vadd.s32 %v446, 16
        %v695 = vadd.s32 %v453, 16
        %v696 = vadd.s32 %v460, 16
        %v697 = vadd.s32 %v467, 16
        %v698 = vadd.s32 %v474, 16
        %v699 = vadd.s32 %v481, 16
        %v700 = vadd.s32 %v488, 16
        %v701 = vadd.s32 %v495, 16
        %v702 = vadd.s32 %v502, 16
        %v703 = vadd.s32 %v509, 16
        %v704 = vadd.s32 %v516, 16
        %v705 = vadd.s32 %v523, 16
        %v706 = vadd.s32 %v530, 16
        %v707 = vadd.s32 %v537, 16
        %v708 = vadd.s32 %v544, 16
        %v709 = vadd.s32 %v551, 16
        %v710 = vadd.s32 %v558, 16
        %v711 = vadd.s32 %v565, 16
        %v712 = vadd.s32 %v572, 16
        %v713 = vadd.s32 %v579, 16
        %v714 = vadd.s32 %v586, 16
        %v715 = vsel %vm651, %v683, %v369
        %v716 = vsel %vm652, %v684, %v376
        %v717 = vsel %vm653, %v685, %v383
        %v718 = vsel %vm654, %v686, %v390
        %v719 = vsel %vm655, %v687, %v397
        %v720 = vsel %vm656, %v688, %v404
        %v721 = vsel %vm657, %v689, %v411
        %v722 = vsel %vm658, %v690, %v418
        %v723 = vsel %vm659, %v691, %v425
        %v724 = vsel %vm660, %v692, %v432
        %v725 = vsel %vm661, %v693, %v439
        %v726 = vsel %vm662, %v694, %v446
        %v727 = vsel %vm663, %v695, %v453
        %v728 = vsel %vm664, %v696, %v460
        %v729 = vsel %vm665, %v697, %v467
        %v730 = vsel %vm666, %v698, %v474
        %v731 = vsel %vm667, %v699, %v481
        %v732 = vsel %vm668, %v700, %v488
        %v733 = vsel %vm669, %v701, %v495
        %v734 = vsel %vm670, %v702, %v502
        %v735 = vsel %vm671, %v703, %v509
        %v736 = vsel %vm672, %v704, %v516
        %v737 = vsel %vm673, %v705, %v523
        %v738 = vsel %vm674, %v706, %v530
        %v739 = vsel %vm675, %v707, %v537
        %v740 = vsel %vm676, %v708, %v544
        %v741 = vsel %vm677, %v709, %v551
        %v742 = vsel %vm678, %v710, %v558
        %v743 = vsel %vm679, %v711, %v565
        %v744 = vsel %vm680, %v712, %v572
        %v745 = vsel %vm681, %v713, %v579
        %v746 = vsel %vm682, %v714, %v586
        %vm747 = vcmp.eq.s32.totalorder %v715, 0
        %vm748 = vcmp.eq.s32.totalorder %v716, 0
        %vm749 = vcmp.eq.s32.totalorder %v717, 0
        %vm750 = vcmp.eq.s32.totalorder %v718, 0
        %vm751 = vcmp.eq.s32.totalorder %v719, 0
        %vm752 = vcmp.eq.s32.totalorder %v720, 0
        %vm753 = vcmp.eq.s32.totalorder %v721, 0
        %vm754 = vcmp.eq.s32.totalorder %v722, 0
        %vm755 = vcmp.eq.s32.totalorder %v723, 0
        %vm756 = vcmp.eq.s32.totalorder %v724, 0
        %vm757 = vcmp.eq.s32.totalorder %v725, 0
        %vm758 = vcmp.eq.s32.totalorder %v726, 0
        %vm759 = vcmp.eq.s32.totalorder %v727, 0
        %vm760 = vcmp.eq.s32.totalorder %v728, 0
        %vm761 = vcmp.eq.s32.totalorder %v729, 0
        %vm762 = vcmp.eq.s32.totalorder %v730, 0
        %vm763 = vcmp.eq.s32.totalorder %v731, 0
        %vm764 = vcmp.eq.s32.totalorder %v732, 0
        %vm765 = vcmp.eq.s32.totalorder %v733, 0
        %vm766 = vcmp.eq.s32.totalorder %v734, 0
        %vm767 = vcmp.eq.s32.totalorder %v735, 0
        %vm768 = vcmp.eq.s32.totalorder %v736, 0
        %vm769 = vcmp.eq.s32.totalorder %v737, 0
        %vm770 = vcmp.eq.s32.totalorder %v738, 0
        %vm771 = vcmp.eq.s32.totalorder %v739, 0
        %vm772 = vcmp.eq.s32.totalorder %v740, 0
        %vm773 = vcmp.eq.s32.totalorder %v741, 0
        %vm774 = vcmp.eq.s32.totalorder %v742, 0
        %vm775 = vcmp.eq.s32.totalorder %v743, 0
        %vm776 = vcmp.eq.s32.totalorder %v744, 0
        %vm777 = vcmp.eq.s32.totalorder %v745, 0
        %vm778 = vcmp.eq.s32.totalorder %v746, 0
        %vm779 = vcmp.eq.s32.totalorder %v715, 15
        %vm780 = vcmp.eq.s32.totalorder %v716, 15
        %vm781 = vcmp.eq.s32.totalorder %v717, 15
        %vm782 = vcmp.eq.s32.totalorder %v718, 15
        %vm783 = vcmp.eq.s32.totalorder %v719, 15
        %vm784 = vcmp.eq.s32.totalorder %v720, 15
        %vm785 = vcmp.eq.s32.totalorder %v721, 15
        %vm786 = vcmp.eq.s32.totalorder %v722, 15
        %vm787 = vcmp.eq.s32.totalorder %v723, 15
        %vm788 = vcmp.eq.s32.totalorder %v724, 15
        %vm789 = vcmp.eq.s32.totalorder %v725, 15
        %vm790 = vcmp.eq.s32.totalorder %v726, 15
        %vm791 = vcmp.eq.s32.totalorder %v727, 15
        %vm792 = vcmp.eq.s32.totalorder %v728, 15
        %vm793 = vcmp.eq.s32.totalorder %v729, 15
        %vm794 = vcmp.eq.s32.totalorder %v730, 15
        %vm795 = vcmp.eq.s32.totalorder %v731, 15
        %vm796 = vcmp.eq.s32.totalorder %v732, 15
        %vm797 = vcmp.eq.s32.totalorder %v733, 15
        %vm798 = vcmp.eq.s32.totalorder %v734, 15
        %vm799 = vcmp.eq.s32.totalorder %v735, 15
        %vm800 = vcmp.eq.s32.totalorder %v736, 15
        %vm801 = vcmp.eq.s32.totalorder %v737, 15
        %vm802 = vcmp.eq.s32.totalorder %v738, 15
        %vm803 = vcmp.eq.s32.totalorder %v739, 15
        %vm804 = vcmp.eq.s32.totalorder %v740, 15
        %vm805 = vcmp.eq.s32.totalorder %v741, 15
        %vm806 = vcmp.eq.s32.totalorder %v742, 15
        %vm807 = vcmp.eq.s32.totalorder %v743, 15
        %vm808 = vcmp.eq.s32.totalorder %v744, 15
        %vm809 = vcmp.eq.s32.totalorder %v745, 15
        %vm810 = vcmp.eq.s32.totalorder %v746, 15
        %v811 = vrot.slane %v298, 7
        %v812 = vrot.slane %v299, 7
        %v813 = vrot.slane %v300, 7
        %v814 = vrot.slane %v301, 7
        %v815 = vrot.slane %v302, 7
        %v816 = vrot.slane %v303, 7
        %v817 = vrot.slane %v304, 7
        %v818 = vrot.slane %v305, 7
        %v819 = vrot.slane %v306, 7
        %v820 = vrot.slane %v307, 7
        %v821 = vrot.slane %v308, 7
        %v822 = vrot.slane %v309, 7
        %v823 = vrot.slane %v310, 7
        %v824 = vrot.slane %v311, 7
        %v825 = vrot.slane %v312, 7
        %v826 = vrot.slane %v313, 7
        %v827 = vrot.slane %v314, 7
        %v828 = vrot.slane %v315, 7
        %v829 = vrot.slane %v316, 7
        %v830 = vrot.slane %v317, 7
        %v831 = vrot.slane %v318, 7
        %v832 = vrot.slane %v319, 7
        %v833 = vrot.slane %v320, 7
        %v834 = vrot.slane %v321, 7
        %v835 = vrot.slane %v322, 7
        %v836 = vrot.slane %v323, 7
        %v837 = vrot.slane %v324, 7
        %v838 = vrot.slane %v325, 7
        %v839 = vrot.slane %v326, 7
        %v840 = vrot.slane %v327, 7
        %v841 = vrot.slane %v328, 7
        %v842 = vrot.slane %v329, 7
        %vm843 = vcmp.lt.s32.totalorder %v331, 1
        %v844 = vsel %vm843, %v841, %v842
        %v845 = vsel %vm843, %v840, %v841
        %v846 = vsel %vm843, %v839, %v840
        %v847 = vsel %vm843, %v838, %v839
        %v848 = vsel %vm843, %v837, %v838
        %v849 = vsel %vm843, %v836, %v837
        %v850 = vsel %vm843, %v835, %v836
        %v851 = vsel %vm843, %v834, %v835
        %v852 = vsel %vm843, %v833, %v834
        %v853 = vsel %vm843, %v832, %v833
        %v854 = vsel %vm843, %v831, %v832
        %v855 = vsel %vm843, %v830, %v831
        %v856 = vsel %vm843, %v829, %v830
        %v857 = vsel %vm843, %v828, %v829
        %v858 = vsel %vm843, %v827, %v828
        %v859 = vsel %vm843, %v826, %v827
        %v860 = vsel %vm843, %v825, %v826
        %v861 = vsel %vm843, %v824, %v825
        %v862 = vsel %vm843, %v823, %v824
        %v863 = vsel %vm843, %v822, %v823
        %v864 = vsel %vm843, %v821, %v822
        %v865 = vsel %vm843, %v820, %v821
        %v866 = vsel %vm843, %v819, %v820
        %v867 = vsel %vm843, %v818, %v819
        %v868 = vsel %vm843, %v817, %v818
        %v869 = vsel %vm843, %v816, %v817
        %v870 = vsel %vm843, %v815, %v816
        %v871 = vsel %vm843, %v814, %v815
        %v872 = vsel %vm843, %v813, %v814
        %v873 = vsel %vm843, %v812, %v813
        %v874 = vsel %vm843, %v811, %v812
        %v875 = vsel %vm843, %v842, %v811
        %v876 = vrot.slane %v298, 1
        %v877 = vrot.slane %v299, 1
        %v878 = vrot.slane %v300, 1
        %v879 = vrot.slane %v301, 1
        %v880 = vrot.slane %v302, 1
        %v881 = vrot.slane %v303, 1
        %v882 = vrot.slane %v304, 1
        %v883 = vrot.slane %v305, 1
        %v884 = vrot.slane %v306, 1
        %v885 = vrot.slane %v307, 1
        %v886 = vrot.slane %v308, 1
        %v887 = vrot.slane %v309, 1
        %v888 = vrot.slane %v310, 1
        %v889 = vrot.slane %v311, 1
        %v890 = vrot.slane %v312, 1
        %v891 = vrot.slane %v313, 1
        %v892 = vrot.slane %v314, 1
        %v893 = vrot.slane %v315, 1
        %v894 = vrot.slane %v316, 1
        %v895 = vrot.slane %v317, 1
        %v896 = vrot.slane %v318, 1
        %v897 = vrot.slane %v319, 1
        %v898 = vrot.slane %v320, 1
        %v899 = vrot.slane %v321, 1
        %v900 = vrot.slane %v322, 1
        %v901 = vrot.slane %v323, 1
        %v902 = vrot.slane %v324, 1
        %v903 = vrot.slane %v325, 1
        %v904 = vrot.slane %v326, 1
        %v905 = vrot.slane %v327, 1
        %v906 = vrot.slane %v328, 1
        %v907 = vrot.slane %v329, 1
        %vm908 = vcmp.lt.s32.totalorder %v331, 7
        %v909 = vsel %vm908, %v906, %v907
        %v910 = vsel %vm908, %v905, %v906
        %v911 = vsel %vm908, %v904, %v905
        %v912 = vsel %vm908, %v903, %v904
        %v913 = vsel %vm908, %v902, %v903
        %v914 = vsel %vm908, %v901, %v902
        %v915 = vsel %vm908, %v900, %v901
        %v916 = vsel %vm908, %v899, %v900
        %v917 = vsel %vm908, %v898, %v899
        %v918 = vsel %vm908, %v897, %v898
        %v919 = vsel %vm908, %v896, %v897
        %v920 = vsel %vm908, %v895, %v896
        %v921 = vsel %vm908, %v894, %v895
        %v922 = vsel %vm908, %v893, %v894
        %v923 = vsel %vm908, %v892, %v893
        %v924 = vsel %vm908, %v891, %v892
        %v925 = vsel %vm908, %v890, %v891
        %v926 = vsel %vm908, %v889, %v890
        %v927 = vsel %vm908, %v888, %v889
        %v928 = vsel %vm908, %v887, %v888
        %v929 = vsel %vm908, %v886, %v887
        %v930 = vsel %vm908, %v885, %v886
        %v931 = vsel %vm908, %v884, %v885
        %v932 = vsel %vm908, %v883, %v884
        %v933 = vsel %vm908, %v882, %v883
        %v934 = vsel %vm908, %v881, %v882
        %v935 = vsel %vm908, %v880, %v881
        %v936 = vsel %vm908, %v879, %v880
        %v937 = vsel %vm908, %v878, %v879
        %v938 = vsel %vm908, %v877, %v878
        %v939 = vsel %vm908, %v876, %v877
        %v940 = vsel %vm908, %v907, %v876
        %v941 = vsel %vm747, 1, 0
        %v942 = vsel %vm748, 1, 0
        %v943 = vsel %vm749, 1, 0
        %v944 = vsel %vm750, 1, 0
        %v945 = vsel %vm751, 1, 0
        %v946 = vsel %vm752, 1, 0
        %v947 = vsel %vm753, 1, 0
        %v948 = vsel %vm754, 1, 0
        %v949 = vsel %vm755, 1, 0
        %v950 = vsel %vm756, 1, 0
        %v951 = vsel %vm757, 1, 0
        %v952 = vsel %vm758, 1, 0
        %v953 = vsel %vm759, 1, 0
        %v954 = vsel %vm760, 1, 0
        %v955 = vsel %vm761, 1, 0
        %v956 = vsel %vm762, 1, 0
        %v957 = vsel %vm763, 1, 0
        %v958 = vsel %vm764, 1, 0
        %v959 = vsel %vm765, 1, 0
        %v960 = vsel %vm766, 1, 0
        %v961 = vsel %vm767, 1, 0
        %v962 = vsel %vm768, 1, 0
        %v963 = vsel %vm769, 1, 0
        %v964 = vsel %vm770, 1, 0
        %v965 = vsel %vm771, 1, 0
        %v966 = vsel %vm772, 1, 0
        %v967 = vsel %vm773, 1, 0
        %v968 = vsel %vm774, 1, 0
        %v969 = vsel %vm775, 1, 0
        %v970 = vsel %vm776, 1, 0
        %v971 = vsel %vm777, 1, 0
        %v972 = vsel %vm778, 1, 0
        %vm973 = vcmp.eq.s32.totalorder %v941, 1
        %vm974 = vcmp.eq.s32.totalorder %v942, 1
        %vm975 = vcmp.eq.s32.totalorder %v943, 1
        %vm976 = vcmp.eq.s32.totalorder %v944, 1
        %vm977 = vcmp.eq.s32.totalorder %v945, 1
        %vm978 = vcmp.eq.s32.totalorder %v946, 1
        %vm979 = vcmp.eq.s32.totalorder %v947, 1
        %vm980 = vcmp.eq.s32.totalorder %v948, 1
        %vm981 = vcmp.eq.s32.totalorder %v949, 1
        %vm982 = vcmp.eq.s32.totalorder %v950, 1
        %vm983 = vcmp.eq.s32.totalorder %v951, 1
        %vm984 = vcmp.eq.s32.totalorder %v952, 1
        %vm985 = vcmp.eq.s32.totalorder %v953, 1
        %vm986 = vcmp.eq.s32.totalorder %v954, 1
        %vm987 = vcmp.eq.s32.totalorder %v955, 1
        %vm988 = vcmp.eq.s32.totalorder %v956, 1
        %vm989 = vcmp.eq.s32.totalorder %v957, 1
        %vm990 = vcmp.eq.s32.totalorder %v958, 1
        %vm991 = vcmp.eq.s32.totalorder %v959, 1
        %vm992 = vcmp.eq.s32.totalorder %v960, 1
        %vm993 = vcmp.eq.s32.totalorder %v961, 1
        %vm994 = vcmp.eq.s32.totalorder %v962, 1
        %vm995 = vcmp.eq.s32.totalorder %v963, 1
        %vm996 = vcmp.eq.s32.totalorder %v964, 1
        %vm997 = vcmp.eq.s32.totalorder %v965, 1
        %vm998 = vcmp.eq.s32.totalorder %v966, 1
        %vm999 = vcmp.eq.s32.totalorder %v967, 1
        %vm1000 = vcmp.eq.s32.totalorder %v968, 1
        %vm1001 = vcmp.eq.s32.totalorder %v969, 1
        %vm1002 = vcmp.eq.s32.totalorder %v970, 1
        %vm1003 = vcmp.eq.s32.totalorder %v971, 1
        %vm1004 = vcmp.eq.s32.totalorder %v972, 1
        %v1005 = vsel %vm973, %v939, %v875
        %v1006 = vsel %vm974, %v938, %v874
        %v1007 = vsel %vm975, %v937, %v873
        %v1008 = vsel %vm976, %v936, %v872
        %v1009 = vsel %vm977, %v935, %v871
        %v1010 = vsel %vm978, %v934, %v870
        %v1011 = vsel %vm979, %v933, %v869
        %v1012 = vsel %vm980, %v932, %v868
        %v1013 = vsel %vm981, %v931, %v867
        %v1014 = vsel %vm982, %v930, %v866
        %v1015 = vsel %vm983, %v929, %v865
        %v1016 = vsel %vm984, %v928, %v864
        %v1017 = vsel %vm985, %v927, %v863
        %v1018 = vsel %vm986, %v926, %v862
        %v1019 = vsel %vm987, %v925, %v861
        %v1020 = vsel %vm988, %v924, %v860
        %v1021 = vsel %vm989, %v923, %v859
        %v1022 = vsel %vm990, %v922, %v858
        %v1023 = vsel %vm991, %v921, %v857
        %v1024 = vsel %vm992, %v920, %v856
        %v1025 = vsel %vm993, %v919, %v855
        %v1026 = vsel %vm994, %v918, %v854
        %v1027 = vsel %vm995, %v917, %v853
        %v1028 = vsel %vm996, %v916, %v852
        %v1029 = vsel %vm997, %v915, %v851
        %v1030 = vsel %vm998, %v914, %v850
        %v1031 = vsel %vm999, %v913, %v849
        %v1032 = vsel %vm1000, %v912, %v848
        %v1033 = vsel %vm1001, %v911, %v847
        %v1034 = vsel %vm1002, %v910, %v846
        %v1035 = vsel %vm1003, %v909, %v845
        %v1036 = vsel %vm1004, %v940, %v844
        %v1037 = vpack.c.bf16 %v1006, %v1005
        %v1038 = vpack.c.bf16 %v1008, %v1007
        %v1039 = vpack.c.bf16 %v1010, %v1009
        %v1040 = vpack.c.bf16 %v1012, %v1011
        %v1041 = vpack.c.bf16 %v1014, %v1013
        %v1042 = vpack.c.bf16 %v1016, %v1015
        %v1043 = vpack.c.bf16 %v1018, %v1017
        %v1044 = vpack.c.bf16 %v1020, %v1019
        %v1045 = vpack.c.bf16 %v1022, %v1021
        %v1046 = vpack.c.bf16 %v1024, %v1023
        %v1047 = vpack.c.bf16 %v1026, %v1025
        %v1048 = vpack.c.bf16 %v1028, %v1027
        %v1049 = vpack.c.bf16 %v1030, %v1029
        %v1050 = vpack.c.bf16 %v1032, %v1031
        %v1051 = vpack.c.bf16 %v1034, %v1033
        %v1052 = vpack.c.bf16 %v1036, %v1035
        %v1053 = vpack.c.bf16 %v299, %v298
        %v1054 = vpack.c.bf16 %v301, %v300
        %v1055 = vpack.c.bf16 %v303, %v302
        %v1056 = vpack.c.bf16 %v305, %v304
        %v1057 = vpack.c.bf16 %v307, %v306
        %v1058 = vpack.c.bf16 %v309, %v308
        %v1059 = vpack.c.bf16 %v311, %v310
        %v1060 = vpack.c.bf16 %v313, %v312
        %v1061 = vpack.c.bf16 %v315, %v314
        %v1062 = vpack.c.bf16 %v317, %v316
        %v1063 = vpack.c.bf16 %v319, %v318
        %v1064 = vpack.c.bf16 %v321, %v320
        %v1065 = vpack.c.bf16 %v323, %v322
        %v1066 = vpack.c.bf16 %v325, %v324
        %v1067 = vpack.c.bf16 %v327, %v326
        %v1068 = vpack.c.bf16 %v329, %v328
        %v1069 = vsel %vm779, 1, 0
        %v1070 = vsel %vm780, 1, 0
        %v1071 = vsel %vm781, 1, 0
        %v1072 = vsel %vm782, 1, 0
        %v1073 = vsel %vm783, 1, 0
        %v1074 = vsel %vm784, 1, 0
        %v1075 = vsel %vm785, 1, 0
        %v1076 = vsel %vm786, 1, 0
        %v1077 = vsel %vm787, 1, 0
        %v1078 = vsel %vm788, 1, 0
        %v1079 = vsel %vm789, 1, 0
        %v1080 = vsel %vm790, 1, 0
        %v1081 = vsel %vm791, 1, 0
        %v1082 = vsel %vm792, 1, 0
        %v1083 = vsel %vm793, 1, 0
        %v1084 = vsel %vm794, 1, 0
        %v1085 = vsel %vm795, 1, 0
        %v1086 = vsel %vm796, 1, 0
        %v1087 = vsel %vm797, 1, 0
        %v1088 = vsel %vm798, 1, 0
        %v1089 = vsel %vm799, 1, 0
        %v1090 = vsel %vm800, 1, 0
        %v1091 = vsel %vm801, 1, 0
        %v1092 = vsel %vm802, 1, 0
        %v1093 = vsel %vm803, 1, 0
        %v1094 = vsel %vm804, 1, 0
        %v1095 = vsel %vm805, 1, 0
        %v1096 = vsel %vm806, 1, 0
        %v1097 = vsel %vm807, 1, 0
        %v1098 = vsel %vm808, 1, 0
        %v1099 = vsel %vm809, 1, 0
        %v1100 = vsel %vm810, 1, 0
        %vm1101 = vcmp.eq.s32.totalorder %v1069, 1
        %vm1102 = vcmp.eq.s32.totalorder %v1070, 1
        %vm1103 = vcmp.eq.s32.totalorder %v1071, 1
        %vm1104 = vcmp.eq.s32.totalorder %v1072, 1
        %vm1105 = vcmp.eq.s32.totalorder %v1073, 1
        %vm1106 = vcmp.eq.s32.totalorder %v1074, 1
        %vm1107 = vcmp.eq.s32.totalorder %v1075, 1
        %vm1108 = vcmp.eq.s32.totalorder %v1076, 1
        %vm1109 = vcmp.eq.s32.totalorder %v1077, 1
        %vm1110 = vcmp.eq.s32.totalorder %v1078, 1
        %vm1111 = vcmp.eq.s32.totalorder %v1079, 1
        %vm1112 = vcmp.eq.s32.totalorder %v1080, 1
        %vm1113 = vcmp.eq.s32.totalorder %v1081, 1
        %vm1114 = vcmp.eq.s32.totalorder %v1082, 1
        %vm1115 = vcmp.eq.s32.totalorder %v1083, 1
        %vm1116 = vcmp.eq.s32.totalorder %v1084, 1
        %vm1117 = vcmp.eq.s32.totalorder %v1085, 1
        %vm1118 = vcmp.eq.s32.totalorder %v1086, 1
        %vm1119 = vcmp.eq.s32.totalorder %v1087, 1
        %vm1120 = vcmp.eq.s32.totalorder %v1088, 1
        %vm1121 = vcmp.eq.s32.totalorder %v1089, 1
        %vm1122 = vcmp.eq.s32.totalorder %v1090, 1
        %vm1123 = vcmp.eq.s32.totalorder %v1091, 1
        %vm1124 = vcmp.eq.s32.totalorder %v1092, 1
        %vm1125 = vcmp.eq.s32.totalorder %v1093, 1
        %vm1126 = vcmp.eq.s32.totalorder %v1094, 1
        %vm1127 = vcmp.eq.s32.totalorder %v1095, 1
        %vm1128 = vcmp.eq.s32.totalorder %v1096, 1
        %vm1129 = vcmp.eq.s32.totalorder %v1097, 1
        %vm1130 = vcmp.eq.s32.totalorder %v1098, 1
        %vm1131 = vcmp.eq.s32.totalorder %v1099, 1
        %vm1132 = vcmp.eq.s32.totalorder %v1100, 1
        %v1133 = vsel %vm1101, %v875, %v939
        %v1134 = vsel %vm1102, %v874, %v938
        %v1135 = vsel %vm1103, %v873, %v937
        %v1136 = vsel %vm1104, %v872, %v936
        %v1137 = vsel %vm1105, %v871, %v935
        %v1138 = vsel %vm1106, %v870, %v934
        %v1139 = vsel %vm1107, %v869, %v933
        %v1140 = vsel %vm1108, %v868, %v932
        %v1141 = vsel %vm1109, %v867, %v931
        %v1142 = vsel %vm1110, %v866, %v930
        %v1143 = vsel %vm1111, %v865, %v929
        %v1144 = vsel %vm1112, %v864, %v928
        %v1145 = vsel %vm1113, %v863, %v927
        %v1146 = vsel %vm1114, %v862, %v926
        %v1147 = vsel %vm1115, %v861, %v925
        %v1148 = vsel %vm1116, %v860, %v924
        %v1149 = vsel %vm1117, %v859, %v923
        %v1150 = vsel %vm1118, %v858, %v922
        %v1151 = vsel %vm1119, %v857, %v921
        %v1152 = vsel %vm1120, %v856, %v920
        %v1153 = vsel %vm1121, %v855, %v919
        %v1154 = vsel %vm1122, %v854, %v918
        %v1155 = vsel %vm1123, %v853, %v917
        %v1156 = vsel %vm1124, %v852, %v916
        %v1157 = vsel %vm1125, %v851, %v915
        %v1158 = vsel %vm1126, %v850, %v914
        %v1159 = vsel %vm1127, %v849, %v913
        %v1160 = vsel %vm1128, %v848, %v912
        %v1161 = vsel %vm1129, %v847, %v911
        %v1162 = vsel %vm1130, %v846, %v910
        %v1163 = vsel %vm1131, %v845, %v909
        %v1164 = vsel %vm1132, %v844, %v940
        %v1165 = vpack.c.bf16 %v1134, %v1133
        %v1166 = vpack.c.bf16 %v1136, %v1135
        %v1167 = vpack.c.bf16 %v1138, %v1137
        %v1168 = vpack.c.bf16 %v1140, %v1139
        %v1169 = vpack.c.bf16 %v1142, %v1141
        %v1170 = vpack.c.bf16 %v1144, %v1143
        %v1171 = vpack.c.bf16 %v1146, %v1145
        %v1172 = vpack.c.bf16 %v1148, %v1147
        %v1173 = vpack.c.bf16 %v1150, %v1149
        %v1174 = vpack.c.bf16 %v1152, %v1151
        %v1175 = vpack.c.bf16 %v1154, %v1153
        %v1176 = vpack.c.bf16 %v1156, %v1155
        %v1177 = vpack.c.bf16 %v1158, %v1157
        %v1178 = vpack.c.bf16 %v1160, %v1159
        %v1179 = vpack.c.bf16 %v1162, %v1161
        %v1180 = vpack.c.bf16 %v1164, %v1163
        %v1181 = vld [vmem:[#allocation5] sm:$0xf]
        %v1182 = vld [vmem:[#allocation5 + $0x4] sm:$0xf]
        %v1183 = vld [vmem:[#allocation5 + $0x8] sm:$0xf]
        %v1184 = vld [vmem:[#allocation5 + $0xc] sm:$0xf]
        %v1185 = vld [vmem:[#allocation5 + $0x10] sm:$0xf]
        %v1186 = vld [vmem:[#allocation5 + $0x14] sm:$0xf]
        %v1187 = vld [vmem:[#allocation5 + $0x18] sm:$0xf]
        %v1188 = vld [vmem:[#allocation5 + $0x1c] sm:$0xf]
        %v1189 = vld [vmem:[#allocation5 + $0x20] sm:$0xf]
        %v1190 = vld [vmem:[#allocation5 + $0x24] sm:$0xf]
        %v1191 = vld [vmem:[#allocation5 + $0x28] sm:$0xf]
        %v1192 = vld [vmem:[#allocation5 + $0x2c] sm:$0xf]
        %v1193 = vld [vmem:[#allocation5 + $0x30] sm:$0xf]
        %v1194 = vld [vmem:[#allocation5 + $0x34] sm:$0xf]
        %v1195 = vld [vmem:[#allocation5 + $0x38] sm:$0xf]
        %v1196 = vld [vmem:[#allocation5 + $0x3c] sm:$0xf]
        %s1197 = scalar_lea.vmem [#allocation5], 192
        %v1198 = vld [vmem:[%s1197] sm:$0xf]
        %v1199 = vld [vmem:[%s1197 + $0x4] sm:$0xf]
        %v1200 = vld [vmem:[%s1197 + $0x8] sm:$0xf]
        %v1201 = vld [vmem:[%s1197 + $0xc] sm:$0xf]
        %v1202 = vld [vmem:[%s1197 + $0x10] sm:$0xf]
        %v1203 = vld [vmem:[%s1197 + $0x14] sm:$0xf]
        %v1204 = vld [vmem:[%s1197 + $0x18] sm:$0xf]
        %v1205 = vld [vmem:[%s1197 + $0x1c] sm:$0xf]
        %v1206 = vld [vmem:[%s1197 + $0x20] sm:$0xf]
        %v1207 = vld [vmem:[%s1197 + $0x24] sm:$0xf]
        %v1208 = vld [vmem:[%s1197 + $0x28] sm:$0xf]
        %v1209 = vld [vmem:[%s1197 + $0x2c] sm:$0xf]
        %v1210 = vld [vmem:[%s1197 + $0x30] sm:$0xf]
        %v1211 = vld [vmem:[%s1197 + $0x34] sm:$0xf]
        %v1212 = vld [vmem:[%s1197 + $0x38] sm:$0xf]
        %v1213 = vld [vmem:[%s1197 + $0x3c] sm:$0xf]
        %v1230 = vunpack.c.l.b16 %v1198
        %v1231 = vunpack.c.l.b16 %v1199
        %v1232 = vunpack.c.l.b16 %v1200
        %v1233 = vunpack.c.l.b16 %v1201
        %v1234 = vunpack.c.l.b16 %v1202
        %v1235 = vunpack.c.l.b16 %v1203
        %v1236 = vunpack.c.l.b16 %v1204
        %v1237 = vunpack.c.l.b16 %v1205
        %v1238 = vunpack.c.l.b16 %v1206
        %v1239 = vunpack.c.l.b16 %v1207
        %v1240 = vunpack.c.l.b16 %v1208
        %v1241 = vunpack.c.l.b16 %v1209
        %v1242 = vunpack.c.l.b16 %v1210
        %v1243 = vunpack.c.l.b16 %v1211
        %v1244 = vunpack.c.l.b16 %v1212
        %v1245 = vunpack.c.l.b16 %v1213
        %v1246 = vpack.c.b16 %v1231, %v1230
        %v1247 = vpack.c.b16 %v1233, %v1232
        %v1248 = vpack.c.b16 %v1235, %v1234
        %v1249 = vpack.c.b16 %v1237, %v1236
        %v1250 = vpack.c.b16 %v1239, %v1238
        %v1251 = vpack.c.b16 %v1241, %v1240
        %v1252 = vpack.c.b16 %v1243, %v1242
        %v1253 = vpack.c.b16 %v1245, %v1244
        %1262 = vmatprep.subr.bf16.mxu0 0
        %1263 = vmatpush1.bf16.msra.mxu0 %v1246
        %1264 = vmatprep.subr.bf16.mxu0 0
        %1265 = vmatpush1.bf16.msra.mxu0 %v1247
        %1266 = vmatprep.subr.bf16.mxu0 0
        %1267 = vmatpush1.bf16.msra.mxu0 %v1248
        %1268 = vmatprep.subr.bf16.mxu0 0
        %1269 = vmatpush1.bf16.msra.mxu0 %v1249
        %1270 = vmatprep.subr.bf16.mxu0 0
        %1271 = vmatpush1.bf16.msra.mxu0 %v1250
        %1272 = vmatprep.subr.bf16.mxu0 0
        %1273 = vmatpush1.bf16.msra.mxu0 %v1251
        %1274 = vmatprep.subr.bf16.mxu0 0
        %1275 = vmatpush1.bf16.msra.mxu0 %v1252
        %1276 = vmatprep.subr.bf16.mxu0 0
        %1277 = vmatpush1.bf16.msra.mxu0 %v1253
        %1278 = vmatprep.subr.bf16.mxu0 0
        %1279 = vmatpush1.bf16.msra.mxu0 0
        %1280 = vmatprep.subr.bf16.mxu0 0
        %1281 = vmatpush1.bf16.msra.mxu0 0
        %1282 = vmatprep.subr.bf16.mxu0 0
        %1283 = vmatpush1.bf16.msra.mxu0 0
        %1284 = vmatprep.subr.bf16.mxu0 0
        %1285 = vmatpush1.bf16.msra.mxu0 0
        %1286 = vmatprep.subr.bf16.mxu0 0
        %1287 = vmatpush1.bf16.msra.mxu0 0
        %1288 = vmatprep.subr.bf16.mxu0 0
        %1289 = vmatpush1.bf16.msra.mxu0 0
        %1290 = vmatprep.subr.bf16.mxu0 0
        %1291 = vmatpush1.bf16.msra.mxu0 0
        %1292 = vmatprep.subr.bf16.mxu0 0
        %1293 = vmatpush1.bf16.msra.mxu0 0
        %1294 = vmatprep.mubr.bf16.mxu0 0
        %1295 = vmatmul.mubr.bf16.gmra.mrb[0].mxu0 %v1037
        %v1296 = vpop.f32.mrb[0].mxu0
        %v1297 = vadd.f32 0.0, %v1296
        %v1298 = vpop.f32.mrb[0].mxu0
        %v1299 = vpop.f32.mrb[0].mxu0
        %v1300 = vadd.f32 0.0, %v1299
        %v1301 = vpop.f32.mrb[0].mxu0
        %1302 = vmatprep.mubr.bf16.mxu0 0
        %1303 = vmatmul.mubr.bf16.gmra.mrb[0].mxu0 %v1038
        %v1304 = vpop.f32.mrb[0].mxu0
        %v1305 = vadd.f32 0.0, %v1304
        %v1306 = vpop.f32.mrb[0].mxu0
        %v1307 = vpop.f32.mrb[0].mxu0
        %v1308 = vadd.f32 0.0, %v1307
        %v1309 = vpop.f32.mrb[0].mxu0
        %1310 = vmatprep.mubr.bf16.mxu0 0
        %1311 = vmatmul.mubr.bf16.gmra.mrb[0].mxu0 %v1039
        %v1312 = vpop.f32.mrb[0].mxu0
        %v1313 = vadd.f32 0.0, %v1312
        %v1314 = vpop.f32.mrb[0].mxu0
        %v1315 = vpop.f32.mrb[0].mxu0
        %v1316 = vadd.f32 0.0, %v1315
        %v1317 = vpop.f32.mrb[0].mxu0
        %1318 = vmatprep.mubr.bf16.mxu0 0
        %1319 = vmatmul.mubr.bf16.gmra.mrb[0].mxu0 %v1040
        %v1320 = vpop.f32.mrb[0].mxu0
        %v1321 = vadd.f32 0.0, %v1320
        %v1322 = vpop.f32.mrb[0].mxu0
        %v1323 = vpop.f32.mrb[0].mxu0
        %v1324 = vadd.f32 0.0, %v1323
        %v1325 = vpop.f32.mrb[0].mxu0
        %1326 = vmatprep.mubr.bf16.mxu0 0
        %1327 = vmatmul.mubr.bf16.gmra.mrb[0].mxu0 %v1041
        %v1328 = vpop.f32.mrb[0].mxu0
        %v1329 = vadd.f32 0.0, %v1328
        %v1330 = vpop.f32.mrb[0].mxu0
        %v1331 = vpop.f32.mrb[0].mxu0
        %v1332 = vadd.f32 0.0, %v1331
        %v1333 = vpop.f32.mrb[0].mxu0
        %1334 = vmatprep.mubr.bf16.mxu0 0
        %1335 = vmatmul.mubr.bf16.gmra.mrb[0].mxu0 %v1042
        %v1336 = vpop.f32.mrb[0].mxu0
        %v1337 = vadd.f32 0.0, %v1336
        %v1338 = vpop.f32.mrb[0].mxu0
        %v1339 = vpop.f32.mrb[0].mxu0
        %v1340 = vadd.f32 0.0, %v1339
        %v1341 = vpop.f32.mrb[0].mxu0
        %1342 = vmatprep.mubr.bf16.mxu0 0
        %1343 = vmatmul.mubr.bf16.gmra.mrb[0].mxu0 %v1043
        %v1344 = vpop.f32.mrb[0].mxu0
        %v1345 = vadd.f32 0.0, %v1344
        %v1346 = vpop.f32.mrb[0].mxu0
        %v1347 = vpop.f32.mrb[0].mxu0
        %v1348 = vadd.f32 0.0, %v1347
        %v1349 = vpop.f32.mrb[0].mxu0
        %1350 = vmatprep.mubr.bf16.mxu0 0
        %1351 = vmatmul.mubr.bf16.gmra.mrb[0].mxu0 %v1044
        %v1352 = vpop.f32.mrb[0].mxu0
        %v1353 = vadd.f32 0.0, %v1352
        %v1354 = vpop.f32.mrb[0].mxu0
        %v1355 = vpop.f32.mrb[0].mxu0
        %v1356 = vadd.f32 0.0, %v1355
        %v1357 = vpop.f32.mrb[0].mxu0
        %1358 = vmatprep.mubr.bf16.mxu0 0
        %1359 = vmatmul.mubr.bf16.gmra.mrb[0].mxu0 %v1045
        %v1360 = vpop.f32.mrb[0].mxu0
        %v1361 = vadd.f32 0.0, %v1360
        %v1362 = vpop.f32.mrb[0].mxu0
        %v1363 = vpop.f32.mrb[0].mxu0
        %v1364 = vadd.f32 0.0, %v1363
        %v1365 = vpop.f32.mrb[0].mxu0
        %1366 = vmatprep.mubr.bf16.mxu0 0
        %1367 = vmatmul.mubr.bf16.gmra.mrb[0].mxu0 %v1046
        %v1368 = vpop.f32.mrb[0].mxu0
        %v1369 = vadd.f32 0.0, %v1368
        %v1370 = vpop.f32.mrb[0].mxu0
        %v1371 = vpop.f32.mrb[0].mxu0
        %v1372 = vadd.f32 0.0, %v1371
        %v1373 = vpop.f32.mrb[0].mxu0
        %1374 = vmatprep.mubr.bf16.mxu0 0
        %1375 = vmatmul.mubr.bf16.gmra.mrb[0].mxu0 %v1047
        %v1376 = vpop.f32.mrb[0].mxu0
        %v1377 = vadd.f32 0.0, %v1376
        %v1378 = vpop.f32.mrb[0].mxu0
        %v1379 = vpop.f32.mrb[0].mxu0
        %v1380 = vadd.f32 0.0, %v1379
        %v1381 = vpop.f32.mrb[0].mxu0
        %1382 = vmatprep.mubr.bf16.mxu0 0
        %1383 = vmatmul.mubr.bf16.gmra.mrb[0].mxu0 %v1048
        %v1384 = vpop.f32.mrb[0].mxu0
        %v1385 = vadd.f32 0.0, %v1384
        %v1386 = vpop.f32.mrb[0].mxu0
        %v1387 = vpop.f32.mrb[0].mxu0
        %v1388 = vadd.f32 0.0, %v1387
        %v1389 = vpop.f32.mrb[0].mxu0
        %1390 = vmatprep.mubr.bf16.mxu0 0
        %1391 = vmatmul.mubr.bf16.gmra.mrb[0].mxu0 %v1049
        %v1392 = vpop.f32.mrb[0].mxu0
        %v1393 = vadd.f32 0.0, %v1392
        %v1394 = vpop.f32.mrb[0].mxu0
        %v1395 = vpop.f32.mrb[0].mxu0
        %v1396 = vadd.f32 0.0, %v1395
        %v1397 = vpop.f32.mrb[0].mxu0
        %1398 = vmatprep.mubr.bf16.mxu0 0
        %1399 = vmatmul.mubr.bf16.gmra.mrb[0].mxu0 %v1050
        %v1400 = vpop.f32.mrb[0].mxu0
        %v1401 = vadd.f32 0.0, %v1400
        %v1402 = vpop.f32.mrb[0].mxu0
        %v1403 = vpop.f32.mrb[0].mxu0
        %v1404 = vadd.f32 0.0, %v1403
        %v1405 = vpop.f32.mrb[0].mxu0
        %1406 = vmatprep.mubr.bf16.mxu0 0
        %1407 = vmatmul.mubr.bf16.gmra.mrb[0].mxu0 %v1051
        %v1408 = vpop.f32.mrb[0].mxu0
        %v1409 = vadd.f32 0.0, %v1408
        %v1410 = vpop.f32.mrb[0].mxu0
        %v1411 = vpop.f32.mrb[0].mxu0
        %v1412 = vadd.f32 0.0, %v1411
        %v1413 = vpop.f32.mrb[0].mxu0
        %1414 = vmatprep.mubr.bf16.mxu0 0
        %1415 = vmatmul.mubr.bf16.gmra.mrb[0].mxu0 %v1052
        %v1416 = vpop.f32.mrb[0].mxu0
        %v1417 = vadd.f32 0.0, %v1416
        %v1418 = vpop.f32.mrb[0].mxu0
        %v1419 = vpop.f32.mrb[0].mxu0
        %v1420 = vadd.f32 0.0, %v1419
        %v1421 = vpop.f32.mrb[0].mxu0
        %1422 = vdwg.mxu0
        %v1439 = vunpack.c.l.b16 %v1181
        %v1440 = vunpack.c.l.b16 %v1182
        %v1441 = vunpack.c.l.b16 %v1183
        %v1442 = vunpack.c.l.b16 %v1184
        %v1443 = vunpack.c.l.b16 %v1185
        %v1444 = vunpack.c.l.b16 %v1186
        %v1445 = vunpack.c.l.b16 %v1187
        %v1446 = vunpack.c.l.b16 %v1188
        %v1447 = vunpack.c.l.b16 %v1189
        %v1448 = vunpack.c.l.b16 %v1190
        %v1449 = vunpack.c.l.b16 %v1191
        %v1450 = vunpack.c.l.b16 %v1192
        %v1451 = vunpack.c.l.b16 %v1193
        %v1452 = vunpack.c.l.b16 %v1194
        %v1453 = vunpack.c.l.b16 %v1195
        %v1454 = vunpack.c.l.b16 %v1196
        %v1455 = vpack.c.b16 %v1440, %v1439
        %v1456 = vpack.c.b16 %v1442, %v1441
        %v1457 = vpack.c.b16 %v1444, %v1443
        %v1458 = vpack.c.b16 %v1446, %v1445
        %v1459 = vpack.c.b16 %v1448, %v1447
        %v1460 = vpack.c.b16 %v1450, %v1449
        %v1461 = vpack.c.b16 %v1452, %v1451
        %v1462 = vpack.c.b16 %v1454, %v1453
        %1471 = vmatprep.subr.bf16.mxu0 0
        %1472 = vmatpush1.bf16.msra.mxu0 %v1455
        %1473 = vmatprep.subr.bf16.mxu0 0
        %1474 = vmatpush1.bf16.msra.mxu0 %v1456
        %1475 = vmatprep.subr.bf16.mxu0 0
        %1476 = vmatpush1.bf16.msra.mxu0 %v1457
        %1477 = vmatprep.subr.bf16.mxu0 0
        %1478 = vmatpush1.bf16.msra.mxu0 %v1458
        %1479 = vmatprep.subr.bf16.mxu0 0
        %1480 = vmatpush1.bf16.msra.mxu0 %v1459
        %1481 = vmatprep.subr.bf16.mxu0 0
        %1482 = vmatpush1.bf16.msra.mxu0 %v1460
        %1483 = vmatprep.subr.bf16.mxu0 0
        %1484 = vmatpush1.bf16.msra.mxu0 %v1461
        %1485 = vmatprep.subr.bf16.mxu0 0
        %1486 = vmatpush1.bf16.msra.mxu0 %v1462
        %1487 = vmatprep.subr.bf16.mxu0 0
        %1488 = vmatpush1.bf16.msra.mxu0 0
        %1489 = vmatprep.subr.bf16.mxu0 0
        %1490 = vmatpush1.bf16.msra.mxu0 0
        %1491 = vmatprep.subr.bf16.mxu0 0
        %1492 = vmatpush1.bf16.msra.mxu0 0
        %1493 = vmatprep.subr.bf16.mxu0 0
        %1494 = vmatpush1.bf16.msra.mxu0 0
        %1495 = vmatprep.subr.bf16.mxu0 0
        %1496 = vmatpush1.bf16.msra.mxu0 0
        %1497 = vmatprep.subr.bf16.mxu0 0
        %1498 = vmatpush1.bf16.msra.mxu0 0
        %1499 = vmatprep.subr.bf16.mxu0 0
        %1500 = vmatpush1.bf16.msra.mxu0 0
        %1501 = vmatprep.subr.bf16.mxu0 0
        %1502 = vmatpush1.bf16.msra.mxu0 0
        %1503 = vmatprep.mubr.bf16.mxu0 0
        %1504 = vmatmul.mubr.bf16.gmra.mrb[0].mxu0 %v1038
        %v1505 = vpop.f32.mrb[0].mxu0
        %v1506 = vadd.f32 %v1297, %v1505
        %v1507 = vpop.f32.mrb[0].mxu0
        %v1508 = vpop.f32.mrb[0].mxu0
        %v1509 = vadd.f32 %v1300, %v1508
        %v1510 = vpop.f32.mrb[0].mxu0
        %1511 = vmatprep.mubr.bf16.mxu0 0
        %1512 = vmatmul.mubr.bf16.gmra.mrb[0].mxu0 %v1037
        %v1513 = vpop.f32.mrb[0].mxu0
        %v1514 = vadd.f32 %v1305, %v1513
        %v1515 = vpop.f32.mrb[0].mxu0
        %v1516 = vpop.f32.mrb[0].mxu0
        %v1517 = vadd.f32 %v1308, %v1516
        %v1518 = vpop.f32.mrb[0].mxu0
        %1519 = vmatprep.mubr.bf16.mxu0 0
        %1520 = vmatmul.mubr.bf16.gmra.mrb[0].mxu0 %v1038
        %v1521 = vpop.f32.mrb[0].mxu0
        %v1522 = vadd.f32 %v1313, %v1521
        %v1523 = vpop.f32.mrb[0].mxu0
        %v1524 = vpop.f32.mrb[0].mxu0
        %v1525 = vadd.f32 %v1316, %v1524
        %v1526 = vpop.f32.mrb[0].mxu0
        %1527 = vmatprep.mubr.bf16.mxu0 0
        %1528 = vmatmul.mubr.bf16.gmra.mrb[0].mxu0 %v1039
        %v1529 = vpop.f32.mrb[0].mxu0
        %v1530 = vadd.f32 %v1321, %v1529
        %v1531 = vpop.f32.mrb[0].mxu0
        %v1532 = vpop.f32.mrb[0].mxu0
        %v1533 = vadd.f32 %v1324, %v1532
        %v1534 = vpop.f32.mrb[0].mxu0
        %1535 = vmatprep.mubr.bf16.mxu0 0
        %1536 = vmatmul.mubr.bf16.gmra.mrb[0].mxu0 %v1040
        %v1537 = vpop.f32.mrb[0].mxu0
        %v1538 = vadd.f32 %v1329, %v1537
        %v1539 = vpop.f32.mrb[0].mxu0
        %v1540 = vpop.f32.mrb[0].mxu0
        %v1541 = vadd.f32 %v1332, %v1540
        %v1542 = vpop.f32.mrb[0].mxu0
        %1543 = vmatprep.mubr.bf16.mxu0 0
        %1544 = vmatmul.mubr.bf16.gmra.mrb[0].mxu0 %v1041
        %v1545 = vpop.f32.mrb[0].mxu0
        %v1546 = vadd.f32 %v1337, %v1545
        %v1547 = vpop.f32.mrb[0].mxu0
        %v1548 = vpop.f32.mrb[0].mxu0
        %v1549 = vadd.f32 %v1340, %v1548
        %v1550 = vpop.f32.mrb[0].mxu0
        %1551 = vmatprep.mubr.bf16.mxu0 0
        %1552 = vmatmul.mubr.bf16.gmra.mrb[0].mxu0 %v1042
        %v1553 = vpop.f32.mrb[0].mxu0
        %v1554 = vadd.f32 %v1345, %v1553
        %v1555 = vpop.f32.mrb[0].mxu0
        %v1556 = vpop.f32.mrb[0].mxu0
        %v1557 = vadd.f32 %v1348, %v1556
        %v1558 = vpop.f32.mrb[0].mxu0
        %1559 = vmatprep.mubr.bf16.mxu0 0
        %1560 = vmatmul.mubr.bf16.gmra.mrb[0].mxu0 %v1043
        %v1561 = vpop.f32.mrb[0].mxu0
        %v1562 = vadd.f32 %v1353, %v1561
        %v1563 = vpop.f32.mrb[0].mxu0
        %v1564 = vpop.f32.mrb[0].mxu0
        %v1565 = vadd.f32 %v1356, %v1564
        %v1566 = vpop.f32.mrb[0].mxu0
        %1567 = vmatprep.mubr.bf16.mxu0 0
        %1568 = vmatmul.mubr.bf16.gmra.mrb[0].mxu0 %v1044
        %v1569 = vpop.f32.mrb[0].mxu0
        %v1570 = vadd.f32 %v1361, %v1569
        %v1571 = vpop.f32.mrb[0].mxu0
        %v1572 = vpop.f32.mrb[0].mxu0
        %v1573 = vadd.f32 %v1364, %v1572
        %v1574 = vpop.f32.mrb[0].mxu0
        %1575 = vmatprep.mubr.bf16.mxu0 0
        %1576 = vmatmul.mubr.bf16.gmra.mrb[0].mxu0 %v1045
        %v1577 = vpop.f32.mrb[0].mxu0
        %v1578 = vadd.f32 %v1369, %v1577
        %v1579 = vpop.f32.mrb[0].mxu0
        %v1580 = vpop.f32.mrb[0].mxu0
        %v1581 = vadd.f32 %v1372, %v1580
        %v1582 = vpop.f32.mrb[0].mxu0
        %1583 = vmatprep.mubr.bf16.mxu0 0
        %1584 = vmatmul.mubr.bf16.gmra.mrb[0].mxu0 %v1046
        %v1585 = vpop.f32.mrb[0].mxu0
        %v1586 = vadd.f32 %v1377, %v1585
        %v1587 = vpop.f32.mrb[0].mxu0
        %v1588 = vpop.f32.mrb[0].mxu0
        %v1589 = vadd.f32 %v1380, %v1588
        %v1590 = vpop.f32.mrb[0].mxu0
        %1591 = vmatprep.mubr.bf16.mxu0 0
        %1592 = vmatmul.mubr.bf16.gmra.mrb[0].mxu0 %v1047
        %v1593 = vpop.f32.mrb[0].mxu0
        %v1594 = vadd.f32 %v1385, %v1593
        %v1595 = vpop.f32.mrb[0].mxu0
        %v1596 = vpop.f32.mrb[0].mxu0
        %v1597 = vadd.f32 %v1388, %v1596
        %v1598 = vpop.f32.mrb[0].mxu0
        %1599 = vmatprep.mubr.bf16.mxu0 0
        %1600 = vmatmul.mubr.bf16.gmra.mrb[0].mxu0 %v1048
        %v1601 = vpop.f32.mrb[0].mxu0
        %v1602 = vadd.f32 %v1393, %v1601
        %v1603 = vpop.f32.mrb[0].mxu0
        %v1604 = vpop.f32.mrb[0].mxu0
        %v1605 = vadd.f32 %v1396, %v1604
        %v1606 = vpop.f32.mrb[0].mxu0
        %1607 = vmatprep.mubr.bf16.mxu0 0
        %1608 = vmatmul.mubr.bf16.gmra.mrb[0].mxu0 %v1049
        %v1609 = vpop.f32.mrb[0].mxu0
        %v1610 = vadd.f32 %v1401, %v1609
        %v1611 = vpop.f32.mrb[0].mxu0
        %v1612 = vpop.f32.mrb[0].mxu0
        %v1613 = vadd.f32 %v1404, %v1612
        %v1614 = vpop.f32.mrb[0].mxu0
        %1615 = vmatprep.mubr.bf16.mxu0 0
        %1616 = vmatmul.mubr.bf16.gmra.mrb[0].mxu0 %v1050
        %v1617 = vpop.f32.mrb[0].mxu0
        %v1618 = vadd.f32 %v1409, %v1617
        %v1619 = vpop.f32.mrb[0].mxu0
        %v1620 = vpop.f32.mrb[0].mxu0
        %v1621 = vadd.f32 %v1412, %v1620
        %v1622 = vpop.f32.mrb[0].mxu0
        %1623 = vmatprep.mubr.bf16.mxu0 0
        %1624 = vmatmul.mubr.bf16.gmra.mrb[0].mxu0 %v1051
        %v1625 = vpop.f32.mrb[0].mxu0
        %v1626 = vadd.f32 %v1417, %v1625
        %v1627 = vpop.f32.mrb[0].mxu0
        %v1628 = vpop.f32.mrb[0].mxu0
        %v1629 = vadd.f32 %v1420, %v1628
        %v1630 = vpop.f32.mrb[0].mxu0
        %1631 = vdwg.mxu0
        %s1632 = scalar_lea.vmem [#allocation5], 384
        %v1633 = vld [vmem:[%s1632] sm:$0xf]
        %v1634 = vld [vmem:[%s1632 + $0x4] sm:$0xf]
        %v1635 = vld [vmem:[%s1632 + $0x8] sm:$0xf]
        %v1636 = vld [vmem:[%s1632 + $0xc] sm:$0xf]
        %v1637 = vld [vmem:[%s1632 + $0x10] sm:$0xf]
        %v1638 = vld [vmem:[%s1632 + $0x14] sm:$0xf]
        %v1639 = vld [vmem:[%s1632 + $0x18] sm:$0xf]
        %v1640 = vld [vmem:[%s1632 + $0x1c] sm:$0xf]
        %v1641 = vld [vmem:[%s1632 + $0x20] sm:$0xf]
        %v1642 = vld [vmem:[%s1632 + $0x24] sm:$0xf]
        %v1643 = vld [vmem:[%s1632 + $0x28] sm:$0xf]
        %v1644 = vld [vmem:[%s1632 + $0x2c] sm:$0xf]
        %v1645 = vld [vmem:[%s1632 + $0x30] sm:$0xf]
        %v1646 = vld [vmem:[%s1632 + $0x34] sm:$0xf]
        %v1647 = vld [vmem:[%s1632 + $0x38] sm:$0xf]
        %v1648 = vld [vmem:[%s1632 + $0x3c] sm:$0xf]
        %v1665 = vunpack.c.l.b16 %v1633
        %v1666 = vunpack.c.l.b16 %v1634
        %v1667 = vunpack.c.l.b16 %v1635
        %v1668 = vunpack.c.l.b16 %v1636
        %v1669 = vunpack.c.l.b16 %v1637
        %v1670 = vunpack.c.l.b16 %v1638
        %v1671 = vunpack.c.l.b16 %v1639
        %v1672 = vunpack.c.l.b16 %v1640
        %v1673 = vunpack.c.l.b16 %v1641
        %v1674 = vunpack.c.l.b16 %v1642
        %v1675 = vunpack.c.l.b16 %v1643
        %v1676 = vunpack.c.l.b16 %v1644
        %v1677 = vunpack.c.l.b16 %v1645
        %v1678 = vunpack.c.l.b16 %v1646
        %v1679 = vunpack.c.l.b16 %v1647
        %v1680 = vunpack.c.l.b16 %v1648
        %v1681 = vpack.c.b16 %v1666, %v1665
        %v1682 = vpack.c.b16 %v1668, %v1667
        %v1683 = vpack.c.b16 %v1670, %v1669
        %v1684 = vpack.c.b16 %v1672, %v1671
        %v1685 = vpack.c.b16 %v1674, %v1673
        %v1686 = vpack.c.b16 %v1676, %v1675
        %v1687 = vpack.c.b16 %v1678, %v1677
        %v1688 = vpack.c.b16 %v1680, %v1679
        %1697 = vmatprep.subr.bf16.mxu0 0
        %1698 = vmatpush1.bf16.msra.mxu0 %v1681
        %1699 = vmatprep.subr.bf16.mxu0 0
        %1700 = vmatpush1.bf16.msra.mxu0 %v1682
        %1701 = vmatprep.subr.bf16.mxu0 0
        %1702 = vmatpush1.bf16.msra.mxu0 %v1683
        %1703 = vmatprep.subr.bf16.mxu0 0
        %1704 = vmatpush1.bf16.msra.mxu0 %v1684
        %1705 = vmatprep.subr.bf16.mxu0 0
        %1706 = vmatpush1.bf16.msra.mxu0 %v1685
        %1707 = vmatprep.subr.bf16.mxu0 0
        %1708 = vmatpush1.bf16.msra.mxu0 %v1686
        %1709 = vmatprep.subr.bf16.mxu0 0
        %1710 = vmatpush1.bf16.msra.mxu0 %v1687
        %1711 = vmatprep.subr.bf16.mxu0 0
        %1712 = vmatpush1.bf16.msra.mxu0 %v1688
        %1713 = vmatprep.subr.bf16.mxu0 0
        %1714 = vmatpush1.bf16.msra.mxu0 0
        %1715 = vmatprep.subr.bf16.mxu0 0
        %1716 = vmatpush1.bf16.msra.mxu0 0
        %1717 = vmatprep.subr.bf16.mxu0 0
        %1718 = vmatpush1.bf16.msra.mxu0 0
        %1719 = vmatprep.subr.bf16.mxu0 0
        %1720 = vmatpush1.bf16.msra.mxu0 0
        %1721 = vmatprep.subr.bf16.mxu0 0
        %1722 = vmatpush1.bf16.msra.mxu0 0
        %1723 = vmatprep.subr.bf16.mxu0 0
        %1724 = vmatpush1.bf16.msra.mxu0 0
        %1725 = vmatprep.subr.bf16.mxu0 0
        %1726 = vmatpush1.bf16.msra.mxu0 0
        %1727 = vmatprep.subr.bf16.mxu0 0
        %1728 = vmatpush1.bf16.msra.mxu0 0
        %1729 = vmatprep.mubr.bf16.mxu0 0
        %1730 = vmatmul.mubr.bf16.gmra.mrb[0].mxu0 %v1038
        %v1731 = vpop.f32.mrb[0].mxu0
        %v1732 = vadd.f32 0.0, %v1731
        %v1733 = vpop.f32.mrb[0].mxu0
        %v1734 = vpop.f32.mrb[0].mxu0
        %v1735 = vadd.f32 0.0, %v1734
        %v1736 = vpop.f32.mrb[0].mxu0
        %1737 = vmatprep.mubr.bf16.mxu0 0
        %1738 = vmatmul.mubr.bf16.gmra.mrb[0].mxu0 %v1039
        %v1739 = vpop.f32.mrb[0].mxu0
        %v1740 = vadd.f32 0.0, %v1739
        %v1741 = vpop.f32.mrb[0].mxu0
        %v1742 = vpop.f32.mrb[0].mxu0
        %v1743 = vadd.f32 0.0, %v1742
        %v1744 = vpop.f32.mrb[0].mxu0
        %1745 = vmatprep.mubr.bf16.mxu0 0
        %1746 = vmatmul.mubr.bf16.gmra.mrb[0].mxu0 %v1040
        %v1747 = vpop.f32.mrb[0].mxu0
        %v1748 = vadd.f32 0.0, %v1747
        %v1749 = vpop.f32.mrb[0].mxu0
        %v1750 = vpop.f32.mrb[0].mxu0
        %v1751 = vadd.f32 0.0, %v1750
        %v1752 = vpop.f32.mrb[0].mxu0
        %1753 = vmatprep.mubr.bf16.mxu0 0
        %1754 = vmatmul.mubr.bf16.gmra.mrb[0].mxu0 %v1041
        %v1755 = vpop.f32.mrb[0].mxu0
        %v1756 = vadd.f32 0.0, %v1755
        %v1757 = vpop.f32.mrb[0].mxu0
        %v1758 = vpop.f32.mrb[0].mxu0
        %v1759 = vadd.f32 0.0, %v1758
        %v1760 = vpop.f32.mrb[0].mxu0
        %1761 = vmatprep.mubr.bf16.mxu0 0
        %1762 = vmatmul.mubr.bf16.gmra.mrb[0].mxu0 %v1042
        %v1763 = vpop.f32.mrb[0].mxu0
        %v1764 = vadd.f32 0.0, %v1763
        %v1765 = vpop.f32.mrb[0].mxu0
        %v1766 = vpop.f32.mrb[0].mxu0
        %v1767 = vadd.f32 0.0, %v1766
        %v1768 = vpop.f32.mrb[0].mxu0
        %1769 = vmatprep.mubr.bf16.mxu0 0
        %1770 = vmatmul.mubr.bf16.gmra.mrb[0].mxu0 %v1043
        %v1771 = vpop.f32.mrb[0].mxu0
        %v1772 = vadd.f32 0.0, %v1771
        %v1773 = vpop.f32.mrb[0].mxu0
        %v1774 = vpop.f32.mrb[0].mxu0
        %v1775 = vadd.f32 0.0, %v1774
        %v1776 = vpop.f32.mrb[0].mxu0
        %1777 = vmatprep.mubr.bf16.mxu0 0
        %1778 = vmatmul.mubr.bf16.gmra.mrb[0].mxu0 %v1044
        %v1779 = vpop.f32.mrb[0].mxu0
        %v1780 = vadd.f32 0.0, %v1779
        %v1781 = vpop.f32.mrb[0].mxu0
        %v1782 = vpop.f32.mrb[0].mxu0
        %v1783 = vadd.f32 0.0, %v1782
        %v1784 = vpop.f32.mrb[0].mxu0
        %1785 = vmatprep.mubr.bf16.mxu0 0
        %1786 = vmatmul.mubr.bf16.gmra.mrb[0].mxu0 %v1045
        %v1787 = vpop.f32.mrb[0].mxu0
        %v1788 = vadd.f32 0.0, %v1787
        %v1789 = vpop.f32.mrb[0].mxu0
        %v1790 = vpop.f32.mrb[0].mxu0
        %v1791 = vadd.f32 0.0, %v1790
        %v1792 = vpop.f32.mrb[0].mxu0
        %1793 = vmatprep.mubr.bf16.mxu0 0
        %1794 = vmatmul.mubr.bf16.gmra.mrb[0].mxu0 %v1046
        %v1795 = vpop.f32.mrb[0].mxu0
        %v1796 = vadd.f32 0.0, %v1795
        %v1797 = vpop.f32.mrb[0].mxu0
        %v1798 = vpop.f32.mrb[0].mxu0
        %v1799 = vadd.f32 0.0, %v1798
        %v1800 = vpop.f32.mrb[0].mxu0
        %1801 = vmatprep.mubr.bf16.mxu0 0
        %1802 = vmatmul.mubr.bf16.gmra.mrb[0].mxu0 %v1047
        %v1803 = vpop.f32.mrb[0].mxu0
        %v1804 = vadd.f32 0.0, %v1803
        %v1805 = vpop.f32.mrb[0].mxu0
        %v1806 = vpop.f32.mrb[0].mxu0
        %v1807 = vadd.f32 0.0, %v1806
        %v1808 = vpop.f32.mrb[0].mxu0
        %1809 = vmatprep.mubr.bf16.mxu0 0
        %1810 = vmatmul.mubr.bf16.gmra.mrb[0].mxu0 %v1048
        %v1811 = vpop.f32.mrb[0].mxu0
        %v1812 = vadd.f32 0.0, %v1811
        %v1813 = vpop.f32.mrb[0].mxu0
        %v1814 = vpop.f32.mrb[0].mxu0
        %v1815 = vadd.f32 0.0, %v1814
        %v1816 = vpop.f32.mrb[0].mxu0
        %1817 = vmatprep.mubr.bf16.mxu0 0
        %1818 = vmatmul.mubr.bf16.gmra.mrb[0].mxu0 %v1049
        %v1819 = vpop.f32.mrb[0].mxu0
        %v1820 = vadd.f32 0.0, %v1819
        %v1821 = vpop.f32.mrb[0].mxu0
        %v1822 = vpop.f32.mrb[0].mxu0
        %v1823 = vadd.f32 0.0, %v1822
        %v1824 = vpop.f32.mrb[0].mxu0
        %1825 = vmatprep.mubr.bf16.mxu0 0
        %1826 = vmatmul.mubr.bf16.gmra.mrb[0].mxu0 %v1050
        %v1827 = vpop.f32.mrb[0].mxu0
        %v1828 = vadd.f32 0.0, %v1827
        %v1829 = vpop.f32.mrb[0].mxu0
        %v1830 = vpop.f32.mrb[0].mxu0
        %v1831 = vadd.f32 0.0, %v1830
        %v1832 = vpop.f32.mrb[0].mxu0
        %1833 = vmatprep.mubr.bf16.mxu0 0
        %1834 = vmatmul.mubr.bf16.gmra.mrb[0].mxu0 %v1051
        %v1835 = vpop.f32.mrb[0].mxu0
        %v1836 = vadd.f32 0.0, %v1835
        %v1837 = vpop.f32.mrb[0].mxu0
        %v1838 = vpop.f32.mrb[0].mxu0
        %v1839 = vadd.f32 0.0, %v1838
        %v1840 = vpop.f32.mrb[0].mxu0
        %1841 = vmatprep.mubr.bf16.mxu0 0
        %1842 = vmatmul.mubr.bf16.gmra.mrb[0].mxu0 %v1052
        %v1843 = vpop.f32.mrb[0].mxu0
        %v1844 = vadd.f32 0.0, %v1843
        %v1845 = vpop.f32.mrb[0].mxu0
        %v1846 = vpop.f32.mrb[0].mxu0
        %v1847 = vadd.f32 0.0, %v1846
        %v1848 = vpop.f32.mrb[0].mxu0
        %1849 = vmatprep.mubr.bf16.mxu0 0
        %1850 = vmatmul.mubr.bf16.gmra.mrb[0].mxu0 %v1051
        %v1851 = vpop.f32.mrb[0].mxu0
        %v1852 = vadd.f32 0.0, %v1851
        %v1853 = vpop.f32.mrb[0].mxu0
        %v1854 = vpop.f32.mrb[0].mxu0
        %v1855 = vadd.f32 0.0, %v1854
        %v1856 = vpop.f32.mrb[0].mxu0
        %1857 = vdwg.mxu0
        %v1858 = vadd.f32 %v1506, %v1732
        %v1859 = vadd.f32 %v1509, %v1735
        %v1860 = vadd.f32 %v1514, %v1740
        %v1861 = vadd.f32 %v1517, %v1743
        %v1862 = vadd.f32 %v1522, %v1748
        %v1863 = vadd.f32 %v1525, %v1751
        %v1864 = vadd.f32 %v1530, %v1756
        %v1865 = vadd.f32 %v1533, %v1759
        %v1866 = vadd.f32 %v1538, %v1764
        %v1867 = vadd.f32 %v1541, %v1767
        %v1868 = vadd.f32 %v1546, %v1772
        %v1869 = vadd.f32 %v1549, %v1775
        %v1870 = vadd.f32 %v1554, %v1780
        %v1871 = vadd.f32 %v1557, %v1783
        %v1872 = vadd.f32 %v1562, %v1788
        %v1873 = vadd.f32 %v1565, %v1791
        %v1874 = vadd.f32 %v1570, %v1796
        %v1875 = vadd.f32 %v1573, %v1799
        %v1876 = vadd.f32 %v1578, %v1804
        %v1877 = vadd.f32 %v1581, %v1807
        %v1878 = vadd.f32 %v1586, %v1812
        %v1879 = vadd.f32 %v1589, %v1815
        %v1880 = vadd.f32 %v1594, %v1820
        %v1881 = vadd.f32 %v1597, %v1823
        %v1882 = vadd.f32 %v1602, %v1828
        %v1883 = vadd.f32 %v1605, %v1831
        %v1884 = vadd.f32 %v1610, %v1836
        %v1885 = vadd.f32 %v1613, %v1839
        %v1886 = vadd.f32 %v1618, %v1844
        %v1887 = vadd.f32 %v1621, %v1847
        %v1888 = vadd.f32 %v1626, %v1852
        %v1889 = vadd.f32 %v1629, %v1855
        %s1890 = scalar_lea.vmem [#allocation5], 64
        %v1891 = vld [vmem:[%s1890] sm:$0xf]
        %v1892 = vld [vmem:[%s1890 + $0x4] sm:$0xf]
        %v1893 = vld [vmem:[%s1890 + $0x8] sm:$0xf]
        %v1894 = vld [vmem:[%s1890 + $0xc] sm:$0xf]
        %v1895 = vld [vmem:[%s1890 + $0x10] sm:$0xf]
        %v1896 = vld [vmem:[%s1890 + $0x14] sm:$0xf]
        %v1897 = vld [vmem:[%s1890 + $0x18] sm:$0xf]
        %v1898 = vld [vmem:[%s1890 + $0x1c] sm:$0xf]
        %v1899 = vld [vmem:[%s1890 + $0x20] sm:$0xf]
        %v1900 = vld [vmem:[%s1890 + $0x24] sm:$0xf]
        %v1901 = vld [vmem:[%s1890 + $0x28] sm:$0xf]
        %v1902 = vld [vmem:[%s1890 + $0x2c] sm:$0xf]
        %v1903 = vld [vmem:[%s1890 + $0x30] sm:$0xf]
        %v1904 = vld [vmem:[%s1890 + $0x34] sm:$0xf]
        %v1905 = vld [vmem:[%s1890 + $0x38] sm:$0xf]
        %v1906 = vld [vmem:[%s1890 + $0x3c] sm:$0xf]
        %v1923 = vunpack.c.l.b16 %v1891
        %v1924 = vunpack.c.l.b16 %v1892
        %v1925 = vunpack.c.l.b16 %v1893
        %v1926 = vunpack.c.l.b16 %v1894
        %v1927 = vunpack.c.l.b16 %v1895
        %v1928 = vunpack.c.l.b16 %v1896
        %v1929 = vunpack.c.l.b16 %v1897
        %v1930 = vunpack.c.l.b16 %v1898
        %v1931 = vunpack.c.l.b16 %v1899
        %v1932 = vunpack.c.l.b16 %v1900
        %v1933 = vunpack.c.l.b16 %v1901
        %v1934 = vunpack.c.l.b16 %v1902
        %v1935 = vunpack.c.l.b16 %v1903
        %v1936 = vunpack.c.l.b16 %v1904
        %v1937 = vunpack.c.l.b16 %v1905
        %v1938 = vunpack.c.l.b16 %v1906
        %v1939 = vpack.c.b16 %v1924, %v1923
        %v1940 = vpack.c.b16 %v1926, %v1925
        %v1941 = vpack.c.b16 %v1928, %v1927
        %v1942 = vpack.c.b16 %v1930, %v1929
        %v1943 = vpack.c.b16 %v1932, %v1931
        %v1944 = vpack.c.b16 %v1934, %v1933
        %v1945 = vpack.c.b16 %v1936, %v1935
        %v1946 = vpack.c.b16 %v1938, %v1937
        %1955 = vmatprep.subr.bf16.mxu0 0
        %1956 = vmatpush1.bf16.msra.mxu0 %v1939
        %1957 = vmatprep.subr.bf16.mxu0 0
        %1958 = vmatpush1.bf16.msra.mxu0 %v1940
        %1959 = vmatprep.subr.bf16.mxu0 0
        %1960 = vmatpush1.bf16.msra.mxu0 %v1941
        %1961 = vmatprep.subr.bf16.mxu0 0
        %1962 = vmatpush1.bf16.msra.mxu0 %v1942
        %1963 = vmatprep.subr.bf16.mxu0 0
        %1964 = vmatpush1.bf16.msra.mxu0 %v1943
        %1965 = vmatprep.subr.bf16.mxu0 0
        %1966 = vmatpush1.bf16.msra.mxu0 %v1944
        %1967 = vmatprep.subr.bf16.mxu0 0
        %1968 = vmatpush1.bf16.msra.mxu0 %v1945
        %1969 = vmatprep.subr.bf16.mxu0 0
        %1970 = vmatpush1.bf16.msra.mxu0 %v1946
        %1971 = vmatprep.subr.bf16.mxu0 0
        %1972 = vmatpush1.bf16.msra.mxu0 0
        %1973 = vmatprep.subr.bf16.mxu0 0
        %1974 = vmatpush1.bf16.msra.mxu0 0
        %1975 = vmatprep.subr.bf16.mxu0 0
        %1976 = vmatpush1.bf16.msra.mxu0 0
        %1977 = vmatprep.subr.bf16.mxu0 0
        %1978 = vmatpush1.bf16.msra.mxu0 0
        %1979 = vmatprep.subr.bf16.mxu0 0
        %1980 = vmatpush1.bf16.msra.mxu0 0
        %1981 = vmatprep.subr.bf16.mxu0 0
        %1982 = vmatpush1.bf16.msra.mxu0 0
        %1983 = vmatprep.subr.bf16.mxu0 0
        %1984 = vmatpush1.bf16.msra.mxu0 0
        %1985 = vmatprep.subr.bf16.mxu0 0
        %1986 = vmatpush1.bf16.msra.mxu0 0
        %1987 = vmatprep.mubr.bf16.mxu0 0
        %1988 = vmatmul.mubr.bf16.gmra.mrb[0].mxu0 %v1054
        %v1989 = vpop.f32.mrb[0].mxu0
        %v1990 = vadd.f32 0.0, %v1989
        %v1991 = vpop.f32.mrb[0].mxu0
        %v1992 = vpop.f32.mrb[0].mxu0
        %v1993 = vadd.f32 0.0, %v1992
        %v1994 = vpop.f32.mrb[0].mxu0
        %1995 = vmatprep.mubr.bf16.mxu0 0
        %1996 = vmatmul.mubr.bf16.gmra.mrb[0].mxu0 %v1053
        %v1997 = vpop.f32.mrb[0].mxu0
        %v1998 = vadd.f32 0.0, %v1997
        %v1999 = vpop.f32.mrb[0].mxu0
        %v2000 = vpop.f32.mrb[0].mxu0
        %v2001 = vadd.f32 0.0, %v2000
        %v2002 = vpop.f32.mrb[0].mxu0
        %2003 = vmatprep.mubr.bf16.mxu0 0
        %2004 = vmatmul.mubr.bf16.gmra.mrb[0].mxu0 %v1054
        %v2005 = vpop.f32.mrb[0].mxu0
        %v2006 = vadd.f32 0.0, %v2005
        %v2007 = vpop.f32.mrb[0].mxu0
        %v2008 = vpop.f32.mrb[0].mxu0
        %v2009 = vadd.f32 0.0, %v2008
        %v2010 = vpop.f32.mrb[0].mxu0
        %2011 = vmatprep.mubr.bf16.mxu0 0
        %2012 = vmatmul.mubr.bf16.gmra.mrb[0].mxu0 %v1055
        %v2013 = vpop.f32.mrb[0].mxu0
        %v2014 = vadd.f32 0.0, %v2013
        %v2015 = vpop.f32.mrb[0].mxu0
        %v2016 = vpop.f32.mrb[0].mxu0
        %v2017 = vadd.f32 0.0, %v2016
        %v2018 = vpop.f32.mrb[0].mxu0
        %2019 = vmatprep.mubr.bf16.mxu0 0
        %2020 = vmatmul.mubr.bf16.gmra.mrb[0].mxu0 %v1056
        %v2021 = vpop.f32.mrb[0].mxu0
        %v2022 = vadd.f32 0.0, %v2021
        %v2023 = vpop.f32.mrb[0].mxu0
        %v2024 = vpop.f32.mrb[0].mxu0
        %v2025 = vadd.f32 0.0, %v2024
        %v2026 = vpop.f32.mrb[0].mxu0
        %2027 = vmatprep.mubr.bf16.mxu0 0
        %2028 = vmatmul.mubr.bf16.gmra.mrb[0].mxu0 %v1057
        %v2029 = vpop.f32.mrb[0].mxu0
        %v2030 = vadd.f32 0.0, %v2029
        %v2031 = vpop.f32.mrb[0].mxu0
        %v2032 = vpop.f32.mrb[0].mxu0
        %v2033 = vadd.f32 0.0, %v2032
        %v2034 = vpop.f32.mrb[0].mxu0
        %2035 = vmatprep.mubr.bf16.mxu0 0
        %2036 = vmatmul.mubr.bf16.gmra.mrb[0].mxu0 %v1058
        %v2037 = vpop.f32.mrb[0].mxu0
        %v2038 = vadd.f32 0.0, %v2037
        %v2039 = vpop.f32.mrb[0].mxu0
        %v2040 = vpop.f32.mrb[0].mxu0
        %v2041 = vadd.f32 0.0, %v2040
        %v2042 = vpop.f32.mrb[0].mxu0
        %2043 = vmatprep.mubr.bf16.mxu0 0
        %2044 = vmatmul.mubr.bf16.gmra.mrb[0].mxu0 %v1059
        %v2045 = vpop.f32.mrb[0].mxu0
        %v2046 = vadd.f32 0.0, %v2045
        %v2047 = vpop.f32.mrb[0].mxu0
        %v2048 = vpop.f32.mrb[0].mxu0
        %v2049 = vadd.f32 0.0, %v2048
        %v2050 = vpop.f32.mrb[0].mxu0
        %2051 = vmatprep.mubr.bf16.mxu0 0
        %2052 = vmatmul.mubr.bf16.gmra.mrb[0].mxu0 %v1060
        %v2053 = vpop.f32.mrb[0].mxu0
        %v2054 = vadd.f32 0.0, %v2053
        %v2055 = vpop.f32.mrb[0].mxu0
        %v2056 = vpop.f32.mrb[0].mxu0
        %v2057 = vadd.f32 0.0, %v2056
        %v2058 = vpop.f32.mrb[0].mxu0
        %2059 = vmatprep.mubr.bf16.mxu0 0
        %2060 = vmatmul.mubr.bf16.gmra.mrb[0].mxu0 %v1061
        %v2061 = vpop.f32.mrb[0].mxu0
        %v2062 = vadd.f32 0.0, %v2061
        %v2063 = vpop.f32.mrb[0].mxu0
        %v2064 = vpop.f32.mrb[0].mxu0
        %v2065 = vadd.f32 0.0, %v2064
        %v2066 = vpop.f32.mrb[0].mxu0
        %2067 = vmatprep.mubr.bf16.mxu0 0
        %2068 = vmatmul.mubr.bf16.gmra.mrb[0].mxu0 %v1062
        %v2069 = vpop.f32.mrb[0].mxu0
        %v2070 = vadd.f32 0.0, %v2069
        %v2071 = vpop.f32.mrb[0].mxu0
        %v2072 = vpop.f32.mrb[0].mxu0
        %v2073 = vadd.f32 0.0, %v2072
        %v2074 = vpop.f32.mrb[0].mxu0
        %2075 = vmatprep.mubr.bf16.mxu0 0
        %2076 = vmatmul.mubr.bf16.gmra.mrb[0].mxu0 %v1063
        %v2077 = vpop.f32.mrb[0].mxu0
        %v2078 = vadd.f32 0.0, %v2077
        %v2079 = vpop.f32.mrb[0].mxu0
        %v2080 = vpop.f32.mrb[0].mxu0
        %v2081 = vadd.f32 0.0, %v2080
        %v2082 = vpop.f32.mrb[0].mxu0
        %2083 = vmatprep.mubr.bf16.mxu0 0
        %2084 = vmatmul.mubr.bf16.gmra.mrb[0].mxu0 %v1064
        %v2085 = vpop.f32.mrb[0].mxu0
        %v2086 = vadd.f32 0.0, %v2085
        %v2087 = vpop.f32.mrb[0].mxu0
        %v2088 = vpop.f32.mrb[0].mxu0
        %v2089 = vadd.f32 0.0, %v2088
        %v2090 = vpop.f32.mrb[0].mxu0
        %2091 = vmatprep.mubr.bf16.mxu0 0
        %2092 = vmatmul.mubr.bf16.gmra.mrb[0].mxu0 %v1065
        %v2093 = vpop.f32.mrb[0].mxu0
        %v2094 = vadd.f32 0.0, %v2093
        %v2095 = vpop.f32.mrb[0].mxu0
        %v2096 = vpop.f32.mrb[0].mxu0
        %v2097 = vadd.f32 0.0, %v2096
        %v2098 = vpop.f32.mrb[0].mxu0
        %2099 = vmatprep.mubr.bf16.mxu0 0
        %2100 = vmatmul.mubr.bf16.gmra.mrb[0].mxu0 %v1066
        %v2101 = vpop.f32.mrb[0].mxu0
        %v2102 = vadd.f32 0.0, %v2101
        %v2103 = vpop.f32.mrb[0].mxu0
        %v2104 = vpop.f32.mrb[0].mxu0
        %v2105 = vadd.f32 0.0, %v2104
        %v2106 = vpop.f32.mrb[0].mxu0
        %2107 = vmatprep.mubr.bf16.mxu0 0
        %2108 = vmatmul.mubr.bf16.gmra.mrb[0].mxu0 %v1067
        %v2109 = vpop.f32.mrb[0].mxu0
        %v2110 = vadd.f32 0.0, %v2109
        %v2111 = vpop.f32.mrb[0].mxu0
        %v2112 = vpop.f32.mrb[0].mxu0
        %v2113 = vadd.f32 0.0, %v2112
        %v2114 = vpop.f32.mrb[0].mxu0
        %2115 = vdwg.mxu0
        %v2116 = vadd.f32 %v1858, %v1990
        %v2117 = vadd.f32 %v1859, %v1993
        %v2118 = vadd.f32 %v1860, %v1998
        %v2119 = vadd.f32 %v1861, %v2001
        %v2120 = vadd.f32 %v1862, %v2006
        %v2121 = vadd.f32 %v1863, %v2009
        %v2122 = vadd.f32 %v1864, %v2014
        %v2123 = vadd.f32 %v1865, %v2017
        %v2124 = vadd.f32 %v1866, %v2022
        %v2125 = vadd.f32 %v1867, %v2025
        %v2126 = vadd.f32 %v1868, %v2030
        %v2127 = vadd.f32 %v1869, %v2033
        %v2128 = vadd.f32 %v1870, %v2038
        %v2129 = vadd.f32 %v1871, %v2041
        %v2130 = vadd.f32 %v1872, %v2046
        %v2131 = vadd.f32 %v1873, %v2049
        %v2132 = vadd.f32 %v1874, %v2054
        %v2133 = vadd.f32 %v1875, %v2057
        %v2134 = vadd.f32 %v1876, %v2062
        %v2135 = vadd.f32 %v1877, %v2065
        %v2136 = vadd.f32 %v1878, %v2070
        %v2137 = vadd.f32 %v1879, %v2073
        %v2138 = vadd.f32 %v1880, %v2078
        %v2139 = vadd.f32 %v1881, %v2081
        %v2140 = vadd.f32 %v1882, %v2086
        %v2141 = vadd.f32 %v1883, %v2089
        %v2142 = vadd.f32 %v1884, %v2094
        %v2143 = vadd.f32 %v1885, %v2097
        %v2144 = vadd.f32 %v1886, %v2102
        %v2145 = vadd.f32 %v1887, %v2105
        %v2146 = vadd.f32 %v1888, %v2110
        %v2147 = vadd.f32 %v1889, %v2113
        %s2148 = scalar_lea.vmem [#allocation5], 256
        %v2149 = vld [vmem:[%s2148] sm:$0xf]
        %v2150 = vld [vmem:[%s2148 + $0x4] sm:$0xf]
        %v2151 = vld [vmem:[%s2148 + $0x8] sm:$0xf]
        %v2152 = vld [vmem:[%s2148 + $0xc] sm:$0xf]
        %v2153 = vld [vmem:[%s2148 + $0x10] sm:$0xf]
        %v2154 = vld [vmem:[%s2148 + $0x14] sm:$0xf]
        %v2155 = vld [vmem:[%s2148 + $0x18] sm:$0xf]
        %v2156 = vld [vmem:[%s2148 + $0x1c] sm:$0xf]
        %v2157 = vld [vmem:[%s2148 + $0x20] sm:$0xf]
        %v2158 = vld [vmem:[%s2148 + $0x24] sm:$0xf]
        %v2159 = vld [vmem:[%s2148 + $0x28] sm:$0xf]
        %v2160 = vld [vmem:[%s2148 + $0x2c] sm:$0xf]
        %v2161 = vld [vmem:[%s2148 + $0x30] sm:$0xf]
        %v2162 = vld [vmem:[%s2148 + $0x34] sm:$0xf]
        %v2163 = vld [vmem:[%s2148 + $0x38] sm:$0xf]
        %v2164 = vld [vmem:[%s2148 + $0x3c] sm:$0xf]
        %v2181 = vunpack.c.l.b16 %v2149
        %v2182 = vunpack.c.l.b16 %v2150
        %v2183 = vunpack.c.l.b16 %v2151
        %v2184 = vunpack.c.l.b16 %v2152
        %v2185 = vunpack.c.l.b16 %v2153
        %v2186 = vunpack.c.l.b16 %v2154
        %v2187 = vunpack.c.l.b16 %v2155
        %v2188 = vunpack.c.l.b16 %v2156
        %v2189 = vunpack.c.l.b16 %v2157
        %v2190 = vunpack.c.l.b16 %v2158
        %v2191 = vunpack.c.l.b16 %v2159
        %v2192 = vunpack.c.l.b16 %v2160
        %v2193 = vunpack.c.l.b16 %v2161
        %v2194 = vunpack.c.l.b16 %v2162
        %v2195 = vunpack.c.l.b16 %v2163
        %v2196 = vunpack.c.l.b16 %v2164
        %v2197 = vpack.c.b16 %v2182, %v2181
        %v2198 = vpack.c.b16 %v2184, %v2183
        %v2199 = vpack.c.b16 %v2186, %v2185
        %v2200 = vpack.c.b16 %v2188, %v2187
        %v2201 = vpack.c.b16 %v2190, %v2189
        %v2202 = vpack.c.b16 %v2192, %v2191
        %v2203 = vpack.c.b16 %v2194, %v2193
        %v2204 = vpack.c.b16 %v2196, %v2195
        %2213 = vmatprep.subr.bf16.mxu0 0
        %2214 = vmatpush1.bf16.msra.mxu0 %v2197
        %2215 = vmatprep.subr.bf16.mxu0 0
        %2216 = vmatpush1.bf16.msra.mxu0 %v2198
        %2217 = vmatprep.subr.bf16.mxu0 0
        %2218 = vmatpush1.bf16.msra.mxu0 %v2199
        %2219 = vmatprep.subr.bf16.mxu0 0
        %2220 = vmatpush1.bf16.msra.mxu0 %v2200
        %2221 = vmatprep.subr.bf16.mxu0 0
        %2222 = vmatpush1.bf16.msra.mxu0 %v2201
        %2223 = vmatprep.subr.bf16.mxu0 0
        %2224 = vmatpush1.bf16.msra.mxu0 %v2202
        %2225 = vmatprep.subr.bf16.mxu0 0
        %2226 = vmatpush1.bf16.msra.mxu0 %v2203
        %2227 = vmatprep.subr.bf16.mxu0 0
        %2228 = vmatpush1.bf16.msra.mxu0 %v2204
        %2229 = vmatprep.subr.bf16.mxu0 0
        %2230 = vmatpush1.bf16.msra.mxu0 0
        %2231 = vmatprep.subr.bf16.mxu0 0
        %2232 = vmatpush1.bf16.msra.mxu0 0
        %2233 = vmatprep.subr.bf16.mxu0 0
        %2234 = vmatpush1.bf16.msra.mxu0 0
        %2235 = vmatprep.subr.bf16.mxu0 0
        %2236 = vmatpush1.bf16.msra.mxu0 0
        %2237 = vmatprep.subr.bf16.mxu0 0
        %2238 = vmatpush1.bf16.msra.mxu0 0
        %2239 = vmatprep.subr.bf16.mxu0 0
        %2240 = vmatpush1.bf16.msra.mxu0 0
        %2241 = vmatprep.subr.bf16.mxu0 0
        %2242 = vmatpush1.bf16.msra.mxu0 0
        %2243 = vmatprep.subr.bf16.mxu0 0
        %2244 = vmatpush1.bf16.msra.mxu0 0
        %2245 = vmatprep.mubr.bf16.mxu0 0
        %2246 = vmatmul.mubr.bf16.gmra.mrb[0].mxu0 %v1053
        %v2247 = vpop.f32.mrb[0].mxu0
        %v2248 = vadd.f32 0.0, %v2247
        %v2249 = vpop.f32.mrb[0].mxu0
        %v2250 = vpop.f32.mrb[0].mxu0
        %v2251 = vadd.f32 0.0, %v2250
        %v2252 = vpop.f32.mrb[0].mxu0
        %2253 = vmatprep.mubr.bf16.mxu0 0
        %2254 = vmatmul.mubr.bf16.gmra.mrb[0].mxu0 %v1054
        %v2255 = vpop.f32.mrb[0].mxu0
        %v2256 = vadd.f32 0.0, %v2255
        %v2257 = vpop.f32.mrb[0].mxu0
        %v2258 = vpop.f32.mrb[0].mxu0
        %v2259 = vadd.f32 0.0, %v2258
        %v2260 = vpop.f32.mrb[0].mxu0
        %2261 = vmatprep.mubr.bf16.mxu0 0
        %2262 = vmatmul.mubr.bf16.gmra.mrb[0].mxu0 %v1055
        %v2263 = vpop.f32.mrb[0].mxu0
        %v2264 = vadd.f32 0.0, %v2263
        %v2265 = vpop.f32.mrb[0].mxu0
        %v2266 = vpop.f32.mrb[0].mxu0
        %v2267 = vadd.f32 0.0, %v2266
        %v2268 = vpop.f32.mrb[0].mxu0
        %2269 = vmatprep.mubr.bf16.mxu0 0
        %2270 = vmatmul.mubr.bf16.gmra.mrb[0].mxu0 %v1056
        %v2271 = vpop.f32.mrb[0].mxu0
        %v2272 = vadd.f32 0.0, %v2271
        %v2273 = vpop.f32.mrb[0].mxu0
        %v2274 = vpop.f32.mrb[0].mxu0
        %v2275 = vadd.f32 0.0, %v2274
        %v2276 = vpop.f32.mrb[0].mxu0
        %2277 = vmatprep.mubr.bf16.mxu0 0
        %2278 = vmatmul.mubr.bf16.gmra.mrb[0].mxu0 %v1057
        %v2279 = vpop.f32.mrb[0].mxu0
        %v2280 = vadd.f32 0.0, %v2279
        %v2281 = vpop.f32.mrb[0].mxu0
        %v2282 = vpop.f32.mrb[0].mxu0
        %v2283 = vadd.f32 0.0, %v2282
        %v2284 = vpop.f32.mrb[0].mxu0
        %2285 = vmatprep.mubr.bf16.mxu0 0
        %2286 = vmatmul.mubr.bf16.gmra.mrb[0].mxu0 %v1058
        %v2287 = vpop.f32.mrb[0].mxu0
        %v2288 = vadd.f32 0.0, %v2287
        %v2289 = vpop.f32.mrb[0].mxu0
        %v2290 = vpop.f32.mrb[0].mxu0
        %v2291 = vadd.f32 0.0, %v2290
        %v2292 = vpop.f32.mrb[0].mxu0
        %2293 = vmatprep.mubr.bf16.mxu0 0
        %2294 = vmatmul.mubr.bf16.gmra.mrb[0].mxu0 %v1059
        %v2295 = vpop.f32.mrb[0].mxu0
        %v2296 = vadd.f32 0.0, %v2295
        %v2297 = vpop.f32.mrb[0].mxu0
        %v2298 = vpop.f32.mrb[0].mxu0
        %v2299 = vadd.f32 0.0, %v2298
        %v2300 = vpop.f32.mrb[0].mxu0
        %2301 = vmatprep.mubr.bf16.mxu0 0
        %2302 = vmatmul.mubr.bf16.gmra.mrb[0].mxu0 %v1060
        %v2303 = vpop.f32.mrb[0].mxu0
        %v2304 = vadd.f32 0.0, %v2303
        %v2305 = vpop.f32.mrb[0].mxu0
        %v2306 = vpop.f32.mrb[0].mxu0
        %v2307 = vadd.f32 0.0, %v2306
        %v2308 = vpop.f32.mrb[0].mxu0
        %2309 = vmatprep.mubr.bf16.mxu0 0
        %2310 = vmatmul.mubr.bf16.gmra.mrb[0].mxu0 %v1061
        %v2311 = vpop.f32.mrb[0].mxu0
        %v2312 = vadd.f32 0.0, %v2311
        %v2313 = vpop.f32.mrb[0].mxu0
        %v2314 = vpop.f32.mrb[0].mxu0
        %v2315 = vadd.f32 0.0, %v2314
        %v2316 = vpop.f32.mrb[0].mxu0
        %2317 = vmatprep.mubr.bf16.mxu0 0
        %2318 = vmatmul.mubr.bf16.gmra.mrb[0].mxu0 %v1062
        %v2319 = vpop.f32.mrb[0].mxu0
        %v2320 = vadd.f32 0.0, %v2319
        %v2321 = vpop.f32.mrb[0].mxu0
        %v2322 = vpop.f32.mrb[0].mxu0
        %v2323 = vadd.f32 0.0, %v2322
        %v2324 = vpop.f32.mrb[0].mxu0
        %2325 = vmatprep.mubr.bf16.mxu0 0
        %2326 = vmatmul.mubr.bf16.gmra.mrb[0].mxu0 %v1063
        %v2327 = vpop.f32.mrb[0].mxu0
        %v2328 = vadd.f32 0.0, %v2327
        %v2329 = vpop.f32.mrb[0].mxu0
        %v2330 = vpop.f32.mrb[0].mxu0
        %v2331 = vadd.f32 0.0, %v2330
        %v2332 = vpop.f32.mrb[0].mxu0
        %2333 = vmatprep.mubr.bf16.mxu0 0
        %2334 = vmatmul.mubr.bf16.gmra.mrb[0].mxu0 %v1064
        %v2335 = vpop.f32.mrb[0].mxu0
        %v2336 = vadd.f32 0.0, %v2335
        %v2337 = vpop.f32.mrb[0].mxu0
        %v2338 = vpop.f32.mrb[0].mxu0
        %v2339 = vadd.f32 0.0, %v2338
        %v2340 = vpop.f32.mrb[0].mxu0
        %2341 = vmatprep.mubr.bf16.mxu0 0
        %2342 = vmatmul.mubr.bf16.gmra.mrb[0].mxu0 %v1065
        %v2343 = vpop.f32.mrb[0].mxu0
        %v2344 = vadd.f32 0.0, %v2343
        %v2345 = vpop.f32.mrb[0].mxu0
        %v2346 = vpop.f32.mrb[0].mxu0
        %v2347 = vadd.f32 0.0, %v2346
        %v2348 = vpop.f32.mrb[0].mxu0
        %2349 = vmatprep.mubr.bf16.mxu0 0
        %2350 = vmatmul.mubr.bf16.gmra.mrb[0].mxu0 %v1066
        %v2351 = vpop.f32.mrb[0].mxu0
        %v2352 = vadd.f32 0.0, %v2351
        %v2353 = vpop.f32.mrb[0].mxu0
        %v2354 = vpop.f32.mrb[0].mxu0
        %v2355 = vadd.f32 0.0, %v2354
        %v2356 = vpop.f32.mrb[0].mxu0
        %2357 = vmatprep.mubr.bf16.mxu0 0
        %2358 = vmatmul.mubr.bf16.gmra.mrb[0].mxu0 %v1067
        %v2359 = vpop.f32.mrb[0].mxu0
        %v2360 = vadd.f32 0.0, %v2359
        %v2361 = vpop.f32.mrb[0].mxu0
        %v2362 = vpop.f32.mrb[0].mxu0
        %v2363 = vadd.f32 0.0, %v2362
        %v2364 = vpop.f32.mrb[0].mxu0
        %2365 = vmatprep.mubr.bf16.mxu0 0
        %2366 = vmatmul.mubr.bf16.gmra.mrb[0].mxu0 %v1068
        %v2367 = vpop.f32.mrb[0].mxu0
        %v2368 = vadd.f32 0.0, %v2367
        %v2369 = vpop.f32.mrb[0].mxu0
        %v2370 = vpop.f32.mrb[0].mxu0
        %v2371 = vadd.f32 0.0, %v2370
        %v2372 = vpop.f32.mrb[0].mxu0
        %2373 = vdwg.mxu0
        %v2374 = vadd.f32 %v2116, %v2248
        %v2375 = vadd.f32 %v2117, %v2251
        %v2376 = vadd.f32 %v2118, %v2256
        %v2377 = vadd.f32 %v2119, %v2259
        %v2378 = vadd.f32 %v2120, %v2264
        %v2379 = vadd.f32 %v2121, %v2267
        %v2380 = vadd.f32 %v2122, %v2272
        %v2381 = vadd.f32 %v2123, %v2275
        %v2382 = vadd.f32 %v2124, %v2280
        %v2383 = vadd.f32 %v2125, %v2283
        %v2384 = vadd.f32 %v2126, %v2288
        %v2385 = vadd.f32 %v2127, %v2291
        %v2386 = vadd.f32 %v2128, %v2296
        %v2387 = vadd.f32 %v2129, %v2299
        %v2388 = vadd.f32 %v2130, %v2304
        %v2389 = vadd.f32 %v2131, %v2307
        %v2390 = vadd.f32 %v2132, %v2312
        %v2391 = vadd.f32 %v2133, %v2315
        %v2392 = vadd.f32 %v2134, %v2320
        %v2393 = vadd.f32 %v2135, %v2323
        %v2394 = vadd.f32 %v2136, %v2328
        %v2395 = vadd.f32 %v2137, %v2331
        %v2396 = vadd.f32 %v2138, %v2336
        %v2397 = vadd.f32 %v2139, %v2339
        %v2398 = vadd.f32 %v2140, %v2344
        %v2399 = vadd.f32 %v2141, %v2347
        %v2400 = vadd.f32 %v2142, %v2352
        %v2401 = vadd.f32 %v2143, %v2355
        %v2402 = vadd.f32 %v2144, %v2360
        %v2403 = vadd.f32 %v2145, %v2363
        %v2404 = vadd.f32 %v2146, %v2368
        %v2405 = vadd.f32 %v2147, %v2371
        %s2406 = scalar_lea.vmem [#allocation5], 448
        %v2407 = vld [vmem:[%s2406] sm:$0xf]
        %v2408 = vld [vmem:[%s2406 + $0x4] sm:$0xf]
        %v2409 = vld [vmem:[%s2406 + $0x8] sm:$0xf]
        %v2410 = vld [vmem:[%s2406 + $0xc] sm:$0xf]
        %v2411 = vld [vmem:[%s2406 + $0x10] sm:$0xf]
        %v2412 = vld [vmem:[%s2406 + $0x14] sm:$0xf]
        %v2413 = vld [vmem:[%s2406 + $0x18] sm:$0xf]
        %v2414 = vld [vmem:[%s2406 + $0x1c] sm:$0xf]
        %v2415 = vld [vmem:[%s2406 + $0x20] sm:$0xf]
        %v2416 = vld [vmem:[%s2406 + $0x24] sm:$0xf]
        %v2417 = vld [vmem:[%s2406 + $0x28] sm:$0xf]
        %v2418 = vld [vmem:[%s2406 + $0x2c] sm:$0xf]
        %v2419 = vld [vmem:[%s2406 + $0x30] sm:$0xf]
        %v2420 = vld [vmem:[%s2406 + $0x34] sm:$0xf]
        %v2421 = vld [vmem:[%s2406 + $0x38] sm:$0xf]
        %v2422 = vld [vmem:[%s2406 + $0x3c] sm:$0xf]
        %v2439 = vunpack.c.l.b16 %v2407
        %v2440 = vunpack.c.l.b16 %v2408
        %v2441 = vunpack.c.l.b16 %v2409
        %v2442 = vunpack.c.l.b16 %v2410
        %v2443 = vunpack.c.l.b16 %v2411
        %v2444 = vunpack.c.l.b16 %v2412
        %v2445 = vunpack.c.l.b16 %v2413
        %v2446 = vunpack.c.l.b16 %v2414
        %v2447 = vunpack.c.l.b16 %v2415
        %v2448 = vunpack.c.l.b16 %v2416
        %v2449 = vunpack.c.l.b16 %v2417
        %v2450 = vunpack.c.l.b16 %v2418
        %v2451 = vunpack.c.l.b16 %v2419
        %v2452 = vunpack.c.l.b16 %v2420
        %v2453 = vunpack.c.l.b16 %v2421
        %v2454 = vunpack.c.l.b16 %v2422
        %v2455 = vpack.c.b16 %v2440, %v2439
        %v2456 = vpack.c.b16 %v2442, %v2441
        %v2457 = vpack.c.b16 %v2444, %v2443
        %v2458 = vpack.c.b16 %v2446, %v2445
        %v2459 = vpack.c.b16 %v2448, %v2447
        %v2460 = vpack.c.b16 %v2450, %v2449
        %v2461 = vpack.c.b16 %v2452, %v2451
        %v2462 = vpack.c.b16 %v2454, %v2453
        %2471 = vmatprep.subr.bf16.mxu0 0
        %2472 = vmatpush1.bf16.msra.mxu0 %v2455
        %2473 = vmatprep.subr.bf16.mxu0 0
        %2474 = vmatpush1.bf16.msra.mxu0 %v2456
        %2475 = vmatprep.subr.bf16.mxu0 0
        %2476 = vmatpush1.bf16.msra.mxu0 %v2457
        %2477 = vmatprep.subr.bf16.mxu0 0
        %2478 = vmatpush1.bf16.msra.mxu0 %v2458
        %2479 = vmatprep.subr.bf16.mxu0 0
        %2480 = vmatpush1.bf16.msra.mxu0 %v2459
        %2481 = vmatprep.subr.bf16.mxu0 0
        %2482 = vmatpush1.bf16.msra.mxu0 %v2460
        %2483 = vmatprep.subr.bf16.mxu0 0
        %2484 = vmatpush1.bf16.msra.mxu0 %v2461
        %2485 = vmatprep.subr.bf16.mxu0 0
        %2486 = vmatpush1.bf16.msra.mxu0 %v2462
        %2487 = vmatprep.subr.bf16.mxu0 0
        %2488 = vmatpush1.bf16.msra.mxu0 0
        %2489 = vmatprep.subr.bf16.mxu0 0
        %2490 = vmatpush1.bf16.msra.mxu0 0
        %2491 = vmatprep.subr.bf16.mxu0 0
        %2492 = vmatpush1.bf16.msra.mxu0 0
        %2493 = vmatprep.subr.bf16.mxu0 0
        %2494 = vmatpush1.bf16.msra.mxu0 0
        %2495 = vmatprep.subr.bf16.mxu0 0
        %2496 = vmatpush1.bf16.msra.mxu0 0
        %2497 = vmatprep.subr.bf16.mxu0 0
        %2498 = vmatpush1.bf16.msra.mxu0 0
        %2499 = vmatprep.subr.bf16.mxu0 0
        %2500 = vmatpush1.bf16.msra.mxu0 0
        %2501 = vmatprep.subr.bf16.mxu0 0
        %2502 = vmatpush1.bf16.msra.mxu0 0
        %2503 = vmatprep.mubr.bf16.mxu0 0
        %2504 = vmatmul.mubr.bf16.gmra.mrb[0].mxu0 %v1054
        %v2505 = vpop.f32.mrb[0].mxu0
        %v2506 = vadd.f32 0.0, %v2505
        %v2507 = vpop.f32.mrb[0].mxu0
        %v2508 = vpop.f32.mrb[0].mxu0
        %v2509 = vadd.f32 0.0, %v2508
        %v2510 = vpop.f32.mrb[0].mxu0
        %2511 = vmatprep.mubr.bf16.mxu0 0
        %2512 = vmatmul.mubr.bf16.gmra.mrb[0].mxu0 %v1055
        %v2513 = vpop.f32.mrb[0].mxu0
        %v2514 = vadd.f32 0.0, %v2513
        %v2515 = vpop.f32.mrb[0].mxu0
        %v2516 = vpop.f32.mrb[0].mxu0
        %v2517 = vadd.f32 0.0, %v2516
        %v2518 = vpop.f32.mrb[0].mxu0
        %2519 = vmatprep.mubr.bf16.mxu0 0
        %2520 = vmatmul.mubr.bf16.gmra.mrb[0].mxu0 %v1056
        %v2521 = vpop.f32.mrb[0].mxu0
        %v2522 = vadd.f32 0.0, %v2521
        %v2523 = vpop.f32.mrb[0].mxu0
        %v2524 = vpop.f32.mrb[0].mxu0
        %v2525 = vadd.f32 0.0, %v2524
        %v2526 = vpop.f32.mrb[0].mxu0
        %2527 = vmatprep.mubr.bf16.mxu0 0
        %2528 = vmatmul.mubr.bf16.gmra.mrb[0].mxu0 %v1057
        %v2529 = vpop.f32.mrb[0].mxu0
        %v2530 = vadd.f32 0.0, %v2529
        %v2531 = vpop.f32.mrb[0].mxu0
        %v2532 = vpop.f32.mrb[0].mxu0
        %v2533 = vadd.f32 0.0, %v2532
        %v2534 = vpop.f32.mrb[0].mxu0
        %2535 = vmatprep.mubr.bf16.mxu0 0
        %2536 = vmatmul.mubr.bf16.gmra.mrb[0].mxu0 %v1058
        %v2537 = vpop.f32.mrb[0].mxu0
        %v2538 = vadd.f32 0.0, %v2537
        %v2539 = vpop.f32.mrb[0].mxu0
        %v2540 = vpop.f32.mrb[0].mxu0
        %v2541 = vadd.f32 0.0, %v2540
        %v2542 = vpop.f32.mrb[0].mxu0
        %2543 = vmatprep.mubr.bf16.mxu0 0
        %2544 = vmatmul.mubr.bf16.gmra.mrb[0].mxu0 %v1059
        %v2545 = vpop.f32.mrb[0].mxu0
        %v2546 = vadd.f32 0.0, %v2545
        %v2547 = vpop.f32.mrb[0].mxu0
        %v2548 = vpop.f32.mrb[0].mxu0
        %v2549 = vadd.f32 0.0, %v2548
        %v2550 = vpop.f32.mrb[0].mxu0
        %2551 = vmatprep.mubr.bf16.mxu0 0
        %2552 = vmatmul.mubr.bf16.gmra.mrb[0].mxu0 %v1060
        %v2553 = vpop.f32.mrb[0].mxu0
        %v2554 = vadd.f32 0.0, %v2553
        %v2555 = vpop.f32.mrb[0].mxu0
        %v2556 = vpop.f32.mrb[0].mxu0
        %v2557 = vadd.f32 0.0, %v2556
        %v2558 = vpop.f32.mrb[0].mxu0
        %2559 = vmatprep.mubr.bf16.mxu0 0
        %2560 = vmatmul.mubr.bf16.gmra.mrb[0].mxu0 %v1061
        %v2561 = vpop.f32.mrb[0].mxu0
        %v2562 = vadd.f32 0.0, %v2561
        %v2563 = vpop.f32.mrb[0].mxu0
        %v2564 = vpop.f32.mrb[0].mxu0
        %v2565 = vadd.f32 0.0, %v2564
        %v2566 = vpop.f32.mrb[0].mxu0
        %2567 = vmatprep.mubr.bf16.mxu0 0
        %2568 = vmatmul.mubr.bf16.gmra.mrb[0].mxu0 %v1062
        %v2569 = vpop.f32.mrb[0].mxu0
        %v2570 = vadd.f32 0.0, %v2569
        %v2571 = vpop.f32.mrb[0].mxu0
        %v2572 = vpop.f32.mrb[0].mxu0
        %v2573 = vadd.f32 0.0, %v2572
        %v2574 = vpop.f32.mrb[0].mxu0
        %2575 = vmatprep.mubr.bf16.mxu0 0
        %2576 = vmatmul.mubr.bf16.gmra.mrb[0].mxu0 %v1063
        %v2577 = vpop.f32.mrb[0].mxu0
        %v2578 = vadd.f32 0.0, %v2577
        %v2579 = vpop.f32.mrb[0].mxu0
        %v2580 = vpop.f32.mrb[0].mxu0
        %v2581 = vadd.f32 0.0, %v2580
        %v2582 = vpop.f32.mrb[0].mxu0
        %2583 = vmatprep.mubr.bf16.mxu0 0
        %2584 = vmatmul.mubr.bf16.gmra.mrb[0].mxu0 %v1064
        %v2585 = vpop.f32.mrb[0].mxu0
        %v2586 = vadd.f32 0.0, %v2585
        %v2587 = vpop.f32.mrb[0].mxu0
        %v2588 = vpop.f32.mrb[0].mxu0
        %v2589 = vadd.f32 0.0, %v2588
        %v2590 = vpop.f32.mrb[0].mxu0
        %2591 = vmatprep.mubr.bf16.mxu0 0
        %2592 = vmatmul.mubr.bf16.gmra.mrb[0].mxu0 %v1065
        %v2593 = vpop.f32.mrb[0].mxu0
        %v2594 = vadd.f32 0.0, %v2593
        %v2595 = vpop.f32.mrb[0].mxu0
        %v2596 = vpop.f32.mrb[0].mxu0
        %v2597 = vadd.f32 0.0, %v2596
        %v2598 = vpop.f32.mrb[0].mxu0
        %2599 = vmatprep.mubr.bf16.mxu0 0
        %2600 = vmatmul.mubr.bf16.gmra.mrb[0].mxu0 %v1066
        %v2601 = vpop.f32.mrb[0].mxu0
        %v2602 = vadd.f32 0.0, %v2601
        %v2603 = vpop.f32.mrb[0].mxu0
        %v2604 = vpop.f32.mrb[0].mxu0
        %v2605 = vadd.f32 0.0, %v2604
        %v2606 = vpop.f32.mrb[0].mxu0
        %2607 = vmatprep.mubr.bf16.mxu0 0
        %2608 = vmatmul.mubr.bf16.gmra.mrb[0].mxu0 %v1067
        %v2609 = vpop.f32.mrb[0].mxu0
        %v2610 = vadd.f32 0.0, %v2609
        %v2611 = vpop.f32.mrb[0].mxu0
        %v2612 = vpop.f32.mrb[0].mxu0
        %v2613 = vadd.f32 0.0, %v2612
        %v2614 = vpop.f32.mrb[0].mxu0
        %2615 = vmatprep.mubr.bf16.mxu0 0
        %2616 = vmatmul.mubr.bf16.gmra.mrb[0].mxu0 %v1068
        %v2617 = vpop.f32.mrb[0].mxu0
        %v2618 = vadd.f32 0.0, %v2617
        %v2619 = vpop.f32.mrb[0].mxu0
        %v2620 = vpop.f32.mrb[0].mxu0
        %v2621 = vadd.f32 0.0, %v2620
        %v2622 = vpop.f32.mrb[0].mxu0
        %2623 = vmatprep.mubr.bf16.mxu0 0
        %2624 = vmatmul.mubr.bf16.gmra.mrb[0].mxu0 %v1067
        %v2625 = vpop.f32.mrb[0].mxu0
        %v2626 = vadd.f32 0.0, %v2625
        %v2627 = vpop.f32.mrb[0].mxu0
        %v2628 = vpop.f32.mrb[0].mxu0
        %v2629 = vadd.f32 0.0, %v2628
        %v2630 = vpop.f32.mrb[0].mxu0
        %2631 = vdwg.mxu0
        %v2632 = vadd.f32 %v2374, %v2506
        %v2633 = vadd.f32 %v2375, %v2509
        %v2634 = vadd.f32 %v2376, %v2514
        %v2635 = vadd.f32 %v2377, %v2517
        %v2636 = vadd.f32 %v2378, %v2522
        %v2637 = vadd.f32 %v2379, %v2525
        %v2638 = vadd.f32 %v2380, %v2530
        %v2639 = vadd.f32 %v2381, %v2533
        %v2640 = vadd.f32 %v2382, %v2538
        %v2641 = vadd.f32 %v2383, %v2541
        %v2642 = vadd.f32 %v2384, %v2546
        %v2643 = vadd.f32 %v2385, %v2549
        %v2644 = vadd.f32 %v2386, %v2554
        %v2645 = vadd.f32 %v2387, %v2557
        %v2646 = vadd.f32 %v2388, %v2562
        %v2647 = vadd.f32 %v2389, %v2565
        %v2648 = vadd.f32 %v2390, %v2570
        %v2649 = vadd.f32 %v2391, %v2573
        %v2650 = vadd.f32 %v2392, %v2578
        %v2651 = vadd.f32 %v2393, %v2581
        %v2652 = vadd.f32 %v2394, %v2586
        %v2653 = vadd.f32 %v2395, %v2589
        %v2654 = vadd.f32 %v2396, %v2594
        %v2655 = vadd.f32 %v2397, %v2597
        %v2656 = vadd.f32 %v2398, %v2602
        %v2657 = vadd.f32 %v2399, %v2605
        %v2658 = vadd.f32 %v2400, %v2610
        %v2659 = vadd.f32 %v2401, %v2613
        %v2660 = vadd.f32 %v2402, %v2618
        %v2661 = vadd.f32 %v2403, %v2621
        %v2662 = vadd.f32 %v2404, %v2626
        %v2663 = vadd.f32 %v2405, %v2629
        %s2664 = scalar_lea.vmem [#allocation5], 128
        %v2665 = vld [vmem:[%s2664] sm:$0xf]
        %v2666 = vld [vmem:[%s2664 + $0x4] sm:$0xf]
        %v2667 = vld [vmem:[%s2664 + $0x8] sm:$0xf]
        %v2668 = vld [vmem:[%s2664 + $0xc] sm:$0xf]
        %v2669 = vld [vmem:[%s2664 + $0x10] sm:$0xf]
        %v2670 = vld [vmem:[%s2664 + $0x14] sm:$0xf]
        %v2671 = vld [vmem:[%s2664 + $0x18] sm:$0xf]
        %v2672 = vld [vmem:[%s2664 + $0x1c] sm:$0xf]
        %v2673 = vld [vmem:[%s2664 + $0x20] sm:$0xf]
        %v2674 = vld [vmem:[%s2664 + $0x24] sm:$0xf]
        %v2675 = vld [vmem:[%s2664 + $0x28] sm:$0xf]
        %v2676 = vld [vmem:[%s2664 + $0x2c] sm:$0xf]
        %v2677 = vld [vmem:[%s2664 + $0x30] sm:$0xf]
        %v2678 = vld [vmem:[%s2664 + $0x34] sm:$0xf]
        %v2679 = vld [vmem:[%s2664 + $0x38] sm:$0xf]
        %v2680 = vld [vmem:[%s2664 + $0x3c] sm:$0xf]
        %v2697 = vunpack.c.l.b16 %v2665
        %v2698 = vunpack.c.l.b16 %v2666
        %v2699 = vunpack.c.l.b16 %v2667
        %v2700 = vunpack.c.l.b16 %v2668
        %v2701 = vunpack.c.l.b16 %v2669
        %v2702 = vunpack.c.l.b16 %v2670
        %v2703 = vunpack.c.l.b16 %v2671
        %v2704 = vunpack.c.l.b16 %v2672
        %v2705 = vunpack.c.l.b16 %v2673
        %v2706 = vunpack.c.l.b16 %v2674
        %v2707 = vunpack.c.l.b16 %v2675
        %v2708 = vunpack.c.l.b16 %v2676
        %v2709 = vunpack.c.l.b16 %v2677
        %v2710 = vunpack.c.l.b16 %v2678
        %v2711 = vunpack.c.l.b16 %v2679
        %v2712 = vunpack.c.l.b16 %v2680
        %v2713 = vpack.c.b16 %v2698, %v2697
        %v2714 = vpack.c.b16 %v2700, %v2699
        %v2715 = vpack.c.b16 %v2702, %v2701
        %v2716 = vpack.c.b16 %v2704, %v2703
        %v2717 = vpack.c.b16 %v2706, %v2705
        %v2718 = vpack.c.b16 %v2708, %v2707
        %v2719 = vpack.c.b16 %v2710, %v2709
        %v2720 = vpack.c.b16 %v2712, %v2711
        %2729 = vmatprep.subr.bf16.mxu0 0
        %2730 = vmatpush1.bf16.msra.mxu0 %v2713
        %2731 = vmatprep.subr.bf16.mxu0 0
        %2732 = vmatpush1.bf16.msra.mxu0 %v2714
        %2733 = vmatprep.subr.bf16.mxu0 0
        %2734 = vmatpush1.bf16.msra.mxu0 %v2715
        %2735 = vmatprep.subr.bf16.mxu0 0
        %2736 = vmatpush1.bf16.msra.mxu0 %v2716
        %2737 = vmatprep.subr.bf16.mxu0 0
        %2738 = vmatpush1.bf16.msra.mxu0 %v2717
        %2739 = vmatprep.subr.bf16.mxu0 0
        %2740 = vmatpush1.bf16.msra.mxu0 %v2718
        %2741 = vmatprep.subr.bf16.mxu0 0
        %2742 = vmatpush1.bf16.msra.mxu0 %v2719
        %2743 = vmatprep.subr.bf16.mxu0 0
        %2744 = vmatpush1.bf16.msra.mxu0 %v2720
        %2745 = vmatprep.subr.bf16.mxu0 0
        %2746 = vmatpush1.bf16.msra.mxu0 0
        %2747 = vmatprep.subr.bf16.mxu0 0
        %2748 = vmatpush1.bf16.msra.mxu0 0
        %2749 = vmatprep.subr.bf16.mxu0 0
        %2750 = vmatpush1.bf16.msra.mxu0 0
        %2751 = vmatprep.subr.bf16.mxu0 0
        %2752 = vmatpush1.bf16.msra.mxu0 0
        %2753 = vmatprep.subr.bf16.mxu0 0
        %2754 = vmatpush1.bf16.msra.mxu0 0
        %2755 = vmatprep.subr.bf16.mxu0 0
        %2756 = vmatpush1.bf16.msra.mxu0 0
        %2757 = vmatprep.subr.bf16.mxu0 0
        %2758 = vmatpush1.bf16.msra.mxu0 0
        %2759 = vmatprep.subr.bf16.mxu0 0
        %2760 = vmatpush1.bf16.msra.mxu0 0
        %2761 = vmatprep.mubr.bf16.mxu0 0
        %2762 = vmatmul.mubr.bf16.gmra.mrb[0].mxu0 %v1166
        %v2763 = vpop.f32.mrb[0].mxu0
        %v2764 = vadd.f32 0.0, %v2763
        %v2765 = vpop.f32.mrb[0].mxu0
        %v2766 = vpop.f32.mrb[0].mxu0
        %v2767 = vadd.f32 0.0, %v2766
        %v2768 = vpop.f32.mrb[0].mxu0
        %2769 = vmatprep.mubr.bf16.mxu0 0
        %2770 = vmatmul.mubr.bf16.gmra.mrb[0].mxu0 %v1165
        %v2771 = vpop.f32.mrb[0].mxu0
        %v2772 = vadd.f32 0.0, %v2771
        %v2773 = vpop.f32.mrb[0].mxu0
        %v2774 = vpop.f32.mrb[0].mxu0
        %v2775 = vadd.f32 0.0, %v2774
        %v2776 = vpop.f32.mrb[0].mxu0
        %2777 = vmatprep.mubr.bf16.mxu0 0
        %2778 = vmatmul.mubr.bf16.gmra.mrb[0].mxu0 %v1166
        %v2779 = vpop.f32.mrb[0].mxu0
        %v2780 = vadd.f32 0.0, %v2779
        %v2781 = vpop.f32.mrb[0].mxu0
        %v2782 = vpop.f32.mrb[0].mxu0
        %v2783 = vadd.f32 0.0, %v2782
        %v2784 = vpop.f32.mrb[0].mxu0
        %2785 = vmatprep.mubr.bf16.mxu0 0
        %2786 = vmatmul.mubr.bf16.gmra.mrb[0].mxu0 %v1167
        %v2787 = vpop.f32.mrb[0].mxu0
        %v2788 = vadd.f32 0.0, %v2787
        %v2789 = vpop.f32.mrb[0].mxu0
        %v2790 = vpop.f32.mrb[0].mxu0
        %v2791 = vadd.f32 0.0, %v2790
        %v2792 = vpop.f32.mrb[0].mxu0
        %2793 = vmatprep.mubr.bf16.mxu0 0
        %2794 = vmatmul.mubr.bf16.gmra.mrb[0].mxu0 %v1168
        %v2795 = vpop.f32.mrb[0].mxu0
        %v2796 = vadd.f32 0.0, %v2795
        %v2797 = vpop.f32.mrb[0].mxu0
        %v2798 = vpop.f32.mrb[0].mxu0
        %v2799 = vadd.f32 0.0, %v2798
        %v2800 = vpop.f32.mrb[0].mxu0
        %2801 = vmatprep.mubr.bf16.mxu0 0
        %2802 = vmatmul.mubr.bf16.gmra.mrb[0].mxu0 %v1169
        %v2803 = vpop.f32.mrb[0].mxu0
        %v2804 = vadd.f32 0.0, %v2803
        %v2805 = vpop.f32.mrb[0].mxu0
        %v2806 = vpop.f32.mrb[0].mxu0
        %v2807 = vadd.f32 0.0, %v2806
        %v2808 = vpop.f32.mrb[0].mxu0
        %2809 = vmatprep.mubr.bf16.mxu0 0
        %2810 = vmatmul.mubr.bf16.gmra.mrb[0].mxu0 %v1170
        %v2811 = vpop.f32.mrb[0].mxu0
        %v2812 = vadd.f32 0.0, %v2811
        %v2813 = vpop.f32.mrb[0].mxu0
        %v2814 = vpop.f32.mrb[0].mxu0
        %v2815 = vadd.f32 0.0, %v2814
        %v2816 = vpop.f32.mrb[0].mxu0
        %2817 = vmatprep.mubr.bf16.mxu0 0
        %2818 = vmatmul.mubr.bf16.gmra.mrb[0].mxu0 %v1171
        %v2819 = vpop.f32.mrb[0].mxu0
        %v2820 = vadd.f32 0.0, %v2819
        %v2821 = vpop.f32.mrb[0].mxu0
        %v2822 = vpop.f32.mrb[0].mxu0
        %v2823 = vadd.f32 0.0, %v2822
        %v2824 = vpop.f32.mrb[0].mxu0
        %2825 = vmatprep.mubr.bf16.mxu0 0
        %2826 = vmatmul.mubr.bf16.gmra.mrb[0].mxu0 %v1172
        %v2827 = vpop.f32.mrb[0].mxu0
        %v2828 = vadd.f32 0.0, %v2827
        %v2829 = vpop.f32.mrb[0].mxu0
        %v2830 = vpop.f32.mrb[0].mxu0
        %v2831 = vadd.f32 0.0, %v2830
        %v2832 = vpop.f32.mrb[0].mxu0
        %2833 = vmatprep.mubr.bf16.mxu0 0
        %2834 = vmatmul.mubr.bf16.gmra.mrb[0].mxu0 %v1173
        %v2835 = vpop.f32.mrb[0].mxu0
        %v2836 = vadd.f32 0.0, %v2835
        %v2837 = vpop.f32.mrb[0].mxu0
        %v2838 = vpop.f32.mrb[0].mxu0
        %v2839 = vadd.f32 0.0, %v2838
        %v2840 = vpop.f32.mrb[0].mxu0
        %2841 = vmatprep.mubr.bf16.mxu0 0
        %2842 = vmatmul.mubr.bf16.gmra.mrb[0].mxu0 %v1174
        %v2843 = vpop.f32.mrb[0].mxu0
        %v2844 = vadd.f32 0.0, %v2843
        %v2845 = vpop.f32.mrb[0].mxu0
        %v2846 = vpop.f32.mrb[0].mxu0
        %v2847 = vadd.f32 0.0, %v2846
        %v2848 = vpop.f32.mrb[0].mxu0
        %2849 = vmatprep.mubr.bf16.mxu0 0
        %2850 = vmatmul.mubr.bf16.gmra.mrb[0].mxu0 %v1175
        %v2851 = vpop.f32.mrb[0].mxu0
        %v2852 = vadd.f32 0.0, %v2851
        %v2853 = vpop.f32.mrb[0].mxu0
        %v2854 = vpop.f32.mrb[0].mxu0
        %v2855 = vadd.f32 0.0, %v2854
        %v2856 = vpop.f32.mrb[0].mxu0
        %2857 = vmatprep.mubr.bf16.mxu0 0
        %2858 = vmatmul.mubr.bf16.gmra.mrb[0].mxu0 %v1176
        %v2859 = vpop.f32.mrb[0].mxu0
        %v2860 = vadd.f32 0.0, %v2859
        %v2861 = vpop.f32.mrb[0].mxu0
        %v2862 = vpop.f32.mrb[0].mxu0
        %v2863 = vadd.f32 0.0, %v2862
        %v2864 = vpop.f32.mrb[0].mxu0
        %2865 = vmatprep.mubr.bf16.mxu0 0
        %2866 = vmatmul.mubr.bf16.gmra.mrb[0].mxu0 %v1177
        %v2867 = vpop.f32.mrb[0].mxu0
        %v2868 = vadd.f32 0.0, %v2867
        %v2869 = vpop.f32.mrb[0].mxu0
        %v2870 = vpop.f32.mrb[0].mxu0
        %v2871 = vadd.f32 0.0, %v2870
        %v2872 = vpop.f32.mrb[0].mxu0
        %2873 = vmatprep.mubr.bf16.mxu0 0
        %2874 = vmatmul.mubr.bf16.gmra.mrb[0].mxu0 %v1178
        %v2875 = vpop.f32.mrb[0].mxu0
        %v2876 = vadd.f32 0.0, %v2875
        %v2877 = vpop.f32.mrb[0].mxu0
        %v2878 = vpop.f32.mrb[0].mxu0
        %v2879 = vadd.f32 0.0, %v2878
        %v2880 = vpop.f32.mrb[0].mxu0
        %2881 = vmatprep.mubr.bf16.mxu0 0
        %2882 = vmatmul.mubr.bf16.gmra.mrb[0].mxu0 %v1179
        %v2883 = vpop.f32.mrb[0].mxu0
        %v2884 = vadd.f32 0.0, %v2883
        %v2885 = vpop.f32.mrb[0].mxu0
        %v2886 = vpop.f32.mrb[0].mxu0
        %v2887 = vadd.f32 0.0, %v2886
        %v2888 = vpop.f32.mrb[0].mxu0
        %2889 = vdwg.mxu0
        %v2890 = vadd.f32 %v2632, %v2764
        %v2891 = vadd.f32 %v2633, %v2767
        %v2892 = vadd.f32 %v2634, %v2772
        %v2893 = vadd.f32 %v2635, %v2775
        %v2894 = vadd.f32 %v2636, %v2780
        %v2895 = vadd.f32 %v2637, %v2783
        %v2896 = vadd.f32 %v2638, %v2788
        %v2897 = vadd.f32 %v2639, %v2791
        %v2898 = vadd.f32 %v2640, %v2796
        %v2899 = vadd.f32 %v2641, %v2799
        %v2900 = vadd.f32 %v2642, %v2804
        %v2901 = vadd.f32 %v2643, %v2807
        %v2902 = vadd.f32 %v2644, %v2812
        %v2903 = vadd.f32 %v2645, %v2815
        %v2904 = vadd.f32 %v2646, %v2820
        %v2905 = vadd.f32 %v2647, %v2823
        %v2906 = vadd.f32 %v2648, %v2828
        %v2907 = vadd.f32 %v2649, %v2831
        %v2908 = vadd.f32 %v2650, %v2836
        %v2909 = vadd.f32 %v2651, %v2839
        %v2910 = vadd.f32 %v2652, %v2844
        %v2911 = vadd.f32 %v2653, %v2847
        %v2912 = vadd.f32 %v2654, %v2852
        %v2913 = vadd.f32 %v2655, %v2855
        %v2914 = vadd.f32 %v2656, %v2860
        %v2915 = vadd.f32 %v2657, %v2863
        %v2916 = vadd.f32 %v2658, %v2868
        %v2917 = vadd.f32 %v2659, %v2871
        %v2918 = vadd.f32 %v2660, %v2876
        %v2919 = vadd.f32 %v2661, %v2879
        %v2920 = vadd.f32 %v2662, %v2884
        %v2921 = vadd.f32 %v2663, %v2887
        %s2922 = scalar_lea.vmem [#allocation5], 320
        %v2923 = vld [vmem:[%s2922] sm:$0xf]
        %v2924 = vld [vmem:[%s2922 + $0x4] sm:$0xf]
        %v2925 = vld [vmem:[%s2922 + $0x8] sm:$0xf]
        %v2926 = vld [vmem:[%s2922 + $0xc] sm:$0xf]
        %v2927 = vld [vmem:[%s2922 + $0x10] sm:$0xf]
        %v2928 = vld [vmem:[%s2922 + $0x14] sm:$0xf]
        %v2929 = vld [vmem:[%s2922 + $0x18] sm:$0xf]
        %v2930 = vld [vmem:[%s2922 + $0x1c] sm:$0xf]
        %v2931 = vld [vmem:[%s2922 + $0x20] sm:$0xf]
        %v2932 = vld [vmem:[%s2922 + $0x24] sm:$0xf]
        %v2933 = vld [vmem:[%s2922 + $0x28] sm:$0xf]
        %v2934 = vld [vmem:[%s2922 + $0x2c] sm:$0xf]
        %v2935 = vld [vmem:[%s2922 + $0x30] sm:$0xf]
        %v2936 = vld [vmem:[%s2922 + $0x34] sm:$0xf]
        %v2937 = vld [vmem:[%s2922 + $0x38] sm:$0xf]
        %v2938 = vld [vmem:[%s2922 + $0x3c] sm:$0xf]
        %v2955 = vunpack.c.l.b16 %v2923
        %v2956 = vunpack.c.l.b16 %v2924
        %v2957 = vunpack.c.l.b16 %v2925
        %v2958 = vunpack.c.l.b16 %v2926
        %v2959 = vunpack.c.l.b16 %v2927
        %v2960 = vunpack.c.l.b16 %v2928
        %v2961 = vunpack.c.l.b16 %v2929
        %v2962 = vunpack.c.l.b16 %v2930
        %v2963 = vunpack.c.l.b16 %v2931
        %v2964 = vunpack.c.l.b16 %v2932
        %v2965 = vunpack.c.l.b16 %v2933
        %v2966 = vunpack.c.l.b16 %v2934
        %v2967 = vunpack.c.l.b16 %v2935
        %v2968 = vunpack.c.l.b16 %v2936
        %v2969 = vunpack.c.l.b16 %v2937
        %v2970 = vunpack.c.l.b16 %v2938
        %v2971 = vpack.c.b16 %v2956, %v2955
        %v2972 = vpack.c.b16 %v2958, %v2957
        %v2973 = vpack.c.b16 %v2960, %v2959
        %v2974 = vpack.c.b16 %v2962, %v2961
        %v2975 = vpack.c.b16 %v2964, %v2963
        %v2976 = vpack.c.b16 %v2966, %v2965
        %v2977 = vpack.c.b16 %v2968, %v2967
        %v2978 = vpack.c.b16 %v2970, %v2969
        %2987 = vmatprep.subr.bf16.mxu0 0
        %2988 = vmatpush1.bf16.msra.mxu0 %v2971
        %2989 = vmatprep.subr.bf16.mxu0 0
        %2990 = vmatpush1.bf16.msra.mxu0 %v2972
        %2991 = vmatprep.subr.bf16.mxu0 0
        %2992 = vmatpush1.bf16.msra.mxu0 %v2973
        %2993 = vmatprep.subr.bf16.mxu0 0
        %2994 = vmatpush1.bf16.msra.mxu0 %v2974
        %2995 = vmatprep.subr.bf16.mxu0 0
        %2996 = vmatpush1.bf16.msra.mxu0 %v2975
        %2997 = vmatprep.subr.bf16.mxu0 0
        %2998 = vmatpush1.bf16.msra.mxu0 %v2976
        %2999 = vmatprep.subr.bf16.mxu0 0
        %3000 = vmatpush1.bf16.msra.mxu0 %v2977
        %3001 = vmatprep.subr.bf16.mxu0 0
        %3002 = vmatpush1.bf16.msra.mxu0 %v2978
        %3003 = vmatprep.subr.bf16.mxu0 0
        %3004 = vmatpush1.bf16.msra.mxu0 0
        %3005 = vmatprep.subr.bf16.mxu0 0
        %3006 = vmatpush1.bf16.msra.mxu0 0
        %3007 = vmatprep.subr.bf16.mxu0 0
        %3008 = vmatpush1.bf16.msra.mxu0 0
        %3009 = vmatprep.subr.bf16.mxu0 0
        %3010 = vmatpush1.bf16.msra.mxu0 0
        %3011 = vmatprep.subr.bf16.mxu0 0
        %3012 = vmatpush1.bf16.msra.mxu0 0
        %3013 = vmatprep.subr.bf16.mxu0 0
        %3014 = vmatpush1.bf16.msra.mxu0 0
        %3015 = vmatprep.subr.bf16.mxu0 0
        %3016 = vmatpush1.bf16.msra.mxu0 0
        %3017 = vmatprep.subr.bf16.mxu0 0
        %3018 = vmatpush1.bf16.msra.mxu0 0
        %3019 = vmatprep.mubr.bf16.mxu0 0
        %3020 = vmatmul.mubr.bf16.gmra.mrb[0].mxu0 %v1165
        %v3021 = vpop.f32.mrb[0].mxu0
        %v3022 = vadd.f32 0.0, %v3021
        %v3023 = vpop.f32.mrb[0].mxu0
        %v3024 = vpop.f32.mrb[0].mxu0
        %v3025 = vadd.f32 0.0, %v3024
        %v3026 = vpop.f32.mrb[0].mxu0
        %3027 = vmatprep.mubr.bf16.mxu0 0
        %3028 = vmatmul.mubr.bf16.gmra.mrb[0].mxu0 %v1166
        %v3029 = vpop.f32.mrb[0].mxu0
        %v3030 = vadd.f32 0.0, %v3029
        %v3031 = vpop.f32.mrb[0].mxu0
        %v3032 = vpop.f32.mrb[0].mxu0
        %v3033 = vadd.f32 0.0, %v3032
        %v3034 = vpop.f32.mrb[0].mxu0
        %3035 = vmatprep.mubr.bf16.mxu0 0
        %3036 = vmatmul.mubr.bf16.gmra.mrb[0].mxu0 %v1167
        %v3037 = vpop.f32.mrb[0].mxu0
        %v3038 = vadd.f32 0.0, %v3037
        %v3039 = vpop.f32.mrb[0].mxu0
        %v3040 = vpop.f32.mrb[0].mxu0
        %v3041 = vadd.f32 0.0, %v3040
        %v3042 = vpop.f32.mrb[0].mxu0
        %3043 = vmatprep.mubr.bf16.mxu0 0
        %3044 = vmatmul.mubr.bf16.gmra.mrb[0].mxu0 %v1168
        %v3045 = vpop.f32.mrb[0].mxu0
        %v3046 = vadd.f32 0.0, %v3045
        %v3047 = vpop.f32.mrb[0].mxu0
        %v3048 = vpop.f32.mrb[0].mxu0
        %v3049 = vadd.f32 0.0, %v3048
        %v3050 = vpop.f32.mrb[0].mxu0
        %3051 = vmatprep.mubr.bf16.mxu0 0
        %3052 = vmatmul.mubr.bf16.gmra.mrb[0].mxu0 %v1169
        %v3053 = vpop.f32.mrb[0].mxu0
        %v3054 = vadd.f32 0.0, %v3053
        %v3055 = vpop.f32.mrb[0].mxu0
        %v3056 = vpop.f32.mrb[0].mxu0
        %v3057 = vadd.f32 0.0, %v3056
        %v3058 = vpop.f32.mrb[0].mxu0
        %3059 = vmatprep.mubr.bf16.mxu0 0
        %3060 = vmatmul.mubr.bf16.gmra.mrb[0].mxu0 %v1170
        %v3061 = vpop.f32.mrb[0].mxu0
        %v3062 = vadd.f32 0.0, %v3061
        %v3063 = vpop.f32.mrb[0].mxu0
        %v3064 = vpop.f32.mrb[0].mxu0
        %v3065 = vadd.f32 0.0, %v3064
        %v3066 = vpop.f32.mrb[0].mxu0
        %3067 = vmatprep.mubr.bf16.mxu0 0
        %3068 = vmatmul.mubr.bf16.gmra.mrb[0].mxu0 %v1171
        %v3069 = vpop.f32.mrb[0].mxu0
        %v3070 = vadd.f32 0.0, %v3069
        %v3071 = vpop.f32.mrb[0].mxu0
        %v3072 = vpop.f32.mrb[0].mxu0
        %v3073 = vadd.f32 0.0, %v3072
        %v3074 = vpop.f32.mrb[0].mxu0
        %3075 = vmatprep.mubr.bf16.mxu0 0
        %3076 = vmatmul.mubr.bf16.gmra.mrb[0].mxu0 %v1172
        %v3077 = vpop.f32.mrb[0].mxu0
        %v3078 = vadd.f32 0.0, %v3077
        %v3079 = vpop.f32.mrb[0].mxu0
        %v3080 = vpop.f32.mrb[0].mxu0
        %v3081 = vadd.f32 0.0, %v3080
        %v3082 = vpop.f32.mrb[0].mxu0
        %3083 = vmatprep.mubr.bf16.mxu0 0
        %3084 = vmatmul.mubr.bf16.gmra.mrb[0].mxu0 %v1173
        %v3085 = vpop.f32.mrb[0].mxu0
        %v3086 = vadd.f32 0.0, %v3085
        %v3087 = vpop.f32.mrb[0].mxu0
        %v3088 = vpop.f32.mrb[0].mxu0
        %v3089 = vadd.f32 0.0, %v3088
        %v3090 = vpop.f32.mrb[0].mxu0
        %3091 = vmatprep.mubr.bf16.mxu0 0
        %3092 = vmatmul.mubr.bf16.gmra.mrb[0].mxu0 %v1174
        %v3093 = vpop.f32.mrb[0].mxu0
        %v3094 = vadd.f32 0.0, %v3093
        %v3095 = vpop.f32.mrb[0].mxu0
        %v3096 = vpop.f32.mrb[0].mxu0
        %v3097 = vadd.f32 0.0, %v3096
        %v3098 = vpop.f32.mrb[0].mxu0
        %3099 = vmatprep.mubr.bf16.mxu0 0
        %3100 = vmatmul.mubr.bf16.gmra.mrb[0].mxu0 %v1175
        %v3101 = vpop.f32.mrb[0].mxu0
        %v3102 = vadd.f32 0.0, %v3101
        %v3103 = vpop.f32.mrb[0].mxu0
        %v3104 = vpop.f32.mrb[0].mxu0
        %v3105 = vadd.f32 0.0, %v3104
        %v3106 = vpop.f32.mrb[0].mxu0
        %3107 = vmatprep.mubr.bf16.mxu0 0
        %3108 = vmatmul.mubr.bf16.gmra.mrb[0].mxu0 %v1176
        %v3109 = vpop.f32.mrb[0].mxu0
        %v3110 = vadd.f32 0.0, %v3109
        %v3111 = vpop.f32.mrb[0].mxu0
        %v3112 = vpop.f32.mrb[0].mxu0
        %v3113 = vadd.f32 0.0, %v3112
        %v3114 = vpop.f32.mrb[0].mxu0
        %3115 = vmatprep.mubr.bf16.mxu0 0
        %3116 = vmatmul.mubr.bf16.gmra.mrb[0].mxu0 %v1177
        %v3117 = vpop.f32.mrb[0].mxu0
        %v3118 = vadd.f32 0.0, %v3117
        %v3119 = vpop.f32.mrb[0].mxu0
        %v3120 = vpop.f32.mrb[0].mxu0
        %v3121 = vadd.f32 0.0, %v3120
        %v3122 = vpop.f32.mrb[0].mxu0
        %3123 = vmatprep.mubr.bf16.mxu0 0
        %3124 = vmatmul.mubr.bf16.gmra.mrb[0].mxu0 %v1178
        %v3125 = vpop.f32.mrb[0].mxu0
        %v3126 = vadd.f32 0.0, %v3125
        %v3127 = vpop.f32.mrb[0].mxu0
        %v3128 = vpop.f32.mrb[0].mxu0
        %v3129 = vadd.f32 0.0, %v3128
        %v3130 = vpop.f32.mrb[0].mxu0
        %3131 = vmatprep.mubr.bf16.mxu0 0
        %3132 = vmatmul.mubr.bf16.gmra.mrb[0].mxu0 %v1179
        %v3133 = vpop.f32.mrb[0].mxu0
        %v3134 = vadd.f32 0.0, %v3133
        %v3135 = vpop.f32.mrb[0].mxu0
        %v3136 = vpop.f32.mrb[0].mxu0
        %v3137 = vadd.f32 0.0, %v3136
        %v3138 = vpop.f32.mrb[0].mxu0
        %3139 = vmatprep.mubr.bf16.mxu0 0
        %3140 = vmatmul.mubr.bf16.gmra.mrb[0].mxu0 %v1180
        %v3141 = vpop.f32.mrb[0].mxu0
        %v3142 = vadd.f32 0.0, %v3141
        %v3143 = vpop.f32.mrb[0].mxu0
        %v3144 = vpop.f32.mrb[0].mxu0
        %v3145 = vadd.f32 0.0, %v3144
        %v3146 = vpop.f32.mrb[0].mxu0
        %3147 = vdwg.mxu0
        %v3148 = vadd.f32 %v2890, %v3022
        %v3149 = vadd.f32 %v2891, %v3025
        %v3150 = vadd.f32 %v2892, %v3030
        %v3151 = vadd.f32 %v2893, %v3033
        %v3152 = vadd.f32 %v2894, %v3038
        %v3153 = vadd.f32 %v2895, %v3041
        %v3154 = vadd.f32 %v2896, %v3046
        %v3155 = vadd.f32 %v2897, %v3049
        %v3156 = vadd.f32 %v2898, %v3054
        %v3157 = vadd.f32 %v2899, %v3057
        %v3158 = vadd.f32 %v2900, %v3062
        %v3159 = vadd.f32 %v2901, %v3065
        %v3160 = vadd.f32 %v2902, %v3070
        %v3161 = vadd.f32 %v2903, %v3073
        %v3162 = vadd.f32 %v2904, %v3078
        %v3163 = vadd.f32 %v2905, %v3081
        %v3164 = vadd.f32 %v2906, %v3086
        %v3165 = vadd.f32 %v2907, %v3089
        %v3166 = vadd.f32 %v2908, %v3094
        %v3167 = vadd.f32 %v2909, %v3097
        %v3168 = vadd.f32 %v2910, %v3102
        %v3169 = vadd.f32 %v2911, %v3105
        %v3170 = vadd.f32 %v2912, %v3110
        %v3171 = vadd.f32 %v2913, %v3113
        %v3172 = vadd.f32 %v2914, %v3118
        %v3173 = vadd.f32 %v2915, %v3121
        %v3174 = vadd.f32 %v2916, %v3126
        %v3175 = vadd.f32 %v2917, %v3129
        %v3176 = vadd.f32 %v2918, %v3134
        %v3177 = vadd.f32 %v2919, %v3137
        %v3178 = vadd.f32 %v2920, %v3142
        %v3179 = vadd.f32 %v2921, %v3145
        %s3180 = scalar_lea.vmem [#allocation5], 512
        %v3181 = vld [vmem:[%s3180] sm:$0xf]
        %v3182 = vld [vmem:[%s3180 + $0x4] sm:$0xf]
        %v3183 = vld [vmem:[%s3180 + $0x8] sm:$0xf]
        %v3184 = vld [vmem:[%s3180 + $0xc] sm:$0xf]
        %v3185 = vld [vmem:[%s3180 + $0x10] sm:$0xf]
        %v3186 = vld [vmem:[%s3180 + $0x14] sm:$0xf]
        %v3187 = vld [vmem:[%s3180 + $0x18] sm:$0xf]
        %v3188 = vld [vmem:[%s3180 + $0x1c] sm:$0xf]
        %v3189 = vld [vmem:[%s3180 + $0x20] sm:$0xf]
        %v3190 = vld [vmem:[%s3180 + $0x24] sm:$0xf]
        %v3191 = vld [vmem:[%s3180 + $0x28] sm:$0xf]
        %v3192 = vld [vmem:[%s3180 + $0x2c] sm:$0xf]
        %v3193 = vld [vmem:[%s3180 + $0x30] sm:$0xf]
        %v3194 = vld [vmem:[%s3180 + $0x34] sm:$0xf]
        %v3195 = vld [vmem:[%s3180 + $0x38] sm:$0xf]
        %v3196 = vld [vmem:[%s3180 + $0x3c] sm:$0xf]
        %v3213 = vunpack.c.l.b16 %v3181
        %v3214 = vunpack.c.l.b16 %v3182
        %v3215 = vunpack.c.l.b16 %v3183
        %v3216 = vunpack.c.l.b16 %v3184
        %v3217 = vunpack.c.l.b16 %v3185
        %v3218 = vunpack.c.l.b16 %v3186
        %v3219 = vunpack.c.l.b16 %v3187
        %v3220 = vunpack.c.l.b16 %v3188
        %v3221 = vunpack.c.l.b16 %v3189
        %v3222 = vunpack.c.l.b16 %v3190
        %v3223 = vunpack.c.l.b16 %v3191
        %v3224 = vunpack.c.l.b16 %v3192
        %v3225 = vunpack.c.l.b16 %v3193
        %v3226 = vunpack.c.l.b16 %v3194
        %v3227 = vunpack.c.l.b16 %v3195
        %v3228 = vunpack.c.l.b16 %v3196
        %v3229 = vpack.c.b16 %v3214, %v3213
        %v3230 = vpack.c.b16 %v3216, %v3215
        %v3231 = vpack.c.b16 %v3218, %v3217
        %v3232 = vpack.c.b16 %v3220, %v3219
        %v3233 = vpack.c.b16 %v3222, %v3221
        %v3234 = vpack.c.b16 %v3224, %v3223
        %v3235 = vpack.c.b16 %v3226, %v3225
        %v3236 = vpack.c.b16 %v3228, %v3227
        %3245 = vmatprep.subr.bf16.mxu0 0
        %3246 = vmatpush1.bf16.msra.mxu0 %v3229
        %3247 = vmatprep.subr.bf16.mxu0 0
        %3248 = vmatpush1.bf16.msra.mxu0 %v3230
        %3249 = vmatprep.subr.bf16.mxu0 0
        %3250 = vmatpush1.bf16.msra.mxu0 %v3231
        %3251 = vmatprep.subr.bf16.mxu0 0
        %3252 = vmatpush1.bf16.msra.mxu0 %v3232
        %3253 = vmatprep.subr.bf16.mxu0 0
        %3254 = vmatpush1.bf16.msra.mxu0 %v3233
        %3255 = vmatprep.subr.bf16.mxu0 0
        %3256 = vmatpush1.bf16.msra.mxu0 %v3234
        %3257 = vmatprep.subr.bf16.mxu0 0
        %3258 = vmatpush1.bf16.msra.mxu0 %v3235
        %3259 = vmatprep.subr.bf16.mxu0 0
        %3260 = vmatpush1.bf16.msra.mxu0 %v3236
        %3261 = vmatprep.subr.bf16.mxu0 0
        %3262 = vmatpush1.bf16.msra.mxu0 0
        %3263 = vmatprep.subr.bf16.mxu0 0
        %3264 = vmatpush1.bf16.msra.mxu0 0
        %3265 = vmatprep.subr.bf16.mxu0 0
        %3266 = vmatpush1.bf16.msra.mxu0 0
        %3267 = vmatprep.subr.bf16.mxu0 0
        %3268 = vmatpush1.bf16.msra.mxu0 0
        %3269 = vmatprep.subr.bf16.mxu0 0
        %3270 = vmatpush1.bf16.msra.mxu0 0
        %3271 = vmatprep.subr.bf16.mxu0 0
        %3272 = vmatpush1.bf16.msra.mxu0 0
        %3273 = vmatprep.subr.bf16.mxu0 0
        %3274 = vmatpush1.bf16.msra.mxu0 0
        %3275 = vmatprep.subr.bf16.mxu0 0
        %3276 = vmatpush1.bf16.msra.mxu0 0
        %3277 = vmatprep.mubr.bf16.mxu0 0
        %3278 = vmatmul.mubr.bf16.gmra.mrb[0].mxu0 %v1166
        %v3279 = vpop.f32.mrb[0].mxu0
        %v3280 = vadd.f32 0.0, %v3279
        %v3281 = vpop.f32.mrb[0].mxu0
        %v3282 = vpop.f32.mrb[0].mxu0
        %v3283 = vadd.f32 0.0, %v3282
        %v3284 = vpop.f32.mrb[0].mxu0
        %3285 = vmatprep.mubr.bf16.mxu0 0
        %3286 = vmatmul.mubr.bf16.gmra.mrb[0].mxu0 %v1167
        %v3287 = vpop.f32.mrb[0].mxu0
        %v3288 = vadd.f32 0.0, %v3287
        %v3289 = vpop.f32.mrb[0].mxu0
        %v3290 = vpop.f32.mrb[0].mxu0
        %v3291 = vadd.f32 0.0, %v3290
        %v3292 = vpop.f32.mrb[0].mxu0
        %3293 = vmatprep.mubr.bf16.mxu0 0
        %3294 = vmatmul.mubr.bf16.gmra.mrb[0].mxu0 %v1168
        %v3295 = vpop.f32.mrb[0].mxu0
        %v3296 = vadd.f32 0.0, %v3295
        %v3297 = vpop.f32.mrb[0].mxu0
        %v3298 = vpop.f32.mrb[0].mxu0
        %v3299 = vadd.f32 0.0, %v3298
        %v3300 = vpop.f32.mrb[0].mxu0
        %3301 = vmatprep.mubr.bf16.mxu0 0
        %3302 = vmatmul.mubr.bf16.gmra.mrb[0].mxu0 %v1169
        %v3303 = vpop.f32.mrb[0].mxu0
        %v3304 = vadd.f32 0.0, %v3303
        %v3305 = vpop.f32.mrb[0].mxu0
        %v3306 = vpop.f32.mrb[0].mxu0
        %v3307 = vadd.f32 0.0, %v3306
        %v3308 = vpop.f32.mrb[0].mxu0
        %3309 = vmatprep.mubr.bf16.mxu0 0
        %3310 = vmatmul.mubr.bf16.gmra.mrb[0].mxu0 %v1170
        %v3311 = vpop.f32.mrb[0].mxu0
        %v3312 = vadd.f32 0.0, %v3311
        %v3313 = vpop.f32.mrb[0].mxu0
        %v3314 = vpop.f32.mrb[0].mxu0
        %v3315 = vadd.f32 0.0, %v3314
        %v3316 = vpop.f32.mrb[0].mxu0
        %3317 = vmatprep.mubr.bf16.mxu0 0
        %3318 = vmatmul.mubr.bf16.gmra.mrb[0].mxu0 %v1171
        %v3319 = vpop.f32.mrb[0].mxu0
        %v3320 = vadd.f32 0.0, %v3319
        %v3321 = vpop.f32.mrb[0].mxu0
        %v3322 = vpop.f32.mrb[0].mxu0
        %v3323 = vadd.f32 0.0, %v3322
        %v3324 = vpop.f32.mrb[0].mxu0
        %3325 = vmatprep.mubr.bf16.mxu0 0
        %3326 = vmatmul.mubr.bf16.gmra.mrb[0].mxu0 %v1172
        %v3327 = vpop.f32.mrb[0].mxu0
        %v3328 = vadd.f32 0.0, %v3327
        %v3329 = vpop.f32.mrb[0].mxu0
        %v3330 = vpop.f32.mrb[0].mxu0
        %v3331 = vadd.f32 0.0, %v3330
        %v3332 = vpop.f32.mrb[0].mxu0
        %3333 = vmatprep.mubr.bf16.mxu0 0
        %3334 = vmatmul.mubr.bf16.gmra.mrb[0].mxu0 %v1173
        %v3335 = vpop.f32.mrb[0].mxu0
        %v3336 = vadd.f32 0.0, %v3335
        %v3337 = vpop.f32.mrb[0].mxu0
        %v3338 = vpop.f32.mrb[0].mxu0
        %v3339 = vadd.f32 0.0, %v3338
        %v3340 = vpop.f32.mrb[0].mxu0
        %3341 = vmatprep.mubr.bf16.mxu0 0
        %3342 = vmatmul.mubr.bf16.gmra.mrb[0].mxu0 %v1174
        %v3343 = vpop.f32.mrb[0].mxu0
        %v3344 = vadd.f32 0.0, %v3343
        %v3345 = vpop.f32.mrb[0].mxu0
        %v3346 = vpop.f32.mrb[0].mxu0
        %v3347 = vadd.f32 0.0, %v3346
        %v3348 = vpop.f32.mrb[0].mxu0
        %3349 = vmatprep.mubr.bf16.mxu0 0
        %3350 = vmatmul.mubr.bf16.gmra.mrb[0].mxu0 %v1175
        %v3351 = vpop.f32.mrb[0].mxu0
        %v3352 = vadd.f32 0.0, %v3351
        %v3353 = vpop.f32.mrb[0].mxu0
        %v3354 = vpop.f32.mrb[0].mxu0
        %v3355 = vadd.f32 0.0, %v3354
        %v3356 = vpop.f32.mrb[0].mxu0
        %3357 = vmatprep.mubr.bf16.mxu0 0
        %3358 = vmatmul.mubr.bf16.gmra.mrb[0].mxu0 %v1176
        %v3359 = vpop.f32.mrb[0].mxu0
        %v3360 = vadd.f32 0.0, %v3359
        %v3361 = vpop.f32.mrb[0].mxu0
        %v3362 = vpop.f32.mrb[0].mxu0
        %v3363 = vadd.f32 0.0, %v3362
        %v3364 = vpop.f32.mrb[0].mxu0
        %3365 = vmatprep.mubr.bf16.mxu0 0
        %3366 = vmatmul.mubr.bf16.gmra.mrb[0].mxu0 %v1177
        %v3367 = vpop.f32.mrb[0].mxu0
        %v3368 = vadd.f32 0.0, %v3367
        %v3369 = vpop.f32.mrb[0].mxu0
        %v3370 = vpop.f32.mrb[0].mxu0
        %v3371 = vadd.f32 0.0, %v3370
        %v3372 = vpop.f32.mrb[0].mxu0
        %3373 = vmatprep.mubr.bf16.mxu0 0
        %3374 = vmatmul.mubr.bf16.gmra.mrb[0].mxu0 %v1178
        %v3375 = vpop.f32.mrb[0].mxu0
        %v3376 = vadd.f32 0.0, %v3375
        %v3377 = vpop.f32.mrb[0].mxu0
        %v3378 = vpop.f32.mrb[0].mxu0
        %v3379 = vadd.f32 0.0, %v3378
        %v3380 = vpop.f32.mrb[0].mxu0
        %3381 = vmatprep.mubr.bf16.mxu0 0
        %3382 = vmatmul.mubr.bf16.gmra.mrb[0].mxu0 %v1179
        %v3383 = vpop.f32.mrb[0].mxu0
        %v3384 = vadd.f32 0.0, %v3383
        %v3385 = vpop.f32.mrb[0].mxu0
        %v3386 = vpop.f32.mrb[0].mxu0
        %v3387 = vadd.f32 0.0, %v3386
        %v3388 = vpop.f32.mrb[0].mxu0
        %3389 = vmatprep.mubr.bf16.mxu0 0
        %3390 = vmatmul.mubr.bf16.gmra.mrb[0].mxu0 %v1180
        %v3391 = vpop.f32.mrb[0].mxu0
        %v3392 = vadd.f32 0.0, %v3391
        %v3393 = vpop.f32.mrb[0].mxu0
        %v3394 = vpop.f32.mrb[0].mxu0
        %v3395 = vadd.f32 0.0, %v3394
        %v3396 = vpop.f32.mrb[0].mxu0
        %3397 = vmatprep.mubr.bf16.mxu0 0
        %3398 = vmatmul.mubr.bf16.gmra.mrb[0].mxu0 %v1179
        %v3399 = vpop.f32.mrb[0].mxu0
        %v3400 = vadd.f32 0.0, %v3399
        %v3401 = vpop.f32.mrb[0].mxu0
        %v3402 = vpop.f32.mrb[0].mxu0
        %v3403 = vadd.f32 0.0, %v3402
        %v3404 = vpop.f32.mrb[0].mxu0
        %3405 = vdwg.mxu0
        %v3406 = vadd.f32 %v3148, %v3280
        %v3407 = vadd.f32 %v3149, %v3283
        %v3408 = vadd.f32 %v3150, %v3288
        %v3409 = vadd.f32 %v3151, %v3291
        %v3410 = vadd.f32 %v3152, %v3296
        %v3411 = vadd.f32 %v3153, %v3299
        %v3412 = vadd.f32 %v3154, %v3304
        %v3413 = vadd.f32 %v3155, %v3307
        %v3414 = vadd.f32 %v3156, %v3312
        %v3415 = vadd.f32 %v3157, %v3315
        %v3416 = vadd.f32 %v3158, %v3320
        %v3417 = vadd.f32 %v3159, %v3323
        %v3418 = vadd.f32 %v3160, %v3328
        %v3419 = vadd.f32 %v3161, %v3331
        %v3420 = vadd.f32 %v3162, %v3336
        %v3421 = vadd.f32 %v3163, %v3339
        %v3422 = vadd.f32 %v3164, %v3344
        %v3423 = vadd.f32 %v3165, %v3347
        %v3424 = vadd.f32 %v3166, %v3352
        %v3425 = vadd.f32 %v3167, %v3355
        %v3426 = vadd.f32 %v3168, %v3360
        %v3427 = vadd.f32 %v3169, %v3363
        %v3428 = vadd.f32 %v3170, %v3368
        %v3429 = vadd.f32 %v3171, %v3371
        %v3430 = vadd.f32 %v3172, %v3376
        %v3431 = vadd.f32 %v3173, %v3379
        %v3432 = vadd.f32 %v3174, %v3384
        %v3433 = vadd.f32 %v3175, %v3387
        %v3434 = vadd.f32 %v3176, %v3392
        %v3435 = vadd.f32 %v3177, %v3395
        %v3436 = vadd.f32 %v3178, %v3400
        %v3437 = vadd.f32 %v3179, %v3403
        %v3438 = vld [vmem:[#allocation7] sm:$0x1]
        %v3440 = vlaneseq
        %v3441 = vshrl.u32 %v3440, 7
        %v3442 = vsub.s32 0, %v3441
        %v3443 = vrot.slane %v3438, %v3442
        %v3445 = vadd.f32 %v3406, %v3443
        %v3446 = vadd.f32 %v3407, %v3443
        %v3447 = vadd.f32 %v3408, %v3443
        %v3448 = vadd.f32 %v3409, %v3443
        %v3449 = vadd.f32 %v3410, %v3443
        %v3450 = vadd.f32 %v3411, %v3443
        %v3451 = vadd.f32 %v3412, %v3443
        %v3452 = vadd.f32 %v3413, %v3443
        %v3453 = vadd.f32 %v3414, %v3443
        %v3454 = vadd.f32 %v3415, %v3443
        %v3455 = vadd.f32 %v3416, %v3443
        %v3456 = vadd.f32 %v3417, %v3443
        %v3457 = vadd.f32 %v3418, %v3443
        %v3458 = vadd.f32 %v3419, %v3443
        %v3459 = vadd.f32 %v3420, %v3443
        %v3460 = vadd.f32 %v3421, %v3443
        %v3461 = vadd.f32 %v3422, %v3443
        %v3462 = vadd.f32 %v3423, %v3443
        %v3463 = vadd.f32 %v3424, %v3443
        %v3464 = vadd.f32 %v3425, %v3443
        %v3465 = vadd.f32 %v3426, %v3443
        %v3466 = vadd.f32 %v3427, %v3443
        %v3467 = vadd.f32 %v3428, %v3443
        %v3468 = vadd.f32 %v3429, %v3443
        %v3469 = vadd.f32 %v3430, %v3443
        %v3470 = vadd.f32 %v3431, %v3443
        %v3471 = vadd.f32 %v3432, %v3443
        %v3472 = vadd.f32 %v3433, %v3443
        %v3473 = vadd.f32 %v3434, %v3443
        %v3474 = vadd.f32 %v3435, %v3443
        %v3475 = vadd.f32 %v3436, %v3443
        %v3476 = vadd.f32 %v3437, %v3443
        %v3477 = vadd.f32 %v3445, %v3446
        %v3478 = vadd.f32 %v3477, %v3447
        %v3479 = vadd.f32 %v3478, %v3448
        %v3480 = vadd.f32 %v3479, %v3449
        %v3481 = vadd.f32 %v3480, %v3450
        %v3482 = vadd.f32 %v3481, %v3451
        %v3483 = vadd.f32 %v3482, %v3452
        %v3484 = vadd.f32 %v3483, %v3453
        %v3485 = vadd.f32 %v3484, %v3454
        %v3486 = vadd.f32 %v3485, %v3455
        %v3487 = vadd.f32 %v3486, %v3456
        %v3488 = vadd.f32 %v3487, %v3457
        %v3489 = vadd.f32 %v3488, %v3458
        %v3490 = vadd.f32 %v3489, %v3459
        %v3491 = vadd.f32 %v3490, %v3460
        %v3492 = vadd.f32 %v3491, %v3461
        %v3493 = vadd.f32 %v3492, %v3462
        %v3494 = vadd.f32 %v3493, %v3463
        %v3495 = vadd.f32 %v3494, %v3464
        %v3496 = vadd.f32 %v3495, %v3465
        %v3497 = vadd.f32 %v3496, %v3466
        %v3498 = vadd.f32 %v3497, %v3467
        %v3499 = vadd.f32 %v3498, %v3468
        %v3500 = vadd.f32 %v3499, %v3469
        %v3501 = vadd.f32 %v3500, %v3470
        %v3502 = vadd.f32 %v3501, %v3471
        %v3503 = vadd.f32 %v3502, %v3472
        %v3504 = vadd.f32 %v3503, %v3473
        %v3505 = vadd.f32 %v3504, %v3474
        %v3506 = vadd.f32 %v3505, %v3475
        %v3507 = vadd.f32 %v3506, %v3476
        %v3508 = vrot.slane %v3507, 4
        %v3509 = vadd.f32 %v3507, %v3508
        %v3510 = vrot.slane %v3509, 2
        %v3511 = vadd.f32 %v3509, %v3510
        %v3512 = vrot.slane %v3511, 1
        %v3513 = vadd.f32 %v3511, %v3512
        %v3514 = vmul.f32 %v3445, %v3445
        %v3515 = vmul.f32 %v3446, %v3446
        %v3516 = vmul.f32 %v3447, %v3447
        %v3517 = vmul.f32 %v3448, %v3448
        %v3518 = vmul.f32 %v3449, %v3449
        %v3519 = vmul.f32 %v3450, %v3450
        %v3520 = vmul.f32 %v3451, %v3451
        %v3521 = vmul.f32 %v3452, %v3452
        %v3522 = vmul.f32 %v3453, %v3453
        %v3523 = vmul.f32 %v3454, %v3454
        %v3524 = vmul.f32 %v3455, %v3455
        %v3525 = vmul.f32 %v3456, %v3456
        %v3526 = vmul.f32 %v3457, %v3457
        %v3527 = vmul.f32 %v3458, %v3458
        %v3528 = vmul.f32 %v3459, %v3459
        %v3529 = vmul.f32 %v3460, %v3460
        %v3530 = vmul.f32 %v3461, %v3461
        %v3531 = vmul.f32 %v3462, %v3462
        %v3532 = vmul.f32 %v3463, %v3463
        %v3533 = vmul.f32 %v3464, %v3464
        %v3534 = vmul.f32 %v3465, %v3465
        %v3535 = vmul.f32 %v3466, %v3466
        %v3536 = vmul.f32 %v3467, %v3467
        %v3537 = vmul.f32 %v3468, %v3468
        %v3538 = vmul.f32 %v3469, %v3469
        %v3539 = vmul.f32 %v3470, %v3470
        %v3540 = vmul.f32 %v3471, %v3471
        %v3541 = vmul.f32 %v3472, %v3472
        %v3542 = vmul.f32 %v3473, %v3473
        %v3543 = vmul.f32 %v3474, %v3474
        %v3544 = vmul.f32 %v3475, %v3475
        %v3545 = vmul.f32 %v3476, %v3476
        %v3546 = vadd.f32 %v3514, %v3515
        %v3547 = vadd.f32 %v3546, %v3516
        %v3548 = vadd.f32 %v3547, %v3517
        %v3549 = vadd.f32 %v3548, %v3518
        %v3550 = vadd.f32 %v3549, %v3519
        %v3551 = vadd.f32 %v3550, %v3520
        %v3552 = vadd.f32 %v3551, %v3521
        %v3553 = vadd.f32 %v3552, %v3522
        %v3554 = vadd.f32 %v3553, %v3523
        %v3555 = vadd.f32 %v3554, %v3524
        %v3556 = vadd.f32 %v3555, %v3525
        %v3557 = vadd.f32 %v3556, %v3526
        %v3558 = vadd.f32 %v3557, %v3527
        %v3559 = vadd.f32 %v3558, %v3528
        %v3560 = vadd.f32 %v3559, %v3529
        %v3561 = vadd.f32 %v3560, %v3530
        %v3562 = vadd.f32 %v3561, %v3531
        %v3563 = vadd.f32 %v3562, %v3532
        %v3564 = vadd.f32 %v3563, %v3533
        %v3565 = vadd.f32 %v3564, %v3534
        %v3566 = vadd.f32 %v3565, %v3535
        %v3567 = vadd.f32 %v3566, %v3536
        %v3568 = vadd.f32 %v3567, %v3537
        %v3569 = vadd.f32 %v3568, %v3538
        %v3570 = vadd.f32 %v3569, %v3539
        %v3571 = vadd.f32 %v3570, %v3540
        %v3572 = vadd.f32 %v3571, %v3541
        %v3573 = vadd.f32 %v3572, %v3542
        %v3574 = vadd.f32 %v3573, %v3543
        %v3575 = vadd.f32 %v3574, %v3544
        %v3576 = vadd.f32 %v3575, %v3545
        %v3577 = vrot.slane %v3576, 4
        %v3578 = vadd.f32 %v3576, %v3577
        %v3579 = vrot.slane %v3578, 2
        %v3580 = vadd.f32 %v3578, %v3579
        %v3581 = vrot.slane %v3580, 1
        %v3582 = vadd.f32 %v3580, %v3581
        %v3583 = vmul.f32 %v3513, 0.00390625
        %v3584 = vmul.f32 %v3582, 0.00390625
        %v3585 = vmul.f32 %v3583, %v3583
        %v3586 = vsub.f32 %v3584, %v3585
        %v3587 = vmax.f32 %v3586, 0.0
        %v3588 = vsub.f32 %v3445, %v3583
        %v3589 = vsub.f32 %v3446, %v3583
        %v3590 = vsub.f32 %v3447, %v3583
        %v3591 = vsub.f32 %v3448, %v3583
        %v3592 = vsub.f32 %v3449, %v3583
        %v3593 = vsub.f32 %v3450, %v3583
        %v3594 = vsub.f32 %v3451, %v3583
        %v3595 = vsub.f32 %v3452, %v3583
        %v3596 = vsub.f32 %v3453, %v3583
        %v3597 = vsub.f32 %v3454, %v3583
        %v3598 = vsub.f32 %v3455, %v3583
        %v3599 = vsub.f32 %v3456, %v3583
        %v3600 = vsub.f32 %v3457, %v3583
        %v3601 = vsub.f32 %v3458, %v3583
        %v3602 = vsub.f32 %v3459, %v3583
        %v3603 = vsub.f32 %v3460, %v3583
        %v3604 = vsub.f32 %v3461, %v3583
        %v3605 = vsub.f32 %v3462, %v3583
        %v3606 = vsub.f32 %v3463, %v3583
        %v3607 = vsub.f32 %v3464, %v3583
        %v3608 = vsub.f32 %v3465, %v3583
        %v3609 = vsub.f32 %v3466, %v3583
        %v3610 = vsub.f32 %v3467, %v3583
        %v3611 = vsub.f32 %v3468, %v3583
        %v3612 = vsub.f32 %v3469, %v3583
        %v3613 = vsub.f32 %v3470, %v3583
        %v3614 = vsub.f32 %v3471, %v3583
        %v3615 = vsub.f32 %v3472, %v3583
        %v3616 = vsub.f32 %v3473, %v3583
        %v3617 = vsub.f32 %v3474, %v3583
        %v3618 = vsub.f32 %v3475, %v3583
        %v3619 = vsub.f32 %v3476, %v3583
        %v3620 = vadd.f32 %v3587, 1e-05
        %v3621 = vrsqrt.pop %v3620
        %v3622 = vmul.f32 %v3588, %v3621
        %v3623 = vmul.f32 %v3589, %v3621
        %v3624 = vmul.f32 %v3590, %v3621
        %v3625 = vmul.f32 %v3591, %v3621
        %v3626 = vmul.f32 %v3592, %v3621
        %v3627 = vmul.f32 %v3593, %v3621
        %v3628 = vmul.f32 %v3594, %v3621
        %v3629 = vmul.f32 %v3595, %v3621
        %v3630 = vmul.f32 %v3596, %v3621
        %v3631 = vmul.f32 %v3597, %v3621
        %v3632 = vmul.f32 %v3598, %v3621
        %v3633 = vmul.f32 %v3599, %v3621
        %v3634 = vmul.f32 %v3600, %v3621
        %v3635 = vmul.f32 %v3601, %v3621
        %v3636 = vmul.f32 %v3602, %v3621
        %v3637 = vmul.f32 %v3603, %v3621
        %v3638 = vmul.f32 %v3604, %v3621
        %v3639 = vmul.f32 %v3605, %v3621
        %v3640 = vmul.f32 %v3606, %v3621
        %v3641 = vmul.f32 %v3607, %v3621
        %v3642 = vmul.f32 %v3608, %v3621
        %v3643 = vmul.f32 %v3609, %v3621
        %v3644 = vmul.f32 %v3610, %v3621
        %v3645 = vmul.f32 %v3611, %v3621
        %v3646 = vmul.f32 %v3612, %v3621
        %v3647 = vmul.f32 %v3613, %v3621
        %v3648 = vmul.f32 %v3614, %v3621
        %v3649 = vmul.f32 %v3615, %v3621
        %v3650 = vmul.f32 %v3616, %v3621
        %v3651 = vmul.f32 %v3617, %v3621
        %v3652 = vmul.f32 %v3618, %v3621
        %v3653 = vmul.f32 %v3619, %v3621
        %v3654 = vmax.f32 %v3622, 0.0
        %v3655 = vmax.f32 %v3623, 0.0
        %v3656 = vmax.f32 %v3624, 0.0
        %v3657 = vmax.f32 %v3625, 0.0
        %v3658 = vmax.f32 %v3626, 0.0
        %v3659 = vmax.f32 %v3627, 0.0
        %v3660 = vmax.f32 %v3628, 0.0
        %v3661 = vmax.f32 %v3629, 0.0
        %v3662 = vmax.f32 %v3630, 0.0
        %v3663 = vmax.f32 %v3631, 0.0
        %v3664 = vmax.f32 %v3632, 0.0
        %v3665 = vmax.f32 %v3633, 0.0
        %v3666 = vmax.f32 %v3634, 0.0
        %v3667 = vmax.f32 %v3635, 0.0
        %v3668 = vmax.f32 %v3636, 0.0
        %v3669 = vmax.f32 %v3637, 0.0
        %v3670 = vmax.f32 %v3638, 0.0
        %v3671 = vmax.f32 %v3639, 0.0
        %v3672 = vmax.f32 %v3640, 0.0
        %v3673 = vmax.f32 %v3641, 0.0
        %v3674 = vmax.f32 %v3642, 0.0
        %v3675 = vmax.f32 %v3643, 0.0
        %v3676 = vmax.f32 %v3644, 0.0
        %v3677 = vmax.f32 %v3645, 0.0
        %v3678 = vmax.f32 %v3646, 0.0
        %v3679 = vmax.f32 %v3647, 0.0
        %v3680 = vmax.f32 %v3648, 0.0
        %v3681 = vmax.f32 %v3649, 0.0
        %v3682 = vmax.f32 %v3650, 0.0
        %v3683 = vmax.f32 %v3651, 0.0
        %v3684 = vmax.f32 %v3652, 0.0
        %v3685 = vmax.f32 %v3653, 0.0
        %v3686 = vrot.slane %v3654, 7
        %v3687 = vrot.slane %v3655, 7
        %v3688 = vrot.slane %v3656, 7
        %v3689 = vrot.slane %v3657, 7
        %v3690 = vrot.slane %v3658, 7
        %v3691 = vrot.slane %v3659, 7
        %v3692 = vrot.slane %v3660, 7
        %v3693 = vrot.slane %v3661, 7
        %v3694 = vrot.slane %v3662, 7
        %v3695 = vrot.slane %v3663, 7
        %v3696 = vrot.slane %v3664, 7
        %v3697 = vrot.slane %v3665, 7
        %v3698 = vrot.slane %v3666, 7
        %v3699 = vrot.slane %v3667, 7
        %v3700 = vrot.slane %v3668, 7
        %v3701 = vrot.slane %v3669, 7
        %v3702 = vrot.slane %v3670, 7
        %v3703 = vrot.slane %v3671, 7
        %v3704 = vrot.slane %v3672, 7
        %v3705 = vrot.slane %v3673, 7
        %v3706 = vrot.slane %v3674, 7
        %v3707 = vrot.slane %v3675, 7
        %v3708 = vrot.slane %v3676, 7
        %v3709 = vrot.slane %v3677, 7
        %v3710 = vrot.slane %v3678, 7
        %v3711 = vrot.slane %v3679, 7
        %v3712 = vrot.slane %v3680, 7
        %v3713 = vrot.slane %v3681, 7
        %v3714 = vrot.slane %v3682, 7
        %v3715 = vrot.slane %v3683, 7
        %v3716 = vrot.slane %v3684, 7
        %v3717 = vrot.slane %v3685, 7
        %v3718 = vsel %vm843, %v3716, %v3717
        %v3719 = vsel %vm843, %v3715, %v3716
        %v3720 = vsel %vm843, %v3714, %v3715
        %v3721 = vsel %vm843, %v3713, %v3714
        %v3722 = vsel %vm843, %v3712, %v3713
        %v3723 = vsel %vm843, %v3711, %v3712
        %v3724 = vsel %vm843, %v3710, %v3711
        %v3725 = vsel %vm843, %v3709, %v3710
        %v3726 = vsel %vm843, %v3708, %v3709
        %v3727 = vsel %vm843, %v3707, %v3708
        %v3728 = vsel %vm843, %v3706, %v3707
        %v3729 = vsel %vm843, %v3705, %v3706
        %v3730 = vsel %vm843, %v3704, %v3705
        %v3731 = vsel %vm843, %v3703, %v3704
        %v3732 = vsel %vm843, %v3702, %v3703
        %v3733 = vsel %vm843, %v3701, %v3702
        %v3734 = vsel %vm843, %v3700, %v3701
        %v3735 = vsel %vm843, %v3699, %v3700
        %v3736 = vsel %vm843, %v3698, %v3699
        %v3737 = vsel %vm843, %v3697, %v3698
        %v3738 = vsel %vm843, %v3696, %v3697
        %v3739 = vsel %vm843, %v3695, %v3696
        %v3740 = vsel %vm843, %v3694, %v3695
        %v3741 = vsel %vm843, %v3693, %v3694
        %v3742 = vsel %vm843, %v3692, %v3693
        %v3743 = vsel %vm843, %v3691, %v3692
        %v3744 = vsel %vm843, %v3690, %v3691
        %v3745 = vsel %vm843, %v3689, %v3690
        %v3746 = vsel %vm843, %v3688, %v3689
        %v3747 = vsel %vm843, %v3687, %v3688
        %v3748 = vsel %vm843, %v3686, %v3687
        %v3749 = vsel %vm843, %v3717, %v3686
        %v3750 = vrot.slane %v3654, 1
        %v3751 = vrot.slane %v3655, 1
        %v3752 = vrot.slane %v3656, 1
        %v3753 = vrot.slane %v3657, 1
        %v3754 = vrot.slane %v3658, 1
        %v3755 = vrot.slane %v3659, 1
        %v3756 = vrot.slane %v3660, 1
        %v3757 = vrot.slane %v3661, 1
        %v3758 = vrot.slane %v3662, 1
        %v3759 = vrot.slane %v3663, 1
        %v3760 = vrot.slane %v3664, 1
        %v3761 = vrot.slane %v3665, 1
        %v3762 = vrot.slane %v3666, 1
        %v3763 = vrot.slane %v3667, 1
        %v3764 = vrot.slane %v3668, 1
        %v3765 = vrot.slane %v3669, 1
        %v3766 = vrot.slane %v3670, 1
        %v3767 = vrot.slane %v3671, 1
        %v3768 = vrot.slane %v3672, 1
        %v3769 = vrot.slane %v3673, 1
        %v3770 = vrot.slane %v3674, 1
        %v3771 = vrot.slane %v3675, 1
        %v3772 = vrot.slane %v3676, 1
        %v3773 = vrot.slane %v3677, 1
        %v3774 = vrot.slane %v3678, 1
        %v3775 = vrot.slane %v3679, 1
        %v3776 = vrot.slane %v3680, 1
        %v3777 = vrot.slane %v3681, 1
        %v3778 = vrot.slane %v3682, 1
        %v3779 = vrot.slane %v3683, 1
        %v3780 = vrot.slane %v3684, 1
        %v3781 = vrot.slane %v3685, 1
        %v3782 = vsel %vm908, %v3780, %v3781
        %v3783 = vsel %vm908, %v3779, %v3780
        %v3784 = vsel %vm908, %v3778, %v3779
        %v3785 = vsel %vm908, %v3777, %v3778
        %v3786 = vsel %vm908, %v3776, %v3777
        %v3787 = vsel %vm908, %v3775, %v3776
        %v3788 = vsel %vm908, %v3774, %v3775
        %v3789 = vsel %vm908, %v3773, %v3774
        %v3790 = vsel %vm908, %v3772, %v3773
        %v3791 = vsel %vm908, %v3771, %v3772
        %v3792 = vsel %vm908, %v3770, %v3771
        %v3793 = vsel %vm908, %v3769, %v3770
        %v3794 = vsel %vm908, %v3768, %v3769
        %v3795 = vsel %vm908, %v3767, %v3768
        %v3796 = vsel %vm908, %v3766, %v3767
        %v3797 = vsel %vm908, %v3765, %v3766
        %v3798 = vsel %vm908, %v3764, %v3765
        %v3799 = vsel %vm908, %v3763, %v3764
        %v3800 = vsel %vm908, %v3762, %v3763
        %v3801 = vsel %vm908, %v3761, %v3762
        %v3802 = vsel %vm908, %v3760, %v3761
        %v3803 = vsel %vm908, %v3759, %v3760
        %v3804 = vsel %vm908, %v3758, %v3759
        %v3805 = vsel %vm908, %v3757, %v3758
        %v3806 = vsel %vm908, %v3756, %v3757
        %v3807 = vsel %vm908, %v3755, %v3756
        %v3808 = vsel %vm908, %v3754, %v3755
        %v3809 = vsel %vm908, %v3753, %v3754
        %v3810 = vsel %vm908, %v3752, %v3753
        %v3811 = vsel %vm908, %v3751, %v3752
        %v3812 = vsel %vm908, %v3750, %v3751
        %v3813 = vsel %vm908, %v3781, %v3750
        %v3814 = vsel %vm973, %v3812, %v3749
        %v3815 = vsel %vm974, %v3811, %v3748
        %v3816 = vsel %vm975, %v3810, %v3747
        %v3817 = vsel %vm976, %v3809, %v3746
        %v3818 = vsel %vm977, %v3808, %v3745
        %v3819 = vsel %vm978, %v3807, %v3744
        %v3820 = vsel %vm979, %v3806, %v3743
        %v3821 = vsel %vm980, %v3805, %v3742
        %v3822 = vsel %vm981, %v3804, %v3741
        %v3823 = vsel %vm982, %v3803, %v3740
        %v3824 = vsel %vm983, %v3802, %v3739
        %v3825 = vsel %vm984, %v3801, %v3738
        %v3826 = vsel %vm985, %v3800, %v3737
        %v3827 = vsel %vm986, %v3799, %v3736
        %v3828 = vsel %vm987, %v3798, %v3735
        %v3829 = vsel %vm988, %v3797, %v3734
        %v3830 = vsel %vm989, %v3796, %v3733
        %v3831 = vsel %vm990, %v3795, %v3732
        %v3832 = vsel %vm991, %v3794, %v3731
        %v3833 = vsel %vm992, %v3793, %v3730
        %v3834 = vsel %vm993, %v3792, %v3729
        %v3835 = vsel %vm994, %v3791, %v3728
        %v3836 = vsel %vm995, %v3790, %v3727
        %v3837 = vsel %vm996, %v3789, %v3726
        %v3838 = vsel %vm997, %v3788, %v3725
        %v3839 = vsel %vm998, %v3787, %v3724
        %v3840 = vsel %vm999, %v3786, %v3723
        %v3841 = vsel %vm1000, %v3785, %v3722
        %v3842 = vsel %vm1001, %v3784, %v3721
        %v3843 = vsel %vm1002, %v3783, %v3720
        %v3844 = vsel %vm1003, %v3782, %v3719
        %v3845 = vsel %vm1004, %v3813, %v3718
        %v3846 = vpack.c.bf16 %v3815, %v3814
        %v3847 = vpack.c.bf16 %v3817, %v3816
        %v3848 = vpack.c.bf16 %v3819, %v3818
        %v3849 = vpack.c.bf16 %v3821, %v3820
        %v3850 = vpack.c.bf16 %v3823, %v3822
        %v3851 = vpack.c.bf16 %v3825, %v3824
        %v3852 = vpack.c.bf16 %v3827, %v3826
        %v3853 = vpack.c.bf16 %v3829, %v3828
        %v3854 = vpack.c.bf16 %v3831, %v3830
        %v3855 = vpack.c.bf16 %v3833, %v3832
        %v3856 = vpack.c.bf16 %v3835, %v3834
        %v3857 = vpack.c.bf16 %v3837, %v3836
        %v3858 = vpack.c.bf16 %v3839, %v3838
        %v3859 = vpack.c.bf16 %v3841, %v3840
        %v3860 = vpack.c.bf16 %v3843, %v3842
        %v3861 = vpack.c.bf16 %v3845, %v3844
        %v3862 = vpack.c.bf16 %v3655, %v3654
        %v3863 = vpack.c.bf16 %v3657, %v3656
        %v3864 = vpack.c.bf16 %v3659, %v3658
        %v3865 = vpack.c.bf16 %v3661, %v3660
        %v3866 = vpack.c.bf16 %v3663, %v3662
        %v3867 = vpack.c.bf16 %v3665, %v3664
        %v3868 = vpack.c.bf16 %v3667, %v3666
        %v3869 = vpack.c.bf16 %v3669, %v3668
        %v3870 = vpack.c.bf16 %v3671, %v3670
        %v3871 = vpack.c.bf16 %v3673, %v3672
        %v3872 = vpack.c.bf16 %v3675, %v3674
        %v3873 = vpack.c.bf16 %v3677, %v3676
        %v3874 = vpack.c.bf16 %v3679, %v3678
        %v3875 = vpack.c.bf16 %v3681, %v3680
        %v3876 = vpack.c.bf16 %v3683, %v3682
        %v3877 = vpack.c.bf16 %v3685, %v3684
        %v3878 = vsel %vm1101, %v3749, %v3812
        %v3879 = vsel %vm1102, %v3748, %v3811
        %v3880 = vsel %vm1103, %v3747, %v3810
        %v3881 = vsel %vm1104, %v3746, %v3809
        %v3882 = vsel %vm1105, %v3745, %v3808
        %v3883 = vsel %vm1106, %v3744, %v3807
        %v3884 = vsel %vm1107, %v3743, %v3806
        %v3885 = vsel %vm1108, %v3742, %v3805
        %v3886 = vsel %vm1109, %v3741, %v3804
        %v3887 = vsel %vm1110, %v3740, %v3803
        %v3888 = vsel %vm1111, %v3739, %v3802
        %v3889 = vsel %vm1112, %v3738, %v3801
        %v3890 = vsel %vm1113, %v3737, %v3800
        %v3891 = vsel %vm1114, %v3736, %v3799
        %v3892 = vsel %vm1115, %v3735, %v3798
        %v3893 = vsel %vm1116, %v3734, %v3797
        %v3894 = vsel %vm1117, %v3733, %v3796
        %v3895 = vsel %vm1118, %v3732, %v3795
        %v3896 = vsel %vm1119, %v3731, %v3794
        %v3897 = vsel %vm1120, %v3730, %v3793
        %v3898 = vsel %vm1121, %v3729, %v3792
        %v3899 = vsel %vm1122, %v3728, %v3791
        %v3900 = vsel %vm1123, %v3727, %v3790
        %v3901 = vsel %vm1124, %v3726, %v3789
        %v3902 = vsel %vm1125, %v3725, %v3788
        %v3903 = vsel %vm1126, %v3724, %v3787
        %v3904 = vsel %vm1127, %v3723, %v3786
        %v3905 = vsel %vm1128, %v3722, %v3785
        %v3906 = vsel %vm1129, %v3721, %v3784
        %v3907 = vsel %vm1130, %v3720, %v3783
        %v3908 = vsel %vm1131, %v3719, %v3782
        %v3909 = vsel %vm1132, %v3718, %v3813
        %v3910 = vpack.c.bf16 %v3879, %v3878
        %v3911 = vpack.c.bf16 %v3881, %v3880
        %v3912 = vpack.c.bf16 %v3883, %v3882
        %v3913 = vpack.c.bf16 %v3885, %v3884
        %v3914 = vpack.c.bf16 %v3887, %v3886
        %v3915 = vpack.c.bf16 %v3889, %v3888
        %v3916 = vpack.c.bf16 %v3891, %v3890
        %v3917 = vpack.c.bf16 %v3893, %v3892
        %v3918 = vpack.c.bf16 %v3895, %v3894
        %v3919 = vpack.c.bf16 %v3897, %v3896
        %v3920 = vpack.c.bf16 %v3899, %v3898
        %v3921 = vpack.c.bf16 %v3901, %v3900
        %v3922 = vpack.c.bf16 %v3903, %v3902
        %v3923 = vpack.c.bf16 %v3905, %v3904
        %v3924 = vpack.c.bf16 %v3907, %v3906
        %v3925 = vpack.c.bf16 %v3909, %v3908
        %v3926 = vld [vmem:[#allocation8] sm:$0xf]
        %v3927 = vld [vmem:[#allocation8 + $0x4] sm:$0xf]
        %v3928 = vld [vmem:[#allocation8 + $0x8] sm:$0xf]
        %v3929 = vld [vmem:[#allocation8 + $0xc] sm:$0xf]
        %v3930 = vld [vmem:[#allocation8 + $0x10] sm:$0xf]
        %v3931 = vld [vmem:[#allocation8 + $0x14] sm:$0xf]
        %v3932 = vld [vmem:[#allocation8 + $0x18] sm:$0xf]
        %v3933 = vld [vmem:[#allocation8 + $0x1c] sm:$0xf]
        %v3934 = vld [vmem:[#allocation8 + $0x20] sm:$0xf]
        %v3935 = vld [vmem:[#allocation8 + $0x24] sm:$0xf]
        %v3936 = vld [vmem:[#allocation8 + $0x28] sm:$0xf]
        %v3937 = vld [vmem:[#allocation8 + $0x2c] sm:$0xf]
        %v3938 = vld [vmem:[#allocation8 + $0x30] sm:$0xf]
        %v3939 = vld [vmem:[#allocation8 + $0x34] sm:$0xf]
        %v3940 = vld [vmem:[#allocation8 + $0x38] sm:$0xf]
        %v3941 = vld [vmem:[#allocation8 + $0x3c] sm:$0xf]
        %s3942 = scalar_lea.vmem [#allocation8], 192
        %v3943 = vld [vmem:[%s3942] sm:$0xf]
        %v3944 = vld [vmem:[%s3942 + $0x4] sm:$0xf]
        %v3945 = vld [vmem:[%s3942 + $0x8] sm:$0xf]
        %v3946 = vld [vmem:[%s3942 + $0xc] sm:$0xf]
        %v3947 = vld [vmem:[%s3942 + $0x10] sm:$0xf]
        %v3948 = vld [vmem:[%s3942 + $0x14] sm:$0xf]
        %v3949 = vld [vmem:[%s3942 + $0x18] sm:$0xf]
        %v3950 = vld [vmem:[%s3942 + $0x1c] sm:$0xf]
        %v3951 = vld [vmem:[%s3942 + $0x20] sm:$0xf]
        %v3952 = vld [vmem:[%s3942 + $0x24] sm:$0xf]
        %v3953 = vld [vmem:[%s3942 + $0x28] sm:$0xf]
        %v3954 = vld [vmem:[%s3942 + $0x2c] sm:$0xf]
        %v3955 = vld [vmem:[%s3942 + $0x30] sm:$0xf]
        %v3956 = vld [vmem:[%s3942 + $0x34] sm:$0xf]
        %v3957 = vld [vmem:[%s3942 + $0x38] sm:$0xf]
        %v3958 = vld [vmem:[%s3942 + $0x3c] sm:$0xf]
        %v3975 = vunpack.c.l.b16 %v3943
        %v3976 = vunpack.c.l.b16 %v3944
        %v3977 = vunpack.c.l.b16 %v3945
        %v3978 = vunpack.c.l.b16 %v3946
        %v3979 = vunpack.c.l.b16 %v3947
        %v3980 = vunpack.c.l.b16 %v3948
        %v3981 = vunpack.c.l.b16 %v3949
        %v3982 = vunpack.c.l.b16 %v3950
        %v3983 = vunpack.c.l.b16 %v3951
        %v3984 = vunpack.c.l.b16 %v3952
        %v3985 = vunpack.c.l.b16 %v3953
        %v3986 = vunpack.c.l.b16 %v3954
        %v3987 = vunpack.c.l.b16 %v3955
        %v3988 = vunpack.c.l.b16 %v3956
        %v3989 = vunpack.c.l.b16 %v3957
        %v3990 = vunpack.c.l.b16 %v3958
        %v3991 = vpack.c.b16 %v3976, %v3975
        %v3992 = vpack.c.b16 %v3978, %v3977
        %v3993 = vpack.c.b16 %v3980, %v3979
        %v3994 = vpack.c.b16 %v3982, %v3981
        %v3995 = vpack.c.b16 %v3984, %v3983
        %v3996 = vpack.c.b16 %v3986, %v3985
        %v3997 = vpack.c.b16 %v3988, %v3987
        %v3998 = vpack.c.b16 %v3990, %v3989
        %4007 = vmatprep.subr.bf16.mxu0 0
        %4008 = vmatpush1.bf16.msra.mxu0 %v3991
        %4009 = vmatprep.subr.bf16.mxu0 0
        %4010 = vmatpush1.bf16.msra.mxu0 %v3992
        %4011 = vmatprep.subr.bf16.mxu0 0
        %4012 = vmatpush1.bf16.msra.mxu0 %v3993
        %4013 = vmatprep.subr.bf16.mxu0 0
        %4014 = vmatpush1.bf16.msra.mxu0 %v3994
        %4015 = vmatprep.subr.bf16.mxu0 0
        %4016 = vmatpush1.bf16.msra.mxu0 %v3995
        %4017 = vmatprep.subr.bf16.mxu0 0
        %4018 = vmatpush1.bf16.msra.mxu0 %v3996
        %4019 = vmatprep.subr.bf16.mxu0 0
        %4020 = vmatpush1.bf16.msra.mxu0 %v3997
        %4021 = vmatprep.subr.bf16.mxu0 0
        %4022 = vmatpush1.bf16.msra.mxu0 %v3998
        %4023 = vmatprep.subr.bf16.mxu0 0
        %4024 = vmatpush1.bf16.msra.mxu0 0
        %4025 = vmatprep.subr.bf16.mxu0 0
        %4026 = vmatpush1.bf16.msra.mxu0 0
        %4027 = vmatprep.subr.bf16.mxu0 0
        %4028 = vmatpush1.bf16.msra.mxu0 0
        %4029 = vmatprep.subr.bf16.mxu0 0
        %4030 = vmatpush1.bf16.msra.mxu0 0
        %4031 = vmatprep.subr.bf16.mxu0 0
        %4032 = vmatpush1.bf16.msra.mxu0 0
        %4033 = vmatprep.subr.bf16.mxu0 0
        %4034 = vmatpush1.bf16.msra.mxu0 0
        %4035 = vmatprep.subr.bf16.mxu0 0
        %4036 = vmatpush1.bf16.msra.mxu0 0
        %4037 = vmatprep.subr.bf16.mxu0 0
        %4038 = vmatpush1.bf16.msra.mxu0 0
        %4039 = vmatprep.mubr.bf16.mxu0 0
        %4040 = vmatmul.mubr.bf16.gmra.mrb[0].mxu0 %v3846
        %v4041 = vpop.f32.mrb[0].mxu0
        %v4042 = vadd.f32 0.0, %v4041
        %v4043 = vpop.f32.mrb[0].mxu0
        %v4044 = vpop.f32.mrb[0].mxu0
        %v4045 = vadd.f32 0.0, %v4044
        %v4046 = vpop.f32.mrb[0].mxu0
        %4047 = vmatprep.mubr.bf16.mxu0 0
        %4048 = vmatmul.mubr.bf16.gmra.mrb[0].mxu0 %v3847
        %v4049 = vpop.f32.mrb[0].mxu0
        %v4050 = vadd.f32 0.0, %v4049
        %v4051 = vpop.f32.mrb[0].mxu0
        %v4052 = vpop.f32.mrb[0].mxu0
        %v4053 = vadd.f32 0.0, %v4052
        %v4054 = vpop.f32.mrb[0].mxu0
        %4055 = vmatprep.mubr.bf16.mxu0 0
        %4056 = vmatmul.mubr.bf16.gmra.mrb[0].mxu0 %v3848
        %v4057 = vpop.f32.mrb[0].mxu0
        %v4058 = vadd.f32 0.0, %v4057
        %v4059 = vpop.f32.mrb[0].mxu0
        %v4060 = vpop.f32.mrb[0].mxu0
        %v4061 = vadd.f32 0.0, %v4060
        %v4062 = vpop.f32.mrb[0].mxu0
        %4063 = vmatprep.mubr.bf16.mxu0 0
        %4064 = vmatmul.mubr.bf16.gmra.mrb[0].mxu0 %v3849
        %v4065 = vpop.f32.mrb[0].mxu0
        %v4066 = vadd.f32 0.0, %v4065
        %v4067 = vpop.f32.mrb[0].mxu0
        %v4068 = vpop.f32.mrb[0].mxu0
        %v4069 = vadd.f32 0.0, %v4068
        %v4070 = vpop.f32.mrb[0].mxu0
        %4071 = vmatprep.mubr.bf16.mxu0 0
        %4072 = vmatmul.mubr.bf16.gmra.mrb[0].mxu0 %v3850
        %v4073 = vpop.f32.mrb[0].mxu0
        %v4074 = vadd.f32 0.0, %v4073
        %v4075 = vpop.f32.mrb[0].mxu0
        %v4076 = vpop.f32.mrb[0].mxu0
        %v4077 = vadd.f32 0.0, %v4076
        %v4078 = vpop.f32.mrb[0].mxu0
        %4079 = vmatprep.mubr.bf16.mxu0 0
        %4080 = vmatmul.mubr.bf16.gmra.mrb[0].mxu0 %v3851
        %v4081 = vpop.f32.mrb[0].mxu0
        %v4082 = vadd.f32 0.0, %v4081
        %v4083 = vpop.f32.mrb[0].mxu0
        %v4084 = vpop.f32.mrb[0].mxu0
        %v4085 = vadd.f32 0.0, %v4084
        %v4086 = vpop.f32.mrb[0].mxu0
        %4087 = vmatprep.mubr.bf16.mxu0 0
        %4088 = vmatmul.mubr.bf16.gmra.mrb[0].mxu0 %v3852
        %v4089 = vpop.f32.mrb[0].mxu0
        %v4090 = vadd.f32 0.0, %v4089
        %v4091 = vpop.f32.mrb[0].mxu0
        %v4092 = vpop.f32.mrb[0].mxu0
        %v4093 = vadd.f32 0.0, %v4092
        %v4094 = vpop.f32.mrb[0].mxu0
        %4095 = vmatprep.mubr.bf16.mxu0 0
        %4096 = vmatmul.mubr.bf16.gmra.mrb[0].mxu0 %v3853
        %v4097 = vpop.f32.mrb[0].mxu0
        %v4098 = vadd.f32 0.0, %v4097
        %v4099 = vpop.f32.mrb[0].mxu0
        %v4100 = vpop.f32.mrb[0].mxu0
        %v4101 = vadd.f32 0.0, %v4100
        %v4102 = vpop.f32.mrb[0].mxu0
        %4103 = vmatprep.mubr.bf16.mxu0 0
        %4104 = vmatmul.mubr.bf16.gmra.mrb[0].mxu0 %v3854
        %v4105 = vpop.f32.mrb[0].mxu0
        %v4106 = vadd.f32 0.0, %v4105
        %v4107 = vpop.f32.mrb[0].mxu0
        %v4108 = vpop.f32.mrb[0].mxu0
        %v4109 = vadd.f32 0.0, %v4108
        %v4110 = vpop.f32.mrb[0].mxu0
        %4111 = vmatprep.mubr.bf16.mxu0 0
        %4112 = vmatmul.mubr.bf16.gmra.mrb[0].mxu0 %v3855
        %v4113 = vpop.f32.mrb[0].mxu0
        %v4114 = vadd.f32 0.0, %v4113
        %v4115 = vpop.f32.mrb[0].mxu0
        %v4116 = vpop.f32.mrb[0].mxu0
        %v4117 = vadd.f32 0.0, %v4116
        %v4118 = vpop.f32.mrb[0].mxu0
        %4119 = vmatprep.mubr.bf16.mxu0 0
        %4120 = vmatmul.mubr.bf16.gmra.mrb[0].mxu0 %v3856
        %v4121 = vpop.f32.mrb[0].mxu0
        %v4122 = vadd.f32 0.0, %v4121
        %v4123 = vpop.f32.mrb[0].mxu0
        %v4124 = vpop.f32.mrb[0].mxu0
        %v4125 = vadd.f32 0.0, %v4124
        %v4126 = vpop.f32.mrb[0].mxu0
        %4127 = vmatprep.mubr.bf16.mxu0 0
        %4128 = vmatmul.mubr.bf16.gmra.mrb[0].mxu0 %v3857
        %v4129 = vpop.f32.mrb[0].mxu0
        %v4130 = vadd.f32 0.0, %v4129
        %v4131 = vpop.f32.mrb[0].mxu0
        %v4132 = vpop.f32.mrb[0].mxu0
        %v4133 = vadd.f32 0.0, %v4132
        %v4134 = vpop.f32.mrb[0].mxu0
        %4135 = vmatprep.mubr.bf16.mxu0 0
        %4136 = vmatmul.mubr.bf16.gmra.mrb[0].mxu0 %v3858
        %v4137 = vpop.f32.mrb[0].mxu0
        %v4138 = vadd.f32 0.0, %v4137
        %v4139 = vpop.f32.mrb[0].mxu0
        %v4140 = vpop.f32.mrb[0].mxu0
        %v4141 = vadd.f32 0.0, %v4140
        %v4142 = vpop.f32.mrb[0].mxu0
        %4143 = vmatprep.mubr.bf16.mxu0 0
        %4144 = vmatmul.mubr.bf16.gmra.mrb[0].mxu0 %v3859
        %v4145 = vpop.f32.mrb[0].mxu0
        %v4146 = vadd.f32 0.0, %v4145
        %v4147 = vpop.f32.mrb[0].mxu0
        %v4148 = vpop.f32.mrb[0].mxu0
        %v4149 = vadd.f32 0.0, %v4148
        %v4150 = vpop.f32.mrb[0].mxu0
        %4151 = vmatprep.mubr.bf16.mxu0 0
        %4152 = vmatmul.mubr.bf16.gmra.mrb[0].mxu0 %v3860
        %v4153 = vpop.f32.mrb[0].mxu0
        %v4154 = vadd.f32 0.0, %v4153
        %v4155 = vpop.f32.mrb[0].mxu0
        %v4156 = vpop.f32.mrb[0].mxu0
        %v4157 = vadd.f32 0.0, %v4156
        %v4158 = vpop.f32.mrb[0].mxu0
        %4159 = vmatprep.mubr.bf16.mxu0 0
        %4160 = vmatmul.mubr.bf16.gmra.mrb[0].mxu0 %v3861
        %v4161 = vpop.f32.mrb[0].mxu0
        %v4162 = vadd.f32 0.0, %v4161
        %v4163 = vpop.f32.mrb[0].mxu0
        %v4164 = vpop.f32.mrb[0].mxu0
        %v4165 = vadd.f32 0.0, %v4164
        %v4166 = vpop.f32.mrb[0].mxu0
        %4167 = vdwg.mxu0
        %v4184 = vunpack.c.l.b16 %v3926
        %v4185 = vunpack.c.l.b16 %v3927
        %v4186 = vunpack.c.l.b16 %v3928
        %v4187 = vunpack.c.l.b16 %v3929
        %v4188 = vunpack.c.l.b16 %v3930
        %v4189 = vunpack.c.l.b16 %v3931
        %v4190 = vunpack.c.l.b16 %v3932
        %v4191 = vunpack.c.l.b16 %v3933
        %v4192 = vunpack.c.l.b16 %v3934
        %v4193 = vunpack.c.l.b16 %v3935
        %v4194 = vunpack.c.l.b16 %v3936
        %v4195 = vunpack.c.l.b16 %v3937
        %v4196 = vunpack.c.l.b16 %v3938
        %v4197 = vunpack.c.l.b16 %v3939
        %v4198 = vunpack.c.l.b16 %v3940
        %v4199 = vunpack.c.l.b16 %v3941
        %v4200 = vpack.c.b16 %v4185, %v4184
        %v4201 = vpack.c.b16 %v4187, %v4186
        %v4202 = vpack.c.b16 %v4189, %v4188
        %v4203 = vpack.c.b16 %v4191, %v4190
        %v4204 = vpack.c.b16 %v4193, %v4192
        %v4205 = vpack.c.b16 %v4195, %v4194
        %v4206 = vpack.c.b16 %v4197, %v4196
        %v4207 = vpack.c.b16 %v4199, %v4198
        %4216 = vmatprep.subr.bf16.mxu0 0
        %4217 = vmatpush1.bf16.msra.mxu0 %v4200
        %4218 = vmatprep.subr.bf16.mxu0 0
        %4219 = vmatpush1.bf16.msra.mxu0 %v4201
        %4220 = vmatprep.subr.bf16.mxu0 0
        %4221 = vmatpush1.bf16.msra.mxu0 %v4202
        %4222 = vmatprep.subr.bf16.mxu0 0
        %4223 = vmatpush1.bf16.msra.mxu0 %v4203
        %4224 = vmatprep.subr.bf16.mxu0 0
        %4225 = vmatpush1.bf16.msra.mxu0 %v4204
        %4226 = vmatprep.subr.bf16.mxu0 0
        %4227 = vmatpush1.bf16.msra.mxu0 %v4205
        %4228 = vmatprep.subr.bf16.mxu0 0
        %4229 = vmatpush1.bf16.msra.mxu0 %v4206
        %4230 = vmatprep.subr.bf16.mxu0 0
        %4231 = vmatpush1.bf16.msra.mxu0 %v4207
        %4232 = vmatprep.subr.bf16.mxu0 0
        %4233 = vmatpush1.bf16.msra.mxu0 0
        %4234 = vmatprep.subr.bf16.mxu0 0
        %4235 = vmatpush1.bf16.msra.mxu0 0
        %4236 = vmatprep.subr.bf16.mxu0 0
        %4237 = vmatpush1.bf16.msra.mxu0 0
        %4238 = vmatprep.subr.bf16.mxu0 0
        %4239 = vmatpush1.bf16.msra.mxu0 0
        %4240 = vmatprep.subr.bf16.mxu0 0
        %4241 = vmatpush1.bf16.msra.mxu0 0
        %4242 = vmatprep.subr.bf16.mxu0 0
        %4243 = vmatpush1.bf16.msra.mxu0 0
        %4244 = vmatprep.subr.bf16.mxu0 0
        %4245 = vmatpush1.bf16.msra.mxu0 0
        %4246 = vmatprep.subr.bf16.mxu0 0
        %4247 = vmatpush1.bf16.msra.mxu0 0
        %4248 = vmatprep.mubr.bf16.mxu0 0
        %4249 = vmatmul.mubr.bf16.gmra.mrb[0].mxu0 %v3847
        %v4250 = vpop.f32.mrb[0].mxu0
        %v4251 = vadd.f32 %v4042, %v4250
        %v4252 = vpop.f32.mrb[0].mxu0
        %v4253 = vpop.f32.mrb[0].mxu0
        %v4254 = vadd.f32 %v4045, %v4253
        %v4255 = vpop.f32.mrb[0].mxu0
        %4256 = vmatprep.mubr.bf16.mxu0 0
        %4257 = vmatmul.mubr.bf16.gmra.mrb[0].mxu0 %v3846
        %v4258 = vpop.f32.mrb[0].mxu0
        %v4259 = vadd.f32 %v4050, %v4258
        %v4260 = vpop.f32.mrb[0].mxu0
        %v4261 = vpop.f32.mrb[0].mxu0
        %v4262 = vadd.f32 %v4053, %v4261
        %v4263 = vpop.f32.mrb[0].mxu0
        %4264 = vmatprep.mubr.bf16.mxu0 0
        %4265 = vmatmul.mubr.bf16.gmra.mrb[0].mxu0 %v3847
        %v4266 = vpop.f32.mrb[0].mxu0
        %v4267 = vadd.f32 %v4058, %v4266
        %v4268 = vpop.f32.mrb[0].mxu0
        %v4269 = vpop.f32.mrb[0].mxu0
        %v4270 = vadd.f32 %v4061, %v4269
        %v4271 = vpop.f32.mrb[0].mxu0
        %4272 = vmatprep.mubr.bf16.mxu0 0
        %4273 = vmatmul.mubr.bf16.gmra.mrb[0].mxu0 %v3848
        %v4274 = vpop.f32.mrb[0].mxu0
        %v4275 = vadd.f32 %v4066, %v4274
        %v4276 = vpop.f32.mrb[0].mxu0
        %v4277 = vpop.f32.mrb[0].mxu0
        %v4278 = vadd.f32 %v4069, %v4277
        %v4279 = vpop.f32.mrb[0].mxu0
        %4280 = vmatprep.mubr.bf16.mxu0 0
        %4281 = vmatmul.mubr.bf16.gmra.mrb[0].mxu0 %v3849
        %v4282 = vpop.f32.mrb[0].mxu0
        %v4283 = vadd.f32 %v4074, %v4282
        %v4284 = vpop.f32.mrb[0].mxu0
        %v4285 = vpop.f32.mrb[0].mxu0
        %v4286 = vadd.f32 %v4077, %v4285
        %v4287 = vpop.f32.mrb[0].mxu0
        %4288 = vmatprep.mubr.bf16.mxu0 0
        %4289 = vmatmul.mubr.bf16.gmra.mrb[0].mxu0 %v3850
        %v4290 = vpop.f32.mrb[0].mxu0
        %v4291 = vadd.f32 %v4082, %v4290
        %v4292 = vpop.f32.mrb[0].mxu0
        %v4293 = vpop.f32.mrb[0].mxu0
        %v4294 = vadd.f32 %v4085, %v4293
        %v4295 = vpop.f32.mrb[0].mxu0
        %4296 = vmatprep.mubr.bf16.mxu0 0
        %4297 = vmatmul.mubr.bf16.gmra.mrb[0].mxu0 %v3851
        %v4298 = vpop.f32.mrb[0].mxu0
        %v4299 = vadd.f32 %v4090, %v4298
        %v4300 = vpop.f32.mrb[0].mxu0
        %v4301 = vpop.f32.mrb[0].mxu0
        %v4302 = vadd.f32 %v4093, %v4301
        %v4303 = vpop.f32.mrb[0].mxu0
        %4304 = vmatprep.mubr.bf16.mxu0 0
        %4305 = vmatmul.mubr.bf16.gmra.mrb[0].mxu0 %v3852
        %v4306 = vpop.f32.mrb[0].mxu0
        %v4307 = vadd.f32 %v4098, %v4306
        %v4308 = vpop.f32.mrb[0].mxu0
        %v4309 = vpop.f32.mrb[0].mxu0
        %v4310 = vadd.f32 %v4101, %v4309
        %v4311 = vpop.f32.mrb[0].mxu0
        %4312 = vmatprep.mubr.bf16.mxu0 0
        %4313 = vmatmul.mubr.bf16.gmra.mrb[0].mxu0 %v3853
        %v4314 = vpop.f32.mrb[0].mxu0
        %v4315 = vadd.f32 %v4106, %v4314
        %v4316 = vpop.f32.mrb[0].mxu0
        %v4317 = vpop.f32.mrb[0].mxu0
        %v4318 = vadd.f32 %v4109, %v4317
        %v4319 = vpop.f32.mrb[0].mxu0
        %4320 = vmatprep.mubr.bf16.mxu0 0
        %4321 = vmatmul.mubr.bf16.gmra.mrb[0].mxu0 %v3854
        %v4322 = vpop.f32.mrb[0].mxu0
        %v4323 = vadd.f32 %v4114, %v4322
        %v4324 = vpop.f32.mrb[0].mxu0
        %v4325 = vpop.f32.mrb[0].mxu0
        %v4326 = vadd.f32 %v4117, %v4325
        %v4327 = vpop.f32.mrb[0].mxu0
        %4328 = vmatprep.mubr.bf16.mxu0 0
        %4329 = vmatmul.mubr.bf16.gmra.mrb[0].mxu0 %v3855
        %v4330 = vpop.f32.mrb[0].mxu0
        %v4331 = vadd.f32 %v4122, %v4330
        %v4332 = vpop.f32.mrb[0].mxu0
        %v4333 = vpop.f32.mrb[0].mxu0
        %v4334 = vadd.f32 %v4125, %v4333
        %v4335 = vpop.f32.mrb[0].mxu0
        %4336 = vmatprep.mubr.bf16.mxu0 0
        %4337 = vmatmul.mubr.bf16.gmra.mrb[0].mxu0 %v3856
        %v4338 = vpop.f32.mrb[0].mxu0
        %v4339 = vadd.f32 %v4130, %v4338
        %v4340 = vpop.f32.mrb[0].mxu0
        %v4341 = vpop.f32.mrb[0].mxu0
        %v4342 = vadd.f32 %v4133, %v4341
        %v4343 = vpop.f32.mrb[0].mxu0
        %4344 = vmatprep.mubr.bf16.mxu0 0
        %4345 = vmatmul.mubr.bf16.gmra.mrb[0].mxu0 %v3857
        %v4346 = vpop.f32.mrb[0].mxu0
        %v4347 = vadd.f32 %v4138, %v4346
        %v4348 = vpop.f32.mrb[0].mxu0
        %v4349 = vpop.f32.mrb[0].mxu0
        %v4350 = vadd.f32 %v4141, %v4349
        %v4351 = vpop.f32.mrb[0].mxu0
        %4352 = vmatprep.mubr.bf16.mxu0 0
        %4353 = vmatmul.mubr.bf16.gmra.mrb[0].mxu0 %v3858
        %v4354 = vpop.f32.mrb[0].mxu0
        %v4355 = vadd.f32 %v4146, %v4354
        %v4356 = vpop.f32.mrb[0].mxu0
        %v4357 = vpop.f32.mrb[0].mxu0
        %v4358 = vadd.f32 %v4149, %v4357
        %v4359 = vpop.f32.mrb[0].mxu0
        %4360 = vmatprep.mubr.bf16.mxu0 0
        %4361 = vmatmul.mubr.bf16.gmra.mrb[0].mxu0 %v3859
        %v4362 = vpop.f32.mrb[0].mxu0
        %v4363 = vadd.f32 %v4154, %v4362
        %v4364 = vpop.f32.mrb[0].mxu0
        %v4365 = vpop.f32.mrb[0].mxu0
        %v4366 = vadd.f32 %v4157, %v4365
        %v4367 = vpop.f32.mrb[0].mxu0
        %4368 = vmatprep.mubr.bf16.mxu0 0
        %4369 = vmatmul.mubr.bf16.gmra.mrb[0].mxu0 %v3860
        %v4370 = vpop.f32.mrb[0].mxu0
        %v4371 = vadd.f32 %v4162, %v4370
        %v4372 = vpop.f32.mrb[0].mxu0
        %v4373 = vpop.f32.mrb[0].mxu0
        %v4374 = vadd.f32 %v4165, %v4373
        %v4375 = vpop.f32.mrb[0].mxu0
        %4376 = vdwg.mxu0
        %s4377 = scalar_lea.vmem [#allocation8], 384
        %v4378 = vld [vmem:[%s4377] sm:$0xf]
        %v4379 = vld [vmem:[%s4377 + $0x4] sm:$0xf]
        %v4380 = vld [vmem:[%s4377 + $0x8] sm:$0xf]
        %v4381 = vld [vmem:[%s4377 + $0xc] sm:$0xf]
        %v4382 = vld [vmem:[%s4377 + $0x10] sm:$0xf]
        %v4383 = vld [vmem:[%s4377 + $0x14] sm:$0xf]
        %v4384 = vld [vmem:[%s4377 + $0x18] sm:$0xf]
        %v4385 = vld [vmem:[%s4377 + $0x1c] sm:$0xf]
        %v4386 = vld [vmem:[%s4377 + $0x20] sm:$0xf]
        %v4387 = vld [vmem:[%s4377 + $0x24] sm:$0xf]
        %v4388 = vld [vmem:[%s4377 + $0x28] sm:$0xf]
        %v4389 = vld [vmem:[%s4377 + $0x2c] sm:$0xf]
        %v4390 = vld [vmem:[%s4377 + $0x30] sm:$0xf]
        %v4391 = vld [vmem:[%s4377 + $0x34] sm:$0xf]
        %v4392 = vld [vmem:[%s4377 + $0x38] sm:$0xf]
        %v4393 = vld [vmem:[%s4377 + $0x3c] sm:$0xf]
        %v4410 = vunpack.c.l.b16 %v4378
        %v4411 = vunpack.c.l.b16 %v4379
        %v4412 = vunpack.c.l.b16 %v4380
        %v4413 = vunpack.c.l.b16 %v4381
        %v4414 = vunpack.c.l.b16 %v4382
        %v4415 = vunpack.c.l.b16 %v4383
        %v4416 = vunpack.c.l.b16 %v4384
        %v4417 = vunpack.c.l.b16 %v4385
        %v4418 = vunpack.c.l.b16 %v4386
        %v4419 = vunpack.c.l.b16 %v4387
        %v4420 = vunpack.c.l.b16 %v4388
        %v4421 = vunpack.c.l.b16 %v4389
        %v4422 = vunpack.c.l.b16 %v4390
        %v4423 = vunpack.c.l.b16 %v4391
        %v4424 = vunpack.c.l.b16 %v4392
        %v4425 = vunpack.c.l.b16 %v4393
        %v4426 = vpack.c.b16 %v4411, %v4410
        %v4427 = vpack.c.b16 %v4413, %v4412
        %v4428 = vpack.c.b16 %v4415, %v4414
        %v4429 = vpack.c.b16 %v4417, %v4416
        %v4430 = vpack.c.b16 %v4419, %v4418
        %v4431 = vpack.c.b16 %v4421, %v4420
        %v4432 = vpack.c.b16 %v4423, %v4422
        %v4433 = vpack.c.b16 %v4425, %v4424
        %4442 = vmatprep.subr.bf16.mxu0 0
        %4443 = vmatpush1.bf16.msra.mxu0 %v4426
        %4444 = vmatprep.subr.bf16.mxu0 0
        %4445 = vmatpush1.bf16.msra.mxu0 %v4427
        %4446 = vmatprep.subr.bf16.mxu0 0
        %4447 = vmatpush1.bf16.msra.mxu0 %v4428
        %4448 = vmatprep.subr.bf16.mxu0 0
        %4449 = vmatpush1.bf16.msra.mxu0 %v4429
        %4450 = vmatprep.subr.bf16.mxu0 0
        %4451 = vmatpush1.bf16.msra.mxu0 %v4430
        %4452 = vmatprep.subr.bf16.mxu0 0
        %4453 = vmatpush1.bf16.msra.mxu0 %v4431
        %4454 = vmatprep.subr.bf16.mxu0 0
        %4455 = vmatpush1.bf16.msra.mxu0 %v4432
        %4456 = vmatprep.subr.bf16.mxu0 0
        %4457 = vmatpush1.bf16.msra.mxu0 %v4433
        %4458 = vmatprep.subr.bf16.mxu0 0
        %4459 = vmatpush1.bf16.msra.mxu0 0
        %4460 = vmatprep.subr.bf16.mxu0 0
        %4461 = vmatpush1.bf16.msra.mxu0 0
        %4462 = vmatprep.subr.bf16.mxu0 0
        %4463 = vmatpush1.bf16.msra.mxu0 0
        %4464 = vmatprep.subr.bf16.mxu0 0
        %4465 = vmatpush1.bf16.msra.mxu0 0
        %4466 = vmatprep.subr.bf16.mxu0 0
        %4467 = vmatpush1.bf16.msra.mxu0 0
        %4468 = vmatprep.subr.bf16.mxu0 0
        %4469 = vmatpush1.bf16.msra.mxu0 0
        %4470 = vmatprep.subr.bf16.mxu0 0
        %4471 = vmatpush1.bf16.msra.mxu0 0
        %4472 = vmatprep.subr.bf16.mxu0 0
        %4473 = vmatpush1.bf16.msra.mxu0 0
        %4474 = vmatprep.mubr.bf16.mxu0 0
        %4475 = vmatmul.mubr.bf16.gmra.mrb[0].mxu0 %v3847
        %v4476 = vpop.f32.mrb[0].mxu0
        %v4477 = vadd.f32 0.0, %v4476
        %v4478 = vpop.f32.mrb[0].mxu0
        %v4479 = vpop.f32.mrb[0].mxu0
        %v4480 = vadd.f32 0.0, %v4479
        %v4481 = vpop.f32.mrb[0].mxu0
        %4482 = vmatprep.mubr.bf16.mxu0 0
        %4483 = vmatmul.mubr.bf16.gmra.mrb[0].mxu0 %v3848
        %v4484 = vpop.f32.mrb[0].mxu0
        %v4485 = vadd.f32 0.0, %v4484
        %v4486 = vpop.f32.mrb[0].mxu0
        %v4487 = vpop.f32.mrb[0].mxu0
        %v4488 = vadd.f32 0.0, %v4487
        %v4489 = vpop.f32.mrb[0].mxu0
        %4490 = vmatprep.mubr.bf16.mxu0 0
        %4491 = vmatmul.mubr.bf16.gmra.mrb[0].mxu0 %v3849
        %v4492 = vpop.f32.mrb[0].mxu0
        %v4493 = vadd.f32 0.0, %v4492
        %v4494 = vpop.f32.mrb[0].mxu0
        %v4495 = vpop.f32.mrb[0].mxu0
        %v4496 = vadd.f32 0.0, %v4495
        %v4497 = vpop.f32.mrb[0].mxu0
        %4498 = vmatprep.mubr.bf16.mxu0 0
        %4499 = vmatmul.mubr.bf16.gmra.mrb[0].mxu0 %v3850
        %v4500 = vpop.f32.mrb[0].mxu0
        %v4501 = vadd.f32 0.0, %v4500
        %v4502 = vpop.f32.mrb[0].mxu0
        %v4503 = vpop.f32.mrb[0].mxu0
        %v4504 = vadd.f32 0.0, %v4503
        %v4505 = vpop.f32.mrb[0].mxu0
        %4506 = vmatprep.mubr.bf16.mxu0 0
        %4507 = vmatmul.mubr.bf16.gmra.mrb[0].mxu0 %v3851
        %v4508 = vpop.f32.mrb[0].mxu0
        %v4509 = vadd.f32 0.0, %v4508
        %v4510 = vpop.f32.mrb[0].mxu0
        %v4511 = vpop.f32.mrb[0].mxu0
        %v4512 = vadd.f32 0.0, %v4511
        %v4513 = vpop.f32.mrb[0].mxu0
        %4514 = vmatprep.mubr.bf16.mxu0 0
        %4515 = vmatmul.mubr.bf16.gmra.mrb[0].mxu0 %v3852
        %v4516 = vpop.f32.mrb[0].mxu0
        %v4517 = vadd.f32 0.0, %v4516
        %v4518 = vpop.f32.mrb[0].mxu0
        %v4519 = vpop.f32.mrb[0].mxu0
        %v4520 = vadd.f32 0.0, %v4519
        %v4521 = vpop.f32.mrb[0].mxu0
        %4522 = vmatprep.mubr.bf16.mxu0 0
        %4523 = vmatmul.mubr.bf16.gmra.mrb[0].mxu0 %v3853
        %v4524 = vpop.f32.mrb[0].mxu0
        %v4525 = vadd.f32 0.0, %v4524
        %v4526 = vpop.f32.mrb[0].mxu0
        %v4527 = vpop.f32.mrb[0].mxu0
        %v4528 = vadd.f32 0.0, %v4527
        %v4529 = vpop.f32.mrb[0].mxu0
        %4530 = vmatprep.mubr.bf16.mxu0 0
        %4531 = vmatmul.mubr.bf16.gmra.mrb[0].mxu0 %v3854
        %v4532 = vpop.f32.mrb[0].mxu0
        %v4533 = vadd.f32 0.0, %v4532
        %v4534 = vpop.f32.mrb[0].mxu0
        %v4535 = vpop.f32.mrb[0].mxu0
        %v4536 = vadd.f32 0.0, %v4535
        %v4537 = vpop.f32.mrb[0].mxu0
        %4538 = vmatprep.mubr.bf16.mxu0 0
        %4539 = vmatmul.mubr.bf16.gmra.mrb[0].mxu0 %v3855
        %v4540 = vpop.f32.mrb[0].mxu0
        %v4541 = vadd.f32 0.0, %v4540
        %v4542 = vpop.f32.mrb[0].mxu0
        %v4543 = vpop.f32.mrb[0].mxu0
        %v4544 = vadd.f32 0.0, %v4543
        %v4545 = vpop.f32.mrb[0].mxu0
        %4546 = vmatprep.mubr.bf16.mxu0 0
        %4547 = vmatmul.mubr.bf16.gmra.mrb[0].mxu0 %v3856
        %v4548 = vpop.f32.mrb[0].mxu0
        %v4549 = vadd.f32 0.0, %v4548
        %v4550 = vpop.f32.mrb[0].mxu0
        %v4551 = vpop.f32.mrb[0].mxu0
        %v4552 = vadd.f32 0.0, %v4551
        %v4553 = vpop.f32.mrb[0].mxu0
        %4554 = vmatprep.mubr.bf16.mxu0 0
        %4555 = vmatmul.mubr.bf16.gmra.mrb[0].mxu0 %v3857
        %v4556 = vpop.f32.mrb[0].mxu0
        %v4557 = vadd.f32 0.0, %v4556
        %v4558 = vpop.f32.mrb[0].mxu0
        %v4559 = vpop.f32.mrb[0].mxu0
        %v4560 = vadd.f32 0.0, %v4559
        %v4561 = vpop.f32.mrb[0].mxu0
        %4562 = vmatprep.mubr.bf16.mxu0 0
        %4563 = vmatmul.mubr.bf16.gmra.mrb[0].mxu0 %v3858
        %v4564 = vpop.f32.mrb[0].mxu0
        %v4565 = vadd.f32 0.0, %v4564
        %v4566 = vpop.f32.mrb[0].mxu0
        %v4567 = vpop.f32.mrb[0].mxu0
        %v4568 = vadd.f32 0.0, %v4567
        %v4569 = vpop.f32.mrb[0].mxu0
        %4570 = vmatprep.mubr.bf16.mxu0 0
        %4571 = vmatmul.mubr.bf16.gmra.mrb[0].mxu0 %v3859
        %v4572 = vpop.f32.mrb[0].mxu0
        %v4573 = vadd.f32 0.0, %v4572
        %v4574 = vpop.f32.mrb[0].mxu0
        %v4575 = vpop.f32.mrb[0].mxu0
        %v4576 = vadd.f32 0.0, %v4575
        %v4577 = vpop.f32.mrb[0].mxu0
        %4578 = vmatprep.mubr.bf16.mxu0 0
        %4579 = vmatmul.mubr.bf16.gmra.mrb[0].mxu0 %v3860
        %v4580 = vpop.f32.mrb[0].mxu0
        %v4581 = vadd.f32 0.0, %v4580
        %v4582 = vpop.f32.mrb[0].mxu0
        %v4583 = vpop.f32.mrb[0].mxu0
        %v4584 = vadd.f32 0.0, %v4583
        %v4585 = vpop.f32.mrb[0].mxu0
        %4586 = vmatprep.mubr.bf16.mxu0 0
        %4587 = vmatmul.mubr.bf16.gmra.mrb[0].mxu0 %v3861
        %v4588 = vpop.f32.mrb[0].mxu0
        %v4589 = vadd.f32 0.0, %v4588
        %v4590 = vpop.f32.mrb[0].mxu0
        %v4591 = vpop.f32.mrb[0].mxu0
        %v4592 = vadd.f32 0.0, %v4591
        %v4593 = vpop.f32.mrb[0].mxu0
        %4594 = vmatprep.mubr.bf16.mxu0 0
        %4595 = vmatmul.mubr.bf16.gmra.mrb[0].mxu0 %v3860
        %v4596 = vpop.f32.mrb[0].mxu0
        %v4597 = vadd.f32 0.0, %v4596
        %v4598 = vpop.f32.mrb[0].mxu0
        %v4599 = vpop.f32.mrb[0].mxu0
        %v4600 = vadd.f32 0.0, %v4599
        %v4601 = vpop.f32.mrb[0].mxu0
        %4602 = vdwg.mxu0
        %v4603 = vadd.f32 %v4251, %v4477
        %v4604 = vadd.f32 %v4254, %v4480
        %v4605 = vadd.f32 %v4259, %v4485
        %v4606 = vadd.f32 %v4262, %v4488
        %v4607 = vadd.f32 %v4267, %v4493
        %v4608 = vadd.f32 %v4270, %v4496
        %v4609 = vadd.f32 %v4275, %v4501
        %v4610 = vadd.f32 %v4278, %v4504
        %v4611 = vadd.f32 %v4283, %v4509
        %v4612 = vadd.f32 %v4286, %v4512
        %v4613 = vadd.f32 %v4291, %v4517
        %v4614 = vadd.f32 %v4294, %v4520
        %v4615 = vadd.f32 %v4299, %v4525
        %v4616 = vadd.f32 %v4302, %v4528
        %v4617 = vadd.f32 %v4307, %v4533
        %v4618 = vadd.f32 %v4310, %v4536
        %v4619 = vadd.f32 %v4315, %v4541
        %v4620 = vadd.f32 %v4318, %v4544
        %v4621 = vadd.f32 %v4323, %v4549
        %v4622 = vadd.f32 %v4326, %v4552
        %v4623 = vadd.f32 %v4331, %v4557
        %v4624 = vadd.f32 %v4334, %v4560
        %v4625 = vadd.f32 %v4339, %v4565
        %v4626 = vadd.f32 %v4342, %v4568
        %v4627 = vadd.f32 %v4347, %v4573
        %v4628 = vadd.f32 %v4350, %v4576
        %v4629 = vadd.f32 %v4355, %v4581
        %v4630 = vadd.f32 %v4358, %v4584
        %v4631 = vadd.f32 %v4363, %v4589
        %v4632 = vadd.f32 %v4366, %v4592
        %v4633 = vadd.f32 %v4371, %v4597
        %v4634 = vadd.f32 %v4374, %v4600
        %s4635 = scalar_lea.vmem [#allocation8], 64
        %v4636 = vld [vmem:[%s4635] sm:$0xf]
        %v4637 = vld [vmem:[%s4635 + $0x4] sm:$0xf]
        %v4638 = vld [vmem:[%s4635 + $0x8] sm:$0xf]
        %v4639 = vld [vmem:[%s4635 + $0xc] sm:$0xf]
        %v4640 = vld [vmem:[%s4635 + $0x10] sm:$0xf]
        %v4641 = vld [vmem:[%s4635 + $0x14] sm:$0xf]
        %v4642 = vld [vmem:[%s4635 + $0x18] sm:$0xf]
        %v4643 = vld [vmem:[%s4635 + $0x1c] sm:$0xf]
        %v4644 = vld [vmem:[%s4635 + $0x20] sm:$0xf]
        %v4645 = vld [vmem:[%s4635 + $0x24] sm:$0xf]
        %v4646 = vld [vmem:[%s4635 + $0x28] sm:$0xf]
        %v4647 = vld [vmem:[%s4635 + $0x2c] sm:$0xf]
        %v4648 = vld [vmem:[%s4635 + $0x30] sm:$0xf]
        %v4649 = vld [vmem:[%s4635 + $0x34] sm:$0xf]
        %v4650 = vld [vmem:[%s4635 + $0x38] sm:$0xf]
        %v4651 = vld [vmem:[%s4635 + $0x3c] sm:$0xf]
        %v4668 = vunpack.c.l.b16 %v4636
        %v4669 = vunpack.c.l.b16 %v4637
        %v4670 = vunpack.c.l.b16 %v4638
        %v4671 = vunpack.c.l.b16 %v4639
        %v4672 = vunpack.c.l.b16 %v4640
        %v4673 = vunpack.c.l.b16 %v4641
        %v4674 = vunpack.c.l.b16 %v4642
        %v4675 = vunpack.c.l.b16 %v4643
        %v4676 = vunpack.c.l.b16 %v4644
        %v4677 = vunpack.c.l.b16 %v4645
        %v4678 = vunpack.c.l.b16 %v4646
        %v4679 = vunpack.c.l.b16 %v4647
        %v4680 = vunpack.c.l.b16 %v4648
        %v4681 = vunpack.c.l.b16 %v4649
        %v4682 = vunpack.c.l.b16 %v4650
        %v4683 = vunpack.c.l.b16 %v4651
        %v4684 = vpack.c.b16 %v4669, %v4668
        %v4685 = vpack.c.b16 %v4671, %v4670
        %v4686 = vpack.c.b16 %v4673, %v4672
        %v4687 = vpack.c.b16 %v4675, %v4674
        %v4688 = vpack.c.b16 %v4677, %v4676
        %v4689 = vpack.c.b16 %v4679, %v4678
        %v4690 = vpack.c.b16 %v4681, %v4680
        %v4691 = vpack.c.b16 %v4683, %v4682
        %4700 = vmatprep.subr.bf16.mxu0 0
        %4701 = vmatpush1.bf16.msra.mxu0 %v4684
        %4702 = vmatprep.subr.bf16.mxu0 0
        %4703 = vmatpush1.bf16.msra.mxu0 %v4685
        %4704 = vmatprep.subr.bf16.mxu0 0
        %4705 = vmatpush1.bf16.msra.mxu0 %v4686
        %4706 = vmatprep.subr.bf16.mxu0 0
        %4707 = vmatpush1.bf16.msra.mxu0 %v4687
        %4708 = vmatprep.subr.bf16.mxu0 0
        %4709 = vmatpush1.bf16.msra.mxu0 %v4688
        %4710 = vmatprep.subr.bf16.mxu0 0
        %4711 = vmatpush1.bf16.msra.mxu0 %v4689
        %4712 = vmatprep.subr.bf16.mxu0 0
        %4713 = vmatpush1.bf16.msra.mxu0 %v4690
        %4714 = vmatprep.subr.bf16.mxu0 0
        %4715 = vmatpush1.bf16.msra.mxu0 %v4691
        %4716 = vmatprep.subr.bf16.mxu0 0
        %4717 = vmatpush1.bf16.msra.mxu0 0
        %4718 = vmatprep.subr.bf16.mxu0 0
        %4719 = vmatpush1.bf16.msra.mxu0 0
        %4720 = vmatprep.subr.bf16.mxu0 0
        %4721 = vmatpush1.bf16.msra.mxu0 0
        %4722 = vmatprep.subr.bf16.mxu0 0
        %4723 = vmatpush1.bf16.msra.mxu0 0
        %4724 = vmatprep.subr.bf16.mxu0 0
        %4725 = vmatpush1.bf16.msra.mxu0 0
        %4726 = vmatprep.subr.bf16.mxu0 0
        %4727 = vmatpush1.bf16.msra.mxu0 0
        %4728 = vmatprep.subr.bf16.mxu0 0
        %4729 = vmatpush1.bf16.msra.mxu0 0
        %4730 = vmatprep.subr.bf16.mxu0 0
        %4731 = vmatpush1.bf16.msra.mxu0 0
        %4732 = vmatprep.mubr.bf16.mxu0 0
        %4733 = vmatmul.mubr.bf16.gmra.mrb[0].mxu0 %v3863
        %v4734 = vpop.f32.mrb[0].mxu0
        %v4735 = vadd.f32 0.0, %v4734
        %v4736 = vpop.f32.mrb[0].mxu0
        %v4737 = vpop.f32.mrb[0].mxu0
        %v4738 = vadd.f32 0.0, %v4737
        %v4739 = vpop.f32.mrb[0].mxu0
        %4740 = vmatprep.mubr.bf16.mxu0 0
        %4741 = vmatmul.mubr.bf16.gmra.mrb[0].mxu0 %v3862
        %v4742 = vpop.f32.mrb[0].mxu0
        %v4743 = vadd.f32 0.0, %v4742
        %v4744 = vpop.f32.mrb[0].mxu0
        %v4745 = vpop.f32.mrb[0].mxu0
        %v4746 = vadd.f32 0.0, %v4745
        %v4747 = vpop.f32.mrb[0].mxu0
        %4748 = vmatprep.mubr.bf16.mxu0 0
        %4749 = vmatmul.mubr.bf16.gmra.mrb[0].mxu0 %v3863
        %v4750 = vpop.f32.mrb[0].mxu0
        %v4751 = vadd.f32 0.0, %v4750
        %v4752 = vpop.f32.mrb[0].mxu0
        %v4753 = vpop.f32.mrb[0].mxu0
        %v4754 = vadd.f32 0.0, %v4753
        %v4755 = vpop.f32.mrb[0].mxu0
        %4756 = vmatprep.mubr.bf16.mxu0 0
        %4757 = vmatmul.mubr.bf16.gmra.mrb[0].mxu0 %v3864
        %v4758 = vpop.f32.mrb[0].mxu0
        %v4759 = vadd.f32 0.0, %v4758
        %v4760 = vpop.f32.mrb[0].mxu0
        %v4761 = vpop.f32.mrb[0].mxu0
        %v4762 = vadd.f32 0.0, %v4761
        %v4763 = vpop.f32.mrb[0].mxu0
        %4764 = vmatprep.mubr.bf16.mxu0 0
        %4765 = vmatmul.mubr.bf16.gmra.mrb[0].mxu0 %v3865
        %v4766 = vpop.f32.mrb[0].mxu0
        %v4767 = vadd.f32 0.0, %v4766
        %v4768 = vpop.f32.mrb[0].mxu0
        %v4769 = vpop.f32.mrb[0].mxu0
        %v4770 = vadd.f32 0.0, %v4769
        %v4771 = vpop.f32.mrb[0].mxu0
        %4772 = vmatprep.mubr.bf16.mxu0 0
        %4773 = vmatmul.mubr.bf16.gmra.mrb[0].mxu0 %v3866
        %v4774 = vpop.f32.mrb[0].mxu0
        %v4775 = vadd.f32 0.0, %v4774
        %v4776 = vpop.f32.mrb[0].mxu0
        %v4777 = vpop.f32.mrb[0].mxu0
        %v4778 = vadd.f32 0.0, %v4777
        %v4779 = vpop.f32.mrb[0].mxu0
        %4780 = vmatprep.mubr.bf16.mxu0 0
        %4781 = vmatmul.mubr.bf16.gmra.mrb[0].mxu0 %v3867
        %v4782 = vpop.f32.mrb[0].mxu0
        %v4783 = vadd.f32 0.0, %v4782
        %v4784 = vpop.f32.mrb[0].mxu0
        %v4785 = vpop.f32.mrb[0].mxu0
        %v4786 = vadd.f32 0.0, %v4785
        %v4787 = vpop.f32.mrb[0].mxu0
        %4788 = vmatprep.mubr.bf16.mxu0 0
        %4789 = vmatmul.mubr.bf16.gmra.mrb[0].mxu0 %v3868
        %v4790 = vpop.f32.mrb[0].mxu0
        %v4791 = vadd.f32 0.0, %v4790
        %v4792 = vpop.f32.mrb[0].mxu0
        %v4793 = vpop.f32.mrb[0].mxu0
        %v4794 = vadd.f32 0.0, %v4793
        %v4795 = vpop.f32.mrb[0].mxu0
        %4796 = vmatprep.mubr.bf16.mxu0 0
        %4797 = vmatmul.mubr.bf16.gmra.mrb[0].mxu0 %v3869
        %v4798 = vpop.f32.mrb[0].mxu0
        %v4799 = vadd.f32 0.0, %v4798
        %v4800 = vpop.f32.mrb[0].mxu0
        %v4801 = vpop.f32.mrb[0].mxu0
        %v4802 = vadd.f32 0.0, %v4801
        %v4803 = vpop.f32.mrb[0].mxu0
        %4804 = vmatprep.mubr.bf16.mxu0 0
        %4805 = vmatmul.mubr.bf16.gmra.mrb[0].mxu0 %v3870
        %v4806 = vpop.f32.mrb[0].mxu0
        %v4807 = vadd.f32 0.0, %v4806
        %v4808 = vpop.f32.mrb[0].mxu0
        %v4809 = vpop.f32.mrb[0].mxu0
        %v4810 = vadd.f32 0.0, %v4809
        %v4811 = vpop.f32.mrb[0].mxu0
        %4812 = vmatprep.mubr.bf16.mxu0 0
        %4813 = vmatmul.mubr.bf16.gmra.mrb[0].mxu0 %v3871
        %v4814 = vpop.f32.mrb[0].mxu0
        %v4815 = vadd.f32 0.0, %v4814
        %v4816 = vpop.f32.mrb[0].mxu0
        %v4817 = vpop.f32.mrb[0].mxu0
        %v4818 = vadd.f32 0.0, %v4817
        %v4819 = vpop.f32.mrb[0].mxu0
        %4820 = vmatprep.mubr.bf16.mxu0 0
        %4821 = vmatmul.mubr.bf16.gmra.mrb[0].mxu0 %v3872
        %v4822 = vpop.f32.mrb[0].mxu0
        %v4823 = vadd.f32 0.0, %v4822
        %v4824 = vpop.f32.mrb[0].mxu0
        %v4825 = vpop.f32.mrb[0].mxu0
        %v4826 = vadd.f32 0.0, %v4825
        %v4827 = vpop.f32.mrb[0].mxu0
        %4828 = vmatprep.mubr.bf16.mxu0 0
        %4829 = vmatmul.mubr.bf16.gmra.mrb[0].mxu0 %v3873
        %v4830 = vpop.f32.mrb[0].mxu0
        %v4831 = vadd.f32 0.0, %v4830
        %v4832 = vpop.f32.mrb[0].mxu0
        %v4833 = vpop.f32.mrb[0].mxu0
        %v4834 = vadd.f32 0.0, %v4833
        %v4835 = vpop.f32.mrb[0].mxu0
        %4836 = vmatprep.mubr.bf16.mxu0 0
        %4837 = vmatmul.mubr.bf16.gmra.mrb[0].mxu0 %v3874
        %v4838 = vpop.f32.mrb[0].mxu0
        %v4839 = vadd.f32 0.0, %v4838
        %v4840 = vpop.f32.mrb[0].mxu0
        %v4841 = vpop.f32.mrb[0].mxu0
        %v4842 = vadd.f32 0.0, %v4841
        %v4843 = vpop.f32.mrb[0].mxu0
        %4844 = vmatprep.mubr.bf16.mxu0 0
        %4845 = vmatmul.mubr.bf16.gmra.mrb[0].mxu0 %v3875
        %v4846 = vpop.f32.mrb[0].mxu0
        %v4847 = vadd.f32 0.0, %v4846
        %v4848 = vpop.f32.mrb[0].mxu0
        %v4849 = vpop.f32.mrb[0].mxu0
        %v4850 = vadd.f32 0.0, %v4849
        %v4851 = vpop.f32.mrb[0].mxu0
        %4852 = vmatprep.mubr.bf16.mxu0 0
        %4853 = vmatmul.mubr.bf16.gmra.mrb[0].mxu0 %v3876
        %v4854 = vpop.f32.mrb[0].mxu0
        %v4855 = vadd.f32 0.0, %v4854
        %v4856 = vpop.f32.mrb[0].mxu0
        %v4857 = vpop.f32.mrb[0].mxu0
        %v4858 = vadd.f32 0.0, %v4857
        %v4859 = vpop.f32.mrb[0].mxu0
        %4860 = vdwg.mxu0
        %v4861 = vadd.f32 %v4603, %v4735
        %v4862 = vadd.f32 %v4604, %v4738
        %v4863 = vadd.f32 %v4605, %v4743
        %v4864 = vadd.f32 %v4606, %v4746
        %v4865 = vadd.f32 %v4607, %v4751
        %v4866 = vadd.f32 %v4608, %v4754
        %v4867 = vadd.f32 %v4609, %v4759
        %v4868 = vadd.f32 %v4610, %v4762
        %v4869 = vadd.f32 %v4611, %v4767
        %v4870 = vadd.f32 %v4612, %v4770
        %v4871 = vadd.f32 %v4613, %v4775
        %v4872 = vadd.f32 %v4614, %v4778
        %v4873 = vadd.f32 %v4615, %v4783
        %v4874 = vadd.f32 %v4616, %v4786
        %v4875 = vadd.f32 %v4617, %v4791
        %v4876 = vadd.f32 %v4618, %v4794
        %v4877 = vadd.f32 %v4619, %v4799
        %v4878 = vadd.f32 %v4620, %v4802
        %v4879 = vadd.f32 %v4621, %v4807
        %v4880 = vadd.f32 %v4622, %v4810
        %v4881 = vadd.f32 %v4623, %v4815
        %v4882 = vadd.f32 %v4624, %v4818
        %v4883 = vadd.f32 %v4625, %v4823
        %v4884 = vadd.f32 %v4626, %v4826
        %v4885 = vadd.f32 %v4627, %v4831
        %v4886 = vadd.f32 %v4628, %v4834
        %v4887 = vadd.f32 %v4629, %v4839
        %v4888 = vadd.f32 %v4630, %v4842
        %v4889 = vadd.f32 %v4631, %v4847
        %v4890 = vadd.f32 %v4632, %v4850
        %v4891 = vadd.f32 %v4633, %v4855
        %v4892 = vadd.f32 %v4634, %v4858
        %s4893 = scalar_lea.vmem [#allocation8], 256
        %v4894 = vld [vmem:[%s4893] sm:$0xf]
        %v4895 = vld [vmem:[%s4893 + $0x4] sm:$0xf]
        %v4896 = vld [vmem:[%s4893 + $0x8] sm:$0xf]
        %v4897 = vld [vmem:[%s4893 + $0xc] sm:$0xf]
        %v4898 = vld [vmem:[%s4893 + $0x10] sm:$0xf]
        %v4899 = vld [vmem:[%s4893 + $0x14] sm:$0xf]
        %v4900 = vld [vmem:[%s4893 + $0x18] sm:$0xf]
        %v4901 = vld [vmem:[%s4893 + $0x1c] sm:$0xf]
        %v4902 = vld [vmem:[%s4893 + $0x20] sm:$0xf]
        %v4903 = vld [vmem:[%s4893 + $0x24] sm:$0xf]
        %v4904 = vld [vmem:[%s4893 + $0x28] sm:$0xf]
        %v4905 = vld [vmem:[%s4893 + $0x2c] sm:$0xf]
        %v4906 = vld [vmem:[%s4893 + $0x30] sm:$0xf]
        %v4907 = vld [vmem:[%s4893 + $0x34] sm:$0xf]
        %v4908 = vld [vmem:[%s4893 + $0x38] sm:$0xf]
        %v4909 = vld [vmem:[%s4893 + $0x3c] sm:$0xf]
        %v4926 = vunpack.c.l.b16 %v4894
        %v4927 = vunpack.c.l.b16 %v4895
        %v4928 = vunpack.c.l.b16 %v4896
        %v4929 = vunpack.c.l.b16 %v4897
        %v4930 = vunpack.c.l.b16 %v4898
        %v4931 = vunpack.c.l.b16 %v4899
        %v4932 = vunpack.c.l.b16 %v4900
        %v4933 = vunpack.c.l.b16 %v4901
        %v4934 = vunpack.c.l.b16 %v4902
        %v4935 = vunpack.c.l.b16 %v4903
        %v4936 = vunpack.c.l.b16 %v4904
        %v4937 = vunpack.c.l.b16 %v4905
        %v4938 = vunpack.c.l.b16 %v4906
        %v4939 = vunpack.c.l.b16 %v4907
        %v4940 = vunpack.c.l.b16 %v4908
        %v4941 = vunpack.c.l.b16 %v4909
        %v4942 = vpack.c.b16 %v4927, %v4926
        %v4943 = vpack.c.b16 %v4929, %v4928
        %v4944 = vpack.c.b16 %v4931, %v4930
        %v4945 = vpack.c.b16 %v4933, %v4932
        %v4946 = vpack.c.b16 %v4935, %v4934
        %v4947 = vpack.c.b16 %v4937, %v4936
        %v4948 = vpack.c.b16 %v4939, %v4938
        %v4949 = vpack.c.b16 %v4941, %v4940
        %4958 = vmatprep.subr.bf16.mxu0 0
        %4959 = vmatpush1.bf16.msra.mxu0 %v4942
        %4960 = vmatprep.subr.bf16.mxu0 0
        %4961 = vmatpush1.bf16.msra.mxu0 %v4943
        %4962 = vmatprep.subr.bf16.mxu0 0
        %4963 = vmatpush1.bf16.msra.mxu0 %v4944
        %4964 = vmatprep.subr.bf16.mxu0 0
        %4965 = vmatpush1.bf16.msra.mxu0 %v4945
        %4966 = vmatprep.subr.bf16.mxu0 0
        %4967 = vmatpush1.bf16.msra.mxu0 %v4946
        %4968 = vmatprep.subr.bf16.mxu0 0
        %4969 = vmatpush1.bf16.msra.mxu0 %v4947
        %4970 = vmatprep.subr.bf16.mxu0 0
        %4971 = vmatpush1.bf16.msra.mxu0 %v4948
        %4972 = vmatprep.subr.bf16.mxu0 0
        %4973 = vmatpush1.bf16.msra.mxu0 %v4949
        %4974 = vmatprep.subr.bf16.mxu0 0
        %4975 = vmatpush1.bf16.msra.mxu0 0
        %4976 = vmatprep.subr.bf16.mxu0 0
        %4977 = vmatpush1.bf16.msra.mxu0 0
        %4978 = vmatprep.subr.bf16.mxu0 0
        %4979 = vmatpush1.bf16.msra.mxu0 0
        %4980 = vmatprep.subr.bf16.mxu0 0
        %4981 = vmatpush1.bf16.msra.mxu0 0
        %4982 = vmatprep.subr.bf16.mxu0 0
        %4983 = vmatpush1.bf16.msra.mxu0 0
        %4984 = vmatprep.subr.bf16.mxu0 0
        %4985 = vmatpush1.bf16.msra.mxu0 0
        %4986 = vmatprep.subr.bf16.mxu0 0
        %4987 = vmatpush1.bf16.msra.mxu0 0
        %4988 = vmatprep.subr.bf16.mxu0 0
        %4989 = vmatpush1.bf16.msra.mxu0 0
        %4990 = vmatprep.mubr.bf16.mxu0 0
        %4991 = vmatmul.mubr.bf16.gmra.mrb[0].mxu0 %v3862
        %v4992 = vpop.f32.mrb[0].mxu0
        %v4993 = vadd.f32 0.0, %v4992
        %v4994 = vpop.f32.mrb[0].mxu0
        %v4995 = vpop.f32.mrb[0].mxu0
        %v4996 = vadd.f32 0.0, %v4995
        %v4997 = vpop.f32.mrb[0].mxu0
        %4998 = vmatprep.mubr.bf16.mxu0 0
        %4999 = vmatmul.mubr.bf16.gmra.mrb[0].mxu0 %v3863
        %v5000 = vpop.f32.mrb[0].mxu0
        %v5001 = vadd.f32 0.0, %v5000
        %v5002 = vpop.f32.mrb[0].mxu0
        %v5003 = vpop.f32.mrb[0].mxu0
        %v5004 = vadd.f32 0.0, %v5003
        %v5005 = vpop.f32.mrb[0].mxu0
        %5006 = vmatprep.mubr.bf16.mxu0 0
        %5007 = vmatmul.mubr.bf16.gmra.mrb[0].mxu0 %v3864
        %v5008 = vpop.f32.mrb[0].mxu0
        %v5009 = vadd.f32 0.0, %v5008
        %v5010 = vpop.f32.mrb[0].mxu0
        %v5011 = vpop.f32.mrb[0].mxu0
        %v5012 = vadd.f32 0.0, %v5011
        %v5013 = vpop.f32.mrb[0].mxu0
        %5014 = vmatprep.mubr.bf16.mxu0 0
        %5015 = vmatmul.mubr.bf16.gmra.mrb[0].mxu0 %v3865
        %v5016 = vpop.f32.mrb[0].mxu0
        %v5017 = vadd.f32 0.0, %v5016
        %v5018 = vpop.f32.mrb[0].mxu0
        %v5019 = vpop.f32.mrb[0].mxu0
        %v5020 = vadd.f32 0.0, %v5019
        %v5021 = vpop.f32.mrb[0].mxu0
        %5022 = vmatprep.mubr.bf16.mxu0 0
        %5023 = vmatmul.mubr.bf16.gmra.mrb[0].mxu0 %v3866
        %v5024 = vpop.f32.mrb[0].mxu0
        %v5025 = vadd.f32 0.0, %v5024
        %v5026 = vpop.f32.mrb[0].mxu0
        %v5027 = vpop.f32.mrb[0].mxu0
        %v5028 = vadd.f32 0.0, %v5027
        %v5029 = vpop.f32.mrb[0].mxu0
        %5030 = vmatprep.mubr.bf16.mxu0 0
        %5031 = vmatmul.mubr.bf16.gmra.mrb[0].mxu0 %v3867
        %v5032 = vpop.f32.mrb[0].mxu0
        %v5033 = vadd.f32 0.0, %v5032
        %v5034 = vpop.f32.mrb[0].mxu0
        %v5035 = vpop.f32.mrb[0].mxu0
        %v5036 = vadd.f32 0.0, %v5035
        %v5037 = vpop.f32.mrb[0].mxu0
        %5038 = vmatprep.mubr.bf16.mxu0 0
        %5039 = vmatmul.mubr.bf16.gmra.mrb[0].mxu0 %v3868
        %v5040 = vpop.f32.mrb[0].mxu0
        %v5041 = vadd.f32 0.0, %v5040
        %v5042 = vpop.f32.mrb[0].mxu0
        %v5043 = vpop.f32.mrb[0].mxu0
        %v5044 = vadd.f32 0.0, %v5043
        %v5045 = vpop.f32.mrb[0].mxu0
        %5046 = vmatprep.mubr.bf16.mxu0 0
        %5047 = vmatmul.mubr.bf16.gmra.mrb[0].mxu0 %v3869
        %v5048 = vpop.f32.mrb[0].mxu0
        %v5049 = vadd.f32 0.0, %v5048
        %v5050 = vpop.f32.mrb[0].mxu0
        %v5051 = vpop.f32.mrb[0].mxu0
        %v5052 = vadd.f32 0.0, %v5051
        %v5053 = vpop.f32.mrb[0].mxu0
        %5054 = vmatprep.mubr.bf16.mxu0 0
        %5055 = vmatmul.mubr.bf16.gmra.mrb[0].mxu0 %v3870
        %v5056 = vpop.f32.mrb[0].mxu0
        %v5057 = vadd.f32 0.0, %v5056
        %v5058 = vpop.f32.mrb[0].mxu0
        %v5059 = vpop.f32.mrb[0].mxu0
        %v5060 = vadd.f32 0.0, %v5059
        %v5061 = vpop.f32.mrb[0].mxu0
        %5062 = vmatprep.mubr.bf16.mxu0 0
        %5063 = vmatmul.mubr.bf16.gmra.mrb[0].mxu0 %v3871
        %v5064 = vpop.f32.mrb[0].mxu0
        %v5065 = vadd.f32 0.0, %v5064
        %v5066 = vpop.f32.mrb[0].mxu0
        %v5067 = vpop.f32.mrb[0].mxu0
        %v5068 = vadd.f32 0.0, %v5067
        %v5069 = vpop.f32.mrb[0].mxu0
        %5070 = vmatprep.mubr.bf16.mxu0 0
        %5071 = vmatmul.mubr.bf16.gmra.mrb[0].mxu0 %v3872
        %v5072 = vpop.f32.mrb[0].mxu0
        %v5073 = vadd.f32 0.0, %v5072
        %v5074 = vpop.f32.mrb[0].mxu0
        %v5075 = vpop.f32.mrb[0].mxu0
        %v5076 = vadd.f32 0.0, %v5075
        %v5077 = vpop.f32.mrb[0].mxu0
        %5078 = vmatprep.mubr.bf16.mxu0 0
        %5079 = vmatmul.mubr.bf16.gmra.mrb[0].mxu0 %v3873
        %v5080 = vpop.f32.mrb[0].mxu0
        %v5081 = vadd.f32 0.0, %v5080
        %v5082 = vpop.f32.mrb[0].mxu0
        %v5083 = vpop.f32.mrb[0].mxu0
        %v5084 = vadd.f32 0.0, %v5083
        %v5085 = vpop.f32.mrb[0].mxu0
        %5086 = vmatprep.mubr.bf16.mxu0 0
        %5087 = vmatmul.mubr.bf16.gmra.mrb[0].mxu0 %v3874
        %v5088 = vpop.f32.mrb[0].mxu0
        %v5089 = vadd.f32 0.0, %v5088
        %v5090 = vpop.f32.mrb[0].mxu0
        %v5091 = vpop.f32.mrb[0].mxu0
        %v5092 = vadd.f32 0.0, %v5091
        %v5093 = vpop.f32.mrb[0].mxu0
        %5094 = vmatprep.mubr.bf16.mxu0 0
        %5095 = vmatmul.mubr.bf16.gmra.mrb[0].mxu0 %v3875
        %v5096 = vpop.f32.mrb[0].mxu0
        %v5097 = vadd.f32 0.0, %v5096
        %v5098 = vpop.f32.mrb[0].mxu0
        %v5099 = vpop.f32.mrb[0].mxu0
        %v5100 = vadd.f32 0.0, %v5099
        %v5101 = vpop.f32.mrb[0].mxu0
        %5102 = vmatprep.mubr.bf16.mxu0 0
        %5103 = vmatmul.mubr.bf16.gmra.mrb[0].mxu0 %v3876
        %v5104 = vpop.f32.mrb[0].mxu0
        %v5105 = vadd.f32 0.0, %v5104
        %v5106 = vpop.f32.mrb[0].mxu0
        %v5107 = vpop.f32.mrb[0].mxu0
        %v5108 = vadd.f32 0.0, %v5107
        %v5109 = vpop.f32.mrb[0].mxu0
        %5110 = vmatprep.mubr.bf16.mxu0 0
        %5111 = vmatmul.mubr.bf16.gmra.mrb[0].mxu0 %v3877
        %v5112 = vpop.f32.mrb[0].mxu0
        %v5113 = vadd.f32 0.0, %v5112
        %v5114 = vpop.f32.mrb[0].mxu0
        %v5115 = vpop.f32.mrb[0].mxu0
        %v5116 = vadd.f32 0.0, %v5115
        %v5117 = vpop.f32.mrb[0].mxu0
        %5118 = vdwg.mxu0
        %v5119 = vadd.f32 %v4861, %v4993
        %v5120 = vadd.f32 %v4862, %v4996
        %v5121 = vadd.f32 %v4863, %v5001
        %v5122 = vadd.f32 %v4864, %v5004
        %v5123 = vadd.f32 %v4865, %v5009
        %v5124 = vadd.f32 %v4866, %v5012
        %v5125 = vadd.f32 %v4867, %v5017
        %v5126 = vadd.f32 %v4868, %v5020
        %v5127 = vadd.f32 %v4869, %v5025
        %v5128 = vadd.f32 %v4870, %v5028
        %v5129 = vadd.f32 %v4871, %v5033
        %v5130 = vadd.f32 %v4872, %v5036
        %v5131 = vadd.f32 %v4873, %v5041
        %v5132 = vadd.f32 %v4874, %v5044
        %v5133 = vadd.f32 %v4875, %v5049
        %v5134 = vadd.f32 %v4876, %v5052
        %v5135 = vadd.f32 %v4877, %v5057
        %v5136 = vadd.f32 %v4878, %v5060
        %v5137 = vadd.f32 %v4879, %v5065
        %v5138 = vadd.f32 %v4880, %v5068
        %v5139 = vadd.f32 %v4881, %v5073
        %v5140 = vadd.f32 %v4882, %v5076
        %v5141 = vadd.f32 %v4883, %v5081
        %v5142 = vadd.f32 %v4884, %v5084
        %v5143 = vadd.f32 %v4885, %v5089
        %v5144 = vadd.f32 %v4886, %v5092
        %v5145 = vadd.f32 %v4887, %v5097
        %v5146 = vadd.f32 %v4888, %v5100
        %v5147 = vadd.f32 %v4889, %v5105
        %v5148 = vadd.f32 %v4890, %v5108
        %v5149 = vadd.f32 %v4891, %v5113
        %v5150 = vadd.f32 %v4892, %v5116
        %s5151 = scalar_lea.vmem [#allocation8], 448
        %v5152 = vld [vmem:[%s5151] sm:$0xf]
        %v5153 = vld [vmem:[%s5151 + $0x4] sm:$0xf]
        %v5154 = vld [vmem:[%s5151 + $0x8] sm:$0xf]
        %v5155 = vld [vmem:[%s5151 + $0xc] sm:$0xf]
        %v5156 = vld [vmem:[%s5151 + $0x10] sm:$0xf]
        %v5157 = vld [vmem:[%s5151 + $0x14] sm:$0xf]
        %v5158 = vld [vmem:[%s5151 + $0x18] sm:$0xf]
        %v5159 = vld [vmem:[%s5151 + $0x1c] sm:$0xf]
        %v5160 = vld [vmem:[%s5151 + $0x20] sm:$0xf]
        %v5161 = vld [vmem:[%s5151 + $0x24] sm:$0xf]
        %v5162 = vld [vmem:[%s5151 + $0x28] sm:$0xf]
        %v5163 = vld [vmem:[%s5151 + $0x2c] sm:$0xf]
        %v5164 = vld [vmem:[%s5151 + $0x30] sm:$0xf]
        %v5165 = vld [vmem:[%s5151 + $0x34] sm:$0xf]
        %v5166 = vld [vmem:[%s5151 + $0x38] sm:$0xf]
        %v5167 = vld [vmem:[%s5151 + $0x3c] sm:$0xf]
        %v5184 = vunpack.c.l.b16 %v5152
        %v5185 = vunpack.c.l.b16 %v5153
        %v5186 = vunpack.c.l.b16 %v5154
        %v5187 = vunpack.c.l.b16 %v5155
        %v5188 = vunpack.c.l.b16 %v5156
        %v5189 = vunpack.c.l.b16 %v5157
        %v5190 = vunpack.c.l.b16 %v5158
        %v5191 = vunpack.c.l.b16 %v5159
        %v5192 = vunpack.c.l.b16 %v5160
        %v5193 = vunpack.c.l.b16 %v5161
        %v5194 = vunpack.c.l.b16 %v5162
        %v5195 = vunpack.c.l.b16 %v5163
        %v5196 = vunpack.c.l.b16 %v5164
        %v5197 = vunpack.c.l.b16 %v5165
        %v5198 = vunpack.c.l.b16 %v5166
        %v5199 = vunpack.c.l.b16 %v5167
        %v5200 = vpack.c.b16 %v5185, %v5184
        %v5201 = vpack.c.b16 %v5187, %v5186
        %v5202 = vpack.c.b16 %v5189, %v5188
        %v5203 = vpack.c.b16 %v5191, %v5190
        %v5204 = vpack.c.b16 %v5193, %v5192
        %v5205 = vpack.c.b16 %v5195, %v5194
        %v5206 = vpack.c.b16 %v5197, %v5196
        %v5207 = vpack.c.b16 %v5199, %v5198
        %5216 = vmatprep.subr.bf16.mxu0 0
        %5217 = vmatpush1.bf16.msra.mxu0 %v5200
        %5218 = vmatprep.subr.bf16.mxu0 0
        %5219 = vmatpush1.bf16.msra.mxu0 %v5201
        %5220 = vmatprep.subr.bf16.mxu0 0
        %5221 = vmatpush1.bf16.msra.mxu0 %v5202
        %5222 = vmatprep.subr.bf16.mxu0 0
        %5223 = vmatpush1.bf16.msra.mxu0 %v5203
        %5224 = vmatprep.subr.bf16.mxu0 0
        %5225 = vmatpush1.bf16.msra.mxu0 %v5204
        %5226 = vmatprep.subr.bf16.mxu0 0
        %5227 = vmatpush1.bf16.msra.mxu0 %v5205
        %5228 = vmatprep.subr.bf16.mxu0 0
        %5229 = vmatpush1.bf16.msra.mxu0 %v5206
        %5230 = vmatprep.subr.bf16.mxu0 0
        %5231 = vmatpush1.bf16.msra.mxu0 %v5207
        %5232 = vmatprep.subr.bf16.mxu0 0
        %5233 = vmatpush1.bf16.msra.mxu0 0
        %5234 = vmatprep.subr.bf16.mxu0 0
        %5235 = vmatpush1.bf16.msra.mxu0 0
        %5236 = vmatprep.subr.bf16.mxu0 0
        %5237 = vmatpush1.bf16.msra.mxu0 0
        %5238 = vmatprep.subr.bf16.mxu0 0
        %5239 = vmatpush1.bf16.msra.mxu0 0
        %5240 = vmatprep.subr.bf16.mxu0 0
        %5241 = vmatpush1.bf16.msra.mxu0 0
        %5242 = vmatprep.subr.bf16.mxu0 0
        %5243 = vmatpush1.bf16.msra.mxu0 0
        %5244 = vmatprep.subr.bf16.mxu0 0
        %5245 = vmatpush1.bf16.msra.mxu0 0
        %5246 = vmatprep.subr.bf16.mxu0 0
        %5247 = vmatpush1.bf16.msra.mxu0 0
        %5248 = vmatprep.mubr.bf16.mxu0 0
        %5249 = vmatmul.mubr.bf16.gmra.mrb[0].mxu0 %v3863
        %v5250 = vpop.f32.mrb[0].mxu0
        %v5251 = vadd.f32 0.0, %v5250
        %v5252 = vpop.f32.mrb[0].mxu0
        %v5253 = vpop.f32.mrb[0].mxu0
        %v5254 = vadd.f32 0.0, %v5253
        %v5255 = vpop.f32.mrb[0].mxu0
        %5256 = vmatprep.mubr.bf16.mxu0 0
        %5257 = vmatmul.mubr.bf16.gmra.mrb[0].mxu0 %v3864
        %v5258 = vpop.f32.mrb[0].mxu0
        %v5259 = vadd.f32 0.0, %v5258
        %v5260 = vpop.f32.mrb[0].mxu0
        %v5261 = vpop.f32.mrb[0].mxu0
        %v5262 = vadd.f32 0.0, %v5261
        %v5263 = vpop.f32.mrb[0].mxu0
        %5264 = vmatprep.mubr.bf16.mxu0 0
        %5265 = vmatmul.mubr.bf16.gmra.mrb[0].mxu0 %v3865
        %v5266 = vpop.f32.mrb[0].mxu0
        %v5267 = vadd.f32 0.0, %v5266
        %v5268 = vpop.f32.mrb[0].mxu0
        %v5269 = vpop.f32.mrb[0].mxu0
        %v5270 = vadd.f32 0.0, %v5269
        %v5271 = vpop.f32.mrb[0].mxu0
        %5272 = vmatprep.mubr.bf16.mxu0 0
        %5273 = vmatmul.mubr.bf16.gmra.mrb[0].mxu0 %v3866
        %v5274 = vpop.f32.mrb[0].mxu0
        %v5275 = vadd.f32 0.0, %v5274
        %v5276 = vpop.f32.mrb[0].mxu0
        %v5277 = vpop.f32.mrb[0].mxu0
        %v5278 = vadd.f32 0.0, %v5277
        %v5279 = vpop.f32.mrb[0].mxu0
        %5280 = vmatprep.mubr.bf16.mxu0 0
        %5281 = vmatmul.mubr.bf16.gmra.mrb[0].mxu0 %v3867
        %v5282 = vpop.f32.mrb[0].mxu0
        %v5283 = vadd.f32 0.0, %v5282
        %v5284 = vpop.f32.mrb[0].mxu0
        %v5285 = vpop.f32.mrb[0].mxu0
        %v5286 = vadd.f32 0.0, %v5285
        %v5287 = vpop.f32.mrb[0].mxu0
        %5288 = vmatprep.mubr.bf16.mxu0 0
        %5289 = vmatmul.mubr.bf16.gmra.mrb[0].mxu0 %v3868
        %v5290 = vpop.f32.mrb[0].mxu0
        %v5291 = vadd.f32 0.0, %v5290
        %v5292 = vpop.f32.mrb[0].mxu0
        %v5293 = vpop.f32.mrb[0].mxu0
        %v5294 = vadd.f32 0.0, %v5293
        %v5295 = vpop.f32.mrb[0].mxu0
        %5296 = vmatprep.mubr.bf16.mxu0 0
        %5297 = vmatmul.mubr.bf16.gmra.mrb[0].mxu0 %v3869
        %v5298 = vpop.f32.mrb[0].mxu0
        %v5299 = vadd.f32 0.0, %v5298
        %v5300 = vpop.f32.mrb[0].mxu0
        %v5301 = vpop.f32.mrb[0].mxu0
        %v5302 = vadd.f32 0.0, %v5301
        %v5303 = vpop.f32.mrb[0].mxu0
        %5304 = vmatprep.mubr.bf16.mxu0 0
        %5305 = vmatmul.mubr.bf16.gmra.mrb[0].mxu0 %v3870
        %v5306 = vpop.f32.mrb[0].mxu0
        %v5307 = vadd.f32 0.0, %v5306
        %v5308 = vpop.f32.mrb[0].mxu0
        %v5309 = vpop.f32.mrb[0].mxu0
        %v5310 = vadd.f32 0.0, %v5309
        %v5311 = vpop.f32.mrb[0].mxu0
        %5312 = vmatprep.mubr.bf16.mxu0 0
        %5313 = vmatmul.mubr.bf16.gmra.mrb[0].mxu0 %v3871
        %v5314 = vpop.f32.mrb[0].mxu0
        %v5315 = vadd.f32 0.0, %v5314
        %v5316 = vpop.f32.mrb[0].mxu0
        %v5317 = vpop.f32.mrb[0].mxu0
        %v5318 = vadd.f32 0.0, %v5317
        %v5319 = vpop.f32.mrb[0].mxu0
        %5320 = vmatprep.mubr.bf16.mxu0 0
        %5321 = vmatmul.mubr.bf16.gmra.mrb[0].mxu0 %v3872
        %v5322 = vpop.f32.mrb[0].mxu0
        %v5323 = vadd.f32 0.0, %v5322
        %v5324 = vpop.f32.mrb[0].mxu0
        %v5325 = vpop.f32.mrb[0].mxu0
        %v5326 = vadd.f32 0.0, %v5325
        %v5327 = vpop.f32.mrb[0].mxu0
        %5328 = vmatprep.mubr.bf16.mxu0 0
        %5329 = vmatmul.mubr.bf16.gmra.mrb[0].mxu0 %v3873
        %v5330 = vpop.f32.mrb[0].mxu0
        %v5331 = vadd.f32 0.0, %v5330
        %v5332 = vpop.f32.mrb[0].mxu0
        %v5333 = vpop.f32.mrb[0].mxu0
        %v5334 = vadd.f32 0.0, %v5333
        %v5335 = vpop.f32.mrb[0].mxu0
        %5336 = vmatprep.mubr.bf16.mxu0 0
        %5337 = vmatmul.mubr.bf16.gmra.mrb[0].mxu0 %v3874
        %v5338 = vpop.f32.mrb[0].mxu0
        %v5339 = vadd.f32 0.0, %v5338
        %v5340 = vpop.f32.mrb[0].mxu0
        %v5341 = vpop.f32.mrb[0].mxu0
        %v5342 = vadd.f32 0.0, %v5341
        %v5343 = vpop.f32.mrb[0].mxu0
        %5344 = vmatprep.mubr.bf16.mxu0 0
        %5345 = vmatmul.mubr.bf16.gmra.mrb[0].mxu0 %v3875
        %v5346 = vpop.f32.mrb[0].mxu0
        %v5347 = vadd.f32 0.0, %v5346
        %v5348 = vpop.f32.mrb[0].mxu0
        %v5349 = vpop.f32.mrb[0].mxu0
        %v5350 = vadd.f32 0.0, %v5349
        %v5351 = vpop.f32.mrb[0].mxu0
        %5352 = vmatprep.mubr.bf16.mxu0 0
        %5353 = vmatmul.mubr.bf16.gmra.mrb[0].mxu0 %v3876
        %v5354 = vpop.f32.mrb[0].mxu0
        %v5355 = vadd.f32 0.0, %v5354
        %v5356 = vpop.f32.mrb[0].mxu0
        %v5357 = vpop.f32.mrb[0].mxu0
        %v5358 = vadd.f32 0.0, %v5357
        %v5359 = vpop.f32.mrb[0].mxu0
        %5360 = vmatprep.mubr.bf16.mxu0 0
        %5361 = vmatmul.mubr.bf16.gmra.mrb[0].mxu0 %v3877
        %v5362 = vpop.f32.mrb[0].mxu0
        %v5363 = vadd.f32 0.0, %v5362
        %v5364 = vpop.f32.mrb[0].mxu0
        %v5365 = vpop.f32.mrb[0].mxu0
        %v5366 = vadd.f32 0.0, %v5365
        %v5367 = vpop.f32.mrb[0].mxu0
        %5368 = vmatprep.mubr.bf16.mxu0 0
        %5369 = vmatmul.mubr.bf16.gmra.mrb[0].mxu0 %v3876
        %v5370 = vpop.f32.mrb[0].mxu0
        %v5371 = vadd.f32 0.0, %v5370
        %v5372 = vpop.f32.mrb[0].mxu0
        %v5373 = vpop.f32.mrb[0].mxu0
        %v5374 = vadd.f32 0.0, %v5373
        %v5375 = vpop.f32.mrb[0].mxu0
        %5376 = vdwg.mxu0
        %v5377 = vadd.f32 %v5119, %v5251
        %v5378 = vadd.f32 %v5120, %v5254
        %v5379 = vadd.f32 %v5121, %v5259
        %v5380 = vadd.f32 %v5122, %v5262
        %v5381 = vadd.f32 %v5123, %v5267
        %v5382 = vadd.f32 %v5124, %v5270
        %v5383 = vadd.f32 %v5125, %v5275
        %v5384 = vadd.f32 %v5126, %v5278
        %v5385 = vadd.f32 %v5127, %v5283
        %v5386 = vadd.f32 %v5128, %v5286
        %v5387 = vadd.f32 %v5129, %v5291
        %v5388 = vadd.f32 %v5130, %v5294
        %v5389 = vadd.f32 %v5131, %v5299
        %v5390 = vadd.f32 %v5132, %v5302
        %v5391 = vadd.f32 %v5133, %v5307
        %v5392 = vadd.f32 %v5134, %v5310
        %v5393 = vadd.f32 %v5135, %v5315
        %v5394 = vadd.f32 %v5136, %v5318
        %v5395 = vadd.f32 %v5137, %v5323
        %v5396 = vadd.f32 %v5138, %v5326
        %v5397 = vadd.f32 %v5139, %v5331
        %v5398 = vadd.f32 %v5140, %v5334
        %v5399 = vadd.f32 %v5141, %v5339
        %v5400 = vadd.f32 %v5142, %v5342
        %v5401 = vadd.f32 %v5143, %v5347
        %v5402 = vadd.f32 %v5144, %v5350
        %v5403 = vadd.f32 %v5145, %v5355
        %v5404 = vadd.f32 %v5146, %v5358
        %v5405 = vadd.f32 %v5147, %v5363
        %v5406 = vadd.f32 %v5148, %v5366
        %v5407 = vadd.f32 %v5149, %v5371
        %v5408 = vadd.f32 %v5150, %v5374
        %s5409 = scalar_lea.vmem [#allocation8], 128
        %v5410 = vld [vmem:[%s5409] sm:$0xf]
        %v5411 = vld [vmem:[%s5409 + $0x4] sm:$0xf]
        %v5412 = vld [vmem:[%s5409 + $0x8] sm:$0xf]
        %v5413 = vld [vmem:[%s5409 + $0xc] sm:$0xf]
        %v5414 = vld [vmem:[%s5409 + $0x10] sm:$0xf]
        %v5415 = vld [vmem:[%s5409 + $0x14] sm:$0xf]
        %v5416 = vld [vmem:[%s5409 + $0x18] sm:$0xf]
        %v5417 = vld [vmem:[%s5409 + $0x1c] sm:$0xf]
        %v5418 = vld [vmem:[%s5409 + $0x20] sm:$0xf]
        %v5419 = vld [vmem:[%s5409 + $0x24] sm:$0xf]
        %v5420 = vld [vmem:[%s5409 + $0x28] sm:$0xf]
        %v5421 = vld [vmem:[%s5409 + $0x2c] sm:$0xf]
        %v5422 = vld [vmem:[%s5409 + $0x30] sm:$0xf]
        %v5423 = vld [vmem:[%s5409 + $0x34] sm:$0xf]
        %v5424 = vld [vmem:[%s5409 + $0x38] sm:$0xf]
        %v5425 = vld [vmem:[%s5409 + $0x3c] sm:$0xf]
        %v5442 = vunpack.c.l.b16 %v5410
        %v5443 = vunpack.c.l.b16 %v5411
        %v5444 = vunpack.c.l.b16 %v5412
        %v5445 = vunpack.c.l.b16 %v5413
        %v5446 = vunpack.c.l.b16 %v5414
        %v5447 = vunpack.c.l.b16 %v5415
        %v5448 = vunpack.c.l.b16 %v5416
        %v5449 = vunpack.c.l.b16 %v5417
        %v5450 = vunpack.c.l.b16 %v5418
        %v5451 = vunpack.c.l.b16 %v5419
        %v5452 = vunpack.c.l.b16 %v5420
        %v5453 = vunpack.c.l.b16 %v5421
        %v5454 = vunpack.c.l.b16 %v5422
        %v5455 = vunpack.c.l.b16 %v5423
        %v5456 = vunpack.c.l.b16 %v5424
        %v5457 = vunpack.c.l.b16 %v5425
        %v5458 = vpack.c.b16 %v5443, %v5442
        %v5459 = vpack.c.b16 %v5445, %v5444
        %v5460 = vpack.c.b16 %v5447, %v5446
        %v5461 = vpack.c.b16 %v5449, %v5448
        %v5462 = vpack.c.b16 %v5451, %v5450
        %v5463 = vpack.c.b16 %v5453, %v5452
        %v5464 = vpack.c.b16 %v5455, %v5454
        %v5465 = vpack.c.b16 %v5457, %v5456
        %5474 = vmatprep.subr.bf16.mxu0 0
        %5475 = vmatpush1.bf16.msra.mxu0 %v5458
        %5476 = vmatprep.subr.bf16.mxu0 0
        %5477 = vmatpush1.bf16.msra.mxu0 %v5459
        %5478 = vmatprep.subr.bf16.mxu0 0
        %5479 = vmatpush1.bf16.msra.mxu0 %v5460
        %5480 = vmatprep.subr.bf16.mxu0 0
        %5481 = vmatpush1.bf16.msra.mxu0 %v5461
        %5482 = vmatprep.subr.bf16.mxu0 0
        %5483 = vmatpush1.bf16.msra.mxu0 %v5462
        %5484 = vmatprep.subr.bf16.mxu0 0
        %5485 = vmatpush1.bf16.msra.mxu0 %v5463
        %5486 = vmatprep.subr.bf16.mxu0 0
        %5487 = vmatpush1.bf16.msra.mxu0 %v5464
        %5488 = vmatprep.subr.bf16.mxu0 0
        %5489 = vmatpush1.bf16.msra.mxu0 %v5465
        %5490 = vmatprep.subr.bf16.mxu0 0
        %5491 = vmatpush1.bf16.msra.mxu0 0
        %5492 = vmatprep.subr.bf16.mxu0 0
        %5493 = vmatpush1.bf16.msra.mxu0 0
        %5494 = vmatprep.subr.bf16.mxu0 0
        %5495 = vmatpush1.bf16.msra.mxu0 0
        %5496 = vmatprep.subr.bf16.mxu0 0
        %5497 = vmatpush1.bf16.msra.mxu0 0
        %5498 = vmatprep.subr.bf16.mxu0 0
        %5499 = vmatpush1.bf16.msra.mxu0 0
        %5500 = vmatprep.subr.bf16.mxu0 0
        %5501 = vmatpush1.bf16.msra.mxu0 0
        %5502 = vmatprep.subr.bf16.mxu0 0
        %5503 = vmatpush1.bf16.msra.mxu0 0
        %5504 = vmatprep.subr.bf16.mxu0 0
        %5505 = vmatpush1.bf16.msra.mxu0 0
        %5506 = vmatprep.mubr.bf16.mxu0 0
        %5507 = vmatmul.mubr.bf16.gmra.mrb[0].mxu0 %v3911
        %v5508 = vpop.f32.mrb[0].mxu0
        %v5509 = vadd.f32 0.0, %v5508
        %v5510 = vpop.f32.mrb[0].mxu0
        %v5511 = vpop.f32.mrb[0].mxu0
        %v5512 = vadd.f32 0.0, %v5511
        %v5513 = vpop.f32.mrb[0].mxu0
        %5514 = vmatprep.mubr.bf16.mxu0 0
        %5515 = vmatmul.mubr.bf16.gmra.mrb[0].mxu0 %v3910
        %v5516 = vpop.f32.mrb[0].mxu0
        %v5517 = vadd.f32 0.0, %v5516
        %v5518 = vpop.f32.mrb[0].mxu0
        %v5519 = vpop.f32.mrb[0].mxu0
        %v5520 = vadd.f32 0.0, %v5519
        %v5521 = vpop.f32.mrb[0].mxu0
        %5522 = vmatprep.mubr.bf16.mxu0 0
        %5523 = vmatmul.mubr.bf16.gmra.mrb[0].mxu0 %v3911
        %v5524 = vpop.f32.mrb[0].mxu0
        %v5525 = vadd.f32 0.0, %v5524
        %v5526 = vpop.f32.mrb[0].mxu0
        %v5527 = vpop.f32.mrb[0].mxu0
        %v5528 = vadd.f32 0.0, %v5527
        %v5529 = vpop.f32.mrb[0].mxu0
        %5530 = vmatprep.mubr.bf16.mxu0 0
        %5531 = vmatmul.mubr.bf16.gmra.mrb[0].mxu0 %v3912
        %v5532 = vpop.f32.mrb[0].mxu0
        %v5533 = vadd.f32 0.0, %v5532
        %v5534 = vpop.f32.mrb[0].mxu0
        %v5535 = vpop.f32.mrb[0].mxu0
        %v5536 = vadd.f32 0.0, %v5535
        %v5537 = vpop.f32.mrb[0].mxu0
        %5538 = vmatprep.mubr.bf16.mxu0 0
        %5539 = vmatmul.mubr.bf16.gmra.mrb[0].mxu0 %v3913
        %v5540 = vpop.f32.mrb[0].mxu0
        %v5541 = vadd.f32 0.0, %v5540
        %v5542 = vpop.f32.mrb[0].mxu0
        %v5543 = vpop.f32.mrb[0].mxu0
        %v5544 = vadd.f32 0.0, %v5543
        %v5545 = vpop.f32.mrb[0].mxu0
        %5546 = vmatprep.mubr.bf16.mxu0 0
        %5547 = vmatmul.mubr.bf16.gmra.mrb[0].mxu0 %v3914
        %v5548 = vpop.f32.mrb[0].mxu0
        %v5549 = vadd.f32 0.0, %v5548
        %v5550 = vpop.f32.mrb[0].mxu0
        %v5551 = vpop.f32.mrb[0].mxu0
        %v5552 = vadd.f32 0.0, %v5551
        %v5553 = vpop.f32.mrb[0].mxu0
        %5554 = vmatprep.mubr.bf16.mxu0 0
        %5555 = vmatmul.mubr.bf16.gmra.mrb[0].mxu0 %v3915
        %v5556 = vpop.f32.mrb[0].mxu0
        %v5557 = vadd.f32 0.0, %v5556
        %v5558 = vpop.f32.mrb[0].mxu0
        %v5559 = vpop.f32.mrb[0].mxu0
        %v5560 = vadd.f32 0.0, %v5559
        %v5561 = vpop.f32.mrb[0].mxu0
        %5562 = vmatprep.mubr.bf16.mxu0 0
        %5563 = vmatmul.mubr.bf16.gmra.mrb[0].mxu0 %v3916
        %v5564 = vpop.f32.mrb[0].mxu0
        %v5565 = vadd.f32 0.0, %v5564
        %v5566 = vpop.f32.mrb[0].mxu0
        %v5567 = vpop.f32.mrb[0].mxu0
        %v5568 = vadd.f32 0.0, %v5567
        %v5569 = vpop.f32.mrb[0].mxu0
        %5570 = vmatprep.mubr.bf16.mxu0 0
        %5571 = vmatmul.mubr.bf16.gmra.mrb[0].mxu0 %v3917
        %v5572 = vpop.f32.mrb[0].mxu0
        %v5573 = vadd.f32 0.0, %v5572
        %v5574 = vpop.f32.mrb[0].mxu0
        %v5575 = vpop.f32.mrb[0].mxu0
        %v5576 = vadd.f32 0.0, %v5575
        %v5577 = vpop.f32.mrb[0].mxu0
        %5578 = vmatprep.mubr.bf16.mxu0 0
        %5579 = vmatmul.mubr.bf16.gmra.mrb[0].mxu0 %v3918
        %v5580 = vpop.f32.mrb[0].mxu0
        %v5581 = vadd.f32 0.0, %v5580
        %v5582 = vpop.f32.mrb[0].mxu0
        %v5583 = vpop.f32.mrb[0].mxu0
        %v5584 = vadd.f32 0.0, %v5583
        %v5585 = vpop.f32.mrb[0].mxu0
        %5586 = vmatprep.mubr.bf16.mxu0 0
        %5587 = vmatmul.mubr.bf16.gmra.mrb[0].mxu0 %v3919
        %v5588 = vpop.f32.mrb[0].mxu0
        %v5589 = vadd.f32 0.0, %v5588
        %v5590 = vpop.f32.mrb[0].mxu0
        %v5591 = vpop.f32.mrb[0].mxu0
        %v5592 = vadd.f32 0.0, %v5591
        %v5593 = vpop.f32.mrb[0].mxu0
        %5594 = vmatprep.mubr.bf16.mxu0 0
        %5595 = vmatmul.mubr.bf16.gmra.mrb[0].mxu0 %v3920
        %v5596 = vpop.f32.mrb[0].mxu0
        %v5597 = vadd.f32 0.0, %v5596
        %v5598 = vpop.f32.mrb[0].mxu0
        %v5599 = vpop.f32.mrb[0].mxu0
        %v5600 = vadd.f32 0.0, %v5599
        %v5601 = vpop.f32.mrb[0].mxu0
        %5602 = vmatprep.mubr.bf16.mxu0 0
        %5603 = vmatmul.mubr.bf16.gmra.mrb[0].mxu0 %v3921
        %v5604 = vpop.f32.mrb[0].mxu0
        %v5605 = vadd.f32 0.0, %v5604
        %v5606 = vpop.f32.mrb[0].mxu0
        %v5607 = vpop.f32.mrb[0].mxu0
        %v5608 = vadd.f32 0.0, %v5607
        %v5609 = vpop.f32.mrb[0].mxu0
        %5610 = vmatprep.mubr.bf16.mxu0 0
        %5611 = vmatmul.mubr.bf16.gmra.mrb[0].mxu0 %v3922
        %v5612 = vpop.f32.mrb[0].mxu0
        %v5613 = vadd.f32 0.0, %v5612
        %v5614 = vpop.f32.mrb[0].mxu0
        %v5615 = vpop.f32.mrb[0].mxu0
        %v5616 = vadd.f32 0.0, %v5615
        %v5617 = vpop.f32.mrb[0].mxu0
        %5618 = vmatprep.mubr.bf16.mxu0 0
        %5619 = vmatmul.mubr.bf16.gmra.mrb[0].mxu0 %v3923
        %v5620 = vpop.f32.mrb[0].mxu0
        %v5621 = vadd.f32 0.0, %v5620
        %v5622 = vpop.f32.mrb[0].mxu0
        %v5623 = vpop.f32.mrb[0].mxu0
        %v5624 = vadd.f32 0.0, %v5623
        %v5625 = vpop.f32.mrb[0].mxu0
        %5626 = vmatprep.mubr.bf16.mxu0 0
        %5627 = vmatmul.mubr.bf16.gmra.mrb[0].mxu0 %v3924
        %v5628 = vpop.f32.mrb[0].mxu0
        %v5629 = vadd.f32 0.0, %v5628
        %v5630 = vpop.f32.mrb[0].mxu0
        %v5631 = vpop.f32.mrb[0].mxu0
        %v5632 = vadd.f32 0.0, %v5631
        %v5633 = vpop.f32.mrb[0].mxu0
        %5634 = vdwg.mxu0
        %v5635 = vadd.f32 %v5377, %v5509
        %v5636 = vadd.f32 %v5378, %v5512
        %v5637 = vadd.f32 %v5379, %v5517
        %v5638 = vadd.f32 %v5380, %v5520
        %v5639 = vadd.f32 %v5381, %v5525
        %v5640 = vadd.f32 %v5382, %v5528
        %v5641 = vadd.f32 %v5383, %v5533
        %v5642 = vadd.f32 %v5384, %v5536
        %v5643 = vadd.f32 %v5385, %v5541
        %v5644 = vadd.f32 %v5386, %v5544
        %v5645 = vadd.f32 %v5387, %v5549
        %v5646 = vadd.f32 %v5388, %v5552
        %v5647 = vadd.f32 %v5389, %v5557
        %v5648 = vadd.f32 %v5390, %v5560
        %v5649 = vadd.f32 %v5391, %v5565
        %v5650 = vadd.f32 %v5392, %v5568
        %v5651 = vadd.f32 %v5393, %v5573
        %v5652 = vadd.f32 %v5394, %v5576
        %v5653 = vadd.f32 %v5395, %v5581
        %v5654 = vadd.f32 %v5396, %v5584
        %v5655 = vadd.f32 %v5397, %v5589
        %v5656 = vadd.f32 %v5398, %v5592
        %v5657 = vadd.f32 %v5399, %v5597
        %v5658 = vadd.f32 %v5400, %v5600
        %v5659 = vadd.f32 %v5401, %v5605
        %v5660 = vadd.f32 %v5402, %v5608
        %v5661 = vadd.f32 %v5403, %v5613
        %v5662 = vadd.f32 %v5404, %v5616
        %v5663 = vadd.f32 %v5405, %v5621
        %v5664 = vadd.f32 %v5406, %v5624
        %v5665 = vadd.f32 %v5407, %v5629
        %v5666 = vadd.f32 %v5408, %v5632
        %s5667 = scalar_lea.vmem [#allocation8], 320
        %v5668 = vld [vmem:[%s5667] sm:$0xf]
        %v5669 = vld [vmem:[%s5667 + $0x4] sm:$0xf]
        %v5670 = vld [vmem:[%s5667 + $0x8] sm:$0xf]
        %v5671 = vld [vmem:[%s5667 + $0xc] sm:$0xf]
        %v5672 = vld [vmem:[%s5667 + $0x10] sm:$0xf]
        %v5673 = vld [vmem:[%s5667 + $0x14] sm:$0xf]
        %v5674 = vld [vmem:[%s5667 + $0x18] sm:$0xf]
        %v5675 = vld [vmem:[%s5667 + $0x1c] sm:$0xf]
        %v5676 = vld [vmem:[%s5667 + $0x20] sm:$0xf]
        %v5677 = vld [vmem:[%s5667 + $0x24] sm:$0xf]
        %v5678 = vld [vmem:[%s5667 + $0x28] sm:$0xf]
        %v5679 = vld [vmem:[%s5667 + $0x2c] sm:$0xf]
        %v5680 = vld [vmem:[%s5667 + $0x30] sm:$0xf]
        %v5681 = vld [vmem:[%s5667 + $0x34] sm:$0xf]
        %v5682 = vld [vmem:[%s5667 + $0x38] sm:$0xf]
        %v5683 = vld [vmem:[%s5667 + $0x3c] sm:$0xf]
        %v5700 = vunpack.c.l.b16 %v5668
        %v5701 = vunpack.c.l.b16 %v5669
        %v5702 = vunpack.c.l.b16 %v5670
        %v5703 = vunpack.c.l.b16 %v5671
        %v5704 = vunpack.c.l.b16 %v5672
        %v5705 = vunpack.c.l.b16 %v5673
        %v5706 = vunpack.c.l.b16 %v5674
        %v5707 = vunpack.c.l.b16 %v5675
        %v5708 = vunpack.c.l.b16 %v5676
        %v5709 = vunpack.c.l.b16 %v5677
        %v5710 = vunpack.c.l.b16 %v5678
        %v5711 = vunpack.c.l.b16 %v5679
        %v5712 = vunpack.c.l.b16 %v5680
        %v5713 = vunpack.c.l.b16 %v5681
        %v5714 = vunpack.c.l.b16 %v5682
        %v5715 = vunpack.c.l.b16 %v5683
        %v5716 = vpack.c.b16 %v5701, %v5700
        %v5717 = vpack.c.b16 %v5703, %v5702
        %v5718 = vpack.c.b16 %v5705, %v5704
        %v5719 = vpack.c.b16 %v5707, %v5706
        %v5720 = vpack.c.b16 %v5709, %v5708
        %v5721 = vpack.c.b16 %v5711, %v5710
        %v5722 = vpack.c.b16 %v5713, %v5712
        %v5723 = vpack.c.b16 %v5715, %v5714
        %5732 = vmatprep.subr.bf16.mxu0 0
        %5733 = vmatpush1.bf16.msra.mxu0 %v5716
        %5734 = vmatprep.subr.bf16.mxu0 0
        %5735 = vmatpush1.bf16.msra.mxu0 %v5717
        %5736 = vmatprep.subr.bf16.mxu0 0
        %5737 = vmatpush1.bf16.msra.mxu0 %v5718
        %5738 = vmatprep.subr.bf16.mxu0 0
        %5739 = vmatpush1.bf16.msra.mxu0 %v5719
        %5740 = vmatprep.subr.bf16.mxu0 0
        %5741 = vmatpush1.bf16.msra.mxu0 %v5720
        %5742 = vmatprep.subr.bf16.mxu0 0
        %5743 = vmatpush1.bf16.msra.mxu0 %v5721
        %5744 = vmatprep.subr.bf16.mxu0 0
        %5745 = vmatpush1.bf16.msra.mxu0 %v5722
        %5746 = vmatprep.subr.bf16.mxu0 0
        %5747 = vmatpush1.bf16.msra.mxu0 %v5723
        %5748 = vmatprep.subr.bf16.mxu0 0
        %5749 = vmatpush1.bf16.msra.mxu0 0
        %5750 = vmatprep.subr.bf16.mxu0 0
        %5751 = vmatpush1.bf16.msra.mxu0 0
        %5752 = vmatprep.subr.bf16.mxu0 0
        %5753 = vmatpush1.bf16.msra.mxu0 0
        %5754 = vmatprep.subr.bf16.mxu0 0
        %5755 = vmatpush1.bf16.msra.mxu0 0
        %5756 = vmatprep.subr.bf16.mxu0 0
        %5757 = vmatpush1.bf16.msra.mxu0 0
        %5758 = vmatprep.subr.bf16.mxu0 0
        %5759 = vmatpush1.bf16.msra.mxu0 0
        %5760 = vmatprep.subr.bf16.mxu0 0
        %5761 = vmatpush1.bf16.msra.mxu0 0
        %5762 = vmatprep.subr.bf16.mxu0 0
        %5763 = vmatpush1.bf16.msra.mxu0 0
        %5764 = vmatprep.mubr.bf16.mxu0 0
        %5765 = vmatmul.mubr.bf16.gmra.mrb[0].mxu0 %v3910
        %v5766 = vpop.f32.mrb[0].mxu0
        %v5767 = vadd.f32 0.0, %v5766
        %v5768 = vpop.f32.mrb[0].mxu0
        %v5769 = vpop.f32.mrb[0].mxu0
        %v5770 = vadd.f32 0.0, %v5769
        %v5771 = vpop.f32.mrb[0].mxu0
        %5772 = vmatprep.mubr.bf16.mxu0 0
        %5773 = vmatmul.mubr.bf16.gmra.mrb[0].mxu0 %v3911
        %v5774 = vpop.f32.mrb[0].mxu0
        %v5775 = vadd.f32 0.0, %v5774
        %v5776 = vpop.f32.mrb[0].mxu0
        %v5777 = vpop.f32.mrb[0].mxu0
        %v5778 = vadd.f32 0.0, %v5777
        %v5779 = vpop.f32.mrb[0].mxu0
        %5780 = vmatprep.mubr.bf16.mxu0 0
        %5781 = vmatmul.mubr.bf16.gmra.mrb[0].mxu0 %v3912
        %v5782 = vpop.f32.mrb[0].mxu0
        %v5783 = vadd.f32 0.0, %v5782
        %v5784 = vpop.f32.mrb[0].mxu0
        %v5785 = vpop.f32.mrb[0].mxu0
        %v5786 = vadd.f32 0.0, %v5785
        %v5787 = vpop.f32.mrb[0].mxu0
        %5788 = vmatprep.mubr.bf16.mxu0 0
        %5789 = vmatmul.mubr.bf16.gmra.mrb[0].mxu0 %v3913
        %v5790 = vpop.f32.mrb[0].mxu0
        %v5791 = vadd.f32 0.0, %v5790
        %v5792 = vpop.f32.mrb[0].mxu0
        %v5793 = vpop.f32.mrb[0].mxu0
        %v5794 = vadd.f32 0.0, %v5793
        %v5795 = vpop.f32.mrb[0].mxu0
        %5796 = vmatprep.mubr.bf16.mxu0 0
        %5797 = vmatmul.mubr.bf16.gmra.mrb[0].mxu0 %v3914
        %v5798 = vpop.f32.mrb[0].mxu0
        %v5799 = vadd.f32 0.0, %v5798
        %v5800 = vpop.f32.mrb[0].mxu0
        %v5801 = vpop.f32.mrb[0].mxu0
        %v5802 = vadd.f32 0.0, %v5801
        %v5803 = vpop.f32.mrb[0].mxu0
        %5804 = vmatprep.mubr.bf16.mxu0 0
        %5805 = vmatmul.mubr.bf16.gmra.mrb[0].mxu0 %v3915
        %v5806 = vpop.f32.mrb[0].mxu0
        %v5807 = vadd.f32 0.0, %v5806
        %v5808 = vpop.f32.mrb[0].mxu0
        %v5809 = vpop.f32.mrb[0].mxu0
        %v5810 = vadd.f32 0.0, %v5809
        %v5811 = vpop.f32.mrb[0].mxu0
        %5812 = vmatprep.mubr.bf16.mxu0 0
        %5813 = vmatmul.mubr.bf16.gmra.mrb[0].mxu0 %v3916
        %v5814 = vpop.f32.mrb[0].mxu0
        %v5815 = vadd.f32 0.0, %v5814
        %v5816 = vpop.f32.mrb[0].mxu0
        %v5817 = vpop.f32.mrb[0].mxu0
        %v5818 = vadd.f32 0.0, %v5817
        %v5819 = vpop.f32.mrb[0].mxu0
        %5820 = vmatprep.mubr.bf16.mxu0 0
        %5821 = vmatmul.mubr.bf16.gmra.mrb[0].mxu0 %v3917
        %v5822 = vpop.f32.mrb[0].mxu0
        %v5823 = vadd.f32 0.0, %v5822
        %v5824 = vpop.f32.mrb[0].mxu0
        %v5825 = vpop.f32.mrb[0].mxu0
        %v5826 = vadd.f32 0.0, %v5825
        %v5827 = vpop.f32.mrb[0].mxu0
        %5828 = vmatprep.mubr.bf16.mxu0 0
        %5829 = vmatmul.mubr.bf16.gmra.mrb[0].mxu0 %v3918
        %v5830 = vpop.f32.mrb[0].mxu0
        %v5831 = vadd.f32 0.0, %v5830
        %v5832 = vpop.f32.mrb[0].mxu0
        %v5833 = vpop.f32.mrb[0].mxu0
        %v5834 = vadd.f32 0.0, %v5833
        %v5835 = vpop.f32.mrb[0].mxu0
        %5836 = vmatprep.mubr.bf16.mxu0 0
        %5837 = vmatmul.mubr.bf16.gmra.mrb[0].mxu0 %v3919
        %v5838 = vpop.f32.mrb[0].mxu0
        %v5839 = vadd.f32 0.0, %v5838
        %v5840 = vpop.f32.mrb[0].mxu0
        %v5841 = vpop.f32.mrb[0].mxu0
        %v5842 = vadd.f32 0.0, %v5841
        %v5843 = vpop.f32.mrb[0].mxu0
        %5844 = vmatprep.mubr.bf16.mxu0 0
        %5845 = vmatmul.mubr.bf16.gmra.mrb[0].mxu0 %v3920
        %v5846 = vpop.f32.mrb[0].mxu0
        %v5847 = vadd.f32 0.0, %v5846
        %v5848 = vpop.f32.mrb[0].mxu0
        %v5849 = vpop.f32.mrb[0].mxu0
        %v5850 = vadd.f32 0.0, %v5849
        %v5851 = vpop.f32.mrb[0].mxu0
        %5852 = vmatprep.mubr.bf16.mxu0 0
        %5853 = vmatmul.mubr.bf16.gmra.mrb[0].mxu0 %v3921
        %v5854 = vpop.f32.mrb[0].mxu0
        %v5855 = vadd.f32 0.0, %v5854
        %v5856 = vpop.f32.mrb[0].mxu0
        %v5857 = vpop.f32.mrb[0].mxu0
        %v5858 = vadd.f32 0.0, %v5857
        %v5859 = vpop.f32.mrb[0].mxu0
        %5860 = vmatprep.mubr.bf16.mxu0 0
        %5861 = vmatmul.mubr.bf16.gmra.mrb[0].mxu0 %v3922
        %v5862 = vpop.f32.mrb[0].mxu0
        %v5863 = vadd.f32 0.0, %v5862
        %v5864 = vpop.f32.mrb[0].mxu0
        %v5865 = vpop.f32.mrb[0].mxu0
        %v5866 = vadd.f32 0.0, %v5865
        %v5867 = vpop.f32.mrb[0].mxu0
        %5868 = vmatprep.mubr.bf16.mxu0 0
        %5869 = vmatmul.mubr.bf16.gmra.mrb[0].mxu0 %v3923
        %v5870 = vpop.f32.mrb[0].mxu0
        %v5871 = vadd.f32 0.0, %v5870
        %v5872 = vpop.f32.mrb[0].mxu0
        %v5873 = vpop.f32.mrb[0].mxu0
        %v5874 = vadd.f32 0.0, %v5873
        %v5875 = vpop.f32.mrb[0].mxu0
        %5876 = vmatprep.mubr.bf16.mxu0 0
        %5877 = vmatmul.mubr.bf16.gmra.mrb[0].mxu0 %v3924
        %v5878 = vpop.f32.mrb[0].mxu0
        %v5879 = vadd.f32 0.0, %v5878
        %v5880 = vpop.f32.mrb[0].mxu0
        %v5881 = vpop.f32.mrb[0].mxu0
        %v5882 = vadd.f32 0.0, %v5881
        %v5883 = vpop.f32.mrb[0].mxu0
        %5884 = vmatprep.mubr.bf16.mxu0 0
        %5885 = vmatmul.mubr.bf16.gmra.mrb[0].mxu0 %v3925
        %v5886 = vpop.f32.mrb[0].mxu0
        %v5887 = vadd.f32 0.0, %v5886
        %v5888 = vpop.f32.mrb[0].mxu0
        %v5889 = vpop.f32.mrb[0].mxu0
        %v5890 = vadd.f32 0.0, %v5889
        %v5891 = vpop.f32.mrb[0].mxu0
        %5892 = vdwg.mxu0
        %v5893 = vadd.f32 %v5635, %v5767
        %v5894 = vadd.f32 %v5636, %v5770
        %v5895 = vadd.f32 %v5637, %v5775
        %v5896 = vadd.f32 %v5638, %v5778
        %v5897 = vadd.f32 %v5639, %v5783
        %v5898 = vadd.f32 %v5640, %v5786
        %v5899 = vadd.f32 %v5641, %v5791
        %v5900 = vadd.f32 %v5642, %v5794
        %v5901 = vadd.f32 %v5643, %v5799
        %v5902 = vadd.f32 %v5644, %v5802
        %v5903 = vadd.f32 %v5645, %v5807
        %v5904 = vadd.f32 %v5646, %v5810
        %v5905 = vadd.f32 %v5647, %v5815
        %v5906 = vadd.f32 %v5648, %v5818
        %v5907 = vadd.f32 %v5649, %v5823
        %v5908 = vadd.f32 %v5650, %v5826
        %v5909 = vadd.f32 %v5651, %v5831
        %v5910 = vadd.f32 %v5652, %v5834
        %v5911 = vadd.f32 %v5653, %v5839
        %v5912 = vadd.f32 %v5654, %v5842
        %v5913 = vadd.f32 %v5655, %v5847
        %v5914 = vadd.f32 %v5656, %v5850
        %v5915 = vadd.f32 %v5657, %v5855
        %v5916 = vadd.f32 %v5658, %v5858
        %v5917 = vadd.f32 %v5659, %v5863
        %v5918 = vadd.f32 %v5660, %v5866
        %v5919 = vadd.f32 %v5661, %v5871
        %v5920 = vadd.f32 %v5662, %v5874
        %v5921 = vadd.f32 %v5663, %v5879
        %v5922 = vadd.f32 %v5664, %v5882
        %v5923 = vadd.f32 %v5665, %v5887
        %v5924 = vadd.f32 %v5666, %v5890
        %s5925 = scalar_lea.vmem [#allocation8], 512
        %v5926 = vld [vmem:[%s5925] sm:$0xf]
        %v5927 = vld [vmem:[%s5925 + $0x4] sm:$0xf]
        %v5928 = vld [vmem:[%s5925 + $0x8] sm:$0xf]
        %v5929 = vld [vmem:[%s5925 + $0xc] sm:$0xf]
        %v5930 = vld [vmem:[%s5925 + $0x10] sm:$0xf]
        %v5931 = vld [vmem:[%s5925 + $0x14] sm:$0xf]
        %v5932 = vld [vmem:[%s5925 + $0x18] sm:$0xf]
        %v5933 = vld [vmem:[%s5925 + $0x1c] sm:$0xf]
        %v5934 = vld [vmem:[%s5925 + $0x20] sm:$0xf]
        %v5935 = vld [vmem:[%s5925 + $0x24] sm:$0xf]
        %v5936 = vld [vmem:[%s5925 + $0x28] sm:$0xf]
        %v5937 = vld [vmem:[%s5925 + $0x2c] sm:$0xf]
        %v5938 = vld [vmem:[%s5925 + $0x30] sm:$0xf]
        %v5939 = vld [vmem:[%s5925 + $0x34] sm:$0xf]
        %v5940 = vld [vmem:[%s5925 + $0x38] sm:$0xf]
        %v5941 = vld [vmem:[%s5925 + $0x3c] sm:$0xf]
        %v5958 = vunpack.c.l.b16 %v5926
        %v5959 = vunpack.c.l.b16 %v5927
        %v5960 = vunpack.c.l.b16 %v5928
        %v5961 = vunpack.c.l.b16 %v5929
        %v5962 = vunpack.c.l.b16 %v5930
        %v5963 = vunpack.c.l.b16 %v5931
        %v5964 = vunpack.c.l.b16 %v5932
        %v5965 = vunpack.c.l.b16 %v5933
        %v5966 = vunpack.c.l.b16 %v5934
        %v5967 = vunpack.c.l.b16 %v5935
        %v5968 = vunpack.c.l.b16 %v5936
        %v5969 = vunpack.c.l.b16 %v5937
        %v5970 = vunpack.c.l.b16 %v5938
        %v5971 = vunpack.c.l.b16 %v5939
        %v5972 = vunpack.c.l.b16 %v5940
        %v5973 = vunpack.c.l.b16 %v5941
        %v5974 = vpack.c.b16 %v5959, %v5958
        %v5975 = vpack.c.b16 %v5961, %v5960
        %v5976 = vpack.c.b16 %v5963, %v5962
        %v5977 = vpack.c.b16 %v5965, %v5964
        %v5978 = vpack.c.b16 %v5967, %v5966
        %v5979 = vpack.c.b16 %v5969, %v5968
        %v5980 = vpack.c.b16 %v5971, %v5970
        %v5981 = vpack.c.b16 %v5973, %v5972
        %5990 = vmatprep.subr.bf16.mxu0 0
        %5991 = vmatpush1.bf16.msra.mxu0 %v5974
        %5992 = vmatprep.subr.bf16.mxu0 0
        %5993 = vmatpush1.bf16.msra.mxu0 %v5975
        %5994 = vmatprep.subr.bf16.mxu0 0
        %5995 = vmatpush1.bf16.msra.mxu0 %v5976
        %5996 = vmatprep.subr.bf16.mxu0 0
        %5997 = vmatpush1.bf16.msra.mxu0 %v5977
        %5998 = vmatprep.subr.bf16.mxu0 0
        %5999 = vmatpush1.bf16.msra.mxu0 %v5978
        %6000 = vmatprep.subr.bf16.mxu0 0
        %6001 = vmatpush1.bf16.msra.mxu0 %v5979
        %6002 = vmatprep.subr.bf16.mxu0 0
        %6003 = vmatpush1.bf16.msra.mxu0 %v5980
        %6004 = vmatprep.subr.bf16.mxu0 0
        %6005 = vmatpush1.bf16.msra.mxu0 %v5981
        %6006 = vmatprep.subr.bf16.mxu0 0
        %6007 = vmatpush1.bf16.msra.mxu0 0
        %6008 = vmatprep.subr.bf16.mxu0 0
        %6009 = vmatpush1.bf16.msra.mxu0 0
        %6010 = vmatprep.subr.bf16.mxu0 0
        %6011 = vmatpush1.bf16.msra.mxu0 0
        %6012 = vmatprep.subr.bf16.mxu0 0
        %6013 = vmatpush1.bf16.msra.mxu0 0
        %6014 = vmatprep.subr.bf16.mxu0 0
        %6015 = vmatpush1.bf16.msra.mxu0 0
        %6016 = vmatprep.subr.bf16.mxu0 0
        %6017 = vmatpush1.bf16.msra.mxu0 0
        %6018 = vmatprep.subr.bf16.mxu0 0
        %6019 = vmatpush1.bf16.msra.mxu0 0
        %6020 = vmatprep.subr.bf16.mxu0 0
        %6021 = vmatpush1.bf16.msra.mxu0 0
        %6022 = vmatprep.mubr.bf16.mxu0 0
        %6023 = vmatmul.mubr.bf16.gmra.mrb[0].mxu0 %v3911
        %v6024 = vpop.f32.mrb[0].mxu0
        %v6025 = vadd.f32 0.0, %v6024
        %v6026 = vpop.f32.mrb[0].mxu0
        %v6027 = vpop.f32.mrb[0].mxu0
        %v6028 = vadd.f32 0.0, %v6027
        %v6029 = vpop.f32.mrb[0].mxu0
        %6030 = vmatprep.mubr.bf16.mxu0 0
        %6031 = vmatmul.mubr.bf16.gmra.mrb[0].mxu0 %v3912
        %v6032 = vpop.f32.mrb[0].mxu0
        %v6033 = vadd.f32 0.0, %v6032
        %v6034 = vpop.f32.mrb[0].mxu0
        %v6035 = vpop.f32.mrb[0].mxu0
        %v6036 = vadd.f32 0.0, %v6035
        %v6037 = vpop.f32.mrb[0].mxu0
        %6038 = vmatprep.mubr.bf16.mxu0 0
        %6039 = vmatmul.mubr.bf16.gmra.mrb[0].mxu0 %v3913
        %v6040 = vpop.f32.mrb[0].mxu0
        %v6041 = vadd.f32 0.0, %v6040
        %v6042 = vpop.f32.mrb[0].mxu0
        %v6043 = vpop.f32.mrb[0].mxu0
        %v6044 = vadd.f32 0.0, %v6043
        %v6045 = vpop.f32.mrb[0].mxu0
        %6046 = vmatprep.mubr.bf16.mxu0 0
        %6047 = vmatmul.mubr.bf16.gmra.mrb[0].mxu0 %v3914
        %v6048 = vpop.f32.mrb[0].mxu0
        %v6049 = vadd.f32 0.0, %v6048
        %v6050 = vpop.f32.mrb[0].mxu0
        %v6051 = vpop.f32.mrb[0].mxu0
        %v6052 = vadd.f32 0.0, %v6051
        %v6053 = vpop.f32.mrb[0].mxu0
        %6054 = vmatprep.mubr.bf16.mxu0 0
        %6055 = vmatmul.mubr.bf16.gmra.mrb[0].mxu0 %v3915
        %v6056 = vpop.f32.mrb[0].mxu0
        %v6057 = vadd.f32 0.0, %v6056
        %v6058 = vpop.f32.mrb[0].mxu0
        %v6059 = vpop.f32.mrb[0].mxu0
        %v6060 = vadd.f32 0.0, %v6059
        %v6061 = vpop.f32.mrb[0].mxu0
        %6062 = vmatprep.mubr.bf16.mxu0 0
        %6063 = vmatmul.mubr.bf16.gmra.mrb[0].mxu0 %v3916
        %v6064 = vpop.f32.mrb[0].mxu0
        %v6065 = vadd.f32 0.0, %v6064
        %v6066 = vpop.f32.mrb[0].mxu0
        %v6067 = vpop.f32.mrb[0].mxu0
        %v6068 = vadd.f32 0.0, %v6067
        %v6069 = vpop.f32.mrb[0].mxu0
        %6070 = vmatprep.mubr.bf16.mxu0 0
        %6071 = vmatmul.mubr.bf16.gmra.mrb[0].mxu0 %v3917
        %v6072 = vpop.f32.mrb[0].mxu0
        %v6073 = vadd.f32 0.0, %v6072
        %v6074 = vpop.f32.mrb[0].mxu0
        %v6075 = vpop.f32.mrb[0].mxu0
        %v6076 = vadd.f32 0.0, %v6075
        %v6077 = vpop.f32.mrb[0].mxu0
        %6078 = vmatprep.mubr.bf16.mxu0 0
        %6079 = vmatmul.mubr.bf16.gmra.mrb[0].mxu0 %v3918
        %v6080 = vpop.f32.mrb[0].mxu0
        %v6081 = vadd.f32 0.0, %v6080
        %v6082 = vpop.f32.mrb[0].mxu0
        %v6083 = vpop.f32.mrb[0].mxu0
        %v6084 = vadd.f32 0.0, %v6083
        %v6085 = vpop.f32.mrb[0].mxu0
        %6086 = vmatprep.mubr.bf16.mxu0 0
        %6087 = vmatmul.mubr.bf16.gmra.mrb[0].mxu0 %v3919
        %v6088 = vpop.f32.mrb[0].mxu0
        %v6089 = vadd.f32 0.0, %v6088
        %v6090 = vpop.f32.mrb[0].mxu0
        %v6091 = vpop.f32.mrb[0].mxu0
        %v6092 = vadd.f32 0.0, %v6091
        %v6093 = vpop.f32.mrb[0].mxu0
        %6094 = vmatprep.mubr.bf16.mxu0 0
        %6095 = vmatmul.mubr.bf16.gmra.mrb[0].mxu0 %v3920
        %v6096 = vpop.f32.mrb[0].mxu0
        %v6097 = vadd.f32 0.0, %v6096
        %v6098 = vpop.f32.mrb[0].mxu0
        %v6099 = vpop.f32.mrb[0].mxu0
        %v6100 = vadd.f32 0.0, %v6099
        %v6101 = vpop.f32.mrb[0].mxu0
        %6102 = vmatprep.mubr.bf16.mxu0 0
        %6103 = vmatmul.mubr.bf16.gmra.mrb[0].mxu0 %v3921
        %v6104 = vpop.f32.mrb[0].mxu0
        %v6105 = vadd.f32 0.0, %v6104
        %v6106 = vpop.f32.mrb[0].mxu0
        %v6107 = vpop.f32.mrb[0].mxu0
        %v6108 = vadd.f32 0.0, %v6107
        %v6109 = vpop.f32.mrb[0].mxu0
        %6110 = vmatprep.mubr.bf16.mxu0 0
        %6111 = vmatmul.mubr.bf16.gmra.mrb[0].mxu0 %v3922
        %v6112 = vpop.f32.mrb[0].mxu0
        %v6113 = vadd.f32 0.0, %v6112
        %v6114 = vpop.f32.mrb[0].mxu0
        %v6115 = vpop.f32.mrb[0].mxu0
        %v6116 = vadd.f32 0.0, %v6115
        %v6117 = vpop.f32.mrb[0].mxu0
        %6118 = vmatprep.mubr.bf16.mxu0 0
        %6119 = vmatmul.mubr.bf16.gmra.mrb[0].mxu0 %v3923
        %v6120 = vpop.f32.mrb[0].mxu0
        %v6121 = vadd.f32 0.0, %v6120
        %v6122 = vpop.f32.mrb[0].mxu0
        %v6123 = vpop.f32.mrb[0].mxu0
        %v6124 = vadd.f32 0.0, %v6123
        %v6125 = vpop.f32.mrb[0].mxu0
        %6126 = vmatprep.mubr.bf16.mxu0 0
        %6127 = vmatmul.mubr.bf16.gmra.mrb[0].mxu0 %v3924
        %v6128 = vpop.f32.mrb[0].mxu0
        %v6129 = vadd.f32 0.0, %v6128
        %v6130 = vpop.f32.mrb[0].mxu0
        %v6131 = vpop.f32.mrb[0].mxu0
        %v6132 = vadd.f32 0.0, %v6131
        %v6133 = vpop.f32.mrb[0].mxu0
        %6134 = vmatprep.mubr.bf16.mxu0 0
        %6135 = vmatmul.mubr.bf16.gmra.mrb[0].mxu0 %v3925
        %v6136 = vpop.f32.mrb[0].mxu0
        %v6137 = vadd.f32 0.0, %v6136
        %v6138 = vpop.f32.mrb[0].mxu0
        %v6139 = vpop.f32.mrb[0].mxu0
        %v6140 = vadd.f32 0.0, %v6139
        %v6141 = vpop.f32.mrb[0].mxu0
        %6142 = vmatprep.mubr.bf16.mxu0 0
        %6143 = vmatmul.mubr.bf16.gmra.mrb[0].mxu0 %v3924
        %v6144 = vpop.f32.mrb[0].mxu0
        %v6145 = vadd.f32 0.0, %v6144
        %v6146 = vpop.f32.mrb[0].mxu0
        %v6147 = vpop.f32.mrb[0].mxu0
        %v6148 = vadd.f32 0.0, %v6147
        %v6149 = vpop.f32.mrb[0].mxu0
        %6150 = vdwg.mxu0
        %v6151 = vadd.f32 %v5893, %v6025
        %v6152 = vadd.f32 %v5894, %v6028
        %v6153 = vadd.f32 %v5895, %v6033
        %v6154 = vadd.f32 %v5896, %v6036
        %v6155 = vadd.f32 %v5897, %v6041
        %v6156 = vadd.f32 %v5898, %v6044
        %v6157 = vadd.f32 %v5899, %v6049
        %v6158 = vadd.f32 %v5900, %v6052
        %v6159 = vadd.f32 %v5901, %v6057
        %v6160 = vadd.f32 %v5902, %v6060
        %v6161 = vadd.f32 %v5903, %v6065
        %v6162 = vadd.f32 %v5904, %v6068
        %v6163 = vadd.f32 %v5905, %v6073
        %v6164 = vadd.f32 %v5906, %v6076
        %v6165 = vadd.f32 %v5907, %v6081
        %v6166 = vadd.f32 %v5908, %v6084
        %v6167 = vadd.f32 %v5909, %v6089
        %v6168 = vadd.f32 %v5910, %v6092
        %v6169 = vadd.f32 %v5911, %v6097
        %v6170 = vadd.f32 %v5912, %v6100
        %v6171 = vadd.f32 %v5913, %v6105
        %v6172 = vadd.f32 %v5914, %v6108
        %v6173 = vadd.f32 %v5915, %v6113
        %v6174 = vadd.f32 %v5916, %v6116
        %v6175 = vadd.f32 %v5917, %v6121
        %v6176 = vadd.f32 %v5918, %v6124
        %v6177 = vadd.f32 %v5919, %v6129
        %v6178 = vadd.f32 %v5920, %v6132
        %v6179 = vadd.f32 %v5921, %v6137
        %v6180 = vadd.f32 %v5922, %v6140
        %v6181 = vadd.f32 %v5923, %v6145
        %v6182 = vadd.f32 %v5924, %v6148
        %v6183 = vld [vmem:[#allocation10] sm:$0x1]
        %v6185 = vlaneseq
        %v6186 = vshrl.u32 %v6185, 7
        %v6187 = vsub.s32 0, %v6186
        %v6188 = vrot.slane %v6183, %v6187
        %v6190 = vadd.f32 %v6151, %v6188
        %v6191 = vadd.f32 %v6152, %v6188
        %v6192 = vadd.f32 %v6153, %v6188
        %v6193 = vadd.f32 %v6154, %v6188
        %v6194 = vadd.f32 %v6155, %v6188
        %v6195 = vadd.f32 %v6156, %v6188
        %v6196 = vadd.f32 %v6157, %v6188
        %v6197 = vadd.f32 %v6158, %v6188
        %v6198 = vadd.f32 %v6159, %v6188
        %v6199 = vadd.f32 %v6160, %v6188
        %v6200 = vadd.f32 %v6161, %v6188
        %v6201 = vadd.f32 %v6162, %v6188
        %v6202 = vadd.f32 %v6163, %v6188
        %v6203 = vadd.f32 %v6164, %v6188
        %v6204 = vadd.f32 %v6165, %v6188
        %v6205 = vadd.f32 %v6166, %v6188
        %v6206 = vadd.f32 %v6167, %v6188
        %v6207 = vadd.f32 %v6168, %v6188
        %v6208 = vadd.f32 %v6169, %v6188
        %v6209 = vadd.f32 %v6170, %v6188
        %v6210 = vadd.f32 %v6171, %v6188
        %v6211 = vadd.f32 %v6172, %v6188
        %v6212 = vadd.f32 %v6173, %v6188
        %v6213 = vadd.f32 %v6174, %v6188
        %v6214 = vadd.f32 %v6175, %v6188
        %v6215 = vadd.f32 %v6176, %v6188
        %v6216 = vadd.f32 %v6177, %v6188
        %v6217 = vadd.f32 %v6178, %v6188
        %v6218 = vadd.f32 %v6179, %v6188
        %v6219 = vadd.f32 %v6180, %v6188
        %v6220 = vadd.f32 %v6181, %v6188
        %v6221 = vadd.f32 %v6182, %v6188
        %v6222 = vadd.f32 %v6190, %v6191
        %v6223 = vadd.f32 %v6222, %v6192
        %v6224 = vadd.f32 %v6223, %v6193
        %v6225 = vadd.f32 %v6224, %v6194
        %v6226 = vadd.f32 %v6225, %v6195
        %v6227 = vadd.f32 %v6226, %v6196
        %v6228 = vadd.f32 %v6227, %v6197
        %v6229 = vadd.f32 %v6228, %v6198
        %v6230 = vadd.f32 %v6229, %v6199
        %v6231 = vadd.f32 %v6230, %v6200
        %v6232 = vadd.f32 %v6231, %v6201
        %v6233 = vadd.f32 %v6232, %v6202
        %v6234 = vadd.f32 %v6233, %v6203
        %v6235 = vadd.f32 %v6234, %v6204
        %v6236 = vadd.f32 %v6235, %v6205
        %v6237 = vadd.f32 %v6236, %v6206
        %v6238 = vadd.f32 %v6237, %v6207
        %v6239 = vadd.f32 %v6238, %v6208
        %v6240 = vadd.f32 %v6239, %v6209
        %v6241 = vadd.f32 %v6240, %v6210
        %v6242 = vadd.f32 %v6241, %v6211
        %v6243 = vadd.f32 %v6242, %v6212
        %v6244 = vadd.f32 %v6243, %v6213
        %v6245 = vadd.f32 %v6244, %v6214
        %v6246 = vadd.f32 %v6245, %v6215
        %v6247 = vadd.f32 %v6246, %v6216
        %v6248 = vadd.f32 %v6247, %v6217
        %v6249 = vadd.f32 %v6248, %v6218
        %v6250 = vadd.f32 %v6249, %v6219
        %v6251 = vadd.f32 %v6250, %v6220
        %v6252 = vadd.f32 %v6251, %v6221
        %v6253 = vrot.slane %v6252, 4
        %v6254 = vadd.f32 %v6252, %v6253
        %v6255 = vrot.slane %v6254, 2
        %v6256 = vadd.f32 %v6254, %v6255
        %v6257 = vrot.slane %v6256, 1
        %v6258 = vadd.f32 %v6256, %v6257
        %v6259 = vmul.f32 %v6190, %v6190
        %v6260 = vmul.f32 %v6191, %v6191
        %v6261 = vmul.f32 %v6192, %v6192
        %v6262 = vmul.f32 %v6193, %v6193
        %v6263 = vmul.f32 %v6194, %v6194
        %v6264 = vmul.f32 %v6195, %v6195
        %v6265 = vmul.f32 %v6196, %v6196
        %v6266 = vmul.f32 %v6197, %v6197
        %v6267 = vmul.f32 %v6198, %v6198
        %v6268 = vmul.f32 %v6199, %v6199
        %v6269 = vmul.f32 %v6200, %v6200
        %v6270 = vmul.f32 %v6201, %v6201
        %v6271 = vmul.f32 %v6202, %v6202
        %v6272 = vmul.f32 %v6203, %v6203
        %v6273 = vmul.f32 %v6204, %v6204
        %v6274 = vmul.f32 %v6205, %v6205
        %v6275 = vmul.f32 %v6206, %v6206
        %v6276 = vmul.f32 %v6207, %v6207
        %v6277 = vmul.f32 %v6208, %v6208
        %v6278 = vmul.f32 %v6209, %v6209
        %v6279 = vmul.f32 %v6210, %v6210
        %v6280 = vmul.f32 %v6211, %v6211
        %v6281 = vmul.f32 %v6212, %v6212
        %v6282 = vmul.f32 %v6213, %v6213
        %v6283 = vmul.f32 %v6214, %v6214
        %v6284 = vmul.f32 %v6215, %v6215
        %v6285 = vmul.f32 %v6216, %v6216
        %v6286 = vmul.f32 %v6217, %v6217
        %v6287 = vmul.f32 %v6218, %v6218
        %v6288 = vmul.f32 %v6219, %v6219
        %v6289 = vmul.f32 %v6220, %v6220
        %v6290 = vmul.f32 %v6221, %v6221
        %v6291 = vadd.f32 %v6259, %v6260
        %v6292 = vadd.f32 %v6291, %v6261
        %v6293 = vadd.f32 %v6292, %v6262
        %v6294 = vadd.f32 %v6293, %v6263
        %v6295 = vadd.f32 %v6294, %v6264
        %v6296 = vadd.f32 %v6295, %v6265
        %v6297 = vadd.f32 %v6296, %v6266
        %v6298 = vadd.f32 %v6297, %v6267
        %v6299 = vadd.f32 %v6298, %v6268
        %v6300 = vadd.f32 %v6299, %v6269
        %v6301 = vadd.f32 %v6300, %v6270
        %v6302 = vadd.f32 %v6301, %v6271
        %v6303 = vadd.f32 %v6302, %v6272
        %v6304 = vadd.f32 %v6303, %v6273
        %v6305 = vadd.f32 %v6304, %v6274
        %v6306 = vadd.f32 %v6305, %v6275
        %v6307 = vadd.f32 %v6306, %v6276
        %v6308 = vadd.f32 %v6307, %v6277
        %v6309 = vadd.f32 %v6308, %v6278
        %v6310 = vadd.f32 %v6309, %v6279
        %v6311 = vadd.f32 %v6310, %v6280
        %v6312 = vadd.f32 %v6311, %v6281
        %v6313 = vadd.f32 %v6312, %v6282
        %v6314 = vadd.f32 %v6313, %v6283
        %v6315 = vadd.f32 %v6314, %v6284
        %v6316 = vadd.f32 %v6315, %v6285
        %v6317 = vadd.f32 %v6316, %v6286
        %v6318 = vadd.f32 %v6317, %v6287
        %v6319 = vadd.f32 %v6318, %v6288
        %v6320 = vadd.f32 %v6319, %v6289
        %v6321 = vadd.f32 %v6320, %v6290
        %v6322 = vrot.slane %v6321, 4
        %v6323 = vadd.f32 %v6321, %v6322
        %v6324 = vrot.slane %v6323, 2
        %v6325 = vadd.f32 %v6323, %v6324
        %v6326 = vrot.slane %v6325, 1
        %v6327 = vadd.f32 %v6325, %v6326
        %v6328 = vmul.f32 %v6258, 0.00390625
        %v6329 = vmul.f32 %v6327, 0.00390625
        %v6330 = vmul.f32 %v6328, %v6328
        %v6331 = vsub.f32 %v6329, %v6330
        %v6332 = vmax.f32 %v6331, 0.0
        %v6333 = vsub.f32 %v6190, %v6328
        %v6334 = vsub.f32 %v6191, %v6328
        %v6335 = vsub.f32 %v6192, %v6328
        %v6336 = vsub.f32 %v6193, %v6328
        %v6337 = vsub.f32 %v6194, %v6328
        %v6338 = vsub.f32 %v6195, %v6328
        %v6339 = vsub.f32 %v6196, %v6328
        %v6340 = vsub.f32 %v6197, %v6328
        %v6341 = vsub.f32 %v6198, %v6328
        %v6342 = vsub.f32 %v6199, %v6328
        %v6343 = vsub.f32 %v6200, %v6328
        %v6344 = vsub.f32 %v6201, %v6328
        %v6345 = vsub.f32 %v6202, %v6328
        %v6346 = vsub.f32 %v6203, %v6328
        %v6347 = vsub.f32 %v6204, %v6328
        %v6348 = vsub.f32 %v6205, %v6328
        %v6349 = vsub.f32 %v6206, %v6328
        %v6350 = vsub.f32 %v6207, %v6328
        %v6351 = vsub.f32 %v6208, %v6328
        %v6352 = vsub.f32 %v6209, %v6328
        %v6353 = vsub.f32 %v6210, %v6328
        %v6354 = vsub.f32 %v6211, %v6328
        %v6355 = vsub.f32 %v6212, %v6328
        %v6356 = vsub.f32 %v6213, %v6328
        %v6357 = vsub.f32 %v6214, %v6328
        %v6358 = vsub.f32 %v6215, %v6328
        %v6359 = vsub.f32 %v6216, %v6328
        %v6360 = vsub.f32 %v6217, %v6328
        %v6361 = vsub.f32 %v6218, %v6328
        %v6362 = vsub.f32 %v6219, %v6328
        %v6363 = vsub.f32 %v6220, %v6328
        %v6364 = vsub.f32 %v6221, %v6328
        %v6365 = vadd.f32 %v6332, 1e-05
        %v6366 = vrsqrt.pop %v6365
        %v6367 = vmul.f32 %v6333, %v6366
        %v6368 = vmul.f32 %v6334, %v6366
        %v6369 = vmul.f32 %v6335, %v6366
        %v6370 = vmul.f32 %v6336, %v6366
        %v6371 = vmul.f32 %v6337, %v6366
        %v6372 = vmul.f32 %v6338, %v6366
        %v6373 = vmul.f32 %v6339, %v6366
        %v6374 = vmul.f32 %v6340, %v6366
        %v6375 = vmul.f32 %v6341, %v6366
        %v6376 = vmul.f32 %v6342, %v6366
        %v6377 = vmul.f32 %v6343, %v6366
        %v6378 = vmul.f32 %v6344, %v6366
        %v6379 = vmul.f32 %v6345, %v6366
        %v6380 = vmul.f32 %v6346, %v6366
        %v6381 = vmul.f32 %v6347, %v6366
        %v6382 = vmul.f32 %v6348, %v6366
        %v6383 = vmul.f32 %v6349, %v6366
        %v6384 = vmul.f32 %v6350, %v6366
        %v6385 = vmul.f32 %v6351, %v6366
        %v6386 = vmul.f32 %v6352, %v6366
        %v6387 = vmul.f32 %v6353, %v6366
        %v6388 = vmul.f32 %v6354, %v6366
        %v6389 = vmul.f32 %v6355, %v6366
        %v6390 = vmul.f32 %v6356, %v6366
        %v6391 = vmul.f32 %v6357, %v6366
        %v6392 = vmul.f32 %v6358, %v6366
        %v6393 = vmul.f32 %v6359, %v6366
        %v6394 = vmul.f32 %v6360, %v6366
        %v6395 = vmul.f32 %v6361, %v6366
        %v6396 = vmul.f32 %v6362, %v6366
        %v6397 = vmul.f32 %v6363, %v6366
        %v6398 = vmul.f32 %v6364, %v6366
        %v6399 = vadd.f32 %v298, %v6367
        %v6400 = vadd.f32 %v299, %v6368
        %v6401 = vadd.f32 %v300, %v6369
        %v6402 = vadd.f32 %v301, %v6370
        %v6403 = vadd.f32 %v302, %v6371
        %v6404 = vadd.f32 %v303, %v6372
        %v6405 = vadd.f32 %v304, %v6373
        %v6406 = vadd.f32 %v305, %v6374
        %v6407 = vadd.f32 %v306, %v6375
        %v6408 = vadd.f32 %v307, %v6376
        %v6409 = vadd.f32 %v308, %v6377
        %v6410 = vadd.f32 %v309, %v6378
        %v6411 = vadd.f32 %v310, %v6379
        %v6412 = vadd.f32 %v311, %v6380
        %v6413 = vadd.f32 %v312, %v6381
        %v6414 = vadd.f32 %v313, %v6382
        %v6415 = vadd.f32 %v314, %v6383
        %v6416 = vadd.f32 %v315, %v6384
        %v6417 = vadd.f32 %v316, %v6385
        %v6418 = vadd.f32 %v317, %v6386
        %v6419 = vadd.f32 %v318, %v6387
        %v6420 = vadd.f32 %v319, %v6388
        %v6421 = vadd.f32 %v320, %v6389
        %v6422 = vadd.f32 %v321, %v6390
        %v6423 = vadd.f32 %v322, %v6391
        %v6424 = vadd.f32 %v323, %v6392
        %v6425 = vadd.f32 %v324, %v6393
        %v6426 = vadd.f32 %v325, %v6394
        %v6427 = vadd.f32 %v326, %v6395
        %v6428 = vadd.f32 %v327, %v6396
        %v6429 = vadd.f32 %v328, %v6397
        %v6430 = vadd.f32 %v329, %v6398
        %6431 = vst [vmem:[%s296] sm:$0xff] %v6399
        %6432 = vst [vmem:[%s296 + $0x8] sm:$0xff] %v6400
        %6433 = vst [vmem:[%s296 + $0x10] sm:$0xff] %v6401
        %6434 = vst [vmem:[%s296 + $0x18] sm:$0xff] %v6402
        %6435 = vst [vmem:[%s296 + $0x20] sm:$0xff] %v6403
        %6436 = vst [vmem:[%s296 + $0x28] sm:$0xff] %v6404
        %6437 = vst [vmem:[%s296 + $0x30] sm:$0xff] %v6405
        %6438 = vst [vmem:[%s296 + $0x38] sm:$0xff] %v6406
        %6439 = vst [vmem:[%s296 + $0x40] sm:$0xff] %v6407
        %6440 = vst [vmem:[%s296 + $0x48] sm:$0xff] %v6408
        %6441 = vst [vmem:[%s296 + $0x50] sm:$0xff] %v6409
        %6442 = vst [vmem:[%s296 + $0x58] sm:$0xff] %v6410
        %6443 = vst [vmem:[%s296 + $0x60] sm:$0xff] %v6411
        %6444 = vst [vmem:[%s296 + $0x68] sm:$0xff] %v6412
        %6445 = vst [vmem:[%s296 + $0x70] sm:$0xff] %v6413
        %6446 = vst [vmem:[%s296 + $0x78] sm:$0xff] %v6414
        %6447 = vst [vmem:[%s296 + $0x80] sm:$0xff] %v6415
        %6448 = vst [vmem:[%s296 + $0x88] sm:$0xff] %v6416
        %6449 = vst [vmem:[%s296 + $0x90] sm:$0xff] %v6417
        %6450 = vst [vmem:[%s296 + $0x98] sm:$0xff] %v6418
        %6451 = vst [vmem:[%s296 + $0xa0] sm:$0xff] %v6419
        %6452 = vst [vmem:[%s296 + $0xa8] sm:$0xff] %v6420
        %6453 = vst [vmem:[%s296 + $0xb0] sm:$0xff] %v6421
        %6454 = vst [vmem:[%s296 + $0xb8] sm:$0xff] %v6422
        %6455 = vst [vmem:[%s296 + $0xc0] sm:$0xff] %v6423
        %6456 = vst [vmem:[%s296 + $0xc8] sm:$0xff] %v6424
        %6457 = vst [vmem:[%s296 + $0xd0] sm:$0xff] %v6425
        %6458 = vst [vmem:[%s296 + $0xd8] sm:$0xff] %v6426
        %6459 = vst [vmem:[%s296 + $0xe0] sm:$0xff] %v6427
        %6460 = vst [vmem:[%s296 + $0xe8] sm:$0xff] %v6428
        %6461 = vst [vmem:[%s296 + $0xf0] sm:$0xff] %v6429
        %6462 = vst [vmem:[%s296 + $0xf8] sm:$0xff] %v6430
        %s6463 = sand.u32 %s142, 1
        %s6464 = scalar_lea.sflag [#allocation4], %s6463
        %s6465 = sand.u32 %s142, 1
        %s6466 = smul.addr %s6465, 256
        %s6467 = scalar_lea.vmem [#allocation11], %s6466
        // Predicated region
        $region61: #{tpu_custom_call.1} parent=39 // pred_check
          %p6468 = pneg %p152
        $region62: #{tpu_custom_call.1} parent=39 // pred_check_branch
          %6470 = sbr.rel (%p6468) target = $region64
        $region63: #{tpu_custom_call.1} parent=39 // pred_region
          %s6472 = ssub.s32 4096, 4096
          %6473 = vsyncadd %s6464, %s6472
          %s6474 = smul.addr %s24, 32
          %s6475 = smul.addr %s6474, 128
          %s6476 = scalar_lea.hbm %s5, %s6475
          %s6477 = sshll.u32 %s6467, 4
          %s6478 = int_to_ptr.vmem [resolvable:$true] %s6477
          %6483 = dma.vmem_to_hbm [thread:$0]  %s6478, 4096, %s6476, %s6464, 128, 128, 8
        $region64: #{tpu_custom_call.1} parent=39 // pred_fallthru
          _
      $region40: #{tpu_custom_call.1} parent=5 // pred_fallthru
        _
      %p6484 = scmp.le.s32.totalorder 2, %s19
      // Predicated region
      $region65: #{tpu_custom_call.1} parent=5 // pred_check
        %p6485 = pneg %p6484
      $region66: #{tpu_custom_call.1} parent=5 // pred_check_branch
        %6487 = sbr.rel (%p6485) target = $region68
      $region67: #{tpu_custom_call.1} parent=5 // pred_region
        %s6488 = ssub.s32 %s19, 2
        // Predicated region
        $region69: #{tpu_custom_call.1} parent=67 // pred_check
          %p6489 = pneg %p158
        $region70: #{tpu_custom_call.1} parent=67 // pred_check_branch
          %6491 = sbr.rel (%p6489) target = $region72
        $region71: #{tpu_custom_call.1} parent=67 // pred_region
          %s6492 = sand.u32 %s143, 1
          %s6493 = scalar_lea.sflag [#allocation4], %s6492
          %s6494 = sand.u32 %s143, 1
          %s6495 = smul.addr %s6494, 256
          %s6496 = scalar_lea.vmem [#allocation11], %s6495
          %6497 = dma.done %s6493, 4096
        $region72: #{tpu_custom_call.1} parent=67 // pred_fallthru
          _
      $region68: #{tpu_custom_call.1} parent=5 // pred_fallthru
        _
    $region6: #{tpu_custom_call.1} parent=1 // loop_footer
      %s23 = sadd.s32 1, %s19
    $region7: #{tpu_custom_call.1} parent=1 // loop_footer_branch
      %18 = sbr.rel target = $region3
    $region8: #{tpu_custom_call.1} parent=1 // loop_exit
      _
    %6498 = vsyncpa [#allocation3], 1
    %s6499 = scalar_lea.sflag [#allocation3], 1
    %6500 = vsyncpa %s6499, 1
    %6501 = vsyncpa [#allocation6], 1
    %6502 = vsyncpa [#allocation9], 1
    %6503 = vsyncpa [#allocation4], 1
    %s6504 = scalar_lea.sflag [#allocation4], 1
    %6505 = vsyncpa %s6504, 1

</llo_original>
